<compile_context>
chip_gen: v7x
topology: tpu7x:2x2x1
jax: 0.10.0
libtpu: 0.0.40
codegen_flags: <defaults>
</compile_context>

<pallas_src>
import numpy as np
import jax
import jax.numpy as jnp
from jax.experimental import pallas as pl
from jax.experimental.pallas import tpu as pltpu

VMEM_SPEC = pl.BlockSpec(memory_space=pltpu.MemorySpace.VMEM)

# name, K, pad, Cin (a1 zero-padded 5->8), Cout
_LAYERS = [
    ("a1", 3, 1, 8, 16), ("a2", 3, 1, 16, 16), ("a3", 3, 1, 16, 32),
    ("b1", 3, 1, 32, 32), ("b2", 3, 1, 32, 32), ("b3", 3, 1, 32, 64),
    ("c1", 2, 1, 64, 64), ("c2", 2, 1, 64, 64), ("c3", 2, 0, 64, 128),
    ("d1", 1, 0, 128, 128), ("d2", 1, 0, 128, 128), ("d3", 1, 0, 128, 128),
    ("last", 1, 0, 128, 1),
]
_CFG = {name: (k, p, ci, co) for name, k, p, ci, co in _LAYERS}
_BIAS_ROW = {name: i for i, (name, *_r) in enumerate(_LAYERS)}
_ROW_OFF = {}
_acc = 0
for _name, _k, _p, _ci, _co in _LAYERS:
    _ROW_OFF[_name] = _acc
    _acc += _ci
_PACK_ROWS = _acc                                    # 840
_PACK_W = max(k * k * co for _n, k, _p, _ci, co in _LAYERS)   # 576


# ---------------------------------------------------------------------------
# Parameters (PyTorch-default-style uniform init) and host-side packing.
# ---------------------------------------------------------------------------
def init_params(key):
    """Conv weights stored HWIO (a1 zero-padded 5->8 input channels),
    biases 1-D, `last` stored pre-transposed as (128, 1)."""
    params = {}
    for name, k, _pad, cin, cout in _LAYERS:
        key, wk, bk = jax.random.split(key, 3)
        cin_real = 5 if name == "a1" else cin
        bound = 1.0 / float(cin_real * k * k) ** 0.5
        if name == "last":
            w = jax.random.uniform(wk, (cin, cout), jnp.float32, -bound, bound)
        else:
            w = jax.random.uniform(wk, (k, k, cin_real, cout), jnp.float32,
                                   -bound, bound)
            if cin_real != cin:
                w = jnp.pad(w, ((0, 0), (0, 0), (0, cin - cin_real), (0, 0)))
        b = jax.random.uniform(bk, (cout,), jnp.float32, -bound, bound)
        params[name] = {"w": w, "b": b}
    return params


def pack_params(params):
    """Pack all weights into one (840, 576) slab (row block per layer, layout
    (Cin, K*K*Cout), taps kh-major) and all biases into one (13, 128) slab."""
    wrows, brows = [], []
    for name, k, _pad, cin, cout in _LAYERS:
        w = params[name]["w"]
        if name == "last":
            wr = w                                              # (128, 1)
        else:
            wr = jnp.transpose(w.reshape(k * k, cin, cout), (1, 0, 2))
            wr = wr.reshape(cin, k * k * cout)
        wrows.append(jnp.pad(wr, ((0, 0), (0, _PACK_W - wr.shape[1]))))
        brows.append(jnp.pad(params[name]["b"], (0, 128 - cout))[None, :])
    return jnp.concatenate(wrows, 0), jnp.concatenate(brows, 0)


def _mask_slab_np(n):
    """Per-tap border-validity masks (pixels on rows, taps on lanes), one row
    block per conv geometry: stage a (8x8), stage b (4x4), c1/c2/c3 on the
    4x4 canvas with valid input regions 2x2 / 3x3 / 4x4.  Shape (128n, 16)."""
    def stage(ch, cw, vh, vw, k, pad):
        m = np.zeros((n * ch * cw, 16), np.float32)
        for p in range(n * ch * cw):
            idx = p % (ch * cw)
            i, j = idx // cw, idx % cw
            for kh in range(k):
                for kw in range(k):
                    si, sj = i + kh - pad, j + kw - pad
                    if 0 <= si < vh and 0 <= sj < vw:
                        m[p, kh * k + kw] = 1.0
        return m
    return np.concatenate([stage(8, 8, 8, 8, 3, 1), stage(4, 4, 4, 4, 3, 1),
                           stage(4, 4, 2, 2, 2, 1), stage(4, 4, 3, 3, 2, 1),
                           stage(4, 4, 4, 4, 2, 0)], axis=0)


def _sel_slab_np(n, npad):
    """0/1 row-selection matrices for the three 2x2 max-pools (applied after
    the in-kernel shift+max), packed into one (32n + npad, 64n) slab."""
    width = 64 * n
    sa = np.zeros((16 * n, width), np.float32)   # 8x8 -> 4x4 (compact rows)
    sb = np.zeros((16 * n, width), np.float32)   # 4x4 -> 2x2, kept on 4x4 canvas
    sc = np.zeros((npad, width), np.float32)     # 3x3 -> 1x1 (canvas row b*16)
    for q in range(16 * n):
        b, r = divmod(q, 16)
        io, jo = divmod(r, 4)
        sa[q, b * 64 + 2 * io * 8 + 2 * jo] = 1.0
        if io < 2 and jo < 2:
            sb[q, b * 16 + 2 * io * 4 + 2 * jo] = 1.0
    for b in range(n):
        sc[b, b * 16] = 1.0
    return np.concatenate([sa, sb, sc], axis=0)


# ---------------------------------------------------------------------------
# The fused kernel.
# ---------------------------------------------------------------------------
def _make_kernel(n, npad):
    f32 = jnp.float32
    moff = {"a": 0, "b": 64 * n, "c1": 80 * n, "c2": 96 * n, "c3": 112 * n}

    def row_shift(x, d):
        """out[p] = x[(p + d) % P]: pixel-axis shift (== pltpu.roll(x, -d, 0)).
        Aligned self-concat + row slice -> cheap sublane relayout, MXU-free."""
        P = x.shape[0]
        d = d % P
        if d == 0:
            return x
        return jnp.concatenate([x, x], axis=0)[d:d + P]

    def conv_relu(x, w_ref, b_ref, mask_slab, name, cw):
        """Conv layer: k matmuls (one per kernel row) + per-tap shift/mask/add,
        accumulated in vregs (no scratch), then bias + ReLU."""
        k, pad, cin, cout = _CFG[name]
        r0 = _ROW_OFF[name]
        acc = None
        for kh in range(k):
            w_kh = w_ref[r0:r0 + cin, kh * k * cout:(kh + 1) * k * cout]
            y = jnp.dot(x, w_kh, preferred_element_type=f32)   # (P, k*cout)
            for kw in range(k):
                t = kh * k + kw
                d = (kh - pad) * cw + (kw - pad)
                blk = row_shift(y[:, kw * cout:(kw + 1) * cout], d)
                blk = blk * mask_slab[:, t:t + 1]              # zero invalid taps
                acc = blk if acc is None else acc + blk
        row = _BIAS_ROW[name]
        return jnp.maximum(acc + b_ref[row:row + 1, 0:cout], 0.0)

    def dense(x, w_ref, b_ref, name, relu):
        _k, _pad, cin, cout = _CFG[name]
        r0, row = _ROW_OFF[name], _BIAS_ROW[name]
        y = jnp.dot(x, w_ref[r0:r0 + cin, 0:cout], preferred_element_type=f32)
        y = y + b_ref[row:row + 1, 0:cout]
        return jnp.maximum(y, 0.0) if relu else y

    def pool(x, cw, sel):
        """2x2/stride-2 max pool: 2 shifts + 2 VPU max + 1 selection matmul."""
        m = jnp.maximum(x, row_shift(x, 1))
        m = jnp.maximum(m, row_shift(m, cw))
        return jnp.dot(sel, m, preferred_element_type=f32)

    def kernel(x_ref, w_ref, b_ref, m_ref, s_ref, o_ref):
        x = x_ref[...]                                          # (64n, 8)
        # stage a: 8x8 maps
        ma = m_ref[moff["a"]:moff["a"] + 64 * n, :]
        x = conv_relu(x, w_ref, b_ref, ma, "a1", 8)
        x = conv_relu(x, w_ref, b_ref, ma, "a2", 8)
        x = conv_relu(x, w_ref, b_ref, ma, "a3", 8)
        x = pool(x, 8, s_ref[0:16 * n, 0:64 * n])               # -> (16n, 32)
        # stage b: 4x4 maps
        mb = m_ref[moff["b"]:moff["b"] + 16 * n, :]
        x = conv_relu(x, w_ref, b_ref, mb, "b1", 4)
        x = conv_relu(x, w_ref, b_ref, mb, "b2", 4)
        x = conv_relu(x, w_ref, b_ref, mb, "b3", 4)
        x = pool(x, 4, s_ref[16 * n:32 * n, 0:16 * n])          # 2x2 on 4x4 canvas
        # stage c: 2x2 -> 3x3 -> 4x4 -> 3x3 maps, all on the 4x4 canvas
        x = conv_relu(x, w_ref, b_ref,
                      m_ref[moff["c1"]:moff["c1"] + 16 * n, :], "c1", 4)
        x = conv_relu(x, w_ref, b_ref,
                      m_ref[moff["c2"]:moff["c2"] + 16 * n, :], "c2", 4)
        x = conv_relu(x, w_ref, b_ref,
                      m_ref[moff["c3"]:moff["c3"] + 16 * n, :], "c3", 4)
        x = pool(x, 4, s_ref[32 * n:32 * n + npad, 0:16 * n])   # -> (npad, 128)
        # stage d (1x1 convs) + Linear + tanh: in-register matmul chain
        x = dense(x, w_ref, b_ref, "d1", True)
        x = dense(x, w_ref, b_ref, "d2", True)
        x = dense(x, w_ref, b_ref, "d3", True)
        o_ref[...] = jnp.tanh(dense(x, w_ref, b_ref, "last", False))

    return kernel


# ---------------------------------------------------------------------------
# Forward pass: one pallas_call, 5 input DMAs, no scratch.
# ---------------------------------------------------------------------------
def forward(wpack, bpack, x_nchw):
    n, c, h, w = x_nchw.shape
    assert (c, h, w) == (5, 8, 8), "Net assumes 5-channel 8x8 inputs (train.py)"
    npad = max(8, -(-n // 8) * 8)
    # NCHW -> (N*H*W, C); zero-pad channels 5 -> 8 for lane packing.
    x = jnp.transpose(x_nchw, (0, 2, 3, 1)).astype(jnp.float32)
    x = jnp.pad(x, ((0, 0), (0, 0), (0, 0), (0, 3))).reshape(n * 64, 8)
    mask_slab = jnp.asarray(_mask_slab_np(n))       # (128n, 16)
    sel_slab = jnp.asarray(_sel_slab_np(n, npad))   # (32n + npad, 64n)
    out = pl.pallas_call(
        _make_kernel(n, npad),
        out_shape=jax.ShapeDtypeStruct((npad, 1), jnp.float32),
        in_specs=[VMEM_SPEC] * 5,
        out_specs=VMEM_SPEC,
    )(x, wpack, bpack, mask_slab, sel_slab)
    return out[:n]


# ---------------------------------------------------------------------------
# Pure-JAX reference (mirrors the PyTorch Net.forward) for self-checking.
# ---------------------------------------------------------------------------
def reference_forward(params, x_nchw):
    x = jnp.transpose(x_nchw, (0, 2, 3, 1)).astype(jnp.float32)
    x = jnp.pad(x, ((0, 0), (0, 0), (0, 0), (0, 3)))  # matches a1's zero rows

    def conv(x, name):
        k, pad, _ci, _co = _CFG[name]
        y = jax.lax.conv_general_dilated(
            x, params[name]["w"], (1, 1), [(pad, pad), (pad, pad)],
            dimension_numbers=("NHWC", "HWIO", "NHWC"))
        return jax.nn.relu(y + params[name]["b"])

    def pool(x):
        n, h, w, c = x.shape
        ho, wo = h // 2, w // 2
        x = x[:, :ho * 2, :wo * 2, :].reshape(n, ho, 2, wo, 2, c)
        return x.max(axis=(2, 4))

    for name in ("a1", "a2", "a3"):
        x = conv(x, name)
    x = pool(x)
    for name in ("b1", "b2", "b3"):
        x = conv(x, name)
    x = pool(x)
    for name in ("c1", "c2", "c3"):
        x = conv(x, name)
    x = pool(x)
    for name in ("d1", "d2", "d3"):
        x = conv(x, name)
    x = x.reshape(x.shape[0], 128)
    return jnp.tanh(x @ params["last"]["w"] + params["last"]["b"])


if __name__ == "__main__":
    key = jax.random.PRNGKey(0)
    pkey, xkey = jax.random.split(key)
    params = init_params(pkey)
    wpack, bpack = pack_params(params)
    # NCHW input like the PyTorch module: batch=2, 5 channels, 8x8 board.
    x = jax.random.normal(xkey, (2, 5, 8, 8), dtype=jnp.float32)

    out = jax.block_until_ready(jax.jit(forward)(wpack, bpack, x))
    assert out.shape == (2, 1), out.shape
    assert bool(jnp.all(jnp.isfinite(out)))

    ref = jax.block_until_ready(jax.jit(reference_forward)(params, x))
    assert float(jnp.max(jnp.abs(out - ref))) < 5e-2, (out, ref)
    print("KERNEL_OK")
</pallas_src>

<mosaic_0001>
module attributes {stable_mosaic.version = 11 : i64} {
  func.func @kernel(%arg0: memref<128x8xf32, #tpu.memory_space<vmem>>, %arg1: memref<840x576xf32, #tpu.memory_space<vmem>>, %arg2: memref<13x128xf32, #tpu.memory_space<vmem>>, %arg3: memref<256x16xf32, #tpu.memory_space<vmem>>, %arg4: memref<72x128xf32, #tpu.memory_space<vmem>>, %arg5: memref<8x1xf32, #tpu.memory_space<vmem>>) attributes {dimension_semantics = [], scalar_prefetch = 0 : i64, scratch_operands = 0 : i64, tpu.core_type = #tpu.core_type<tc>} {
    %c0 = arith.constant 0 : index
    %c0_0 = arith.constant 0 : index
    %0 = vector.load %arg0[%c0, %c0_0] : memref<128x8xf32, #tpu.memory_space<vmem>>, vector<128x8xf32>
    %c0_1 = arith.constant 0 : index
    %c0_2 = arith.constant 0 : index
    %1 = vector.load %arg3[%c0_1, %c0_2] : memref<256x16xf32, #tpu.memory_space<vmem>>, vector<128x16xf32>
    %c0_3 = arith.constant 0 : index
    %c0_4 = arith.constant 0 : index
    %2 = vector.load %arg1[%c0_3, %c0_4] : memref<840x576xf32, #tpu.memory_space<vmem>>, vector<8x48xf32>
    %cst = arith.constant dense<0.000000e+00> : vector<128x48xf32>
    %3 = tpu.matmul %0, %2, %cst {dimension_numbers = #tpu.dot_dimension_numbers<[1], [0], [0], [1], [0, 0, 1, 1], [], []>} : vector<128x8xf32>, vector<8x48xf32>, vector<128x48xf32> -> vector<128x48xf32>
    %4 = vector.extract_strided_slice %3 {offsets = [0, 0], sizes = [128, 16], strides = [1, 1]} : vector<128x48xf32> to vector<128x16xf32>
    %5 = tpu.concatenate %4, %4 in 0 : vector<128x16xf32>, vector<128x16xf32> -> vector<256x16xf32>
    %6 = vector.extract_strided_slice %5 {offsets = [119, 0], sizes = [128, 16], strides = [1, 1]} : vector<256x16xf32> to vector<128x16xf32>
    %7 = vector.extract_strided_slice %1 {offsets = [0, 0], sizes = [128, 1], strides = [1, 1]} : vector<128x16xf32> to vector<128x1xf32>
    %8 = vector.broadcast %7 : vector<128x1xf32> to vector<128x16xf32>
    %9 = arith.mulf %6, %8 : vector<128x16xf32>
    %10 = vector.extract_strided_slice %3 {offsets = [0, 16], sizes = [128, 16], strides = [1, 1]} : vector<128x48xf32> to vector<128x16xf32>
    %11 = tpu.concatenate %10, %10 in 0 : vector<128x16xf32>, vector<128x16xf32> -> vector<256x16xf32>
    %12 = vector.extract_strided_slice %11 {offsets = [120, 0], sizes = [128, 16], strides = [1, 1]} : vector<256x16xf32> to vector<128x16xf32>
    %13 = vector.extract_strided_slice %1 {offsets = [0, 1], sizes = [128, 1], strides = [1, 1]} : vector<128x16xf32> to vector<128x1xf32>
    %14 = vector.broadcast %13 : vector<128x1xf32> to vector<128x16xf32>
    %15 = arith.mulf %12, %14 : vector<128x16xf32>
    %16 = arith.addf %9, %15 : vector<128x16xf32>
    %17 = vector.extract_strided_slice %3 {offsets = [0, 32], sizes = [128, 16], strides = [1, 1]} : vector<128x48xf32> to vector<128x16xf32>
    %18 = tpu.concatenate %17, %17 in 0 : vector<128x16xf32>, vector<128x16xf32> -> vector<256x16xf32>
    %19 = vector.extract_strided_slice %18 {offsets = [121, 0], sizes = [128, 16], strides = [1, 1]} : vector<256x16xf32> to vector<128x16xf32>
    %20 = vector.extract_strided_slice %1 {offsets = [0, 2], sizes = [128, 1], strides = [1, 1]} : vector<128x16xf32> to vector<128x1xf32>
    %21 = vector.broadcast %20 : vector<128x1xf32> to vector<128x16xf32>
    %22 = arith.mulf %19, %21 : vector<128x16xf32>
    %23 = arith.addf %16, %22 : vector<128x16xf32>
    %c0_5 = arith.constant 0 : index
    %c48 = arith.constant 48 : index
    %24 = vector.load %arg1[%c0_5, %c48] : memref<840x576xf32, #tpu.memory_space<vmem>>, vector<8x48xf32>
    %cst_6 = arith.constant dense<0.000000e+00> : vector<128x48xf32>
    %25 = tpu.matmul %0, %24, %cst_6 {dimension_numbers = #tpu.dot_dimension_numbers<[1], [0], [0], [1], [0, 0, 1, 1], [], []>} : vector<128x8xf32>, vector<8x48xf32>, vector<128x48xf32> -> vector<128x48xf32>
    %26 = vector.extract_strided_slice %25 {offsets = [0, 0], sizes = [128, 16], strides = [1, 1]} : vector<128x48xf32> to vector<128x16xf32>
    %27 = tpu.concatenate %26, %26 in 0 : vector<128x16xf32>, vector<128x16xf32> -> vector<256x16xf32>
    %28 = vector.extract_strided_slice %27 {offsets = [127, 0], sizes = [128, 16], strides = [1, 1]} : vector<256x16xf32> to vector<128x16xf32>
    %29 = vector.extract_strided_slice %1 {offsets = [0, 3], sizes = [128, 1], strides = [1, 1]} : vector<128x16xf32> to vector<128x1xf32>
    %30 = vector.broadcast %29 : vector<128x1xf32> to vector<128x16xf32>
    %31 = arith.mulf %28, %30 : vector<128x16xf32>
    %32 = arith.addf %23, %31 : vector<128x16xf32>
    %33 = vector.extract_strided_slice %25 {offsets = [0, 16], sizes = [128, 16], strides = [1, 1]} : vector<128x48xf32> to vector<128x16xf32>
    %34 = vector.extract_strided_slice %1 {offsets = [0, 4], sizes = [128, 1], strides = [1, 1]} : vector<128x16xf32> to vector<128x1xf32>
    %35 = vector.broadcast %34 : vector<128x1xf32> to vector<128x16xf32>
    %36 = arith.mulf %33, %35 : vector<128x16xf32>
    %37 = arith.addf %32, %36 : vector<128x16xf32>
    %38 = vector.extract_strided_slice %25 {offsets = [0, 32], sizes = [128, 16], strides = [1, 1]} : vector<128x48xf32> to vector<128x16xf32>
    %39 = tpu.concatenate %38, %38 in 0 : vector<128x16xf32>, vector<128x16xf32> -> vector<256x16xf32>
    %40 = vector.extract_strided_slice %39 {offsets = [1, 0], sizes = [128, 16], strides = [1, 1]} : vector<256x16xf32> to vector<128x16xf32>
    %41 = vector.extract_strided_slice %1 {offsets = [0, 5], sizes = [128, 1], strides = [1, 1]} : vector<128x16xf32> to vector<128x1xf32>
    %42 = vector.broadcast %41 : vector<128x1xf32> to vector<128x16xf32>
    %43 = arith.mulf %40, %42 : vector<128x16xf32>
    %44 = arith.addf %37, %43 : vector<128x16xf32>
    %c0_7 = arith.constant 0 : index
    %c96 = arith.constant 96 : index
    %45 = vector.load %arg1[%c0_7, %c96] : memref<840x576xf32, #tpu.memory_space<vmem>>, vector<8x48xf32>
    %cst_8 = arith.constant dense<0.000000e+00> : vector<128x48xf32>
    %46 = tpu.matmul %0, %45, %cst_8 {dimension_numbers = #tpu.dot_dimension_numbers<[1], [0], [0], [1], [0, 0, 1, 1], [], []>} : vector<128x8xf32>, vector<8x48xf32>, vector<128x48xf32> -> vector<128x48xf32>
    %47 = vector.extract_strided_slice %46 {offsets = [0, 0], sizes = [128, 16], strides = [1, 1]} : vector<128x48xf32> to vector<128x16xf32>
    %48 = tpu.concatenate %47, %47 in 0 : vector<128x16xf32>, vector<128x16xf32> -> vector<256x16xf32>
    %49 = vector.extract_strided_slice %48 {offsets = [7, 0], sizes = [128, 16], strides = [1, 1]} : vector<256x16xf32> to vector<128x16xf32>
    %50 = vector.extract_strided_slice %1 {offsets = [0, 6], sizes = [128, 1], strides = [1, 1]} : vector<128x16xf32> to vector<128x1xf32>
    %51 = vector.broadcast %50 : vector<128x1xf32> to vector<128x16xf32>
    %52 = arith.mulf %49, %51 : vector<128x16xf32>
    %53 = arith.addf %44, %52 : vector<128x16xf32>
    %54 = vector.extract_strided_slice %46 {offsets = [0, 16], sizes = [128, 16], strides = [1, 1]} : vector<128x48xf32> to vector<128x16xf32>
    %55 = tpu.concatenate %54, %54 in 0 : vector<128x16xf32>, vector<128x16xf32> -> vector<256x16xf32>
    %56 = vector.extract_strided_slice %55 {offsets = [8, 0], sizes = [128, 16], strides = [1, 1]} : vector<256x16xf32> to vector<128x16xf32>
    %57 = vector.extract_strided_slice %1 {offsets = [0, 7], sizes = [128, 1], strides = [1, 1]} : vector<128x16xf32> to vector<128x1xf32>
    %58 = vector.broadcast %57 : vector<128x1xf32> to vector<128x16xf32>
    %59 = arith.mulf %56, %58 : vector<128x16xf32>
    %60 = arith.addf %53, %59 : vector<128x16xf32>
    %61 = vector.extract_strided_slice %46 {offsets = [0, 32], sizes = [128, 16], strides = [1, 1]} : vector<128x48xf32> to vector<128x16xf32>
    %62 = tpu.concatenate %61, %61 in 0 : vector<128x16xf32>, vector<128x16xf32> -> vector<256x16xf32>
    %63 = vector.extract_strided_slice %62 {offsets = [9, 0], sizes = [128, 16], strides = [1, 1]} : vector<256x16xf32> to vector<128x16xf32>
    %64 = vector.extract_strided_slice %1 {offsets = [0, 8], sizes = [128, 1], strides = [1, 1]} : vector<128x16xf32> to vector<128x1xf32>
    %65 = vector.broadcast %64 : vector<128x1xf32> to vector<128x16xf32>
    %66 = arith.mulf %63, %65 : vector<128x16xf32>
    %67 = arith.addf %60, %66 : vector<128x16xf32>
    %c0_9 = arith.constant 0 : index
    %c0_10 = arith.constant 0 : index
    %68 = vector.load %arg2[%c0_9, %c0_10] : memref<13x128xf32, #tpu.memory_space<vmem>>, vector<1x16xf32>
    %69 = vector.broadcast %68 : vector<1x16xf32> to vector<128x16xf32>
    %70 = arith.addf %67, %69 : vector<128x16xf32>
    %cst_11 = arith.constant 0.000000e+00 : f32
    %71 = vector.broadcast %cst_11 : f32 to vector<128x16xf32>
    %72 = arith.maximumf %70, %71 : vector<128x16xf32>
    %c8 = arith.constant 8 : index
    %c0_12 = arith.constant 0 : index
    %73 = vector.load %arg1[%c8, %c0_12] : memref<840x576xf32, #tpu.memory_space<vmem>>, vector<16x48xf32>
    %cst_13 = arith.constant dense<0.000000e+00> : vector<128x48xf32>
    %74 = tpu.matmul %72, %73, %cst_13 {dimension_numbers = #tpu.dot_dimension_numbers<[1], [0], [0], [1], [0, 0, 1, 1], [], []>} : vector<128x16xf32>, vector<16x48xf32>, vector<128x48xf32> -> vector<128x48xf32>
    %75 = vector.extract_strided_slice %74 {offsets = [0, 0], sizes = [128, 16], strides = [1, 1]} : vector<128x48xf32> to vector<128x16xf32>
    %76 = tpu.concatenate %75, %75 in 0 : vector<128x16xf32>, vector<128x16xf32> -> vector<256x16xf32>
    %77 = vector.extract_strided_slice %76 {offsets = [119, 0], sizes = [128, 16], strides = [1, 1]} : vector<256x16xf32> to vector<128x16xf32>
    %78 = vector.extract_strided_slice %1 {offsets = [0, 0], sizes = [128, 1], strides = [1, 1]} : vector<128x16xf32> to vector<128x1xf32>
    %79 = vector.broadcast %78 : vector<128x1xf32> to vector<128x16xf32>
    %80 = arith.mulf %77, %79 : vector<128x16xf32>
    %81 = vector.extract_strided_slice %74 {offsets = [0, 16], sizes = [128, 16], strides = [1, 1]} : vector<128x48xf32> to vector<128x16xf32>
    %82 = tpu.concatenate %81, %81 in 0 : vector<128x16xf32>, vector<128x16xf32> -> vector<256x16xf32>
    %83 = vector.extract_strided_slice %82 {offsets = [120, 0], sizes = [128, 16], strides = [1, 1]} : vector<256x16xf32> to vector<128x16xf32>
    %84 = vector.extract_strided_slice %1 {offsets = [0, 1], sizes = [128, 1], strides = [1, 1]} : vector<128x16xf32> to vector<128x1xf32>
    %85 = vector.broadcast %84 : vector<128x1xf32> to vector<128x16xf32>
    %86 = arith.mulf %83, %85 : vector<128x16xf32>
    %87 = arith.addf %80, %86 : vector<128x16xf32>
    %88 = vector.extract_strided_slice %74 {offsets = [0, 32], sizes = [128, 16], strides = [1, 1]} : vector<128x48xf32> to vector<128x16xf32>
    %89 = tpu.concatenate %88, %88 in 0 : vector<128x16xf32>, vector<128x16xf32> -> vector<256x16xf32>
    %90 = vector.extract_strided_slice %89 {offsets = [121, 0], sizes = [128, 16], strides = [1, 1]} : vector<256x16xf32> to vector<128x16xf32>
    %91 = vector.extract_strided_slice %1 {offsets = [0, 2], sizes = [128, 1], strides = [1, 1]} : vector<128x16xf32> to vector<128x1xf32>
    %92 = vector.broadcast %91 : vector<128x1xf32> to vector<128x16xf32>
    %93 = arith.mulf %90, %92 : vector<128x16xf32>
    %94 = arith.addf %87, %93 : vector<128x16xf32>
    %c8_14 = arith.constant 8 : index
    %c48_15 = arith.constant 48 : index
    %95 = vector.load %arg1[%c8_14, %c48_15] : memref<840x576xf32, #tpu.memory_space<vmem>>, vector<16x48xf32>
    %cst_16 = arith.constant dense<0.000000e+00> : vector<128x48xf32>
    %96 = tpu.matmul %72, %95, %cst_16 {dimension_numbers = #tpu.dot_dimension_numbers<[1], [0], [0], [1], [0, 0, 1, 1], [], []>} : vector<128x16xf32>, vector<16x48xf32>, vector<128x48xf32> -> vector<128x48xf32>
    %97 = vector.extract_strided_slice %96 {offsets = [0, 0], sizes = [128, 16], strides = [1, 1]} : vector<128x48xf32> to vector<128x16xf32>
    %98 = tpu.concatenate %97, %97 in 0 : vector<128x16xf32>, vector<128x16xf32> -> vector<256x16xf32>
    %99 = vector.extract_strided_slice %98 {offsets = [127, 0], sizes = [128, 16], strides = [1, 1]} : vector<256x16xf32> to vector<128x16xf32>
    %100 = vector.extract_strided_slice %1 {offsets = [0, 3], sizes = [128, 1], strides = [1, 1]} : vector<128x16xf32> to vector<128x1xf32>
    %101 = vector.broadcast %100 : vector<128x1xf32> to vector<128x16xf32>
    %102 = arith.mulf %99, %101 : vector<128x16xf32>
    %103 = arith.addf %94, %102 : vector<128x16xf32>
    %104 = vector.extract_strided_slice %96 {offsets = [0, 16], sizes = [128, 16], strides = [1, 1]} : vector<128x48xf32> to vector<128x16xf32>
    %105 = vector.extract_strided_slice %1 {offsets = [0, 4], sizes = [128, 1], strides = [1, 1]} : vector<128x16xf32> to vector<128x1xf32>
    %106 = vector.broadcast %105 : vector<128x1xf32> to vector<128x16xf32>
    %107 = arith.mulf %104, %106 : vector<128x16xf32>
    %108 = arith.addf %103, %107 : vector<128x16xf32>
    %109 = vector.extract_strided_slice %96 {offsets = [0, 32], sizes = [128, 16], strides = [1, 1]} : vector<128x48xf32> to vector<128x16xf32>
    %110 = tpu.concatenate %109, %109 in 0 : vector<128x16xf32>, vector<128x16xf32> -> vector<256x16xf32>
    %111 = vector.extract_strided_slice %110 {offsets = [1, 0], sizes = [128, 16], strides = [1, 1]} : vector<256x16xf32> to vector<128x16xf32>
    %112 = vector.extract_strided_slice %1 {offsets = [0, 5], sizes = [128, 1], strides = [1, 1]} : vector<128x16xf32> to vector<128x1xf32>
    %113 = vector.broadcast %112 : vector<128x1xf32> to vector<128x16xf32>
    %114 = arith.mulf %111, %113 : vector<128x16xf32>
    %115 = arith.addf %108, %114 : vector<128x16xf32>
    %c8_17 = arith.constant 8 : index
    %c96_18 = arith.constant 96 : index
    %116 = vector.load %arg1[%c8_17, %c96_18] : memref<840x576xf32, #tpu.memory_space<vmem>>, vector<16x48xf32>
    %cst_19 = arith.constant dense<0.000000e+00> : vector<128x48xf32>
    %117 = tpu.matmul %72, %116, %cst_19 {dimension_numbers = #tpu.dot_dimension_numbers<[1], [0], [0], [1], [0, 0, 1, 1], [], []>} : vector<128x16xf32>, vector<16x48xf32>, vector<128x48xf32> -> vector<128x48xf32>
    %118 = vector.extract_strided_slice %117 {offsets = [0, 0], sizes = [128, 16], strides = [1, 1]} : vector<128x48xf32> to vector<128x16xf32>
    %119 = tpu.concatenate %118, %118 in 0 : vector<128x16xf32>, vector<128x16xf32> -> vector<256x16xf32>
    %120 = vector.extract_strided_slice %119 {offsets = [7, 0], sizes = [128, 16], strides = [1, 1]} : vector<256x16xf32> to vector<128x16xf32>
    %121 = vector.extract_strided_slice %1 {offsets = [0, 6], sizes = [128, 1], strides = [1, 1]} : vector<128x16xf32> to vector<128x1xf32>
    %122 = vector.broadcast %121 : vector<128x1xf32> to vector<128x16xf32>
    %123 = arith.mulf %120, %122 : vector<128x16xf32>
    %124 = arith.addf %115, %123 : vector<128x16xf32>
    %125 = vector.extract_strided_slice %117 {offsets = [0, 16], sizes = [128, 16], strides = [1, 1]} : vector<128x48xf32> to vector<128x16xf32>
    %126 = tpu.concatenate %125, %125 in 0 : vector<128x16xf32>, vector<128x16xf32> -> vector<256x16xf32>
    %127 = vector.extract_strided_slice %126 {offsets = [8, 0], sizes = [128, 16], strides = [1, 1]} : vector<256x16xf32> to vector<128x16xf32>
    %128 = vector.extract_strided_slice %1 {offsets = [0, 7], sizes = [128, 1], strides = [1, 1]} : vector<128x16xf32> to vector<128x1xf32>
    %129 = vector.broadcast %128 : vector<128x1xf32> to vector<128x16xf32>
    %130 = arith.mulf %127, %129 : vector<128x16xf32>
    %131 = arith.addf %124, %130 : vector<128x16xf32>
    %132 = vector.extract_strided_slice %117 {offsets = [0, 32], sizes = [128, 16], strides = [1, 1]} : vector<128x48xf32> to vector<128x16xf32>
    %133 = tpu.concatenate %132, %132 in 0 : vector<128x16xf32>, vector<128x16xf32> -> vector<256x16xf32>
    %134 = vector.extract_strided_slice %133 {offsets = [9, 0], sizes = [128, 16], strides = [1, 1]} : vector<256x16xf32> to vector<128x16xf32>
    %135 = vector.extract_strided_slice %1 {offsets = [0, 8], sizes = [128, 1], strides = [1, 1]} : vector<128x16xf32> to vector<128x1xf32>
    %136 = vector.broadcast %135 : vector<128x1xf32> to vector<128x16xf32>
    %137 = arith.mulf %134, %136 : vector<128x16xf32>
    %138 = arith.addf %131, %137 : vector<128x16xf32>
    %c1 = arith.constant 1 : index
    %c0_20 = arith.constant 0 : index
    %139 = vector.load %arg2[%c1, %c0_20] : memref<13x128xf32, #tpu.memory_space<vmem>>, vector<1x16xf32>
    %140 = vector.broadcast %139 : vector<1x16xf32> to vector<128x16xf32>
    %141 = arith.addf %138, %140 : vector<128x16xf32>
    %cst_21 = arith.constant 0.000000e+00 : f32
    %142 = vector.broadcast %cst_21 : f32 to vector<128x16xf32>
    %143 = arith.maximumf %141, %142 : vector<128x16xf32>
    %c24 = arith.constant 24 : index
    %c0_22 = arith.constant 0 : index
    %144 = vector.load %arg1[%c24, %c0_22] : memref<840x576xf32, #tpu.memory_space<vmem>>, vector<16x96xf32>
    %cst_23 = arith.constant dense<0.000000e+00> : vector<128x96xf32>
    %145 = tpu.matmul %143, %144, %cst_23 {dimension_numbers = #tpu.dot_dimension_numbers<[1], [0], [0], [1], [0, 0, 1, 1], [], []>} : vector<128x16xf32>, vector<16x96xf32>, vector<128x96xf32> -> vector<128x96xf32>
    %146 = vector.extract_strided_slice %145 {offsets = [0, 0], sizes = [128, 32], strides = [1, 1]} : vector<128x96xf32> to vector<128x32xf32>
    %147 = tpu.concatenate %146, %146 in 0 : vector<128x32xf32>, vector<128x32xf32> -> vector<256x32xf32>
    %148 = vector.extract_strided_slice %147 {offsets = [119, 0], sizes = [128, 32], strides = [1, 1]} : vector<256x32xf32> to vector<128x32xf32>
    %149 = vector.extract_strided_slice %1 {offsets = [0, 0], sizes = [128, 1], strides = [1, 1]} : vector<128x16xf32> to vector<128x1xf32>
    %150 = vector.broadcast %149 : vector<128x1xf32> to vector<128x32xf32>
    %151 = arith.mulf %148, %150 : vector<128x32xf32>
    %152 = vector.extract_strided_slice %145 {offsets = [0, 32], sizes = [128, 32], strides = [1, 1]} : vector<128x96xf32> to vector<128x32xf32>
    %153 = tpu.concatenate %152, %152 in 0 : vector<128x32xf32>, vector<128x32xf32> -> vector<256x32xf32>
    %154 = vector.extract_strided_slice %153 {offsets = [120, 0], sizes = [128, 32], strides = [1, 1]} : vector<256x32xf32> to vector<128x32xf32>
    %155 = vector.extract_strided_slice %1 {offsets = [0, 1], sizes = [128, 1], strides = [1, 1]} : vector<128x16xf32> to vector<128x1xf32>
    %156 = vector.broadcast %155 : vector<128x1xf32> to vector<128x32xf32>
    %157 = arith.mulf %154, %156 : vector<128x32xf32>
    %158 = arith.addf %151, %157 : vector<128x32xf32>
    %159 = vector.extract_strided_slice %145 {offsets = [0, 64], sizes = [128, 32], strides = [1, 1]} : vector<128x96xf32> to vector<128x32xf32>
    %160 = tpu.concatenate %159, %159 in 0 : vector<128x32xf32>, vector<128x32xf32> -> vector<256x32xf32>
    %161 = vector.extract_strided_slice %160 {offsets = [121, 0], sizes = [128, 32], strides = [1, 1]} : vector<256x32xf32> to vector<128x32xf32>
    %162 = vector.extract_strided_slice %1 {offsets = [0, 2], sizes = [128, 1], strides = [1, 1]} : vector<128x16xf32> to vector<128x1xf32>
    %163 = vector.broadcast %162 : vector<128x1xf32> to vector<128x32xf32>
    %164 = arith.mulf %161, %163 : vector<128x32xf32>
    %165 = arith.addf %158, %164 : vector<128x32xf32>
    %c24_24 = arith.constant 24 : index
    %c96_25 = arith.constant 96 : index
    %166 = vector.load %arg1[%c24_24, %c96_25] : memref<840x576xf32, #tpu.memory_space<vmem>>, vector<16x96xf32>
    %cst_26 = arith.constant dense<0.000000e+00> : vector<128x96xf32>
    %167 = tpu.matmul %143, %166, %cst_26 {dimension_numbers = #tpu.dot_dimension_numbers<[1], [0], [0], [1], [0, 0, 1, 1], [], []>} : vector<128x16xf32>, vector<16x96xf32>, vector<128x96xf32> -> vector<128x96xf32>
    %168 = vector.extract_strided_slice %167 {offsets = [0, 0], sizes = [128, 32], strides = [1, 1]} : vector<128x96xf32> to vector<128x32xf32>
    %169 = tpu.concatenate %168, %168 in 0 : vector<128x32xf32>, vector<128x32xf32> -> vector<256x32xf32>
    %170 = vector.extract_strided_slice %169 {offsets = [127, 0], sizes = [128, 32], strides = [1, 1]} : vector<256x32xf32> to vector<128x32xf32>
    %171 = vector.extract_strided_slice %1 {offsets = [0, 3], sizes = [128, 1], strides = [1, 1]} : vector<128x16xf32> to vector<128x1xf32>
    %172 = vector.broadcast %171 : vector<128x1xf32> to vector<128x32xf32>
    %173 = arith.mulf %170, %172 : vector<128x32xf32>
    %174 = arith.addf %165, %173 : vector<128x32xf32>
    %175 = vector.extract_strided_slice %167 {offsets = [0, 32], sizes = [128, 32], strides = [1, 1]} : vector<128x96xf32> to vector<128x32xf32>
    %176 = vector.extract_strided_slice %1 {offsets = [0, 4], sizes = [128, 1], strides = [1, 1]} : vector<128x16xf32> to vector<128x1xf32>
    %177 = vector.broadcast %176 : vector<128x1xf32> to vector<128x32xf32>
    %178 = arith.mulf %175, %177 : vector<128x32xf32>
    %179 = arith.addf %174, %178 : vector<128x32xf32>
    %180 = vector.extract_strided_slice %167 {offsets = [0, 64], sizes = [128, 32], strides = [1, 1]} : vector<128x96xf32> to vector<128x32xf32>
    %181 = tpu.concatenate %180, %180 in 0 : vector<128x32xf32>, vector<128x32xf32> -> vector<256x32xf32>
    %182 = vector.extract_strided_slice %181 {offsets = [1, 0], sizes = [128, 32], strides = [1, 1]} : vector<256x32xf32> to vector<128x32xf32>
    %183 = vector.extract_strided_slice %1 {offsets = [0, 5], sizes = [128, 1], strides = [1, 1]} : vector<128x16xf32> to vector<128x1xf32>
    %184 = vector.broadcast %183 : vector<128x1xf32> to vector<128x32xf32>
    %185 = arith.mulf %182, %184 : vector<128x32xf32>
    %186 = arith.addf %179, %185 : vector<128x32xf32>
    %c24_27 = arith.constant 24 : index
    %c192 = arith.constant 192 : index
    %187 = vector.load %arg1[%c24_27, %c192] : memref<840x576xf32, #tpu.memory_space<vmem>>, vector<16x96xf32>
    %cst_28 = arith.constant dense<0.000000e+00> : vector<128x96xf32>
    %188 = tpu.matmul %143, %187, %cst_28 {dimension_numbers = #tpu.dot_dimension_numbers<[1], [0], [0], [1], [0, 0, 1, 1], [], []>} : vector<128x16xf32>, vector<16x96xf32>, vector<128x96xf32> -> vector<128x96xf32>
    %189 = vector.extract_strided_slice %188 {offsets = [0, 0], sizes = [128, 32], strides = [1, 1]} : vector<128x96xf32> to vector<128x32xf32>
    %190 = tpu.concatenate %189, %189 in 0 : vector<128x32xf32>, vector<128x32xf32> -> vector<256x32xf32>
    %191 = vector.extract_strided_slice %190 {offsets = [7, 0], sizes = [128, 32], strides = [1, 1]} : vector<256x32xf32> to vector<128x32xf32>
    %192 = vector.extract_strided_slice %1 {offsets = [0, 6], sizes = [128, 1], strides = [1, 1]} : vector<128x16xf32> to vector<128x1xf32>
    %193 = vector.broadcast %192 : vector<128x1xf32> to vector<128x32xf32>
    %194 = arith.mulf %191, %193 : vector<128x32xf32>
    %195 = arith.addf %186, %194 : vector<128x32xf32>
    %196 = vector.extract_strided_slice %188 {offsets = [0, 32], sizes = [128, 32], strides = [1, 1]} : vector<128x96xf32> to vector<128x32xf32>
    %197 = tpu.concatenate %196, %196 in 0 : vector<128x32xf32>, vector<128x32xf32> -> vector<256x32xf32>
    %198 = vector.extract_strided_slice %197 {offsets = [8, 0], sizes = [128, 32], strides = [1, 1]} : vector<256x32xf32> to vector<128x32xf32>
    %199 = vector.extract_strided_slice %1 {offsets = [0, 7], sizes = [128, 1], strides = [1, 1]} : vector<128x16xf32> to vector<128x1xf32>
    %200 = vector.broadcast %199 : vector<128x1xf32> to vector<128x32xf32>
    %201 = arith.mulf %198, %200 : vector<128x32xf32>
    %202 = arith.addf %195, %201 : vector<128x32xf32>
    %203 = vector.extract_strided_slice %188 {offsets = [0, 64], sizes = [128, 32], strides = [1, 1]} : vector<128x96xf32> to vector<128x32xf32>
    %204 = tpu.concatenate %203, %203 in 0 : vector<128x32xf32>, vector<128x32xf32> -> vector<256x32xf32>
    %205 = vector.extract_strided_slice %204 {offsets = [9, 0], sizes = [128, 32], strides = [1, 1]} : vector<256x32xf32> to vector<128x32xf32>
    %206 = vector.extract_strided_slice %1 {offsets = [0, 8], sizes = [128, 1], strides = [1, 1]} : vector<128x16xf32> to vector<128x1xf32>
    %207 = vector.broadcast %206 : vector<128x1xf32> to vector<128x32xf32>
    %208 = arith.mulf %205, %207 : vector<128x32xf32>
    %209 = arith.addf %202, %208 : vector<128x32xf32>
    %c2 = arith.constant 2 : index
    %c0_29 = arith.constant 0 : index
    %210 = vector.load %arg2[%c2, %c0_29] : memref<13x128xf32, #tpu.memory_space<vmem>>, vector<1x32xf32>
    %211 = vector.broadcast %210 : vector<1x32xf32> to vector<128x32xf32>
    %212 = arith.addf %209, %211 : vector<128x32xf32>
    %cst_30 = arith.constant 0.000000e+00 : f32
    %213 = vector.broadcast %cst_30 : f32 to vector<128x32xf32>
    %214 = arith.maximumf %212, %213 : vector<128x32xf32>
    %c0_31 = arith.constant 0 : index
    %c0_32 = arith.constant 0 : index
    %215 = vector.load %arg4[%c0_31, %c0_32] : memref<72x128xf32, #tpu.memory_space<vmem>>, vector<32x128xf32>
    %216 = tpu.concatenate %214, %214 in 0 : vector<128x32xf32>, vector<128x32xf32> -> vector<256x32xf32>
    %217 = vector.extract_strided_slice %216 {offsets = [1, 0], sizes = [128, 32], strides = [1, 1]} : vector<256x32xf32> to vector<128x32xf32>
    %218 = arith.maximumf %214, %217 : vector<128x32xf32>
    %219 = tpu.concatenate %218, %218 in 0 : vector<128x32xf32>, vector<128x32xf32> -> vector<256x32xf32>
    %220 = vector.extract_strided_slice %219 {offsets = [8, 0], sizes = [128, 32], strides = [1, 1]} : vector<256x32xf32> to vector<128x32xf32>
    %221 = arith.maximumf %218, %220 : vector<128x32xf32>
    %cst_33 = arith.constant dense<0.000000e+00> : vector<32x32xf32>
    %222 = tpu.matmul %215, %221, %cst_33 {dimension_numbers = #tpu.dot_dimension_numbers<[1], [0], [0], [1], [0, 0, 1, 1], [], []>} : vector<32x128xf32>, vector<128x32xf32>, vector<32x32xf32> -> vector<32x32xf32>
    %c128 = arith.constant 128 : index
    %c0_34 = arith.constant 0 : index
    %223 = vector.load %arg3[%c128, %c0_34] : memref<256x16xf32, #tpu.memory_space<vmem>>, vector<32x16xf32>
    %c40 = arith.constant 40 : index
    %c0_35 = arith.constant 0 : index
    %224 = vector.load %arg1[%c40, %c0_35] : memref<840x576xf32, #tpu.memory_space<vmem>>, vector<32x96xf32>
    %cst_36 = arith.constant dense<0.000000e+00> : vector<32x96xf32>
    %225 = tpu.matmul %222, %224, %cst_36 {dimension_numbers = #tpu.dot_dimension_numbers<[1], [0], [0], [1], [0, 0, 1, 1], [], []>} : vector<32x32xf32>, vector<32x96xf32>, vector<32x96xf32> -> vector<32x96xf32>
    %226 = vector.extract_strided_slice %225 {offsets = [0, 0], sizes = [32, 32], strides = [1, 1]} : vector<32x96xf32> to vector<32x32xf32>
    %227 = tpu.concatenate %226, %226 in 0 : vector<32x32xf32>, vector<32x32xf32> -> vector<64x32xf32>
    %228 = vector.extract_strided_slice %227 {offsets = [27, 0], sizes = [32, 32], strides = [1, 1]} : vector<64x32xf32> to vector<32x32xf32>
    %229 = vector.extract_strided_slice %223 {offsets = [0, 0], sizes = [32, 1], strides = [1, 1]} : vector<32x16xf32> to vector<32x1xf32>
    %230 = vector.broadcast %229 : vector<32x1xf32> to vector<32x32xf32>
    %231 = arith.mulf %228, %230 : vector<32x32xf32>
    %232 = vector.extract_strided_slice %225 {offsets = [0, 32], sizes = [32, 32], strides = [1, 1]} : vector<32x96xf32> to vector<32x32xf32>
    %233 = tpu.concatenate %232, %232 in 0 : vector<32x32xf32>, vector<32x32xf32> -> vector<64x32xf32>
    %234 = vector.extract_strided_slice %233 {offsets = [28, 0], sizes = [32, 32], strides = [1, 1]} : vector<64x32xf32> to vector<32x32xf32>
    %235 = vector.extract_strided_slice %223 {offsets = [0, 1], sizes = [32, 1], strides = [1, 1]} : vector<32x16xf32> to vector<32x1xf32>
    %236 = vector.broadcast %235 : vector<32x1xf32> to vector<32x32xf32>
    %237 = arith.mulf %234, %236 : vector<32x32xf32>
    %238 = arith.addf %231, %237 : vector<32x32xf32>
    %239 = vector.extract_strided_slice %225 {offsets = [0, 64], sizes = [32, 32], strides = [1, 1]} : vector<32x96xf32> to vector<32x32xf32>
    %240 = tpu.concatenate %239, %239 in 0 : vector<32x32xf32>, vector<32x32xf32> -> vector<64x32xf32>
    %241 = vector.extract_strided_slice %240 {offsets = [29, 0], sizes = [32, 32], strides = [1, 1]} : vector<64x32xf32> to vector<32x32xf32>
    %242 = vector.extract_strided_slice %223 {offsets = [0, 2], sizes = [32, 1], strides = [1, 1]} : vector<32x16xf32> to vector<32x1xf32>
    %243 = vector.broadcast %242 : vector<32x1xf32> to vector<32x32xf32>
    %244 = arith.mulf %241, %243 : vector<32x32xf32>
    %245 = arith.addf %238, %244 : vector<32x32xf32>
    %c40_37 = arith.constant 40 : index
    %c96_38 = arith.constant 96 : index
    %246 = vector.load %arg1[%c40_37, %c96_38] : memref<840x576xf32, #tpu.memory_space<vmem>>, vector<32x96xf32>
    %cst_39 = arith.constant dense<0.000000e+00> : vector<32x96xf32>
    %247 = tpu.matmul %222, %246, %cst_39 {dimension_numbers = #tpu.dot_dimension_numbers<[1], [0], [0], [1], [0, 0, 1, 1], [], []>} : vector<32x32xf32>, vector<32x96xf32>, vector<32x96xf32> -> vector<32x96xf32>
    %248 = vector.extract_strided_slice %247 {offsets = [0, 0], sizes = [32, 32], strides = [1, 1]} : vector<32x96xf32> to vector<32x32xf32>
    %249 = tpu.concatenate %248, %248 in 0 : vector<32x32xf32>, vector<32x32xf32> -> vector<64x32xf32>
    %250 = vector.extract_strided_slice %249 {offsets = [31, 0], sizes = [32, 32], strides = [1, 1]} : vector<64x32xf32> to vector<32x32xf32>
    %251 = vector.extract_strided_slice %223 {offsets = [0, 3], sizes = [32, 1], strides = [1, 1]} : vector<32x16xf32> to vector<32x1xf32>
    %252 = vector.broadcast %251 : vector<32x1xf32> to vector<32x32xf32>
    %253 = arith.mulf %250, %252 : vector<32x32xf32>
    %254 = arith.addf %245, %253 : vector<32x32xf32>
    %255 = vector.extract_strided_slice %247 {offsets = [0, 32], sizes = [32, 32], strides = [1, 1]} : vector<32x96xf32> to vector<32x32xf32>
    %256 = vector.extract_strided_slice %223 {offsets = [0, 4], sizes = [32, 1], strides = [1, 1]} : vector<32x16xf32> to vector<32x1xf32>
    %257 = vector.broadcast %256 : vector<32x1xf32> to vector<32x32xf32>
    %258 = arith.mulf %255, %257 : vector<32x32xf32>
    %259 = arith.addf %254, %258 : vector<32x32xf32>
    %260 = vector.extract_strided_slice %247 {offsets = [0, 64], sizes = [32, 32], strides = [1, 1]} : vector<32x96xf32> to vector<32x32xf32>
    %261 = tpu.concatenate %260, %260 in 0 : vector<32x32xf32>, vector<32x32xf32> -> vector<64x32xf32>
    %262 = vector.extract_strided_slice %261 {offsets = [1, 0], sizes = [32, 32], strides = [1, 1]} : vector<64x32xf32> to vector<32x32xf32>
    %263 = vector.extract_strided_slice %223 {offsets = [0, 5], sizes = [32, 1], strides = [1, 1]} : vector<32x16xf32> to vector<32x1xf32>
    %264 = vector.broadcast %263 : vector<32x1xf32> to vector<32x32xf32>
    %265 = arith.mulf %262, %264 : vector<32x32xf32>
    %266 = arith.addf %259, %265 : vector<32x32xf32>
    %c40_40 = arith.constant 40 : index
    %c192_41 = arith.constant 192 : index
    %267 = vector.load %arg1[%c40_40, %c192_41] : memref<840x576xf32, #tpu.memory_space<vmem>>, vector<32x96xf32>
    %cst_42 = arith.constant dense<0.000000e+00> : vector<32x96xf32>
    %268 = tpu.matmul %222, %267, %cst_42 {dimension_numbers = #tpu.dot_dimension_numbers<[1], [0], [0], [1], [0, 0, 1, 1], [], []>} : vector<32x32xf32>, vector<32x96xf32>, vector<32x96xf32> -> vector<32x96xf32>
    %269 = vector.extract_strided_slice %268 {offsets = [0, 0], sizes = [32, 32], strides = [1, 1]} : vector<32x96xf32> to vector<32x32xf32>
    %270 = tpu.concatenate %269, %269 in 0 : vector<32x32xf32>, vector<32x32xf32> -> vector<64x32xf32>
    %271 = vector.extract_strided_slice %270 {offsets = [3, 0], sizes = [32, 32], strides = [1, 1]} : vector<64x32xf32> to vector<32x32xf32>
    %272 = vector.extract_strided_slice %223 {offsets = [0, 6], sizes = [32, 1], strides = [1, 1]} : vector<32x16xf32> to vector<32x1xf32>
    %273 = vector.broadcast %272 : vector<32x1xf32> to vector<32x32xf32>
    %274 = arith.mulf %271, %273 : vector<32x32xf32>
    %275 = arith.addf %266, %274 : vector<32x32xf32>
    %276 = vector.extract_strided_slice %268 {offsets = [0, 32], sizes = [32, 32], strides = [1, 1]} : vector<32x96xf32> to vector<32x32xf32>
    %277 = tpu.concatenate %276, %276 in 0 : vector<32x32xf32>, vector<32x32xf32> -> vector<64x32xf32>
    %278 = vector.extract_strided_slice %277 {offsets = [4, 0], sizes = [32, 32], strides = [1, 1]} : vector<64x32xf32> to vector<32x32xf32>
    %279 = vector.extract_strided_slice %223 {offsets = [0, 7], sizes = [32, 1], strides = [1, 1]} : vector<32x16xf32> to vector<32x1xf32>
    %280 = vector.broadcast %279 : vector<32x1xf32> to vector<32x32xf32>
    %281 = arith.mulf %278, %280 : vector<32x32xf32>
    %282 = arith.addf %275, %281 : vector<32x32xf32>
    %283 = vector.extract_strided_slice %268 {offsets = [0, 64], sizes = [32, 32], strides = [1, 1]} : vector<32x96xf32> to vector<32x32xf32>
    %284 = tpu.concatenate %283, %283 in 0 : vector<32x32xf32>, vector<32x32xf32> -> vector<64x32xf32>
    %285 = vector.extract_strided_slice %284 {offsets = [5, 0], sizes = [32, 32], strides = [1, 1]} : vector<64x32xf32> to vector<32x32xf32>
    %286 = vector.extract_strided_slice %223 {offsets = [0, 8], sizes = [32, 1], strides = [1, 1]} : vector<32x16xf32> to vector<32x1xf32>
    %287 = vector.broadcast %286 : vector<32x1xf32> to vector<32x32xf32>
    %288 = arith.mulf %285, %287 : vector<32x32xf32>
    %289 = arith.addf %282, %288 : vector<32x32xf32>
    %c3 = arith.constant 3 : index
    %c0_43 = arith.constant 0 : index
    %290 = vector.load %arg2[%c3, %c0_43] : memref<13x128xf32, #tpu.memory_space<vmem>>, vector<1x32xf32>
    %291 = vector.broadcast %290 : vector<1x32xf32> to vector<32x32xf32>
    %292 = arith.addf %289, %291 : vector<32x32xf32>
    %cst_44 = arith.constant 0.000000e+00 : f32
    %293 = vector.broadcast %cst_44 : f32 to vector<32x32xf32>
    %294 = arith.maximumf %292, %293 : vector<32x32xf32>
    %c72 = arith.constant 72 : index
    %c0_45 = arith.constant 0 : index
    %295 = vector.load %arg1[%c72, %c0_45] : memref<840x576xf32, #tpu.memory_space<vmem>>, vector<32x96xf32>
    %cst_46 = arith.constant dense<0.000000e+00> : vector<32x96xf32>
    %296 = tpu.matmul %294, %295, %cst_46 {dimension_numbers = #tpu.dot_dimension_numbers<[1], [0], [0], [1], [0, 0, 1, 1], [], []>} : vector<32x32xf32>, vector<32x96xf32>, vector<32x96xf32> -> vector<32x96xf32>
    %297 = vector.extract_strided_slice %296 {offsets = [0, 0], sizes = [32, 32], strides = [1, 1]} : vector<32x96xf32> to vector<32x32xf32>
    %298 = tpu.concatenate %297, %297 in 0 : vector<32x32xf32>, vector<32x32xf32> -> vector<64x32xf32>
    %299 = vector.extract_strided_slice %298 {offsets = [27, 0], sizes = [32, 32], strides = [1, 1]} : vector<64x32xf32> to vector<32x32xf32>
    %300 = vector.extract_strided_slice %223 {offsets = [0, 0], sizes = [32, 1], strides = [1, 1]} : vector<32x16xf32> to vector<32x1xf32>
    %301 = vector.broadcast %300 : vector<32x1xf32> to vector<32x32xf32>
    %302 = arith.mulf %299, %301 : vector<32x32xf32>
    %303 = vector.extract_strided_slice %296 {offsets = [0, 32], sizes = [32, 32], strides = [1, 1]} : vector<32x96xf32> to vector<32x32xf32>
    %304 = tpu.concatenate %303, %303 in 0 : vector<32x32xf32>, vector<32x32xf32> -> vector<64x32xf32>
    %305 = vector.extract_strided_slice %304 {offsets = [28, 0], sizes = [32, 32], strides = [1, 1]} : vector<64x32xf32> to vector<32x32xf32>
    %306 = vector.extract_strided_slice %223 {offsets = [0, 1], sizes = [32, 1], strides = [1, 1]} : vector<32x16xf32> to vector<32x1xf32>
    %307 = vector.broadcast %306 : vector<32x1xf32> to vector<32x32xf32>
    %308 = arith.mulf %305, %307 : vector<32x32xf32>
    %309 = arith.addf %302, %308 : vector<32x32xf32>
    %310 = vector.extract_strided_slice %296 {offsets = [0, 64], sizes = [32, 32], strides = [1, 1]} : vector<32x96xf32> to vector<32x32xf32>
    %311 = tpu.concatenate %310, %310 in 0 : vector<32x32xf32>, vector<32x32xf32> -> vector<64x32xf32>
    %312 = vector.extract_strided_slice %311 {offsets = [29, 0], sizes = [32, 32], strides = [1, 1]} : vector<64x32xf32> to vector<32x32xf32>
    %313 = vector.extract_strided_slice %223 {offsets = [0, 2], sizes = [32, 1], strides = [1, 1]} : vector<32x16xf32> to vector<32x1xf32>
    %314 = vector.broadcast %313 : vector<32x1xf32> to vector<32x32xf32>
    %315 = arith.mulf %312, %314 : vector<32x32xf32>
    %316 = arith.addf %309, %315 : vector<32x32xf32>
    %c72_47 = arith.constant 72 : index
    %c96_48 = arith.constant 96 : index
    %317 = vector.load %arg1[%c72_47, %c96_48] : memref<840x576xf32, #tpu.memory_space<vmem>>, vector<32x96xf32>
    %cst_49 = arith.constant dense<0.000000e+00> : vector<32x96xf32>
    %318 = tpu.matmul %294, %317, %cst_49 {dimension_numbers = #tpu.dot_dimension_numbers<[1], [0], [0], [1], [0, 0, 1, 1], [], []>} : vector<32x32xf32>, vector<32x96xf32>, vector<32x96xf32> -> vector<32x96xf32>
    %319 = vector.extract_strided_slice %318 {offsets = [0, 0], sizes = [32, 32], strides = [1, 1]} : vector<32x96xf32> to vector<32x32xf32>
    %320 = tpu.concatenate %319, %319 in 0 : vector<32x32xf32>, vector<32x32xf32> -> vector<64x32xf32>
    %321 = vector.extract_strided_slice %320 {offsets = [31, 0], sizes = [32, 32], strides = [1, 1]} : vector<64x32xf32> to vector<32x32xf32>
    %322 = vector.extract_strided_slice %223 {offsets = [0, 3], sizes = [32, 1], strides = [1, 1]} : vector<32x16xf32> to vector<32x1xf32>
    %323 = vector.broadcast %322 : vector<32x1xf32> to vector<32x32xf32>
    %324 = arith.mulf %321, %323 : vector<32x32xf32>
    %325 = arith.addf %316, %324 : vector<32x32xf32>
    %326 = vector.extract_strided_slice %318 {offsets = [0, 32], sizes = [32, 32], strides = [1, 1]} : vector<32x96xf32> to vector<32x32xf32>
    %327 = vector.extract_strided_slice %223 {offsets = [0, 4], sizes = [32, 1], strides = [1, 1]} : vector<32x16xf32> to vector<32x1xf32>
    %328 = vector.broadcast %327 : vector<32x1xf32> to vector<32x32xf32>
    %329 = arith.mulf %326, %328 : vector<32x32xf32>
    %330 = arith.addf %325, %329 : vector<32x32xf32>
    %331 = vector.extract_strided_slice %318 {offsets = [0, 64], sizes = [32, 32], strides = [1, 1]} : vector<32x96xf32> to vector<32x32xf32>
    %332 = tpu.concatenate %331, %331 in 0 : vector<32x32xf32>, vector<32x32xf32> -> vector<64x32xf32>
    %333 = vector.extract_strided_slice %332 {offsets = [1, 0], sizes = [32, 32], strides = [1, 1]} : vector<64x32xf32> to vector<32x32xf32>
    %334 = vector.extract_strided_slice %223 {offsets = [0, 5], sizes = [32, 1], strides = [1, 1]} : vector<32x16xf32> to vector<32x1xf32>
    %335 = vector.broadcast %334 : vector<32x1xf32> to vector<32x32xf32>
    %336 = arith.mulf %333, %335 : vector<32x32xf32>
    %337 = arith.addf %330, %336 : vector<32x32xf32>
    %c72_50 = arith.constant 72 : index
    %c192_51 = arith.constant 192 : index
    %338 = vector.load %arg1[%c72_50, %c192_51] : memref<840x576xf32, #tpu.memory_space<vmem>>, vector<32x96xf32>
    %cst_52 = arith.constant dense<0.000000e+00> : vector<32x96xf32>
    %339 = tpu.matmul %294, %338, %cst_52 {dimension_numbers = #tpu.dot_dimension_numbers<[1], [0], [0], [1], [0, 0, 1, 1], [], []>} : vector<32x32xf32>, vector<32x96xf32>, vector<32x96xf32> -> vector<32x96xf32>
    %340 = vector.extract_strided_slice %339 {offsets = [0, 0], sizes = [32, 32], strides = [1, 1]} : vector<32x96xf32> to vector<32x32xf32>
    %341 = tpu.concatenate %340, %340 in 0 : vector<32x32xf32>, vector<32x32xf32> -> vector<64x32xf32>
    %342 = vector.extract_strided_slice %341 {offsets = [3, 0], sizes = [32, 32], strides = [1, 1]} : vector<64x32xf32> to vector<32x32xf32>
    %343 = vector.extract_strided_slice %223 {offsets = [0, 6], sizes = [32, 1], strides = [1, 1]} : vector<32x16xf32> to vector<32x1xf32>
    %344 = vector.broadcast %343 : vector<32x1xf32> to vector<32x32xf32>
    %345 = arith.mulf %342, %344 : vector<32x32xf32>
    %346 = arith.addf %337, %345 : vector<32x32xf32>
    %347 = vector.extract_strided_slice %339 {offsets = [0, 32], sizes = [32, 32], strides = [1, 1]} : vector<32x96xf32> to vector<32x32xf32>
    %348 = tpu.concatenate %347, %347 in 0 : vector<32x32xf32>, vector<32x32xf32> -> vector<64x32xf32>
    %349 = vector.extract_strided_slice %348 {offsets = [4, 0], sizes = [32, 32], strides = [1, 1]} : vector<64x32xf32> to vector<32x32xf32>
    %350 = vector.extract_strided_slice %223 {offsets = [0, 7], sizes = [32, 1], strides = [1, 1]} : vector<32x16xf32> to vector<32x1xf32>
    %351 = vector.broadcast %350 : vector<32x1xf32> to vector<32x32xf32>
    %352 = arith.mulf %349, %351 : vector<32x32xf32>
    %353 = arith.addf %346, %352 : vector<32x32xf32>
    %354 = vector.extract_strided_slice %339 {offsets = [0, 64], sizes = [32, 32], strides = [1, 1]} : vector<32x96xf32> to vector<32x32xf32>
    %355 = tpu.concatenate %354, %354 in 0 : vector<32x32xf32>, vector<32x32xf32> -> vector<64x32xf32>
    %356 = vector.extract_strided_slice %355 {offsets = [5, 0], sizes = [32, 32], strides = [1, 1]} : vector<64x32xf32> to vector<32x32xf32>
    %357 = vector.extract_strided_slice %223 {offsets = [0, 8], sizes = [32, 1], strides = [1, 1]} : vector<32x16xf32> to vector<32x1xf32>
    %358 = vector.broadcast %357 : vector<32x1xf32> to vector<32x32xf32>
    %359 = arith.mulf %356, %358 : vector<32x32xf32>
    %360 = arith.addf %353, %359 : vector<32x32xf32>
    %c4 = arith.constant 4 : index
    %c0_53 = arith.constant 0 : index
    %361 = vector.load %arg2[%c4, %c0_53] : memref<13x128xf32, #tpu.memory_space<vmem>>, vector<1x32xf32>
    %362 = vector.broadcast %361 : vector<1x32xf32> to vector<32x32xf32>
    %363 = arith.addf %360, %362 : vector<32x32xf32>
    %cst_54 = arith.constant 0.000000e+00 : f32
    %364 = vector.broadcast %cst_54 : f32 to vector<32x32xf32>
    %365 = arith.maximumf %363, %364 : vector<32x32xf32>
    %c104 = arith.constant 104 : index
    %c0_55 = arith.constant 0 : index
    %366 = vector.load %arg1[%c104, %c0_55] : memref<840x576xf32, #tpu.memory_space<vmem>>, vector<32x192xf32>
    %cst_56 = arith.constant dense<0.000000e+00> : vector<32x192xf32>
    %367 = tpu.matmul %365, %366, %cst_56 {dimension_numbers = #tpu.dot_dimension_numbers<[1], [0], [0], [1], [0, 0, 1, 1], [], []>} : vector<32x32xf32>, vector<32x192xf32>, vector<32x192xf32> -> vector<32x192xf32>
    %368 = vector.extract_strided_slice %367 {offsets = [0, 0], sizes = [32, 64], strides = [1, 1]} : vector<32x192xf32> to vector<32x64xf32>
    %369 = tpu.concatenate %368, %368 in 0 : vector<32x64xf32>, vector<32x64xf32> -> vector<64x64xf32>
    %370 = vector.extract_strided_slice %369 {offsets = [27, 0], sizes = [32, 64], strides = [1, 1]} : vector<64x64xf32> to vector<32x64xf32>
    %371 = vector.extract_strided_slice %223 {offsets = [0, 0], sizes = [32, 1], strides = [1, 1]} : vector<32x16xf32> to vector<32x1xf32>
    %372 = vector.broadcast %371 : vector<32x1xf32> to vector<32x64xf32>
    %373 = arith.mulf %370, %372 : vector<32x64xf32>
    %374 = vector.extract_strided_slice %367 {offsets = [0, 64], sizes = [32, 64], strides = [1, 1]} : vector<32x192xf32> to vector<32x64xf32>
    %375 = tpu.concatenate %374, %374 in 0 : vector<32x64xf32>, vector<32x64xf32> -> vector<64x64xf32>
    %376 = vector.extract_strided_slice %375 {offsets = [28, 0], sizes = [32, 64], strides = [1, 1]} : vector<64x64xf32> to vector<32x64xf32>
    %377 = vector.extract_strided_slice %223 {offsets = [0, 1], sizes = [32, 1], strides = [1, 1]} : vector<32x16xf32> to vector<32x1xf32>
    %378 = vector.broadcast %377 : vector<32x1xf32> to vector<32x64xf32>
    %379 = arith.mulf %376, %378 : vector<32x64xf32>
    %380 = arith.addf %373, %379 : vector<32x64xf32>
    %381 = vector.extract_strided_slice %367 {offsets = [0, 128], sizes = [32, 64], strides = [1, 1]} : vector<32x192xf32> to vector<32x64xf32>
    %382 = tpu.concatenate %381, %381 in 0 : vector<32x64xf32>, vector<32x64xf32> -> vector<64x64xf32>
    %383 = vector.extract_strided_slice %382 {offsets = [29, 0], sizes = [32, 64], strides = [1, 1]} : vector<64x64xf32> to vector<32x64xf32>
    %384 = vector.extract_strided_slice %223 {offsets = [0, 2], sizes = [32, 1], strides = [1, 1]} : vector<32x16xf32> to vector<32x1xf32>
    %385 = vector.broadcast %384 : vector<32x1xf32> to vector<32x64xf32>
    %386 = arith.mulf %383, %385 : vector<32x64xf32>
    %387 = arith.addf %380, %386 : vector<32x64xf32>
    %c104_57 = arith.constant 104 : index
    %c192_58 = arith.constant 192 : index
    %388 = vector.load %arg1[%c104_57, %c192_58] : memref<840x576xf32, #tpu.memory_space<vmem>>, vector<32x192xf32>
    %cst_59 = arith.constant dense<0.000000e+00> : vector<32x192xf32>
    %389 = tpu.matmul %365, %388, %cst_59 {dimension_numbers = #tpu.dot_dimension_numbers<[1], [0], [0], [1], [0, 0, 1, 1], [], []>} : vector<32x32xf32>, vector<32x192xf32>, vector<32x192xf32> -> vector<32x192xf32>
    %390 = vector.extract_strided_slice %389 {offsets = [0, 0], sizes = [32, 64], strides = [1, 1]} : vector<32x192xf32> to vector<32x64xf32>
    %391 = tpu.concatenate %390, %390 in 0 : vector<32x64xf32>, vector<32x64xf32> -> vector<64x64xf32>
    %392 = vector.extract_strided_slice %391 {offsets = [31, 0], sizes = [32, 64], strides = [1, 1]} : vector<64x64xf32> to vector<32x64xf32>
    %393 = vector.extract_strided_slice %223 {offsets = [0, 3], sizes = [32, 1], strides = [1, 1]} : vector<32x16xf32> to vector<32x1xf32>
    %394 = vector.broadcast %393 : vector<32x1xf32> to vector<32x64xf32>
    %395 = arith.mulf %392, %394 : vector<32x64xf32>
    %396 = arith.addf %387, %395 : vector<32x64xf32>
    %397 = vector.extract_strided_slice %389 {offsets = [0, 64], sizes = [32, 64], strides = [1, 1]} : vector<32x192xf32> to vector<32x64xf32>
    %398 = vector.extract_strided_slice %223 {offsets = [0, 4], sizes = [32, 1], strides = [1, 1]} : vector<32x16xf32> to vector<32x1xf32>
    %399 = vector.broadcast %398 : vector<32x1xf32> to vector<32x64xf32>
    %400 = arith.mulf %397, %399 : vector<32x64xf32>
    %401 = arith.addf %396, %400 : vector<32x64xf32>
    %402 = vector.extract_strided_slice %389 {offsets = [0, 128], sizes = [32, 64], strides = [1, 1]} : vector<32x192xf32> to vector<32x64xf32>
    %403 = tpu.concatenate %402, %402 in 0 : vector<32x64xf32>, vector<32x64xf32> -> vector<64x64xf32>
    %404 = vector.extract_strided_slice %403 {offsets = [1, 0], sizes = [32, 64], strides = [1, 1]} : vector<64x64xf32> to vector<32x64xf32>
    %405 = vector.extract_strided_slice %223 {offsets = [0, 5], sizes = [32, 1], strides = [1, 1]} : vector<32x16xf32> to vector<32x1xf32>
    %406 = vector.broadcast %405 : vector<32x1xf32> to vector<32x64xf32>
    %407 = arith.mulf %404, %406 : vector<32x64xf32>
    %408 = arith.addf %401, %407 : vector<32x64xf32>
    %c104_60 = arith.constant 104 : index
    %c384 = arith.constant 384 : index
    %409 = vector.load %arg1[%c104_60, %c384] : memref<840x576xf32, #tpu.memory_space<vmem>>, vector<32x192xf32>
    %cst_61 = arith.constant dense<0.000000e+00> : vector<32x192xf32>
    %410 = tpu.matmul %365, %409, %cst_61 {dimension_numbers = #tpu.dot_dimension_numbers<[1], [0], [0], [1], [0, 0, 1, 1], [], []>} : vector<32x32xf32>, vector<32x192xf32>, vector<32x192xf32> -> vector<32x192xf32>
    %411 = vector.extract_strided_slice %410 {offsets = [0, 0], sizes = [32, 64], strides = [1, 1]} : vector<32x192xf32> to vector<32x64xf32>
    %412 = tpu.concatenate %411, %411 in 0 : vector<32x64xf32>, vector<32x64xf32> -> vector<64x64xf32>
    %413 = vector.extract_strided_slice %412 {offsets = [3, 0], sizes = [32, 64], strides = [1, 1]} : vector<64x64xf32> to vector<32x64xf32>
    %414 = vector.extract_strided_slice %223 {offsets = [0, 6], sizes = [32, 1], strides = [1, 1]} : vector<32x16xf32> to vector<32x1xf32>
    %415 = vector.broadcast %414 : vector<32x1xf32> to vector<32x64xf32>
    %416 = arith.mulf %413, %415 : vector<32x64xf32>
    %417 = arith.addf %408, %416 : vector<32x64xf32>
    %418 = vector.extract_strided_slice %410 {offsets = [0, 64], sizes = [32, 64], strides = [1, 1]} : vector<32x192xf32> to vector<32x64xf32>
    %419 = tpu.concatenate %418, %418 in 0 : vector<32x64xf32>, vector<32x64xf32> -> vector<64x64xf32>
    %420 = vector.extract_strided_slice %419 {offsets = [4, 0], sizes = [32, 64], strides = [1, 1]} : vector<64x64xf32> to vector<32x64xf32>
    %421 = vector.extract_strided_slice %223 {offsets = [0, 7], sizes = [32, 1], strides = [1, 1]} : vector<32x16xf32> to vector<32x1xf32>
    %422 = vector.broadcast %421 : vector<32x1xf32> to vector<32x64xf32>
    %423 = arith.mulf %420, %422 : vector<32x64xf32>
    %424 = arith.addf %417, %423 : vector<32x64xf32>
    %425 = vector.extract_strided_slice %410 {offsets = [0, 128], sizes = [32, 64], strides = [1, 1]} : vector<32x192xf32> to vector<32x64xf32>
    %426 = tpu.concatenate %425, %425 in 0 : vector<32x64xf32>, vector<32x64xf32> -> vector<64x64xf32>
    %427 = vector.extract_strided_slice %426 {offsets = [5, 0], sizes = [32, 64], strides = [1, 1]} : vector<64x64xf32> to vector<32x64xf32>
    %428 = vector.extract_strided_slice %223 {offsets = [0, 8], sizes = [32, 1], strides = [1, 1]} : vector<32x16xf32> to vector<32x1xf32>
    %429 = vector.broadcast %428 : vector<32x1xf32> to vector<32x64xf32>
    %430 = arith.mulf %427, %429 : vector<32x64xf32>
    %431 = arith.addf %424, %430 : vector<32x64xf32>
    %c5 = arith.constant 5 : index
    %c0_62 = arith.constant 0 : index
    %432 = vector.load %arg2[%c5, %c0_62] : memref<13x128xf32, #tpu.memory_space<vmem>>, vector<1x64xf32>
    %433 = vector.broadcast %432 : vector<1x64xf32> to vector<32x64xf32>
    %434 = arith.addf %431, %433 : vector<32x64xf32>
    %cst_63 = arith.constant 0.000000e+00 : f32
    %435 = vector.broadcast %cst_63 : f32 to vector<32x64xf32>
    %436 = arith.maximumf %434, %435 : vector<32x64xf32>
    %c32 = arith.constant 32 : index
    %c0_64 = arith.constant 0 : index
    %437 = vector.load %arg4[%c32, %c0_64] : memref<72x128xf32, #tpu.memory_space<vmem>>, vector<32x32xf32>
    %438 = tpu.concatenate %436, %436 in 0 : vector<32x64xf32>, vector<32x64xf32> -> vector<64x64xf32>
    %439 = vector.extract_strided_slice %438 {offsets = [1, 0], sizes = [32, 64], strides = [1, 1]} : vector<64x64xf32> to vector<32x64xf32>
    %440 = arith.maximumf %436, %439 : vector<32x64xf32>
    %441 = tpu.concatenate %440, %440 in 0 : vector<32x64xf32>, vector<32x64xf32> -> vector<64x64xf32>
    %442 = vector.extract_strided_slice %441 {offsets = [4, 0], sizes = [32, 64], strides = [1, 1]} : vector<64x64xf32> to vector<32x64xf32>
    %443 = arith.maximumf %440, %442 : vector<32x64xf32>
    %cst_65 = arith.constant dense<0.000000e+00> : vector<32x64xf32>
    %444 = tpu.matmul %437, %443, %cst_65 {dimension_numbers = #tpu.dot_dimension_numbers<[1], [0], [0], [1], [0, 0, 1, 1], [], []>} : vector<32x32xf32>, vector<32x64xf32>, vector<32x64xf32> -> vector<32x64xf32>
    %c160 = arith.constant 160 : index
    %c0_66 = arith.constant 0 : index
    %445 = vector.load %arg3[%c160, %c0_66] : memref<256x16xf32, #tpu.memory_space<vmem>>, vector<32x16xf32>
    %c136 = arith.constant 136 : index
    %c0_67 = arith.constant 0 : index
    %446 = vector.load %arg1[%c136, %c0_67] : memref<840x576xf32, #tpu.memory_space<vmem>>, vector<64x128xf32>
    %cst_68 = arith.constant dense<0.000000e+00> : vector<32x128xf32>
    %447 = tpu.matmul %444, %446, %cst_68 {dimension_numbers = #tpu.dot_dimension_numbers<[1], [0], [0], [1], [0, 0, 1, 1], [], []>} : vector<32x64xf32>, vector<64x128xf32>, vector<32x128xf32> -> vector<32x128xf32>
    %448 = vector.extract_strided_slice %447 {offsets = [0, 0], sizes = [32, 64], strides = [1, 1]} : vector<32x128xf32> to vector<32x64xf32>
    %449 = tpu.concatenate %448, %448 in 0 : vector<32x64xf32>, vector<32x64xf32> -> vector<64x64xf32>
    %450 = vector.extract_strided_slice %449 {offsets = [27, 0], sizes = [32, 64], strides = [1, 1]} : vector<64x64xf32> to vector<32x64xf32>
    %451 = vector.extract_strided_slice %445 {offsets = [0, 0], sizes = [32, 1], strides = [1, 1]} : vector<32x16xf32> to vector<32x1xf32>
    %452 = vector.broadcast %451 : vector<32x1xf32> to vector<32x64xf32>
    %453 = arith.mulf %450, %452 : vector<32x64xf32>
    %454 = vector.extract_strided_slice %447 {offsets = [0, 64], sizes = [32, 64], strides = [1, 1]} : vector<32x128xf32> to vector<32x64xf32>
    %455 = tpu.concatenate %454, %454 in 0 : vector<32x64xf32>, vector<32x64xf32> -> vector<64x64xf32>
    %456 = vector.extract_strided_slice %455 {offsets = [28, 0], sizes = [32, 64], strides = [1, 1]} : vector<64x64xf32> to vector<32x64xf32>
    %457 = vector.extract_strided_slice %445 {offsets = [0, 1], sizes = [32, 1], strides = [1, 1]} : vector<32x16xf32> to vector<32x1xf32>
    %458 = vector.broadcast %457 : vector<32x1xf32> to vector<32x64xf32>
    %459 = arith.mulf %456, %458 : vector<32x64xf32>
    %460 = arith.addf %453, %459 : vector<32x64xf32>
    %c136_69 = arith.constant 136 : index
    %c128_70 = arith.constant 128 : index
    %461 = vector.load %arg1[%c136_69, %c128_70] : memref<840x576xf32, #tpu.memory_space<vmem>>, vector<64x128xf32>
    %cst_71 = arith.constant dense<0.000000e+00> : vector<32x128xf32>
    %462 = tpu.matmul %444, %461, %cst_71 {dimension_numbers = #tpu.dot_dimension_numbers<[1], [0], [0], [1], [0, 0, 1, 1], [], []>} : vector<32x64xf32>, vector<64x128xf32>, vector<32x128xf32> -> vector<32x128xf32>
    %463 = vector.extract_strided_slice %462 {offsets = [0, 0], sizes = [32, 64], strides = [1, 1]} : vector<32x128xf32> to vector<32x64xf32>
    %464 = tpu.concatenate %463, %463 in 0 : vector<32x64xf32>, vector<32x64xf32> -> vector<64x64xf32>
    %465 = vector.extract_strided_slice %464 {offsets = [31, 0], sizes = [32, 64], strides = [1, 1]} : vector<64x64xf32> to vector<32x64xf32>
    %466 = vector.extract_strided_slice %445 {offsets = [0, 2], sizes = [32, 1], strides = [1, 1]} : vector<32x16xf32> to vector<32x1xf32>
    %467 = vector.broadcast %466 : vector<32x1xf32> to vector<32x64xf32>
    %468 = arith.mulf %465, %467 : vector<32x64xf32>
    %469 = arith.addf %460, %468 : vector<32x64xf32>
    %470 = vector.extract_strided_slice %462 {offsets = [0, 64], sizes = [32, 64], strides = [1, 1]} : vector<32x128xf32> to vector<32x64xf32>
    %471 = vector.extract_strided_slice %445 {offsets = [0, 3], sizes = [32, 1], strides = [1, 1]} : vector<32x16xf32> to vector<32x1xf32>
    %472 = vector.broadcast %471 : vector<32x1xf32> to vector<32x64xf32>
    %473 = arith.mulf %470, %472 : vector<32x64xf32>
    %474 = arith.addf %469, %473 : vector<32x64xf32>
    %c6 = arith.constant 6 : index
    %c0_72 = arith.constant 0 : index
    %475 = vector.load %arg2[%c6, %c0_72] : memref<13x128xf32, #tpu.memory_space<vmem>>, vector<1x64xf32>
    %476 = vector.broadcast %475 : vector<1x64xf32> to vector<32x64xf32>
    %477 = arith.addf %474, %476 : vector<32x64xf32>
    %cst_73 = arith.constant 0.000000e+00 : f32
    %478 = vector.broadcast %cst_73 : f32 to vector<32x64xf32>
    %479 = arith.maximumf %477, %478 : vector<32x64xf32>
    %c192_74 = arith.constant 192 : index
    %c0_75 = arith.constant 0 : index
    %480 = vector.load %arg3[%c192_74, %c0_75] : memref<256x16xf32, #tpu.memory_space<vmem>>, vector<32x16xf32>
    %c200 = arith.constant 200 : index
    %c0_76 = arith.constant 0 : index
    %481 = vector.load %arg1[%c200, %c0_76] : memref<840x576xf32, #tpu.memory_space<vmem>>, vector<64x128xf32>
    %cst_77 = arith.constant dense<0.000000e+00> : vector<32x128xf32>
    %482 = tpu.matmul %479, %481, %cst_77 {dimension_numbers = #tpu.dot_dimension_numbers<[1], [0], [0], [1], [0, 0, 1, 1], [], []>} : vector<32x64xf32>, vector<64x128xf32>, vector<32x128xf32> -> vector<32x128xf32>
    %483 = vector.extract_strided_slice %482 {offsets = [0, 0], sizes = [32, 64], strides = [1, 1]} : vector<32x128xf32> to vector<32x64xf32>
    %484 = tpu.concatenate %483, %483 in 0 : vector<32x64xf32>, vector<32x64xf32> -> vector<64x64xf32>
    %485 = vector.extract_strided_slice %484 {offsets = [27, 0], sizes = [32, 64], strides = [1, 1]} : vector<64x64xf32> to vector<32x64xf32>
    %486 = vector.extract_strided_slice %480 {offsets = [0, 0], sizes = [32, 1], strides = [1, 1]} : vector<32x16xf32> to vector<32x1xf32>
    %487 = vector.broadcast %486 : vector<32x1xf32> to vector<32x64xf32>
    %488 = arith.mulf %485, %487 : vector<32x64xf32>
    %489 = vector.extract_strided_slice %482 {offsets = [0, 64], sizes = [32, 64], strides = [1, 1]} : vector<32x128xf32> to vector<32x64xf32>
    %490 = tpu.concatenate %489, %489 in 0 : vector<32x64xf32>, vector<32x64xf32> -> vector<64x64xf32>
    %491 = vector.extract_strided_slice %490 {offsets = [28, 0], sizes = [32, 64], strides = [1, 1]} : vector<64x64xf32> to vector<32x64xf32>
    %492 = vector.extract_strided_slice %480 {offsets = [0, 1], sizes = [32, 1], strides = [1, 1]} : vector<32x16xf32> to vector<32x1xf32>
    %493 = vector.broadcast %492 : vector<32x1xf32> to vector<32x64xf32>
    %494 = arith.mulf %491, %493 : vector<32x64xf32>
    %495 = arith.addf %488, %494 : vector<32x64xf32>
    %c200_78 = arith.constant 200 : index
    %c128_79 = arith.constant 128 : index
    %496 = vector.load %arg1[%c200_78, %c128_79] : memref<840x576xf32, #tpu.memory_space<vmem>>, vector<64x128xf32>
    %cst_80 = arith.constant dense<0.000000e+00> : vector<32x128xf32>
    %497 = tpu.matmul %479, %496, %cst_80 {dimension_numbers = #tpu.dot_dimension_numbers<[1], [0], [0], [1], [0, 0, 1, 1], [], []>} : vector<32x64xf32>, vector<64x128xf32>, vector<32x128xf32> -> vector<32x128xf32>
    %498 = vector.extract_strided_slice %497 {offsets = [0, 0], sizes = [32, 64], strides = [1, 1]} : vector<32x128xf32> to vector<32x64xf32>
    %499 = tpu.concatenate %498, %498 in 0 : vector<32x64xf32>, vector<32x64xf32> -> vector<64x64xf32>
    %500 = vector.extract_strided_slice %499 {offsets = [31, 0], sizes = [32, 64], strides = [1, 1]} : vector<64x64xf32> to vector<32x64xf32>
    %501 = vector.extract_strided_slice %480 {offsets = [0, 2], sizes = [32, 1], strides = [1, 1]} : vector<32x16xf32> to vector<32x1xf32>
    %502 = vector.broadcast %501 : vector<32x1xf32> to vector<32x64xf32>
    %503 = arith.mulf %500, %502 : vector<32x64xf32>
    %504 = arith.addf %495, %503 : vector<32x64xf32>
    %505 = vector.extract_strided_slice %497 {offsets = [0, 64], sizes = [32, 64], strides = [1, 1]} : vector<32x128xf32> to vector<32x64xf32>
    %506 = vector.extract_strided_slice %480 {offsets = [0, 3], sizes = [32, 1], strides = [1, 1]} : vector<32x16xf32> to vector<32x1xf32>
    %507 = vector.broadcast %506 : vector<32x1xf32> to vector<32x64xf32>
    %508 = arith.mulf %505, %507 : vector<32x64xf32>
    %509 = arith.addf %504, %508 : vector<32x64xf32>
    %c7 = arith.constant 7 : index
    %c0_81 = arith.constant 0 : index
    %510 = vector.load %arg2[%c7, %c0_81] : memref<13x128xf32, #tpu.memory_space<vmem>>, vector<1x64xf32>
    %511 = vector.broadcast %510 : vector<1x64xf32> to vector<32x64xf32>
    %512 = arith.addf %509, %511 : vector<32x64xf32>
    %cst_82 = arith.constant 0.000000e+00 : f32
    %513 = vector.broadcast %cst_82 : f32 to vector<32x64xf32>
    %514 = arith.maximumf %512, %513 : vector<32x64xf32>
    %c224 = arith.constant 224 : index
    %c0_83 = arith.constant 0 : index
    %515 = vector.load %arg3[%c224, %c0_83] : memref<256x16xf32, #tpu.memory_space<vmem>>, vector<32x16xf32>
    %c264 = arith.constant 264 : index
    %c0_84 = arith.constant 0 : index
    %516 = vector.load %arg1[%c264, %c0_84] : memref<840x576xf32, #tpu.memory_space<vmem>>, vector<64x256xf32>
    %cst_85 = arith.constant dense<0.000000e+00> : vector<32x256xf32>
    %517 = tpu.matmul %514, %516, %cst_85 {dimension_numbers = #tpu.dot_dimension_numbers<[1], [0], [0], [1], [0, 0, 1, 1], [], []>} : vector<32x64xf32>, vector<64x256xf32>, vector<32x256xf32> -> vector<32x256xf32>
    %518 = vector.extract_strided_slice %517 {offsets = [0, 0], sizes = [32, 128], strides = [1, 1]} : vector<32x256xf32> to vector<32x128xf32>
    %519 = vector.extract_strided_slice %515 {offsets = [0, 0], sizes = [32, 1], strides = [1, 1]} : vector<32x16xf32> to vector<32x1xf32>
    %520 = vector.broadcast %519 : vector<32x1xf32> to vector<32x128xf32>
    %521 = arith.mulf %518, %520 : vector<32x128xf32>
    %522 = vector.extract_strided_slice %517 {offsets = [0, 128], sizes = [32, 128], strides = [1, 1]} : vector<32x256xf32> to vector<32x128xf32>
    %523 = tpu.concatenate %522, %522 in 0 : vector<32x128xf32>, vector<32x128xf32> -> vector<64x128xf32>
    %524 = vector.extract_strided_slice %523 {offsets = [1, 0], sizes = [32, 128], strides = [1, 1]} : vector<64x128xf32> to vector<32x128xf32>
    %525 = vector.extract_strided_slice %515 {offsets = [0, 1], sizes = [32, 1], strides = [1, 1]} : vector<32x16xf32> to vector<32x1xf32>
    %526 = vector.broadcast %525 : vector<32x1xf32> to vector<32x128xf32>
    %527 = arith.mulf %524, %526 : vector<32x128xf32>
    %528 = arith.addf %521, %527 : vector<32x128xf32>
    %c264_86 = arith.constant 264 : index
    %c256 = arith.constant 256 : index
    %529 = vector.load %arg1[%c264_86, %c256] : memref<840x576xf32, #tpu.memory_space<vmem>>, vector<64x256xf32>
    %cst_87 = arith.constant dense<0.000000e+00> : vector<32x256xf32>
    %530 = tpu.matmul %514, %529, %cst_87 {dimension_numbers = #tpu.dot_dimension_numbers<[1], [0], [0], [1], [0, 0, 1, 1], [], []>} : vector<32x64xf32>, vector<64x256xf32>, vector<32x256xf32> -> vector<32x256xf32>
    %531 = vector.extract_strided_slice %530 {offsets = [0, 0], sizes = [32, 128], strides = [1, 1]} : vector<32x256xf32> to vector<32x128xf32>
    %532 = tpu.concatenate %531, %531 in 0 : vector<32x128xf32>, vector<32x128xf32> -> vector<64x128xf32>
    %533 = vector.extract_strided_slice %532 {offsets = [4, 0], sizes = [32, 128], strides = [1, 1]} : vector<64x128xf32> to vector<32x128xf32>
    %534 = vector.extract_strided_slice %515 {offsets = [0, 2], sizes = [32, 1], strides = [1, 1]} : vector<32x16xf32> to vector<32x1xf32>
    %535 = vector.broadcast %534 : vector<32x1xf32> to vector<32x128xf32>
    %536 = arith.mulf %533, %535 : vector<32x128xf32>
    %537 = arith.addf %528, %536 : vector<32x128xf32>
    %538 = vector.extract_strided_slice %530 {offsets = [0, 128], sizes = [32, 128], strides = [1, 1]} : vector<32x256xf32> to vector<32x128xf32>
    %539 = tpu.concatenate %538, %538 in 0 : vector<32x128xf32>, vector<32x128xf32> -> vector<64x128xf32>
    %540 = vector.extract_strided_slice %539 {offsets = [5, 0], sizes = [32, 128], strides = [1, 1]} : vector<64x128xf32> to vector<32x128xf32>
    %541 = vector.extract_strided_slice %515 {offsets = [0, 3], sizes = [32, 1], strides = [1, 1]} : vector<32x16xf32> to vector<32x1xf32>
    %542 = vector.broadcast %541 : vector<32x1xf32> to vector<32x128xf32>
    %543 = arith.mulf %540, %542 : vector<32x128xf32>
    %544 = arith.addf %537, %543 : vector<32x128xf32>
    %c8_88 = arith.constant 8 : index
    %c0_89 = arith.constant 0 : index
    %545 = vector.load %arg2[%c8_88, %c0_89] : memref<13x128xf32, #tpu.memory_space<vmem>>, vector<1x128xf32>
    %546 = vector.broadcast %545 : vector<1x128xf32> to vector<32x128xf32>
    %547 = arith.addf %544, %546 : vector<32x128xf32>
    %cst_90 = arith.constant 0.000000e+00 : f32
    %548 = vector.broadcast %cst_90 : f32 to vector<32x128xf32>
    %549 = arith.maximumf %547, %548 : vector<32x128xf32>
    %c64 = arith.constant 64 : index
    %c0_91 = arith.constant 0 : index
    %550 = vector.load %arg4[%c64, %c0_91] : memref<72x128xf32, #tpu.memory_space<vmem>>, vector<8x32xf32>
    %551 = tpu.concatenate %549, %549 in 0 : vector<32x128xf32>, vector<32x128xf32> -> vector<64x128xf32>
    %552 = vector.extract_strided_slice %551 {offsets = [1, 0], sizes = [32, 128], strides = [1, 1]} : vector<64x128xf32> to vector<32x128xf32>
    %553 = arith.maximumf %549, %552 : vector<32x128xf32>
    %554 = tpu.concatenate %553, %553 in 0 : vector<32x128xf32>, vector<32x128xf32> -> vector<64x128xf32>
    %555 = vector.extract_strided_slice %554 {offsets = [4, 0], sizes = [32, 128], strides = [1, 1]} : vector<64x128xf32> to vector<32x128xf32>
    %556 = arith.maximumf %553, %555 : vector<32x128xf32>
    %cst_92 = arith.constant dense<0.000000e+00> : vector<8x128xf32>
    %557 = tpu.matmul %550, %556, %cst_92 {dimension_numbers = #tpu.dot_dimension_numbers<[1], [0], [0], [1], [0, 0, 1, 1], [], []>} : vector<8x32xf32>, vector<32x128xf32>, vector<8x128xf32> -> vector<8x128xf32>
    %c328 = arith.constant 328 : index
    %c0_93 = arith.constant 0 : index
    %558 = vector.load %arg1[%c328, %c0_93] : memref<840x576xf32, #tpu.memory_space<vmem>>, vector<128x128xf32>
    %cst_94 = arith.constant dense<0.000000e+00> : vector<8x128xf32>
    %559 = tpu.matmul %557, %558, %cst_94 {dimension_numbers = #tpu.dot_dimension_numbers<[1], [0], [0], [1], [0, 0, 1, 1], [], []>} : vector<8x128xf32>, vector<128x128xf32>, vector<8x128xf32> -> vector<8x128xf32>
    %c9 = arith.constant 9 : index
    %c0_95 = arith.constant 0 : index
    %560 = vector.load %arg2[%c9, %c0_95] : memref<13x128xf32, #tpu.memory_space<vmem>>, vector<1x128xf32>
    %561 = vector.broadcast %560 : vector<1x128xf32> to vector<8x128xf32>
    %562 = arith.addf %559, %561 : vector<8x128xf32>
    %cst_96 = arith.constant 0.000000e+00 : f32
    %563 = vector.broadcast %cst_96 : f32 to vector<8x128xf32>
    %564 = arith.maximumf %562, %563 : vector<8x128xf32>
    %c456 = arith.constant 456 : index
    %c0_97 = arith.constant 0 : index
    %565 = vector.load %arg1[%c456, %c0_97] : memref<840x576xf32, #tpu.memory_space<vmem>>, vector<128x128xf32>
    %cst_98 = arith.constant dense<0.000000e+00> : vector<8x128xf32>
    %566 = tpu.matmul %564, %565, %cst_98 {dimension_numbers = #tpu.dot_dimension_numbers<[1], [0], [0], [1], [0, 0, 1, 1], [], []>} : vector<8x128xf32>, vector<128x128xf32>, vector<8x128xf32> -> vector<8x128xf32>
    %c10 = arith.constant 10 : index
    %c0_99 = arith.constant 0 : index
    %567 = vector.load %arg2[%c10, %c0_99] : memref<13x128xf32, #tpu.memory_space<vmem>>, vector<1x128xf32>
    %568 = vector.broadcast %567 : vector<1x128xf32> to vector<8x128xf32>
    %569 = arith.addf %566, %568 : vector<8x128xf32>
    %cst_100 = arith.constant 0.000000e+00 : f32
    %570 = vector.broadcast %cst_100 : f32 to vector<8x128xf32>
    %571 = arith.maximumf %569, %570 : vector<8x128xf32>
    %c584 = arith.constant 584 : index
    %c0_101 = arith.constant 0 : index
    %572 = vector.load %arg1[%c584, %c0_101] : memref<840x576xf32, #tpu.memory_space<vmem>>, vector<128x128xf32>
    %cst_102 = arith.constant dense<0.000000e+00> : vector<8x128xf32>
    %573 = tpu.matmul %571, %572, %cst_102 {dimension_numbers = #tpu.dot_dimension_numbers<[1], [0], [0], [1], [0, 0, 1, 1], [], []>} : vector<8x128xf32>, vector<128x128xf32>, vector<8x128xf32> -> vector<8x128xf32>
    %c11 = arith.constant 11 : index
    %c0_103 = arith.constant 0 : index
    %574 = vector.load %arg2[%c11, %c0_103] : memref<13x128xf32, #tpu.memory_space<vmem>>, vector<1x128xf32>
    %575 = vector.broadcast %574 : vector<1x128xf32> to vector<8x128xf32>
    %576 = arith.addf %573, %575 : vector<8x128xf32>
    %cst_104 = arith.constant 0.000000e+00 : f32
    %577 = vector.broadcast %cst_104 : f32 to vector<8x128xf32>
    %578 = arith.maximumf %576, %577 : vector<8x128xf32>
    %c712 = arith.constant 712 : index
    %c0_105 = arith.constant 0 : index
    %579 = vector.load %arg1[%c712, %c0_105] : memref<840x576xf32, #tpu.memory_space<vmem>>, vector<128x1xf32>
    %cst_106 = arith.constant dense<0.000000e+00> : vector<8x1xf32>
    %580 = tpu.matmul %578, %579, %cst_106 {dimension_numbers = #tpu.dot_dimension_numbers<[1], [0], [0], [1], [0, 0, 1, 1], [], []>} : vector<8x128xf32>, vector<128x1xf32>, vector<8x1xf32> -> vector<8x1xf32>
    %c12 = arith.constant 12 : index
    %c0_107 = arith.constant 0 : index
    %581 = vector.load %arg2[%c12, %c0_107] : memref<13x128xf32, #tpu.memory_space<vmem>>, vector<1x1xf32>
    %582 = vector.broadcast %581 : vector<1x1xf32> to vector<8x1xf32>
    %583 = arith.addf %580, %582 : vector<8x1xf32>
    %584 = math.tanh %583 : vector<8x1xf32>
    %c0_108 = arith.constant 0 : index
    %c0_109 = arith.constant 0 : index
    %585 = vector.load %arg5[%c0_108, %c0_109] : memref<8x1xf32, #tpu.memory_space<vmem>>, vector<8x1xf32>
    tpu.vector_store %arg5[%c0_108, %c0_109], %584 {strides = array<i32>} : memref<8x1xf32, #tpu.memory_space<vmem>>, vector<8x1xf32>,
    return
  }
}

</mosaic_0001>

<llo_original>
// kernel: forward.1
$region0: #{forward.1}
  #allocation0 [shape = 'u32[]', space=smem, size = 0x4, offset = 0x4, fixed_abs, tag = 'smem constant byte address 0x4 - core index']
  #allocation1 [shape = 'u32[144,128]{1,0:T(1,128)}', space=vmem, size = 0x12000, scoped, tag = 'internal scratch']
  %s0 = inlined_call_operand.vmem [shape: f32[128,8], index: 0, kind: input, shape index: {}]
  %s1 = inlined_call_operand.vmem [shape: f32[840,576], index: 1, kind: input, shape index: {}]
  %s2 = inlined_call_operand.vmem [shape: f32[13,128], index: 2, kind: input, shape index: {}]
  %s3 = inlined_call_operand.vmem [shape: f32[256,16], index: 3, kind: input, shape index: {}]
  %s4 = inlined_call_operand.vmem [shape: f32[72,128], index: 4, kind: input, shape index: {}]
  %s5 = inlined_call_operand.vmem [shape: f32[8,1], index: 5, kind: output, shape index: {}]
  %s6 = sld [smem:[#allocation0]]
  $region30: #{forward.1} parent=0
    _
  %s8 = ssub.s32 1, %s6
  %s9 = scalar_select 0, %s8, %s6
  // Predicated region
  $region2: #{forward.1} parent=0 // pred_check
    _
  $region3: #{forward.1} parent=0 // pred_check_branch
    %11 = sbr.rel (0) target = $region5
  $region4: #{forward.1} parent=0 // pred_region
    _
  $region5: #{forward.1} parent=0 // pred_fallthru
    _
  // Predicated region
  $region6: #{forward.1} parent=0 // pred_check
    _
  $region7: #{forward.1} parent=0 // pred_check_branch
    %13 = sbr.rel (0) target = $region9
  $region8: #{forward.1} parent=0 // pred_region
    _
  $region9: #{forward.1} parent=0 // pred_fallthru
    _
  // Predicated region
  $region10: #{forward.1} parent=0 // pred_check
    _
  $region11: #{forward.1} parent=0 // pred_check_branch
    %15 = sbr.rel (0) target = $region13
  $region12: #{forward.1} parent=0 // pred_region
    _
  $region13: #{forward.1} parent=0 // pred_fallthru
    _
  // Predicated region
  $region14: #{forward.1} parent=0 // pred_check
    _
  $region15: #{forward.1} parent=0 // pred_check_branch
    %17 = sbr.rel (0) target = $region17
  $region16: #{forward.1} parent=0 // pred_region
    _
  $region17: #{forward.1} parent=0 // pred_fallthru
    _
  // Predicated region
  $region18: #{forward.1} parent=0 // pred_check
    _
  $region19: #{forward.1} parent=0 // pred_check_branch
    %19 = sbr.rel (0) target = $region21
  $region20: #{forward.1} parent=0 // pred_region
    _
  $region21: #{forward.1} parent=0 // pred_fallthru
    _
  %v20 = vld [vmem:[%s0] sm:$0xff]
  %v21 = vld [vmem:[%s0 + $0x8] sm:$0xff]
  %v22 = vld [vmem:[%s0 + $0x10] sm:$0xff]
  %v23 = vld [vmem:[%s0 + $0x18] sm:$0xff]
  %v24 = vld [vmem:[%s0 + $0x20] sm:$0xff]
  %v25 = vld [vmem:[%s0 + $0x28] sm:$0xff]
  %v26 = vld [vmem:[%s0 + $0x30] sm:$0xff]
  %v27 = vld [vmem:[%s0 + $0x38] sm:$0xff]
  %v28 = vld [vmem:[%s0 + $0x40] sm:$0xff]
  %v29 = vld [vmem:[%s0 + $0x48] sm:$0xff]
  %v30 = vld [vmem:[%s0 + $0x50] sm:$0xff]
  %v31 = vld [vmem:[%s0 + $0x58] sm:$0xff]
  %v32 = vld [vmem:[%s0 + $0x60] sm:$0xff]
  %v33 = vld [vmem:[%s0 + $0x68] sm:$0xff]
  %v34 = vld [vmem:[%s0 + $0x70] sm:$0xff]
  %v35 = vld [vmem:[%s0 + $0x78] sm:$0xff]
  %v36 = vld [vmem:[%s3] sm:$0xff]
  %v37 = vld [vmem:[%s3 + $0x8] sm:$0xff]
  %v38 = vld [vmem:[%s3 + $0x10] sm:$0xff]
  %v39 = vld [vmem:[%s3 + $0x18] sm:$0xff]
  %v40 = vld [vmem:[%s3 + $0x20] sm:$0xff]
  %v41 = vld [vmem:[%s3 + $0x28] sm:$0xff]
  %v42 = vld [vmem:[%s3 + $0x30] sm:$0xff]
  %v43 = vld [vmem:[%s3 + $0x38] sm:$0xff]
  %v44 = vld [vmem:[%s3 + $0x40] sm:$0xff]
  %v45 = vld [vmem:[%s3 + $0x48] sm:$0xff]
  %v46 = vld [vmem:[%s3 + $0x50] sm:$0xff]
  %v47 = vld [vmem:[%s3 + $0x58] sm:$0xff]
  %v48 = vld [vmem:[%s3 + $0x60] sm:$0xff]
  %v49 = vld [vmem:[%s3 + $0x68] sm:$0xff]
  %v50 = vld [vmem:[%s3 + $0x70] sm:$0xff]
  %v51 = vld [vmem:[%s3 + $0x78] sm:$0xff]
  %v52 = vld [vmem:[%s1] sm:$0xff]
  %vm53 = vcmask 64512
  %v55 = vsel %vm53, %v20, 0
  %v58 = vsel %vm53, %v21, 0
  %v61 = vsel %vm53, %v22, 0
  %v64 = vsel %vm53, %v23, 0
  %v67 = vsel %vm53, %v24, 0
  %v70 = vsel %vm53, %v25, 0
  %v73 = vsel %vm53, %v26, 0
  %v76 = vsel %vm53, %v27, 0
  %v79 = vsel %vm53, %v28, 0
  %v82 = vsel %vm53, %v29, 0
  %v85 = vsel %vm53, %v30, 0
  %v88 = vsel %vm53, %v31, 0
  %v91 = vsel %vm53, %v32, 0
  %v94 = vsel %vm53, %v33, 0
  %v97 = vsel %vm53, %v34, 0
  %v100 = vsel %vm53, %v35, 0
  %102 = vmatprep.subr.mxu0 0.0
  %103 = vmatpush1.msra.mxu0 %v52
  %104 = vmatprep.subr.mxu0 0.0
  %105 = vmatpush1.msra.mxu0 0.0
  %106 = vmatprep.subr.mxu0 0.0
  %107 = vmatpush1.msra.mxu0 0.0
  %108 = vmatprep.subr.mxu0 0.0
  %109 = vmatpush1.msra.mxu0 0.0
  %110 = vmatprep.subr.mxu0 0.0
  %111 = vmatpush1.msra.mxu0 0.0
  %112 = vmatprep.subr.mxu0 0.0
  %113 = vmatpush1.msra.mxu0 0.0
  %114 = vmatprep.subr.mxu0 0.0
  %115 = vmatpush1.msra.mxu0 0.0
  %116 = vmatprep.subr.mxu0 0.0
  %117 = vmatpush1.msra.mxu0 0.0
  %118 = vmatprep.subr.mxu0 0.0
  %119 = vmatpush1.msra.mxu0 0.0
  %120 = vmatprep.subr.mxu0 0.0
  %121 = vmatpush1.msra.mxu0 0.0
  %122 = vmatprep.subr.mxu0 0.0
  %123 = vmatpush1.msra.mxu0 0.0
  %124 = vmatprep.subr.mxu0 0.0
  %125 = vmatpush1.msra.mxu0 0.0
  %126 = vmatprep.subr.mxu0 0.0
  %127 = vmatpush1.msra.mxu0 0.0
  %128 = vmatprep.subr.mxu0 0.0
  %129 = vmatpush1.msra.mxu0 0.0
  %130 = vmatprep.subr.mxu0 0.0
  %131 = vmatpush1.msra.mxu0 0.0
  %132 = vmatprep.subr.mxu0 0.0
  %133 = vmatpush1.msra.mxu0 0.0
  %134 = vmatprep.subr.mxu0 0.0
  %135 = vmatpush1.msra.mxu0 0.0
  %136 = vmatprep.subr.mxu0 0.0
  %137 = vmatpush1.msra.mxu0 0.0
  %138 = vmatprep.subr.mxu0 0.0
  %139 = vmatpush1.msra.mxu0 0.0
  %140 = vmatprep.subr.mxu0 0.0
  %141 = vmatpush1.msra.mxu0 0.0
  %142 = vmatprep.subr.mxu0 0.0
  %143 = vmatpush1.msra.mxu0 0.0
  %144 = vmatprep.subr.mxu0 0.0
  %145 = vmatpush1.msra.mxu0 0.0
  %146 = vmatprep.subr.mxu0 0.0
  %147 = vmatpush1.msra.mxu0 0.0
  %148 = vmatprep.subr.mxu0 0.0
  %149 = vmatpush1.msra.mxu0 0.0
  %150 = vmatprep.subr.mxu0 0.0
  %151 = vmatpush1.msra.mxu0 0.0
  %152 = vmatprep.subr.mxu0 0.0
  %153 = vmatpush1.msra.mxu0 0.0
  %154 = vmatprep.subr.mxu0 0.0
  %155 = vmatpush1.msra.mxu0 0.0
  %156 = vmatprep.subr.mxu0 0.0
  %157 = vmatpush1.msra.mxu0 0.0
  %158 = vmatprep.subr.mxu0 0.0
  %159 = vmatpush1.msra.mxu0 0.0
  %160 = vmatprep.subr.mxu0 0.0
  %161 = vmatpush1.msra.mxu0 0.0
  %162 = vmatprep.subr.mxu0 0.0
  %163 = vmatpush1.msra.mxu0 0.0
  %164 = vmatprep.subr.mxu0 0.0
  %165 = vmatpush1.msra.mxu0 0.0
  %166 = vmatprep.mubr.f32.mxu0 0.0
  %167 = vmatmul.mubr.f32.gmra.mrb[0].mxu0 %v55
  %v168 = vpop.f32.mrb[0].mxu0
  %v169 = vadd.f32 0.0, %v168
  %v170 = vpop.f32.mrb[0].mxu0
  %171 = vmatprep.mubr.f32.mxu0 0.0
  %172 = vmatmul.mubr.f32.gmra.mrb[0].mxu0 %v58
  %v173 = vpop.f32.mrb[0].mxu0
  %v174 = vadd.f32 0.0, %v173
  %v175 = vpop.f32.mrb[0].mxu0
  %176 = vmatprep.mubr.f32.mxu0 0.0
  %177 = vmatmul.mubr.f32.gmra.mrb[0].mxu0 %v61
  %v178 = vpop.f32.mrb[0].mxu0
  %v179 = vadd.f32 0.0, %v178
  %v180 = vpop.f32.mrb[0].mxu0
  %181 = vmatprep.mubr.f32.mxu0 0.0
  %182 = vmatmul.mubr.f32.gmra.mrb[0].mxu0 %v64
  %v183 = vpop.f32.mrb[0].mxu0
  %v184 = vadd.f32 0.0, %v183
  %v185 = vpop.f32.mrb[0].mxu0
  %186 = vmatprep.mubr.f32.mxu0 0.0
  %187 = vmatmul.mubr.f32.gmra.mrb[0].mxu0 %v67
  %v188 = vpop.f32.mrb[0].mxu0
  %v189 = vadd.f32 0.0, %v188
  %v190 = vpop.f32.mrb[0].mxu0
  %191 = vmatprep.mubr.f32.mxu0 0.0
  %192 = vmatmul.mubr.f32.gmra.mrb[0].mxu0 %v70
  %v193 = vpop.f32.mrb[0].mxu0
  %v194 = vadd.f32 0.0, %v193
  %v195 = vpop.f32.mrb[0].mxu0
  %196 = vmatprep.mubr.f32.mxu0 0.0
  %197 = vmatmul.mubr.f32.gmra.mrb[0].mxu0 %v73
  %v198 = vpop.f32.mrb[0].mxu0
  %v199 = vadd.f32 0.0, %v198
  %v200 = vpop.f32.mrb[0].mxu0
  %201 = vmatprep.mubr.f32.mxu0 0.0
  %202 = vmatmul.mubr.f32.gmra.mrb[0].mxu0 %v76
  %v203 = vpop.f32.mrb[0].mxu0
  %v204 = vadd.f32 0.0, %v203
  %v205 = vpop.f32.mrb[0].mxu0
  %206 = vmatprep.mubr.f32.mxu0 0.0
  %207 = vmatmul.mubr.f32.gmra.mrb[0].mxu0 %v79
  %v208 = vpop.f32.mrb[0].mxu0
  %v209 = vadd.f32 0.0, %v208
  %v210 = vpop.f32.mrb[0].mxu0
  %211 = vmatprep.mubr.f32.mxu0 0.0
  %212 = vmatmul.mubr.f32.gmra.mrb[0].mxu0 %v82
  %v213 = vpop.f32.mrb[0].mxu0
  %v214 = vadd.f32 0.0, %v213
  %v215 = vpop.f32.mrb[0].mxu0
  %216 = vmatprep.mubr.f32.mxu0 0.0
  %217 = vmatmul.mubr.f32.gmra.mrb[0].mxu0 %v85
  %v218 = vpop.f32.mrb[0].mxu0
  %v219 = vadd.f32 0.0, %v218
  %v220 = vpop.f32.mrb[0].mxu0
  %221 = vmatprep.mubr.f32.mxu0 0.0
  %222 = vmatmul.mubr.f32.gmra.mrb[0].mxu0 %v88
  %v223 = vpop.f32.mrb[0].mxu0
  %v224 = vadd.f32 0.0, %v223
  %v225 = vpop.f32.mrb[0].mxu0
  %226 = vmatprep.mubr.f32.mxu0 0.0
  %227 = vmatmul.mubr.f32.gmra.mrb[0].mxu0 %v91
  %v228 = vpop.f32.mrb[0].mxu0
  %v229 = vadd.f32 0.0, %v228
  %v230 = vpop.f32.mrb[0].mxu0
  %231 = vmatprep.mubr.f32.mxu0 0.0
  %232 = vmatmul.mubr.f32.gmra.mrb[0].mxu0 %v94
  %v233 = vpop.f32.mrb[0].mxu0
  %v234 = vadd.f32 0.0, %v233
  %v235 = vpop.f32.mrb[0].mxu0
  %236 = vmatprep.mubr.f32.mxu0 0.0
  %237 = vmatmul.mubr.f32.gmra.mrb[0].mxu0 %v97
  %v238 = vpop.f32.mrb[0].mxu0
  %v239 = vadd.f32 0.0, %v238
  %v240 = vpop.f32.mrb[0].mxu0
  %241 = vmatprep.mubr.f32.mxu0 0.0
  %242 = vmatmul.mubr.f32.gmra.mrb[0].mxu0 %v100
  %v243 = vpop.f32.mrb[0].mxu0
  %v244 = vadd.f32 0.0, %v243
  %v245 = vpop.f32.mrb[0].mxu0
  %246 = vdwg.mxu0
  %248 = vset.pattern.permute.xlu0 0
  %249 = vperm.xlu0 %248, %v36
  %v250 = vpop.permute.xlu0 %249
  %252 = vset.pattern.permute.xlu0 0
  %253 = vperm.xlu0 %252, %v37
  %v254 = vpop.permute.xlu0 %253
  %256 = vset.pattern.permute.xlu0 0
  %257 = vperm.xlu0 %256, %v38
  %v258 = vpop.permute.xlu0 %257
  %260 = vset.pattern.permute.xlu0 0
  %261 = vperm.xlu0 %260, %v39
  %v262 = vpop.permute.xlu0 %261
  %264 = vset.pattern.permute.xlu0 0
  %265 = vperm.xlu0 %264, %v40
  %v266 = vpop.permute.xlu0 %265
  %268 = vset.pattern.permute.xlu0 0
  %269 = vperm.xlu0 %268, %v41
  %v270 = vpop.permute.xlu0 %269
  %272 = vset.pattern.permute.xlu0 0
  %273 = vperm.xlu0 %272, %v42
  %v274 = vpop.permute.xlu0 %273
  %276 = vset.pattern.permute.xlu0 0
  %277 = vperm.xlu0 %276, %v43
  %v278 = vpop.permute.xlu0 %277
  %280 = vset.pattern.permute.xlu0 0
  %281 = vperm.xlu0 %280, %v44
  %v282 = vpop.permute.xlu0 %281
  %284 = vset.pattern.permute.xlu0 0
  %285 = vperm.xlu0 %284, %v45
  %v286 = vpop.permute.xlu0 %285
  %288 = vset.pattern.permute.xlu0 0
  %289 = vperm.xlu0 %288, %v46
  %v290 = vpop.permute.xlu0 %289
  %292 = vset.pattern.permute.xlu0 0
  %293 = vperm.xlu0 %292, %v47
  %v294 = vpop.permute.xlu0 %293
  %296 = vset.pattern.permute.xlu0 0
  %297 = vperm.xlu0 %296, %v48
  %v298 = vpop.permute.xlu0 %297
  %300 = vset.pattern.permute.xlu0 0
  %301 = vperm.xlu0 %300, %v49
  %v302 = vpop.permute.xlu0 %301
  %304 = vset.pattern.permute.xlu0 0
  %305 = vperm.xlu0 %304, %v50
  %v306 = vpop.permute.xlu0 %305
  %308 = vset.pattern.permute.xlu0 0
  %309 = vperm.xlu0 %308, %v51
  %v310 = vpop.permute.xlu0 %309
  %vm311 = vcmask 1046528
  %v312 = vrot.slane %v250, 1
  %v313 = vrot.slane %v254, 1
  %v314 = vsel %vm311, %v312, %v313
  %v315 = vrot.slane %v258, 1
  %v316 = vsel %vm311, %v313, %v315
  %v317 = vrot.slane %v262, 1
  %v318 = vsel %vm311, %v315, %v317
  %v319 = vrot.slane %v266, 1
  %v320 = vsel %vm311, %v317, %v319
  %v321 = vrot.slane %v270, 1
  %v322 = vsel %vm311, %v319, %v321
  %v323 = vrot.slane %v274, 1
  %v324 = vsel %vm311, %v321, %v323
  %v325 = vrot.slane %v278, 1
  %v326 = vsel %vm311, %v323, %v325
  %v327 = vrot.slane %v282, 1
  %v328 = vsel %vm311, %v325, %v327
  %v329 = vrot.slane %v286, 1
  %v330 = vsel %vm311, %v327, %v329
  %v331 = vrot.slane %v290, 1
  %v332 = vsel %vm311, %v329, %v331
  %v333 = vrot.slane %v294, 1
  %v334 = vsel %vm311, %v331, %v333
  %v335 = vrot.slane %v298, 1
  %v336 = vsel %vm311, %v333, %v335
  %v337 = vrot.slane %v302, 1
  %v338 = vsel %vm311, %v335, %v337
  %v339 = vrot.slane %v306, 1
  %v340 = vsel %vm311, %v337, %v339
  %v341 = vrot.slane %v310, 1
  %v342 = vsel %vm311, %v339, %v341
  %v360 = vmul.f32 %v239, %v312
  %v361 = vmul.f32 %v244, %v314
  %v362 = vmul.f32 %v169, %v316
  %v363 = vmul.f32 %v174, %v318
  %v364 = vmul.f32 %v179, %v320
  %v365 = vmul.f32 %v184, %v322
  %v366 = vmul.f32 %v189, %v324
  %v367 = vmul.f32 %v194, %v326
  %v368 = vmul.f32 %v199, %v328
  %v369 = vmul.f32 %v204, %v330
  %v370 = vmul.f32 %v209, %v332
  %v371 = vmul.f32 %v214, %v334
  %v372 = vmul.f32 %v219, %v336
  %v373 = vmul.f32 %v224, %v338
  %v374 = vmul.f32 %v229, %v340
  %v375 = vmul.f32 %v234, %v342
  %v376 = vmul.f32 %v239, %v341
  %377 = vset.pattern.permute.xlu0 1
  %378 = vperm.xlu0 %377, %v36
  %v379 = vpop.permute.xlu0 %378
  %381 = vset.pattern.permute.xlu0 1
  %382 = vperm.xlu0 %381, %v37
  %v383 = vpop.permute.xlu0 %382
  %385 = vset.pattern.permute.xlu0 1
  %386 = vperm.xlu0 %385, %v38
  %v387 = vpop.permute.xlu0 %386
  %389 = vset.pattern.permute.xlu0 1
  %390 = vperm.xlu0 %389, %v39
  %v391 = vpop.permute.xlu0 %390
  %393 = vset.pattern.permute.xlu0 1
  %394 = vperm.xlu0 %393, %v40
  %v395 = vpop.permute.xlu0 %394
  %397 = vset.pattern.permute.xlu0 1
  %398 = vperm.xlu0 %397, %v41
  %v399 = vpop.permute.xlu0 %398
  %401 = vset.pattern.permute.xlu0 1
  %402 = vperm.xlu0 %401, %v42
  %v403 = vpop.permute.xlu0 %402
  %405 = vset.pattern.permute.xlu0 1
  %406 = vperm.xlu0 %405, %v43
  %v407 = vpop.permute.xlu0 %406
  %409 = vset.pattern.permute.xlu0 1
  %410 = vperm.xlu0 %409, %v44
  %v411 = vpop.permute.xlu0 %410
  %413 = vset.pattern.permute.xlu0 1
  %414 = vperm.xlu0 %413, %v45
  %v415 = vpop.permute.xlu0 %414
  %417 = vset.pattern.permute.xlu0 1
  %418 = vperm.xlu0 %417, %v46
  %v419 = vpop.permute.xlu0 %418
  %421 = vset.pattern.permute.xlu0 1
  %422 = vperm.xlu0 %421, %v47
  %v423 = vpop.permute.xlu0 %422
  %425 = vset.pattern.permute.xlu0 1
  %426 = vperm.xlu0 %425, %v48
  %v427 = vpop.permute.xlu0 %426
  %429 = vset.pattern.permute.xlu0 1
  %430 = vperm.xlu0 %429, %v49
  %v431 = vpop.permute.xlu0 %430
  %433 = vset.pattern.permute.xlu0 1
  %434 = vperm.xlu0 %433, %v50
  %v435 = vpop.permute.xlu0 %434
  %437 = vset.pattern.permute.xlu0 1
  %438 = vperm.xlu0 %437, %v51
  %v439 = vpop.permute.xlu0 %438
  %v441 = vmul.f32 %v244, %v379
  %v442 = vmul.f32 %v169, %v383
  %v443 = vmul.f32 %v174, %v387
  %v444 = vmul.f32 %v179, %v391
  %v445 = vmul.f32 %v184, %v395
  %v446 = vmul.f32 %v189, %v399
  %v447 = vmul.f32 %v194, %v403
  %v448 = vmul.f32 %v199, %v407
  %v449 = vmul.f32 %v204, %v411
  %v450 = vmul.f32 %v209, %v415
  %v451 = vmul.f32 %v214, %v419
  %v452 = vmul.f32 %v219, %v423
  %v453 = vmul.f32 %v224, %v427
  %v454 = vmul.f32 %v229, %v431
  %v455 = vmul.f32 %v234, %v435
  %v456 = vmul.f32 %v239, %v439
  %v473 = vrot.slane %v441, 1
  %v474 = vrot.slane %v442, 1
  %v475 = vsel %vm311, %v473, %v474
  %v476 = vrot.slane %v443, 1
  %v477 = vsel %vm311, %v474, %v476
  %v478 = vrot.slane %v444, 1
  %v479 = vsel %vm311, %v476, %v478
  %v480 = vrot.slane %v445, 1
  %v481 = vsel %vm311, %v478, %v480
  %v482 = vrot.slane %v446, 1
  %v483 = vsel %vm311, %v480, %v482
  %v484 = vrot.slane %v447, 1
  %v485 = vsel %vm311, %v482, %v484
  %v486 = vrot.slane %v448, 1
  %v487 = vsel %vm311, %v484, %v486
  %v488 = vrot.slane %v449, 1
  %v489 = vsel %vm311, %v486, %v488
  %v490 = vrot.slane %v450, 1
  %v491 = vsel %vm311, %v488, %v490
  %v492 = vrot.slane %v451, 1
  %v493 = vsel %vm311, %v490, %v492
  %v494 = vrot.slane %v452, 1
  %v495 = vsel %vm311, %v492, %v494
  %v496 = vrot.slane %v453, 1
  %v497 = vsel %vm311, %v494, %v496
  %v498 = vrot.slane %v454, 1
  %v499 = vsel %vm311, %v496, %v498
  %v500 = vrot.slane %v455, 1
  %v501 = vsel %vm311, %v498, %v500
  %v502 = vrot.slane %v456, 1
  %v503 = vsel %vm311, %v500, %v502
  %504 = vrot.lane.b32.xlu0 %v473, 112
  %v505 = vpop.permute.xlu0 %504
  %506 = vrot.lane.b32.xlu0 %v475, 112
  %v507 = vpop.permute.xlu0 %506
  %508 = vrot.lane.b32.xlu0 %v477, 112
  %v509 = vpop.permute.xlu0 %508
  %510 = vrot.lane.b32.xlu0 %v479, 112
  %v511 = vpop.permute.xlu0 %510
  %512 = vrot.lane.b32.xlu0 %v481, 112
  %v513 = vpop.permute.xlu0 %512
  %514 = vrot.lane.b32.xlu0 %v483, 112
  %v515 = vpop.permute.xlu0 %514
  %516 = vrot.lane.b32.xlu0 %v485, 112
  %v517 = vpop.permute.xlu0 %516
  %518 = vrot.lane.b32.xlu0 %v487, 112
  %v519 = vpop.permute.xlu0 %518
  %520 = vrot.lane.b32.xlu0 %v489, 112
  %v521 = vpop.permute.xlu0 %520
  %522 = vrot.lane.b32.xlu0 %v491, 112
  %v523 = vpop.permute.xlu0 %522
  %524 = vrot.lane.b32.xlu0 %v493, 112
  %v525 = vpop.permute.xlu0 %524
  %526 = vrot.lane.b32.xlu0 %v495, 112
  %v527 = vpop.permute.xlu0 %526
  %528 = vrot.lane.b32.xlu0 %v497, 112
  %v529 = vpop.permute.xlu0 %528
  %530 = vrot.lane.b32.xlu0 %v499, 112
  %v531 = vpop.permute.xlu0 %530
  %532 = vrot.lane.b32.xlu0 %v501, 112
  %v533 = vpop.permute.xlu0 %532
  %534 = vrot.lane.b32.xlu0 %v503, 112
  %v535 = vpop.permute.xlu0 %534
  %536 = vrot.lane.b32.xlu0 %v502, 112
  %v537 = vpop.permute.xlu0 %536
  %v555 = vadd.f32 %v360, %v505
  %v556 = vadd.f32 %v361, %v507
  %v557 = vadd.f32 %v362, %v509
  %v558 = vadd.f32 %v363, %v511
  %v559 = vadd.f32 %v364, %v513
  %v560 = vadd.f32 %v365, %v515
  %v561 = vadd.f32 %v366, %v517
  %v562 = vadd.f32 %v367, %v519
  %v563 = vadd.f32 %v368, %v521
  %v564 = vadd.f32 %v369, %v523
  %v565 = vadd.f32 %v370, %v525
  %v566 = vadd.f32 %v371, %v527
  %v567 = vadd.f32 %v372, %v529
  %v568 = vadd.f32 %v373, %v531
  %v569 = vadd.f32 %v374, %v533
  %v570 = vadd.f32 %v375, %v535
  %v571 = vadd.f32 %v376, %v537
  %572 = vset.pattern.permute.xlu0 2
  %573 = vperm.xlu0 %572, %v36
  %v574 = vpop.permute.xlu0 %573
  %575 = vset.pattern.permute.xlu0 2
  %576 = vperm.xlu0 %575, %v37
  %v577 = vpop.permute.xlu0 %576
  %578 = vset.pattern.permute.xlu0 2
  %579 = vperm.xlu0 %578, %v38
  %v580 = vpop.permute.xlu0 %579
  %581 = vset.pattern.permute.xlu0 2
  %582 = vperm.xlu0 %581, %v39
  %v583 = vpop.permute.xlu0 %582
  %584 = vset.pattern.permute.xlu0 2
  %585 = vperm.xlu0 %584, %v40
  %v586 = vpop.permute.xlu0 %585
  %587 = vset.pattern.permute.xlu0 2
  %588 = vperm.xlu0 %587, %v41
  %v589 = vpop.permute.xlu0 %588
  %590 = vset.pattern.permute.xlu0 2
  %591 = vperm.xlu0 %590, %v42
  %v592 = vpop.permute.xlu0 %591
  %593 = vset.pattern.permute.xlu0 2
  %594 = vperm.xlu0 %593, %v43
  %v595 = vpop.permute.xlu0 %594
  %596 = vset.pattern.permute.xlu0 2
  %597 = vperm.xlu0 %596, %v44
  %v598 = vpop.permute.xlu0 %597
  %599 = vset.pattern.permute.xlu0 2
  %600 = vperm.xlu0 %599, %v45
  %v601 = vpop.permute.xlu0 %600
  %602 = vset.pattern.permute.xlu0 2
  %603 = vperm.xlu0 %602, %v46
  %v604 = vpop.permute.xlu0 %603
  %605 = vset.pattern.permute.xlu0 2
  %606 = vperm.xlu0 %605, %v47
  %v607 = vpop.permute.xlu0 %606
  %608 = vset.pattern.permute.xlu0 2
  %609 = vperm.xlu0 %608, %v48
  %v610 = vpop.permute.xlu0 %609
  %611 = vset.pattern.permute.xlu0 2
  %612 = vperm.xlu0 %611, %v49
  %v613 = vpop.permute.xlu0 %612
  %614 = vset.pattern.permute.xlu0 2
  %615 = vperm.xlu0 %614, %v50
  %v616 = vpop.permute.xlu0 %615
  %617 = vset.pattern.permute.xlu0 2
  %618 = vperm.xlu0 %617, %v51
  %v619 = vpop.permute.xlu0 %618
  %vm620 = vcmask 1040384
  %v621 = vrot.slane %v574, 7
  %v622 = vrot.slane %v577, 7
  %v623 = vsel %vm620, %v621, %v622
  %v624 = vrot.slane %v580, 7
  %v625 = vsel %vm620, %v622, %v624
  %v626 = vrot.slane %v583, 7
  %v627 = vsel %vm620, %v624, %v626
  %v628 = vrot.slane %v586, 7
  %v629 = vsel %vm620, %v626, %v628
  %v630 = vrot.slane %v589, 7
  %v631 = vsel %vm620, %v628, %v630
  %v632 = vrot.slane %v592, 7
  %v633 = vsel %vm620, %v630, %v632
  %v634 = vrot.slane %v595, 7
  %v635 = vsel %vm620, %v632, %v634
  %v636 = vrot.slane %v598, 7
  %v637 = vsel %vm620, %v634, %v636
  %v638 = vrot.slane %v601, 7
  %v639 = vsel %vm620, %v636, %v638
  %v640 = vrot.slane %v604, 7
  %v641 = vsel %vm620, %v638, %v640
  %v642 = vrot.slane %v607, 7
  %v643 = vsel %vm620, %v640, %v642
  %v644 = vrot.slane %v610, 7
  %v645 = vsel %vm620, %v642, %v644
  %v646 = vrot.slane %v613, 7
  %v647 = vsel %vm620, %v644, %v646
  %v648 = vrot.slane %v616, 7
  %v649 = vsel %vm620, %v646, %v648
  %v650 = vrot.slane %v619, 7
  %v651 = vsel %vm620, %v648, %v650
  %v669 = vmul.f32 %v244, %v621
  %v670 = vmul.f32 %v169, %v623
  %v671 = vmul.f32 %v174, %v625
  %v672 = vmul.f32 %v179, %v627
  %v673 = vmul.f32 %v184, %v629
  %v674 = vmul.f32 %v189, %v631
  %v675 = vmul.f32 %v194, %v633
  %v676 = vmul.f32 %v199, %v635
  %v677 = vmul.f32 %v204, %v637
  %v678 = vmul.f32 %v209, %v639
  %v679 = vmul.f32 %v214, %v641
  %v680 = vmul.f32 %v219, %v643
  %v681 = vmul.f32 %v224, %v645
  %v682 = vmul.f32 %v229, %v647
  %v683 = vmul.f32 %v234, %v649
  %v684 = vmul.f32 %v239, %v651
  %v685 = vmul.f32 %v244, %v650
  %vm703 = vcmask 1045504
  %v704 = vrot.slane %v669, 2
  %v705 = vrot.slane %v670, 2
  %v706 = vsel %vm703, %v704, %v705
  %v707 = vrot.slane %v671, 2
  %v708 = vsel %vm703, %v705, %v707
  %v709 = vrot.slane %v672, 2
  %v710 = vsel %vm703, %v707, %v709
  %v711 = vrot.slane %v673, 2
  %v712 = vsel %vm703, %v709, %v711
  %v713 = vrot.slane %v674, 2
  %v714 = vsel %vm703, %v711, %v713
  %v715 = vrot.slane %v675, 2
  %v716 = vsel %vm703, %v713, %v715
  %v717 = vrot.slane %v676, 2
  %v718 = vsel %vm703, %v715, %v717
  %v719 = vrot.slane %v677, 2
  %v720 = vsel %vm703, %v717, %v719
  %v721 = vrot.slane %v678, 2
  %v722 = vsel %vm703, %v719, %v721
  %v723 = vrot.slane %v679, 2
  %v724 = vsel %vm703, %v721, %v723
  %v725 = vrot.slane %v680, 2
  %v726 = vsel %vm703, %v723, %v725
  %v727 = vrot.slane %v681, 2
  %v728 = vsel %vm703, %v725, %v727
  %v729 = vrot.slane %v682, 2
  %v730 = vsel %vm703, %v727, %v729
  %v731 = vrot.slane %v683, 2
  %v732 = vsel %vm703, %v729, %v731
  %v733 = vrot.slane %v684, 2
  %v734 = vsel %vm703, %v731, %v733
  %v735 = vrot.slane %v685, 2
  %v736 = vsel %vm703, %v733, %v735
  %737 = vrot.lane.b32.xlu0 %v704, 96
  %v738 = vpop.permute.xlu0 %737
  %739 = vrot.lane.b32.xlu0 %v706, 96
  %v740 = vpop.permute.xlu0 %739
  %741 = vrot.lane.b32.xlu0 %v708, 96
  %v742 = vpop.permute.xlu0 %741
  %743 = vrot.lane.b32.xlu0 %v710, 96
  %v744 = vpop.permute.xlu0 %743
  %745 = vrot.lane.b32.xlu0 %v712, 96
  %v746 = vpop.permute.xlu0 %745
  %747 = vrot.lane.b32.xlu0 %v714, 96
  %v748 = vpop.permute.xlu0 %747
  %749 = vrot.lane.b32.xlu0 %v716, 96
  %v750 = vpop.permute.xlu0 %749
  %751 = vrot.lane.b32.xlu0 %v718, 96
  %v752 = vpop.permute.xlu0 %751
  %753 = vrot.lane.b32.xlu0 %v720, 96
  %v754 = vpop.permute.xlu0 %753
  %755 = vrot.lane.b32.xlu0 %v722, 96
  %v756 = vpop.permute.xlu0 %755
  %757 = vrot.lane.b32.xlu0 %v724, 96
  %v758 = vpop.permute.xlu0 %757
  %759 = vrot.lane.b32.xlu0 %v726, 96
  %v760 = vpop.permute.xlu0 %759
  %761 = vrot.lane.b32.xlu0 %v728, 96
  %v762 = vpop.permute.xlu0 %761
  %763 = vrot.lane.b32.xlu0 %v730, 96
  %v764 = vpop.permute.xlu0 %763
  %765 = vrot.lane.b32.xlu0 %v732, 96
  %v766 = vpop.permute.xlu0 %765
  %767 = vrot.lane.b32.xlu0 %v734, 96
  %v768 = vpop.permute.xlu0 %767
  %769 = vrot.lane.b32.xlu0 %v736, 96
  %v770 = vpop.permute.xlu0 %769
  %v788 = vadd.f32 %v555, %v738
  %v789 = vadd.f32 %v556, %v740
  %v790 = vadd.f32 %v557, %v742
  %v791 = vadd.f32 %v558, %v744
  %v792 = vadd.f32 %v559, %v746
  %v793 = vadd.f32 %v560, %v748
  %v794 = vadd.f32 %v561, %v750
  %v795 = vadd.f32 %v562, %v752
  %v796 = vadd.f32 %v563, %v754
  %v797 = vadd.f32 %v564, %v756
  %v798 = vadd.f32 %v565, %v758
  %v799 = vadd.f32 %v566, %v760
  %v800 = vadd.f32 %v567, %v762
  %v801 = vadd.f32 %v568, %v764
  %v802 = vadd.f32 %v569, %v766
  %v803 = vadd.f32 %v570, %v768
  %v804 = vadd.f32 %v571, %v770
  %806 = vrot.lane.b32.xlu0 %v52, 80
  %v807 = vpop.permute.xlu0 %806
  %809 = vmatprep.subr.mxu0 0.0
  %810 = vmatpush1.msra.mxu0 %v807
  %811 = vmatprep.subr.mxu0 0.0
  %812 = vmatpush1.msra.mxu0 0.0
  %813 = vmatprep.subr.mxu0 0.0
  %814 = vmatpush1.msra.mxu0 0.0
  %815 = vmatprep.subr.mxu0 0.0
  %816 = vmatpush1.msra.mxu0 0.0
  %817 = vmatprep.subr.mxu0 0.0
  %818 = vmatpush1.msra.mxu0 0.0
  %819 = vmatprep.subr.mxu0 0.0
  %820 = vmatpush1.msra.mxu0 0.0
  %821 = vmatprep.subr.mxu0 0.0
  %822 = vmatpush1.msra.mxu0 0.0
  %823 = vmatprep.subr.mxu0 0.0
  %824 = vmatpush1.msra.mxu0 0.0
  %825 = vmatprep.subr.mxu0 0.0
  %826 = vmatpush1.msra.mxu0 0.0
  %827 = vmatprep.subr.mxu0 0.0
  %828 = vmatpush1.msra.mxu0 0.0
  %829 = vmatprep.subr.mxu0 0.0
  %830 = vmatpush1.msra.mxu0 0.0
  %831 = vmatprep.subr.mxu0 0.0
  %832 = vmatpush1.msra.mxu0 0.0
  %833 = vmatprep.subr.mxu0 0.0
  %834 = vmatpush1.msra.mxu0 0.0
  %835 = vmatprep.subr.mxu0 0.0
  %836 = vmatpush1.msra.mxu0 0.0
  %837 = vmatprep.subr.mxu0 0.0
  %838 = vmatpush1.msra.mxu0 0.0
  %839 = vmatprep.subr.mxu0 0.0
  %840 = vmatpush1.msra.mxu0 0.0
  %841 = vmatprep.subr.mxu0 0.0
  %842 = vmatpush1.msra.mxu0 0.0
  %843 = vmatprep.subr.mxu0 0.0
  %844 = vmatpush1.msra.mxu0 0.0
  %845 = vmatprep.subr.mxu0 0.0
  %846 = vmatpush1.msra.mxu0 0.0
  %847 = vmatprep.subr.mxu0 0.0
  %848 = vmatpush1.msra.mxu0 0.0
  %849 = vmatprep.subr.mxu0 0.0
  %850 = vmatpush1.msra.mxu0 0.0
  %851 = vmatprep.subr.mxu0 0.0
  %852 = vmatpush1.msra.mxu0 0.0
  %853 = vmatprep.subr.mxu0 0.0
  %854 = vmatpush1.msra.mxu0 0.0
  %855 = vmatprep.subr.mxu0 0.0
  %856 = vmatpush1.msra.mxu0 0.0
  %857 = vmatprep.subr.mxu0 0.0
  %858 = vmatpush1.msra.mxu0 0.0
  %859 = vmatprep.subr.mxu0 0.0
  %860 = vmatpush1.msra.mxu0 0.0
  %861 = vmatprep.subr.mxu0 0.0
  %862 = vmatpush1.msra.mxu0 0.0
  %863 = vmatprep.subr.mxu0 0.0
  %864 = vmatpush1.msra.mxu0 0.0
  %865 = vmatprep.subr.mxu0 0.0
  %866 = vmatpush1.msra.mxu0 0.0
  %867 = vmatprep.subr.mxu0 0.0
  %868 = vmatpush1.msra.mxu0 0.0
  %869 = vmatprep.subr.mxu0 0.0
  %870 = vmatpush1.msra.mxu0 0.0
  %871 = vmatprep.subr.mxu0 0.0
  %872 = vmatpush1.msra.mxu0 0.0
  %873 = vmatprep.mubr.f32.mxu0 0.0
  %874 = vmatmul.mubr.f32.gmra.mrb[0].mxu0 %v55
  %v875 = vpop.f32.mrb[0].mxu0
  %v876 = vadd.f32 0.0, %v875
  %v877 = vpop.f32.mrb[0].mxu0
  %878 = vmatprep.mubr.f32.mxu0 0.0
  %879 = vmatmul.mubr.f32.gmra.mrb[0].mxu0 %v58
  %v880 = vpop.f32.mrb[0].mxu0
  %v881 = vadd.f32 0.0, %v880
  %v882 = vpop.f32.mrb[0].mxu0
  %883 = vmatprep.mubr.f32.mxu0 0.0
  %884 = vmatmul.mubr.f32.gmra.mrb[0].mxu0 %v61
  %v885 = vpop.f32.mrb[0].mxu0
  %v886 = vadd.f32 0.0, %v885
  %v887 = vpop.f32.mrb[0].mxu0
  %888 = vmatprep.mubr.f32.mxu0 0.0
  %889 = vmatmul.mubr.f32.gmra.mrb[0].mxu0 %v64
  %v890 = vpop.f32.mrb[0].mxu0
  %v891 = vadd.f32 0.0, %v890
  %v892 = vpop.f32.mrb[0].mxu0
  %893 = vmatprep.mubr.f32.mxu0 0.0
  %894 = vmatmul.mubr.f32.gmra.mrb[0].mxu0 %v67
  %v895 = vpop.f32.mrb[0].mxu0
  %v896 = vadd.f32 0.0, %v895
  %v897 = vpop.f32.mrb[0].mxu0
  %898 = vmatprep.mubr.f32.mxu0 0.0
  %899 = vmatmul.mubr.f32.gmra.mrb[0].mxu0 %v70
  %v900 = vpop.f32.mrb[0].mxu0
  %v901 = vadd.f32 0.0, %v900
  %v902 = vpop.f32.mrb[0].mxu0
  %903 = vmatprep.mubr.f32.mxu0 0.0
  %904 = vmatmul.mubr.f32.gmra.mrb[0].mxu0 %v73
  %v905 = vpop.f32.mrb[0].mxu0
  %v906 = vadd.f32 0.0, %v905
  %v907 = vpop.f32.mrb[0].mxu0
  %908 = vmatprep.mubr.f32.mxu0 0.0
  %909 = vmatmul.mubr.f32.gmra.mrb[0].mxu0 %v76
  %v910 = vpop.f32.mrb[0].mxu0
  %v911 = vadd.f32 0.0, %v910
  %v912 = vpop.f32.mrb[0].mxu0
  %913 = vmatprep.mubr.f32.mxu0 0.0
  %914 = vmatmul.mubr.f32.gmra.mrb[0].mxu0 %v79
  %v915 = vpop.f32.mrb[0].mxu0
  %v916 = vadd.f32 0.0, %v915
  %v917 = vpop.f32.mrb[0].mxu0
  %918 = vmatprep.mubr.f32.mxu0 0.0
  %919 = vmatmul.mubr.f32.gmra.mrb[0].mxu0 %v82
  %v920 = vpop.f32.mrb[0].mxu0
  %v921 = vadd.f32 0.0, %v920
  %v922 = vpop.f32.mrb[0].mxu0
  %923 = vmatprep.mubr.f32.mxu0 0.0
  %924 = vmatmul.mubr.f32.gmra.mrb[0].mxu0 %v85
  %v925 = vpop.f32.mrb[0].mxu0
  %v926 = vadd.f32 0.0, %v925
  %v927 = vpop.f32.mrb[0].mxu0
  %928 = vmatprep.mubr.f32.mxu0 0.0
  %929 = vmatmul.mubr.f32.gmra.mrb[0].mxu0 %v88
  %v930 = vpop.f32.mrb[0].mxu0
  %v931 = vadd.f32 0.0, %v930
  %v932 = vpop.f32.mrb[0].mxu0
  %933 = vmatprep.mubr.f32.mxu0 0.0
  %934 = vmatmul.mubr.f32.gmra.mrb[0].mxu0 %v91
  %v935 = vpop.f32.mrb[0].mxu0
  %v936 = vadd.f32 0.0, %v935
  %v937 = vpop.f32.mrb[0].mxu0
  %938 = vmatprep.mubr.f32.mxu0 0.0
  %939 = vmatmul.mubr.f32.gmra.mrb[0].mxu0 %v94
  %v940 = vpop.f32.mrb[0].mxu0
  %v941 = vadd.f32 0.0, %v940
  %v942 = vpop.f32.mrb[0].mxu0
  %943 = vmatprep.mubr.f32.mxu0 0.0
  %944 = vmatmul.mubr.f32.gmra.mrb[0].mxu0 %v97
  %v945 = vpop.f32.mrb[0].mxu0
  %v946 = vadd.f32 0.0, %v945
  %v947 = vpop.f32.mrb[0].mxu0
  %948 = vmatprep.mubr.f32.mxu0 0.0
  %949 = vmatmul.mubr.f32.gmra.mrb[0].mxu0 %v100
  %v950 = vpop.f32.mrb[0].mxu0
  %v951 = vadd.f32 0.0, %v950
  %v952 = vpop.f32.mrb[0].mxu0
  %953 = vdwg.mxu0
  %954 = vset.pattern.permute.xlu0 3
  %955 = vperm.xlu0 %954, %v36
  %v956 = vpop.permute.xlu0 %955
  %957 = vset.pattern.permute.xlu0 3
  %958 = vperm.xlu0 %957, %v37
  %v959 = vpop.permute.xlu0 %958
  %960 = vset.pattern.permute.xlu0 3
  %961 = vperm.xlu0 %960, %v38
  %v962 = vpop.permute.xlu0 %961
  %963 = vset.pattern.permute.xlu0 3
  %964 = vperm.xlu0 %963, %v39
  %v965 = vpop.permute.xlu0 %964
  %966 = vset.pattern.permute.xlu0 3
  %967 = vperm.xlu0 %966, %v40
  %v968 = vpop.permute.xlu0 %967
  %969 = vset.pattern.permute.xlu0 3
  %970 = vperm.xlu0 %969, %v41
  %v971 = vpop.permute.xlu0 %970
  %972 = vset.pattern.permute.xlu0 3
  %973 = vperm.xlu0 %972, %v42
  %v974 = vpop.permute.xlu0 %973
  %975 = vset.pattern.permute.xlu0 3
  %976 = vperm.xlu0 %975, %v43
  %v977 = vpop.permute.xlu0 %976
  %978 = vset.pattern.permute.xlu0 3
  %979 = vperm.xlu0 %978, %v44
  %v980 = vpop.permute.xlu0 %979
  %981 = vset.pattern.permute.xlu0 3
  %982 = vperm.xlu0 %981, %v45
  %v983 = vpop.permute.xlu0 %982
  %984 = vset.pattern.permute.xlu0 3
  %985 = vperm.xlu0 %984, %v46
  %v986 = vpop.permute.xlu0 %985
  %987 = vset.pattern.permute.xlu0 3
  %988 = vperm.xlu0 %987, %v47
  %v989 = vpop.permute.xlu0 %988
  %990 = vset.pattern.permute.xlu0 3
  %991 = vperm.xlu0 %990, %v48
  %v992 = vpop.permute.xlu0 %991
  %993 = vset.pattern.permute.xlu0 3
  %994 = vperm.xlu0 %993, %v49
  %v995 = vpop.permute.xlu0 %994
  %996 = vset.pattern.permute.xlu0 3
  %997 = vperm.xlu0 %996, %v50
  %v998 = vpop.permute.xlu0 %997
  %999 = vset.pattern.permute.xlu0 3
  %1000 = vperm.xlu0 %999, %v51
  %v1001 = vpop.permute.xlu0 %1000
  %v1002 = vrot.slane %v956, 1
  %v1003 = vrot.slane %v959, 1
  %v1004 = vsel %vm311, %v1002, %v1003
  %v1005 = vrot.slane %v962, 1
  %v1006 = vsel %vm311, %v1003, %v1005
  %v1007 = vrot.slane %v965, 1
  %v1008 = vsel %vm311, %v1005, %v1007
  %v1009 = vrot.slane %v968, 1
  %v1010 = vsel %vm311, %v1007, %v1009
  %v1011 = vrot.slane %v971, 1
  %v1012 = vsel %vm311, %v1009, %v1011
  %v1013 = vrot.slane %v974, 1
  %v1014 = vsel %vm311, %v1011, %v1013
  %v1015 = vrot.slane %v977, 1
  %v1016 = vsel %vm311, %v1013, %v1015
  %v1017 = vrot.slane %v980, 1
  %v1018 = vsel %vm311, %v1015, %v1017
  %v1019 = vrot.slane %v983, 1
  %v1020 = vsel %vm311, %v1017, %v1019
  %v1021 = vrot.slane %v986, 1
  %v1022 = vsel %vm311, %v1019, %v1021
  %v1023 = vrot.slane %v989, 1
  %v1024 = vsel %vm311, %v1021, %v1023
  %v1025 = vrot.slane %v992, 1
  %v1026 = vsel %vm311, %v1023, %v1025
  %v1027 = vrot.slane %v995, 1
  %v1028 = vsel %vm311, %v1025, %v1027
  %v1029 = vrot.slane %v998, 1
  %v1030 = vsel %vm311, %v1027, %v1029
  %v1031 = vrot.slane %v1001, 1
  %v1032 = vsel %vm311, %v1029, %v1031
  %v1050 = vmul.f32 %v951, %v1002
  %v1051 = vmul.f32 %v876, %v1004
  %v1052 = vmul.f32 %v881, %v1006
  %v1053 = vmul.f32 %v886, %v1008
  %v1054 = vmul.f32 %v891, %v1010
  %v1055 = vmul.f32 %v896, %v1012
  %v1056 = vmul.f32 %v901, %v1014
  %v1057 = vmul.f32 %v906, %v1016
  %v1058 = vmul.f32 %v911, %v1018
  %v1059 = vmul.f32 %v916, %v1020
  %v1060 = vmul.f32 %v921, %v1022
  %v1061 = vmul.f32 %v926, %v1024
  %v1062 = vmul.f32 %v931, %v1026
  %v1063 = vmul.f32 %v936, %v1028
  %v1064 = vmul.f32 %v941, %v1030
  %v1065 = vmul.f32 %v946, %v1032
  %v1066 = vmul.f32 %v951, %v1031
  %v1067 = vadd.f32 %v788, %v1050
  %v1068 = vadd.f32 %v789, %v1051
  %v1069 = vadd.f32 %v790, %v1052
  %v1070 = vadd.f32 %v791, %v1053
  %v1071 = vadd.f32 %v792, %v1054
  %v1072 = vadd.f32 %v793, %v1055
  %v1073 = vadd.f32 %v794, %v1056
  %v1074 = vadd.f32 %v795, %v1057
  %v1075 = vadd.f32 %v796, %v1058
  %v1076 = vadd.f32 %v797, %v1059
  %v1077 = vadd.f32 %v798, %v1060
  %v1078 = vadd.f32 %v799, %v1061
  %v1079 = vadd.f32 %v800, %v1062
  %v1080 = vadd.f32 %v801, %v1063
  %v1081 = vadd.f32 %v802, %v1064
  %v1082 = vadd.f32 %v803, %v1065
  %v1083 = vadd.f32 %v804, %v1066
  %1084 = vset.pattern.permute.xlu0 4
  %1085 = vperm.xlu0 %1084, %v36
  %v1086 = vpop.permute.xlu0 %1085
  %1088 = vset.pattern.permute.xlu0 4
  %1089 = vperm.xlu0 %1088, %v37
  %v1090 = vpop.permute.xlu0 %1089
  %1092 = vset.pattern.permute.xlu0 4
  %1093 = vperm.xlu0 %1092, %v38
  %v1094 = vpop.permute.xlu0 %1093
  %1096 = vset.pattern.permute.xlu0 4
  %1097 = vperm.xlu0 %1096, %v39
  %v1098 = vpop.permute.xlu0 %1097
  %1100 = vset.pattern.permute.xlu0 4
  %1101 = vperm.xlu0 %1100, %v40
  %v1102 = vpop.permute.xlu0 %1101
  %1104 = vset.pattern.permute.xlu0 4
  %1105 = vperm.xlu0 %1104, %v41
  %v1106 = vpop.permute.xlu0 %1105
  %1108 = vset.pattern.permute.xlu0 4
  %1109 = vperm.xlu0 %1108, %v42
  %v1110 = vpop.permute.xlu0 %1109
  %1112 = vset.pattern.permute.xlu0 4
  %1113 = vperm.xlu0 %1112, %v43
  %v1114 = vpop.permute.xlu0 %1113
  %1116 = vset.pattern.permute.xlu0 4
  %1117 = vperm.xlu0 %1116, %v44
  %v1118 = vpop.permute.xlu0 %1117
  %1120 = vset.pattern.permute.xlu0 4
  %1121 = vperm.xlu0 %1120, %v45
  %v1122 = vpop.permute.xlu0 %1121
  %1124 = vset.pattern.permute.xlu0 4
  %1125 = vperm.xlu0 %1124, %v46
  %v1126 = vpop.permute.xlu0 %1125
  %1128 = vset.pattern.permute.xlu0 4
  %1129 = vperm.xlu0 %1128, %v47
  %v1130 = vpop.permute.xlu0 %1129
  %1132 = vset.pattern.permute.xlu0 4
  %1133 = vperm.xlu0 %1132, %v48
  %v1134 = vpop.permute.xlu0 %1133
  %1136 = vset.pattern.permute.xlu0 4
  %1137 = vperm.xlu0 %1136, %v49
  %v1138 = vpop.permute.xlu0 %1137
  %1140 = vset.pattern.permute.xlu0 4
  %1141 = vperm.xlu0 %1140, %v50
  %v1142 = vpop.permute.xlu0 %1141
  %1144 = vset.pattern.permute.xlu0 4
  %1145 = vperm.xlu0 %1144, %v51
  %v1146 = vpop.permute.xlu0 %1145
  %v1148 = vmul.f32 %v876, %v1086
  %v1149 = vmul.f32 %v881, %v1090
  %v1150 = vmul.f32 %v886, %v1094
  %v1151 = vmul.f32 %v891, %v1098
  %v1152 = vmul.f32 %v896, %v1102
  %v1153 = vmul.f32 %v901, %v1106
  %v1154 = vmul.f32 %v906, %v1110
  %v1155 = vmul.f32 %v911, %v1114
  %v1156 = vmul.f32 %v916, %v1118
  %v1157 = vmul.f32 %v921, %v1122
  %v1158 = vmul.f32 %v926, %v1126
  %v1159 = vmul.f32 %v931, %v1130
  %v1160 = vmul.f32 %v936, %v1134
  %v1161 = vmul.f32 %v941, %v1138
  %v1162 = vmul.f32 %v946, %v1142
  %v1163 = vmul.f32 %v951, %v1146
  %v1180 = vrot.slane %v1148, 1
  %v1181 = vrot.slane %v1149, 1
  %v1182 = vsel %vm311, %v1180, %v1181
  %v1183 = vrot.slane %v1150, 1
  %v1184 = vsel %vm311, %v1181, %v1183
  %v1185 = vrot.slane %v1151, 1
  %v1186 = vsel %vm311, %v1183, %v1185
  %v1187 = vrot.slane %v1152, 1
  %v1188 = vsel %vm311, %v1185, %v1187
  %v1189 = vrot.slane %v1153, 1
  %v1190 = vsel %vm311, %v1187, %v1189
  %v1191 = vrot.slane %v1154, 1
  %v1192 = vsel %vm311, %v1189, %v1191
  %v1193 = vrot.slane %v1155, 1
  %v1194 = vsel %vm311, %v1191, %v1193
  %v1195 = vrot.slane %v1156, 1
  %v1196 = vsel %vm311, %v1193, %v1195
  %v1197 = vrot.slane %v1157, 1
  %v1198 = vsel %vm311, %v1195, %v1197
  %v1199 = vrot.slane %v1158, 1
  %v1200 = vsel %vm311, %v1197, %v1199
  %v1201 = vrot.slane %v1159, 1
  %v1202 = vsel %vm311, %v1199, %v1201
  %v1203 = vrot.slane %v1160, 1
  %v1204 = vsel %vm311, %v1201, %v1203
  %v1205 = vrot.slane %v1161, 1
  %v1206 = vsel %vm311, %v1203, %v1205
  %v1207 = vrot.slane %v1162, 1
  %v1208 = vsel %vm311, %v1205, %v1207
  %v1209 = vrot.slane %v1163, 1
  %v1210 = vsel %vm311, %v1207, %v1209
  %1211 = vrot.lane.b32.xlu0 %v1180, 112
  %v1212 = vpop.permute.xlu0 %1211
  %1213 = vrot.lane.b32.xlu0 %v1182, 112
  %v1214 = vpop.permute.xlu0 %1213
  %1215 = vrot.lane.b32.xlu0 %v1184, 112
  %v1216 = vpop.permute.xlu0 %1215
  %1217 = vrot.lane.b32.xlu0 %v1186, 112
  %v1218 = vpop.permute.xlu0 %1217
  %1219 = vrot.lane.b32.xlu0 %v1188, 112
  %v1220 = vpop.permute.xlu0 %1219
  %1221 = vrot.lane.b32.xlu0 %v1190, 112
  %v1222 = vpop.permute.xlu0 %1221
  %1223 = vrot.lane.b32.xlu0 %v1192, 112
  %v1224 = vpop.permute.xlu0 %1223
  %1225 = vrot.lane.b32.xlu0 %v1194, 112
  %v1226 = vpop.permute.xlu0 %1225
  %1227 = vrot.lane.b32.xlu0 %v1196, 112
  %v1228 = vpop.permute.xlu0 %1227
  %1229 = vrot.lane.b32.xlu0 %v1198, 112
  %v1230 = vpop.permute.xlu0 %1229
  %1231 = vrot.lane.b32.xlu0 %v1200, 112
  %v1232 = vpop.permute.xlu0 %1231
  %1233 = vrot.lane.b32.xlu0 %v1202, 112
  %v1234 = vpop.permute.xlu0 %1233
  %1235 = vrot.lane.b32.xlu0 %v1204, 112
  %v1236 = vpop.permute.xlu0 %1235
  %1237 = vrot.lane.b32.xlu0 %v1206, 112
  %v1238 = vpop.permute.xlu0 %1237
  %1239 = vrot.lane.b32.xlu0 %v1208, 112
  %v1240 = vpop.permute.xlu0 %1239
  %1241 = vrot.lane.b32.xlu0 %v1210, 112
  %v1242 = vpop.permute.xlu0 %1241
  %1243 = vrot.lane.b32.xlu0 %v1209, 112
  %v1244 = vpop.permute.xlu0 %1243
  %v1262 = vadd.f32 %v1067, %v1212
  %v1263 = vadd.f32 %v1068, %v1214
  %v1264 = vadd.f32 %v1069, %v1216
  %v1265 = vadd.f32 %v1070, %v1218
  %v1266 = vadd.f32 %v1071, %v1220
  %v1267 = vadd.f32 %v1072, %v1222
  %v1268 = vadd.f32 %v1073, %v1224
  %v1269 = vadd.f32 %v1074, %v1226
  %v1270 = vadd.f32 %v1075, %v1228
  %v1271 = vadd.f32 %v1076, %v1230
  %v1272 = vadd.f32 %v1077, %v1232
  %v1273 = vadd.f32 %v1078, %v1234
  %v1274 = vadd.f32 %v1079, %v1236
  %v1275 = vadd.f32 %v1080, %v1238
  %v1276 = vadd.f32 %v1081, %v1240
  %v1277 = vadd.f32 %v1082, %v1242
  %v1278 = vadd.f32 %v1083, %v1244
  %1279 = vset.pattern.permute.xlu0 5
  %1280 = vperm.xlu0 %1279, %v36
  %v1281 = vpop.permute.xlu0 %1280
  %1282 = vset.pattern.permute.xlu0 5
  %1283 = vperm.xlu0 %1282, %v37
  %v1284 = vpop.permute.xlu0 %1283
  %1285 = vset.pattern.permute.xlu0 5
  %1286 = vperm.xlu0 %1285, %v38
  %v1287 = vpop.permute.xlu0 %1286
  %1288 = vset.pattern.permute.xlu0 5
  %1289 = vperm.xlu0 %1288, %v39
  %v1290 = vpop.permute.xlu0 %1289
  %1291 = vset.pattern.permute.xlu0 5
  %1292 = vperm.xlu0 %1291, %v40
  %v1293 = vpop.permute.xlu0 %1292
  %1294 = vset.pattern.permute.xlu0 5
  %1295 = vperm.xlu0 %1294, %v41
  %v1296 = vpop.permute.xlu0 %1295
  %1297 = vset.pattern.permute.xlu0 5
  %1298 = vperm.xlu0 %1297, %v42
  %v1299 = vpop.permute.xlu0 %1298
  %1300 = vset.pattern.permute.xlu0 5
  %1301 = vperm.xlu0 %1300, %v43
  %v1302 = vpop.permute.xlu0 %1301
  %1303 = vset.pattern.permute.xlu0 5
  %1304 = vperm.xlu0 %1303, %v44
  %v1305 = vpop.permute.xlu0 %1304
  %1306 = vset.pattern.permute.xlu0 5
  %1307 = vperm.xlu0 %1306, %v45
  %v1308 = vpop.permute.xlu0 %1307
  %1309 = vset.pattern.permute.xlu0 5
  %1310 = vperm.xlu0 %1309, %v46
  %v1311 = vpop.permute.xlu0 %1310
  %1312 = vset.pattern.permute.xlu0 5
  %1313 = vperm.xlu0 %1312, %v47
  %v1314 = vpop.permute.xlu0 %1313
  %1315 = vset.pattern.permute.xlu0 5
  %1316 = vperm.xlu0 %1315, %v48
  %v1317 = vpop.permute.xlu0 %1316
  %1318 = vset.pattern.permute.xlu0 5
  %1319 = vperm.xlu0 %1318, %v49
  %v1320 = vpop.permute.xlu0 %1319
  %1321 = vset.pattern.permute.xlu0 5
  %1322 = vperm.xlu0 %1321, %v50
  %v1323 = vpop.permute.xlu0 %1322
  %1324 = vset.pattern.permute.xlu0 5
  %1325 = vperm.xlu0 %1324, %v51
  %v1326 = vpop.permute.xlu0 %1325
  %v1327 = vrot.slane %v1281, 7
  %v1328 = vrot.slane %v1284, 7
  %v1329 = vsel %vm620, %v1327, %v1328
  %v1330 = vrot.slane %v1287, 7
  %v1331 = vsel %vm620, %v1328, %v1330
  %v1332 = vrot.slane %v1290, 7
  %v1333 = vsel %vm620, %v1330, %v1332
  %v1334 = vrot.slane %v1293, 7
  %v1335 = vsel %vm620, %v1332, %v1334
  %v1336 = vrot.slane %v1296, 7
  %v1337 = vsel %vm620, %v1334, %v1336
  %v1338 = vrot.slane %v1299, 7
  %v1339 = vsel %vm620, %v1336, %v1338
  %v1340 = vrot.slane %v1302, 7
  %v1341 = vsel %vm620, %v1338, %v1340
  %v1342 = vrot.slane %v1305, 7
  %v1343 = vsel %vm620, %v1340, %v1342
  %v1344 = vrot.slane %v1308, 7
  %v1345 = vsel %vm620, %v1342, %v1344
  %v1346 = vrot.slane %v1311, 7
  %v1347 = vsel %vm620, %v1344, %v1346
  %v1348 = vrot.slane %v1314, 7
  %v1349 = vsel %vm620, %v1346, %v1348
  %v1350 = vrot.slane %v1317, 7
  %v1351 = vsel %vm620, %v1348, %v1350
  %v1352 = vrot.slane %v1320, 7
  %v1353 = vsel %vm620, %v1350, %v1352
  %v1354 = vrot.slane %v1323, 7
  %v1355 = vsel %vm620, %v1352, %v1354
  %v1356 = vrot.slane %v1326, 7
  %v1357 = vsel %vm620, %v1354, %v1356
  %v1375 = vmul.f32 %v876, %v1327
  %v1376 = vmul.f32 %v881, %v1329
  %v1377 = vmul.f32 %v886, %v1331
  %v1378 = vmul.f32 %v891, %v1333
  %v1379 = vmul.f32 %v896, %v1335
  %v1380 = vmul.f32 %v901, %v1337
  %v1381 = vmul.f32 %v906, %v1339
  %v1382 = vmul.f32 %v911, %v1341
  %v1383 = vmul.f32 %v916, %v1343
  %v1384 = vmul.f32 %v921, %v1345
  %v1385 = vmul.f32 %v926, %v1347
  %v1386 = vmul.f32 %v931, %v1349
  %v1387 = vmul.f32 %v936, %v1351
  %v1388 = vmul.f32 %v941, %v1353
  %v1389 = vmul.f32 %v946, %v1355
  %v1390 = vmul.f32 %v951, %v1357
  %v1391 = vmul.f32 %v876, %v1356
  %v1409 = vrot.slane %v1375, 2
  %v1410 = vrot.slane %v1376, 2
  %v1411 = vsel %vm703, %v1409, %v1410
  %v1412 = vrot.slane %v1377, 2
  %v1413 = vsel %vm703, %v1410, %v1412
  %v1414 = vrot.slane %v1378, 2
  %v1415 = vsel %vm703, %v1412, %v1414
  %v1416 = vrot.slane %v1379, 2
  %v1417 = vsel %vm703, %v1414, %v1416
  %v1418 = vrot.slane %v1380, 2
  %v1419 = vsel %vm703, %v1416, %v1418
  %v1420 = vrot.slane %v1381, 2
  %v1421 = vsel %vm703, %v1418, %v1420
  %v1422 = vrot.slane %v1382, 2
  %v1423 = vsel %vm703, %v1420, %v1422
  %v1424 = vrot.slane %v1383, 2
  %v1425 = vsel %vm703, %v1422, %v1424
  %v1426 = vrot.slane %v1384, 2
  %v1427 = vsel %vm703, %v1424, %v1426
  %v1428 = vrot.slane %v1385, 2
  %v1429 = vsel %vm703, %v1426, %v1428
  %v1430 = vrot.slane %v1386, 2
  %v1431 = vsel %vm703, %v1428, %v1430
  %v1432 = vrot.slane %v1387, 2
  %v1433 = vsel %vm703, %v1430, %v1432
  %v1434 = vrot.slane %v1388, 2
  %v1435 = vsel %vm703, %v1432, %v1434
  %v1436 = vrot.slane %v1389, 2
  %v1437 = vsel %vm703, %v1434, %v1436
  %v1438 = vrot.slane %v1390, 2
  %v1439 = vsel %vm703, %v1436, %v1438
  %v1440 = vrot.slane %v1391, 2
  %v1441 = vsel %vm703, %v1438, %v1440
  %1442 = vrot.lane.b32.xlu0 %v1409, 96
  %v1443 = vpop.permute.xlu0 %1442
  %1444 = vrot.lane.b32.xlu0 %v1411, 96
  %v1445 = vpop.permute.xlu0 %1444
  %1446 = vrot.lane.b32.xlu0 %v1413, 96
  %v1447 = vpop.permute.xlu0 %1446
  %1448 = vrot.lane.b32.xlu0 %v1415, 96
  %v1449 = vpop.permute.xlu0 %1448
  %1450 = vrot.lane.b32.xlu0 %v1417, 96
  %v1451 = vpop.permute.xlu0 %1450
  %1452 = vrot.lane.b32.xlu0 %v1419, 96
  %v1453 = vpop.permute.xlu0 %1452
  %1454 = vrot.lane.b32.xlu0 %v1421, 96
  %v1455 = vpop.permute.xlu0 %1454
  %1456 = vrot.lane.b32.xlu0 %v1423, 96
  %v1457 = vpop.permute.xlu0 %1456
  %1458 = vrot.lane.b32.xlu0 %v1425, 96
  %v1459 = vpop.permute.xlu0 %1458
  %1460 = vrot.lane.b32.xlu0 %v1427, 96
  %v1461 = vpop.permute.xlu0 %1460
  %1462 = vrot.lane.b32.xlu0 %v1429, 96
  %v1463 = vpop.permute.xlu0 %1462
  %1464 = vrot.lane.b32.xlu0 %v1431, 96
  %v1465 = vpop.permute.xlu0 %1464
  %1466 = vrot.lane.b32.xlu0 %v1433, 96
  %v1467 = vpop.permute.xlu0 %1466
  %1468 = vrot.lane.b32.xlu0 %v1435, 96
  %v1469 = vpop.permute.xlu0 %1468
  %1470 = vrot.lane.b32.xlu0 %v1437, 96
  %v1471 = vpop.permute.xlu0 %1470
  %1472 = vrot.lane.b32.xlu0 %v1439, 96
  %v1473 = vpop.permute.xlu0 %1472
  %1474 = vrot.lane.b32.xlu0 %v1441, 96
  %v1475 = vpop.permute.xlu0 %1474
  %v1493 = vadd.f32 %v1262, %v1443
  %v1494 = vadd.f32 %v1263, %v1445
  %v1495 = vadd.f32 %v1264, %v1447
  %v1496 = vadd.f32 %v1265, %v1449
  %v1497 = vadd.f32 %v1266, %v1451
  %v1498 = vadd.f32 %v1267, %v1453
  %v1499 = vadd.f32 %v1268, %v1455
  %v1500 = vadd.f32 %v1269, %v1457
  %v1501 = vadd.f32 %v1270, %v1459
  %v1502 = vadd.f32 %v1271, %v1461
  %v1503 = vadd.f32 %v1272, %v1463
  %v1504 = vadd.f32 %v1273, %v1465
  %v1505 = vadd.f32 %v1274, %v1467
  %v1506 = vadd.f32 %v1275, %v1469
  %v1507 = vadd.f32 %v1276, %v1471
  %v1508 = vadd.f32 %v1277, %v1473
  %v1509 = vadd.f32 %v1278, %v1475
  %v1510 = vld [vmem:[%s1] sm:$0xff]
  %v1511 = vld [vmem:[%s1 + $0x8] sm:$0xff]
  %1514 = vrot.lane.b32.xlu0 %v1510, 32
  %v1515 = vpop.permute.xlu0 %1514
  %1516 = vrot.lane.b32.xlu0 %v1511, 32
  %v1517 = vpop.permute.xlu0 %1516
  %vm1518 = vcmask 261120
  %v1519 = vsel %vm1518, %v1515, %v1517
  %1521 = vmatprep.subr.mxu0 0.0
  %1522 = vmatpush1.msra.mxu0 %v1519
  %1523 = vmatprep.subr.mxu0 0.0
  %1524 = vmatpush1.msra.mxu0 0.0
  %1525 = vmatprep.subr.mxu0 0.0
  %1526 = vmatpush1.msra.mxu0 0.0
  %1527 = vmatprep.subr.mxu0 0.0
  %1528 = vmatpush1.msra.mxu0 0.0
  %1529 = vmatprep.subr.mxu0 0.0
  %1530 = vmatpush1.msra.mxu0 0.0
  %1531 = vmatprep.subr.mxu0 0.0
  %1532 = vmatpush1.msra.mxu0 0.0
  %1533 = vmatprep.subr.mxu0 0.0
  %1534 = vmatpush1.msra.mxu0 0.0
  %1535 = vmatprep.subr.mxu0 0.0
  %1536 = vmatpush1.msra.mxu0 0.0
  %1537 = vmatprep.subr.mxu0 0.0
  %1538 = vmatpush1.msra.mxu0 0.0
  %1539 = vmatprep.subr.mxu0 0.0
  %1540 = vmatpush1.msra.mxu0 0.0
  %1541 = vmatprep.subr.mxu0 0.0
  %1542 = vmatpush1.msra.mxu0 0.0
  %1543 = vmatprep.subr.mxu0 0.0
  %1544 = vmatpush1.msra.mxu0 0.0
  %1545 = vmatprep.subr.mxu0 0.0
  %1546 = vmatpush1.msra.mxu0 0.0
  %1547 = vmatprep.subr.mxu0 0.0
  %1548 = vmatpush1.msra.mxu0 0.0
  %1549 = vmatprep.subr.mxu0 0.0
  %1550 = vmatpush1.msra.mxu0 0.0
  %1551 = vmatprep.subr.mxu0 0.0
  %1552 = vmatpush1.msra.mxu0 0.0
  %1553 = vmatprep.subr.mxu0 0.0
  %1554 = vmatpush1.msra.mxu0 0.0
  %1555 = vmatprep.subr.mxu0 0.0
  %1556 = vmatpush1.msra.mxu0 0.0
  %1557 = vmatprep.subr.mxu0 0.0
  %1558 = vmatpush1.msra.mxu0 0.0
  %1559 = vmatprep.subr.mxu0 0.0
  %1560 = vmatpush1.msra.mxu0 0.0
  %1561 = vmatprep.subr.mxu0 0.0
  %1562 = vmatpush1.msra.mxu0 0.0
  %1563 = vmatprep.subr.mxu0 0.0
  %1564 = vmatpush1.msra.mxu0 0.0
  %1565 = vmatprep.subr.mxu0 0.0
  %1566 = vmatpush1.msra.mxu0 0.0
  %1567 = vmatprep.subr.mxu0 0.0
  %1568 = vmatpush1.msra.mxu0 0.0
  %1569 = vmatprep.subr.mxu0 0.0
  %1570 = vmatpush1.msra.mxu0 0.0
  %1571 = vmatprep.subr.mxu0 0.0
  %1572 = vmatpush1.msra.mxu0 0.0
  %1573 = vmatprep.subr.mxu0 0.0
  %1574 = vmatpush1.msra.mxu0 0.0
  %1575 = vmatprep.subr.mxu0 0.0
  %1576 = vmatpush1.msra.mxu0 0.0
  %1577 = vmatprep.subr.mxu0 0.0
  %1578 = vmatpush1.msra.mxu0 0.0
  %1579 = vmatprep.subr.mxu0 0.0
  %1580 = vmatpush1.msra.mxu0 0.0
  %1581 = vmatprep.subr.mxu0 0.0
  %1582 = vmatpush1.msra.mxu0 0.0
  %1583 = vmatprep.subr.mxu0 0.0
  %1584 = vmatpush1.msra.mxu0 0.0
  %1585 = vmatprep.mubr.f32.mxu0 0.0
  %1586 = vmatmul.mubr.f32.gmra.mrb[0].mxu0 %v55
  %v1587 = vpop.f32.mrb[0].mxu0
  %v1588 = vadd.f32 0.0, %v1587
  %v1589 = vpop.f32.mrb[0].mxu0
  %1590 = vmatprep.mubr.f32.mxu0 0.0
  %1591 = vmatmul.mubr.f32.gmra.mrb[0].mxu0 %v58
  %v1592 = vpop.f32.mrb[0].mxu0
  %v1593 = vadd.f32 0.0, %v1592
  %v1594 = vpop.f32.mrb[0].mxu0
  %1595 = vmatprep.mubr.f32.mxu0 0.0
  %1596 = vmatmul.mubr.f32.gmra.mrb[0].mxu0 %v61
  %v1597 = vpop.f32.mrb[0].mxu0
  %v1598 = vadd.f32 0.0, %v1597
  %v1599 = vpop.f32.mrb[0].mxu0
  %1600 = vmatprep.mubr.f32.mxu0 0.0
  %1601 = vmatmul.mubr.f32.gmra.mrb[0].mxu0 %v64
  %v1602 = vpop.f32.mrb[0].mxu0
  %v1603 = vadd.f32 0.0, %v1602
  %v1604 = vpop.f32.mrb[0].mxu0
  %1605 = vmatprep.mubr.f32.mxu0 0.0
  %1606 = vmatmul.mubr.f32.gmra.mrb[0].mxu0 %v67
  %v1607 = vpop.f32.mrb[0].mxu0
  %v1608 = vadd.f32 0.0, %v1607
  %v1609 = vpop.f32.mrb[0].mxu0
  %1610 = vmatprep.mubr.f32.mxu0 0.0
  %1611 = vmatmul.mubr.f32.gmra.mrb[0].mxu0 %v70
  %v1612 = vpop.f32.mrb[0].mxu0
  %v1613 = vadd.f32 0.0, %v1612
  %v1614 = vpop.f32.mrb[0].mxu0
  %1615 = vmatprep.mubr.f32.mxu0 0.0
  %1616 = vmatmul.mubr.f32.gmra.mrb[0].mxu0 %v73
  %v1617 = vpop.f32.mrb[0].mxu0
  %v1618 = vadd.f32 0.0, %v1617
  %v1619 = vpop.f32.mrb[0].mxu0
  %1620 = vmatprep.mubr.f32.mxu0 0.0
  %1621 = vmatmul.mubr.f32.gmra.mrb[0].mxu0 %v76
  %v1622 = vpop.f32.mrb[0].mxu0
  %v1623 = vadd.f32 0.0, %v1622
  %v1624 = vpop.f32.mrb[0].mxu0
  %1625 = vmatprep.mubr.f32.mxu0 0.0
  %1626 = vmatmul.mubr.f32.gmra.mrb[0].mxu0 %v79
  %v1627 = vpop.f32.mrb[0].mxu0
  %v1628 = vadd.f32 0.0, %v1627
  %v1629 = vpop.f32.mrb[0].mxu0
  %1630 = vmatprep.mubr.f32.mxu0 0.0
  %1631 = vmatmul.mubr.f32.gmra.mrb[0].mxu0 %v82
  %v1632 = vpop.f32.mrb[0].mxu0
  %v1633 = vadd.f32 0.0, %v1632
  %v1634 = vpop.f32.mrb[0].mxu0
  %1635 = vmatprep.mubr.f32.mxu0 0.0
  %1636 = vmatmul.mubr.f32.gmra.mrb[0].mxu0 %v85
  %v1637 = vpop.f32.mrb[0].mxu0
  %v1638 = vadd.f32 0.0, %v1637
  %v1639 = vpop.f32.mrb[0].mxu0
  %1640 = vmatprep.mubr.f32.mxu0 0.0
  %1641 = vmatmul.mubr.f32.gmra.mrb[0].mxu0 %v88
  %v1642 = vpop.f32.mrb[0].mxu0
  %v1643 = vadd.f32 0.0, %v1642
  %v1644 = vpop.f32.mrb[0].mxu0
  %1645 = vmatprep.mubr.f32.mxu0 0.0
  %1646 = vmatmul.mubr.f32.gmra.mrb[0].mxu0 %v91
  %v1647 = vpop.f32.mrb[0].mxu0
  %v1648 = vadd.f32 0.0, %v1647
  %v1649 = vpop.f32.mrb[0].mxu0
  %1650 = vmatprep.mubr.f32.mxu0 0.0
  %1651 = vmatmul.mubr.f32.gmra.mrb[0].mxu0 %v94
  %v1652 = vpop.f32.mrb[0].mxu0
  %v1653 = vadd.f32 0.0, %v1652
  %v1654 = vpop.f32.mrb[0].mxu0
  %1655 = vmatprep.mubr.f32.mxu0 0.0
  %1656 = vmatmul.mubr.f32.gmra.mrb[0].mxu0 %v97
  %v1657 = vpop.f32.mrb[0].mxu0
  %v1658 = vadd.f32 0.0, %v1657
  %v1659 = vpop.f32.mrb[0].mxu0
  %1660 = vmatprep.mubr.f32.mxu0 0.0
  %1661 = vmatmul.mubr.f32.gmra.mrb[0].mxu0 %v100
  %v1662 = vpop.f32.mrb[0].mxu0
  %v1663 = vadd.f32 0.0, %v1662
  %v1664 = vpop.f32.mrb[0].mxu0
  %1665 = vdwg.mxu0
  %1666 = vset.pattern.permute.xlu0 6
  %1667 = vperm.xlu0 %1666, %v36
  %v1668 = vpop.permute.xlu0 %1667
  %1669 = vset.pattern.permute.xlu0 6
  %1670 = vperm.xlu0 %1669, %v37
  %v1671 = vpop.permute.xlu0 %1670
  %1672 = vset.pattern.permute.xlu0 6
  %1673 = vperm.xlu0 %1672, %v38
  %v1674 = vpop.permute.xlu0 %1673
  %1675 = vset.pattern.permute.xlu0 6
  %1676 = vperm.xlu0 %1675, %v39
  %v1677 = vpop.permute.xlu0 %1676
  %1678 = vset.pattern.permute.xlu0 6
  %1679 = vperm.xlu0 %1678, %v40
  %v1680 = vpop.permute.xlu0 %1679
  %1681 = vset.pattern.permute.xlu0 6
  %1682 = vperm.xlu0 %1681, %v41
  %v1683 = vpop.permute.xlu0 %1682
  %1684 = vset.pattern.permute.xlu0 6
  %1685 = vperm.xlu0 %1684, %v42
  %v1686 = vpop.permute.xlu0 %1685
  %1687 = vset.pattern.permute.xlu0 6
  %1688 = vperm.xlu0 %1687, %v43
  %v1689 = vpop.permute.xlu0 %1688
  %1690 = vset.pattern.permute.xlu0 6
  %1691 = vperm.xlu0 %1690, %v44
  %v1692 = vpop.permute.xlu0 %1691
  %1693 = vset.pattern.permute.xlu0 6
  %1694 = vperm.xlu0 %1693, %v45
  %v1695 = vpop.permute.xlu0 %1694
  %1696 = vset.pattern.permute.xlu0 6
  %1697 = vperm.xlu0 %1696, %v46
  %v1698 = vpop.permute.xlu0 %1697
  %1699 = vset.pattern.permute.xlu0 6
  %1700 = vperm.xlu0 %1699, %v47
  %v1701 = vpop.permute.xlu0 %1700
  %1702 = vset.pattern.permute.xlu0 6
  %1703 = vperm.xlu0 %1702, %v48
  %v1704 = vpop.permute.xlu0 %1703
  %1705 = vset.pattern.permute.xlu0 6
  %1706 = vperm.xlu0 %1705, %v49
  %v1707 = vpop.permute.xlu0 %1706
  %1708 = vset.pattern.permute.xlu0 6
  %1709 = vperm.xlu0 %1708, %v50
  %v1710 = vpop.permute.xlu0 %1709
  %1711 = vset.pattern.permute.xlu0 6
  %1712 = vperm.xlu0 %1711, %v51
  %v1713 = vpop.permute.xlu0 %1712
  %v1714 = vrot.slane %v1668, 1
  %v1715 = vrot.slane %v1671, 1
  %v1716 = vsel %vm311, %v1714, %v1715
  %v1717 = vrot.slane %v1674, 1
  %v1718 = vsel %vm311, %v1715, %v1717
  %v1719 = vrot.slane %v1677, 1
  %v1720 = vsel %vm311, %v1717, %v1719
  %v1721 = vrot.slane %v1680, 1
  %v1722 = vsel %vm311, %v1719, %v1721
  %v1723 = vrot.slane %v1683, 1
  %v1724 = vsel %vm311, %v1721, %v1723
  %v1725 = vrot.slane %v1686, 1
  %v1726 = vsel %vm311, %v1723, %v1725
  %v1727 = vrot.slane %v1689, 1
  %v1728 = vsel %vm311, %v1725, %v1727
  %v1729 = vrot.slane %v1692, 1
  %v1730 = vsel %vm311, %v1727, %v1729
  %v1731 = vrot.slane %v1695, 1
  %v1732 = vsel %vm311, %v1729, %v1731
  %v1733 = vrot.slane %v1698, 1
  %v1734 = vsel %vm311, %v1731, %v1733
  %v1735 = vrot.slane %v1701, 1
  %v1736 = vsel %vm311, %v1733, %v1735
  %v1737 = vrot.slane %v1704, 1
  %v1738 = vsel %vm311, %v1735, %v1737
  %v1739 = vrot.slane %v1707, 1
  %v1740 = vsel %vm311, %v1737, %v1739
  %v1741 = vrot.slane %v1710, 1
  %v1742 = vsel %vm311, %v1739, %v1741
  %v1743 = vrot.slane %v1713, 1
  %v1744 = vsel %vm311, %v1741, %v1743
  %v1762 = vmul.f32 %v1588, %v1714
  %v1763 = vmul.f32 %v1593, %v1716
  %v1764 = vmul.f32 %v1598, %v1718
  %v1765 = vmul.f32 %v1603, %v1720
  %v1766 = vmul.f32 %v1608, %v1722
  %v1767 = vmul.f32 %v1613, %v1724
  %v1768 = vmul.f32 %v1618, %v1726
  %v1769 = vmul.f32 %v1623, %v1728
  %v1770 = vmul.f32 %v1628, %v1730
  %v1771 = vmul.f32 %v1633, %v1732
  %v1772 = vmul.f32 %v1638, %v1734
  %v1773 = vmul.f32 %v1643, %v1736
  %v1774 = vmul.f32 %v1648, %v1738
  %v1775 = vmul.f32 %v1653, %v1740
  %v1776 = vmul.f32 %v1658, %v1742
  %v1777 = vmul.f32 %v1663, %v1744
  %v1778 = vmul.f32 %v1588, %v1743
  %v1779 = vadd.f32 %v1493, %v1762
  %v1780 = vadd.f32 %v1494, %v1763
  %v1781 = vadd.f32 %v1495, %v1764
  %v1782 = vadd.f32 %v1496, %v1765
  %v1783 = vadd.f32 %v1497, %v1766
  %v1784 = vadd.f32 %v1498, %v1767
  %v1785 = vadd.f32 %v1499, %v1768
  %v1786 = vadd.f32 %v1500, %v1769
  %v1787 = vadd.f32 %v1501, %v1770
  %v1788 = vadd.f32 %v1502, %v1771
  %v1789 = vadd.f32 %v1503, %v1772
  %v1790 = vadd.f32 %v1504, %v1773
  %v1791 = vadd.f32 %v1505, %v1774
  %v1792 = vadd.f32 %v1506, %v1775
  %v1793 = vadd.f32 %v1507, %v1776
  %v1794 = vadd.f32 %v1508, %v1777
  %v1795 = vadd.f32 %v1509, %v1778
  %1796 = vset.pattern.permute.xlu0 7
  %1797 = vperm.xlu0 %1796, %v36
  %v1798 = vpop.permute.xlu0 %1797
  %1800 = vset.pattern.permute.xlu0 7
  %1801 = vperm.xlu0 %1800, %v37
  %v1802 = vpop.permute.xlu0 %1801
  %1804 = vset.pattern.permute.xlu0 7
  %1805 = vperm.xlu0 %1804, %v38
  %v1806 = vpop.permute.xlu0 %1805
  %1808 = vset.pattern.permute.xlu0 7
  %1809 = vperm.xlu0 %1808, %v39
  %v1810 = vpop.permute.xlu0 %1809
  %1812 = vset.pattern.permute.xlu0 7
  %1813 = vperm.xlu0 %1812, %v40
  %v1814 = vpop.permute.xlu0 %1813
  %1816 = vset.pattern.permute.xlu0 7
  %1817 = vperm.xlu0 %1816, %v41
  %v1818 = vpop.permute.xlu0 %1817
  %1820 = vset.pattern.permute.xlu0 7
  %1821 = vperm.xlu0 %1820, %v42
  %v1822 = vpop.permute.xlu0 %1821
  %1824 = vset.pattern.permute.xlu0 7
  %1825 = vperm.xlu0 %1824, %v43
  %v1826 = vpop.permute.xlu0 %1825
  %1828 = vset.pattern.permute.xlu0 7
  %1829 = vperm.xlu0 %1828, %v44
  %v1830 = vpop.permute.xlu0 %1829
  %1832 = vset.pattern.permute.xlu0 7
  %1833 = vperm.xlu0 %1832, %v45
  %v1834 = vpop.permute.xlu0 %1833
  %1836 = vset.pattern.permute.xlu0 7
  %1837 = vperm.xlu0 %1836, %v46
  %v1838 = vpop.permute.xlu0 %1837
  %1840 = vset.pattern.permute.xlu0 7
  %1841 = vperm.xlu0 %1840, %v47
  %v1842 = vpop.permute.xlu0 %1841
  %1844 = vset.pattern.permute.xlu0 7
  %1845 = vperm.xlu0 %1844, %v48
  %v1846 = vpop.permute.xlu0 %1845
  %1848 = vset.pattern.permute.xlu0 7
  %1849 = vperm.xlu0 %1848, %v49
  %v1850 = vpop.permute.xlu0 %1849
  %1852 = vset.pattern.permute.xlu0 7
  %1853 = vperm.xlu0 %1852, %v50
  %v1854 = vpop.permute.xlu0 %1853
  %1856 = vset.pattern.permute.xlu0 7
  %1857 = vperm.xlu0 %1856, %v51
  %v1858 = vpop.permute.xlu0 %1857
  %v1860 = vmul.f32 %v1593, %v1798
  %v1861 = vmul.f32 %v1598, %v1802
  %v1862 = vmul.f32 %v1603, %v1806
  %v1863 = vmul.f32 %v1608, %v1810
  %v1864 = vmul.f32 %v1613, %v1814
  %v1865 = vmul.f32 %v1618, %v1818
  %v1866 = vmul.f32 %v1623, %v1822
  %v1867 = vmul.f32 %v1628, %v1826
  %v1868 = vmul.f32 %v1633, %v1830
  %v1869 = vmul.f32 %v1638, %v1834
  %v1870 = vmul.f32 %v1643, %v1838
  %v1871 = vmul.f32 %v1648, %v1842
  %v1872 = vmul.f32 %v1653, %v1846
  %v1873 = vmul.f32 %v1658, %v1850
  %v1874 = vmul.f32 %v1663, %v1854
  %v1875 = vmul.f32 %v1588, %v1858
  %v1892 = vrot.slane %v1860, 1
  %v1893 = vrot.slane %v1861, 1
  %v1894 = vsel %vm311, %v1892, %v1893
  %v1895 = vrot.slane %v1862, 1
  %v1896 = vsel %vm311, %v1893, %v1895
  %v1897 = vrot.slane %v1863, 1
  %v1898 = vsel %vm311, %v1895, %v1897
  %v1899 = vrot.slane %v1864, 1
  %v1900 = vsel %vm311, %v1897, %v1899
  %v1901 = vrot.slane %v1865, 1
  %v1902 = vsel %vm311, %v1899, %v1901
  %v1903 = vrot.slane %v1866, 1
  %v1904 = vsel %vm311, %v1901, %v1903
  %v1905 = vrot.slane %v1867, 1
  %v1906 = vsel %vm311, %v1903, %v1905
  %v1907 = vrot.slane %v1868, 1
  %v1908 = vsel %vm311, %v1905, %v1907
  %v1909 = vrot.slane %v1869, 1
  %v1910 = vsel %vm311, %v1907, %v1909
  %v1911 = vrot.slane %v1870, 1
  %v1912 = vsel %vm311, %v1909, %v1911
  %v1913 = vrot.slane %v1871, 1
  %v1914 = vsel %vm311, %v1911, %v1913
  %v1915 = vrot.slane %v1872, 1
  %v1916 = vsel %vm311, %v1913, %v1915
  %v1917 = vrot.slane %v1873, 1
  %v1918 = vsel %vm311, %v1915, %v1917
  %v1919 = vrot.slane %v1874, 1
  %v1920 = vsel %vm311, %v1917, %v1919
  %v1921 = vrot.slane %v1875, 1
  %v1922 = vsel %vm311, %v1919, %v1921
  %1923 = vrot.lane.b32.xlu0 %v1892, 112
  %v1924 = vpop.permute.xlu0 %1923
  %1925 = vrot.lane.b32.xlu0 %v1894, 112
  %v1926 = vpop.permute.xlu0 %1925
  %1927 = vrot.lane.b32.xlu0 %v1896, 112
  %v1928 = vpop.permute.xlu0 %1927
  %1929 = vrot.lane.b32.xlu0 %v1898, 112
  %v1930 = vpop.permute.xlu0 %1929
  %1931 = vrot.lane.b32.xlu0 %v1900, 112
  %v1932 = vpop.permute.xlu0 %1931
  %1933 = vrot.lane.b32.xlu0 %v1902, 112
  %v1934 = vpop.permute.xlu0 %1933
  %1935 = vrot.lane.b32.xlu0 %v1904, 112
  %v1936 = vpop.permute.xlu0 %1935
  %1937 = vrot.lane.b32.xlu0 %v1906, 112
  %v1938 = vpop.permute.xlu0 %1937
  %1939 = vrot.lane.b32.xlu0 %v1908, 112
  %v1940 = vpop.permute.xlu0 %1939
  %1941 = vrot.lane.b32.xlu0 %v1910, 112
  %v1942 = vpop.permute.xlu0 %1941
  %1943 = vrot.lane.b32.xlu0 %v1912, 112
  %v1944 = vpop.permute.xlu0 %1943
  %1945 = vrot.lane.b32.xlu0 %v1914, 112
  %v1946 = vpop.permute.xlu0 %1945
  %1947 = vrot.lane.b32.xlu0 %v1916, 112
  %v1948 = vpop.permute.xlu0 %1947
  %1949 = vrot.lane.b32.xlu0 %v1918, 112
  %v1950 = vpop.permute.xlu0 %1949
  %1951 = vrot.lane.b32.xlu0 %v1920, 112
  %v1952 = vpop.permute.xlu0 %1951
  %1953 = vrot.lane.b32.xlu0 %v1922, 112
  %v1954 = vpop.permute.xlu0 %1953
  %1955 = vrot.lane.b32.xlu0 %v1921, 112
  %v1956 = vpop.permute.xlu0 %1955
  %v1974 = vadd.f32 %v1779, %v1924
  %v1975 = vadd.f32 %v1780, %v1926
  %v1976 = vadd.f32 %v1781, %v1928
  %v1977 = vadd.f32 %v1782, %v1930
  %v1978 = vadd.f32 %v1783, %v1932
  %v1979 = vadd.f32 %v1784, %v1934
  %v1980 = vadd.f32 %v1785, %v1936
  %v1981 = vadd.f32 %v1786, %v1938
  %v1982 = vadd.f32 %v1787, %v1940
  %v1983 = vadd.f32 %v1788, %v1942
  %v1984 = vadd.f32 %v1789, %v1944
  %v1985 = vadd.f32 %v1790, %v1946
  %v1986 = vadd.f32 %v1791, %v1948
  %v1987 = vadd.f32 %v1792, %v1950
  %v1988 = vadd.f32 %v1793, %v1952
  %v1989 = vadd.f32 %v1794, %v1954
  %v1990 = vadd.f32 %v1795, %v1956
  %1991 = vset.pattern.permute.xlu0 8
  %1992 = vperm.xlu0 %1991, %v36
  %v1993 = vpop.permute.xlu0 %1992
  %1994 = vset.pattern.permute.xlu0 8
  %1995 = vperm.xlu0 %1994, %v37
  %v1996 = vpop.permute.xlu0 %1995
  %1997 = vset.pattern.permute.xlu0 8
  %1998 = vperm.xlu0 %1997, %v38
  %v1999 = vpop.permute.xlu0 %1998
  %2000 = vset.pattern.permute.xlu0 8
  %2001 = vperm.xlu0 %2000, %v39
  %v2002 = vpop.permute.xlu0 %2001
  %2003 = vset.pattern.permute.xlu0 8
  %2004 = vperm.xlu0 %2003, %v40
  %v2005 = vpop.permute.xlu0 %2004
  %2006 = vset.pattern.permute.xlu0 8
  %2007 = vperm.xlu0 %2006, %v41
  %v2008 = vpop.permute.xlu0 %2007
  %2009 = vset.pattern.permute.xlu0 8
  %2010 = vperm.xlu0 %2009, %v42
  %v2011 = vpop.permute.xlu0 %2010
  %2012 = vset.pattern.permute.xlu0 8
  %2013 = vperm.xlu0 %2012, %v43
  %v2014 = vpop.permute.xlu0 %2013
  %2015 = vset.pattern.permute.xlu0 8
  %2016 = vperm.xlu0 %2015, %v44
  %v2017 = vpop.permute.xlu0 %2016
  %2018 = vset.pattern.permute.xlu0 8
  %2019 = vperm.xlu0 %2018, %v45
  %v2020 = vpop.permute.xlu0 %2019
  %2021 = vset.pattern.permute.xlu0 8
  %2022 = vperm.xlu0 %2021, %v46
  %v2023 = vpop.permute.xlu0 %2022
  %2024 = vset.pattern.permute.xlu0 8
  %2025 = vperm.xlu0 %2024, %v47
  %v2026 = vpop.permute.xlu0 %2025
  %2027 = vset.pattern.permute.xlu0 8
  %2028 = vperm.xlu0 %2027, %v48
  %v2029 = vpop.permute.xlu0 %2028
  %2030 = vset.pattern.permute.xlu0 8
  %2031 = vperm.xlu0 %2030, %v49
  %v2032 = vpop.permute.xlu0 %2031
  %2033 = vset.pattern.permute.xlu0 8
  %2034 = vperm.xlu0 %2033, %v50
  %v2035 = vpop.permute.xlu0 %2034
  %2036 = vset.pattern.permute.xlu0 8
  %2037 = vperm.xlu0 %2036, %v51
  %v2038 = vpop.permute.xlu0 %2037
  %v2039 = vrot.slane %v1993, 7
  %v2040 = vrot.slane %v1996, 7
  %v2041 = vsel %vm620, %v2039, %v2040
  %v2042 = vrot.slane %v1999, 7
  %v2043 = vsel %vm620, %v2040, %v2042
  %v2044 = vrot.slane %v2002, 7
  %v2045 = vsel %vm620, %v2042, %v2044
  %v2046 = vrot.slane %v2005, 7
  %v2047 = vsel %vm620, %v2044, %v2046
  %v2048 = vrot.slane %v2008, 7
  %v2049 = vsel %vm620, %v2046, %v2048
  %v2050 = vrot.slane %v2011, 7
  %v2051 = vsel %vm620, %v2048, %v2050
  %v2052 = vrot.slane %v2014, 7
  %v2053 = vsel %vm620, %v2050, %v2052
  %v2054 = vrot.slane %v2017, 7
  %v2055 = vsel %vm620, %v2052, %v2054
  %v2056 = vrot.slane %v2020, 7
  %v2057 = vsel %vm620, %v2054, %v2056
  %v2058 = vrot.slane %v2023, 7
  %v2059 = vsel %vm620, %v2056, %v2058
  %v2060 = vrot.slane %v2026, 7
  %v2061 = vsel %vm620, %v2058, %v2060
  %v2062 = vrot.slane %v2029, 7
  %v2063 = vsel %vm620, %v2060, %v2062
  %v2064 = vrot.slane %v2032, 7
  %v2065 = vsel %vm620, %v2062, %v2064
  %v2066 = vrot.slane %v2035, 7
  %v2067 = vsel %vm620, %v2064, %v2066
  %v2068 = vrot.slane %v2038, 7
  %v2069 = vsel %vm620, %v2066, %v2068
  %v2087 = vmul.f32 %v1593, %v2039
  %v2088 = vmul.f32 %v1598, %v2041
  %v2089 = vmul.f32 %v1603, %v2043
  %v2090 = vmul.f32 %v1608, %v2045
  %v2091 = vmul.f32 %v1613, %v2047
  %v2092 = vmul.f32 %v1618, %v2049
  %v2093 = vmul.f32 %v1623, %v2051
  %v2094 = vmul.f32 %v1628, %v2053
  %v2095 = vmul.f32 %v1633, %v2055
  %v2096 = vmul.f32 %v1638, %v2057
  %v2097 = vmul.f32 %v1643, %v2059
  %v2098 = vmul.f32 %v1648, %v2061
  %v2099 = vmul.f32 %v1653, %v2063
  %v2100 = vmul.f32 %v1658, %v2065
  %v2101 = vmul.f32 %v1663, %v2067
  %v2102 = vmul.f32 %v1588, %v2069
  %v2103 = vmul.f32 %v1593, %v2068
  %v2121 = vrot.slane %v2087, 2
  %v2122 = vrot.slane %v2088, 2
  %v2123 = vsel %vm703, %v2121, %v2122
  %v2124 = vrot.slane %v2089, 2
  %v2125 = vsel %vm703, %v2122, %v2124
  %v2126 = vrot.slane %v2090, 2
  %v2127 = vsel %vm703, %v2124, %v2126
  %v2128 = vrot.slane %v2091, 2
  %v2129 = vsel %vm703, %v2126, %v2128
  %v2130 = vrot.slane %v2092, 2
  %v2131 = vsel %vm703, %v2128, %v2130
  %v2132 = vrot.slane %v2093, 2
  %v2133 = vsel %vm703, %v2130, %v2132
  %v2134 = vrot.slane %v2094, 2
  %v2135 = vsel %vm703, %v2132, %v2134
  %v2136 = vrot.slane %v2095, 2
  %v2137 = vsel %vm703, %v2134, %v2136
  %v2138 = vrot.slane %v2096, 2
  %v2139 = vsel %vm703, %v2136, %v2138
  %v2140 = vrot.slane %v2097, 2
  %v2141 = vsel %vm703, %v2138, %v2140
  %v2142 = vrot.slane %v2098, 2
  %v2143 = vsel %vm703, %v2140, %v2142
  %v2144 = vrot.slane %v2099, 2
  %v2145 = vsel %vm703, %v2142, %v2144
  %v2146 = vrot.slane %v2100, 2
  %v2147 = vsel %vm703, %v2144, %v2146
  %v2148 = vrot.slane %v2101, 2
  %v2149 = vsel %vm703, %v2146, %v2148
  %v2150 = vrot.slane %v2102, 2
  %v2151 = vsel %vm703, %v2148, %v2150
  %v2152 = vrot.slane %v2103, 2
  %v2153 = vsel %vm703, %v2150, %v2152
  %2154 = vrot.lane.b32.xlu0 %v2121, 96
  %v2155 = vpop.permute.xlu0 %2154
  %2156 = vrot.lane.b32.xlu0 %v2123, 96
  %v2157 = vpop.permute.xlu0 %2156
  %2158 = vrot.lane.b32.xlu0 %v2125, 96
  %v2159 = vpop.permute.xlu0 %2158
  %2160 = vrot.lane.b32.xlu0 %v2127, 96
  %v2161 = vpop.permute.xlu0 %2160
  %2162 = vrot.lane.b32.xlu0 %v2129, 96
  %v2163 = vpop.permute.xlu0 %2162
  %2164 = vrot.lane.b32.xlu0 %v2131, 96
  %v2165 = vpop.permute.xlu0 %2164
  %2166 = vrot.lane.b32.xlu0 %v2133, 96
  %v2167 = vpop.permute.xlu0 %2166
  %2168 = vrot.lane.b32.xlu0 %v2135, 96
  %v2169 = vpop.permute.xlu0 %2168
  %2170 = vrot.lane.b32.xlu0 %v2137, 96
  %v2171 = vpop.permute.xlu0 %2170
  %2172 = vrot.lane.b32.xlu0 %v2139, 96
  %v2173 = vpop.permute.xlu0 %2172
  %2174 = vrot.lane.b32.xlu0 %v2141, 96
  %v2175 = vpop.permute.xlu0 %2174
  %2176 = vrot.lane.b32.xlu0 %v2143, 96
  %v2177 = vpop.permute.xlu0 %2176
  %2178 = vrot.lane.b32.xlu0 %v2145, 96
  %v2179 = vpop.permute.xlu0 %2178
  %2180 = vrot.lane.b32.xlu0 %v2147, 96
  %v2181 = vpop.permute.xlu0 %2180
  %2182 = vrot.lane.b32.xlu0 %v2149, 96
  %v2183 = vpop.permute.xlu0 %2182
  %2184 = vrot.lane.b32.xlu0 %v2151, 96
  %v2185 = vpop.permute.xlu0 %2184
  %2186 = vrot.lane.b32.xlu0 %v2153, 96
  %v2187 = vpop.permute.xlu0 %2186
  %v2205 = vadd.f32 %v1974, %v2155
  %v2206 = vadd.f32 %v1975, %v2157
  %v2207 = vadd.f32 %v1976, %v2159
  %v2208 = vadd.f32 %v1977, %v2161
  %v2209 = vadd.f32 %v1978, %v2163
  %v2210 = vadd.f32 %v1979, %v2165
  %v2211 = vadd.f32 %v1980, %v2167
  %v2212 = vadd.f32 %v1981, %v2169
  %v2213 = vadd.f32 %v1982, %v2171
  %v2214 = vadd.f32 %v1983, %v2173
  %v2215 = vadd.f32 %v1984, %v2175
  %v2216 = vadd.f32 %v1985, %v2177
  %v2217 = vadd.f32 %v1986, %v2179
  %v2218 = vadd.f32 %v1987, %v2181
  %v2219 = vadd.f32 %v1988, %v2183
  %v2220 = vadd.f32 %v1989, %v2185
  %v2221 = vadd.f32 %v1990, %v2187
  %v2222 = vld [vmem:[%s2] sm:$0x1]
  %v2223 = vlaneseq
  %v2224 = vshrl.u32 %v2223, 7
  %v2225 = vsub.s32 0, %v2224
  %v2226 = vrot.slane %v2222, %v2225
  %v2227 = vadd.f32 %v2205, %v2226
  %v2228 = vadd.f32 %v2206, %v2226
  %v2229 = vadd.f32 %v2207, %v2226
  %v2230 = vadd.f32 %v2208, %v2226
  %v2231 = vadd.f32 %v2209, %v2226
  %v2232 = vadd.f32 %v2210, %v2226
  %v2233 = vadd.f32 %v2211, %v2226
  %v2234 = vadd.f32 %v2212, %v2226
  %v2235 = vadd.f32 %v2213, %v2226
  %v2236 = vadd.f32 %v2214, %v2226
  %v2237 = vadd.f32 %v2215, %v2226
  %v2238 = vadd.f32 %v2216, %v2226
  %v2239 = vadd.f32 %v2217, %v2226
  %v2240 = vadd.f32 %v2218, %v2226
  %v2241 = vadd.f32 %v2219, %v2226
  %v2242 = vadd.f32 %v2220, %v2226
  %v2243 = vadd.f32 %v2221, %v2226
  %v2244 = vmax.f32 %v2227, 0.0
  %v2245 = vmax.f32 %v2228, 0.0
  %v2246 = vmax.f32 %v2229, 0.0
  %v2247 = vmax.f32 %v2230, 0.0
  %v2248 = vmax.f32 %v2231, 0.0
  %v2249 = vmax.f32 %v2232, 0.0
  %v2250 = vmax.f32 %v2233, 0.0
  %v2251 = vmax.f32 %v2234, 0.0
  %v2252 = vmax.f32 %v2235, 0.0
  %v2253 = vmax.f32 %v2236, 0.0
  %v2254 = vmax.f32 %v2237, 0.0
  %v2255 = vmax.f32 %v2238, 0.0
  %v2256 = vmax.f32 %v2239, 0.0
  %v2257 = vmax.f32 %v2240, 0.0
  %v2258 = vmax.f32 %v2241, 0.0
  %v2259 = vmax.f32 %v2242, 0.0
  %v2260 = vmax.f32 %v2243, 0.0
  %v2261 = vld [vmem:[%s1 + $0x28] sm:$0xff]
  %v2262 = vld [vmem:[%s1 + $0x50] sm:$0xff]
  %v2280 = vrot.slane %v2244, 7
  %v2281 = vrot.slane %v2245, 7
  %v2282 = vsel %vm620, %v2280, %v2281
  %v2283 = vrot.slane %v2246, 7
  %v2284 = vsel %vm620, %v2281, %v2283
  %v2285 = vrot.slane %v2247, 7
  %v2286 = vsel %vm620, %v2283, %v2285
  %v2287 = vrot.slane %v2248, 7
  %v2288 = vsel %vm620, %v2285, %v2287
  %v2289 = vrot.slane %v2249, 7
  %v2290 = vsel %vm620, %v2287, %v2289
  %v2291 = vrot.slane %v2250, 7
  %v2292 = vsel %vm620, %v2289, %v2291
  %v2293 = vrot.slane %v2251, 7
  %v2294 = vsel %vm620, %v2291, %v2293
  %v2295 = vrot.slane %v2252, 7
  %v2296 = vsel %vm620, %v2293, %v2295
  %v2297 = vrot.slane %v2253, 7
  %v2298 = vsel %vm620, %v2295, %v2297
  %v2299 = vrot.slane %v2254, 7
  %v2300 = vsel %vm620, %v2297, %v2299
  %v2301 = vrot.slane %v2255, 7
  %v2302 = vsel %vm620, %v2299, %v2301
  %v2303 = vrot.slane %v2256, 7
  %v2304 = vsel %vm620, %v2301, %v2303
  %v2305 = vrot.slane %v2257, 7
  %v2306 = vsel %vm620, %v2303, %v2305
  %v2307 = vrot.slane %v2258, 7
  %v2308 = vsel %vm620, %v2305, %v2307
  %v2309 = vrot.slane %v2259, 7
  %v2310 = vsel %vm620, %v2307, %v2309
  %v2311 = vrot.slane %v2260, 7
  %v2312 = vsel %vm620, %v2309, %v2311
  %vm2313 = vcmask 130048
  %v2314 = vsel %vm2313, %v2282, 0
  %v2316 = vsel %vm2313, %v2284, 0
  %v2318 = vsel %vm2313, %v2286, 0
  %v2320 = vsel %vm2313, %v2288, 0
  %v2322 = vsel %vm2313, %v2290, 0
  %v2324 = vsel %vm2313, %v2292, 0
  %v2326 = vsel %vm2313, %v2294, 0
  %v2328 = vsel %vm2313, %v2296, 0
  %v2330 = vsel %vm2313, %v2298, 0
  %v2332 = vsel %vm2313, %v2300, 0
  %v2334 = vsel %vm2313, %v2302, 0
  %v2336 = vsel %vm2313, %v2304, 0
  %v2338 = vsel %vm2313, %v2306, 0
  %v2340 = vsel %vm2313, %v2308, 0
  %v2342 = vsel %vm2313, %v2310, 0
  %v2344 = vsel %vm2313, %v2312, 0
  %2346 = vmatprep.subr.mxu0 0.0
  %2347 = vmatpush1.msra.mxu0 %v2261
  %2348 = vmatprep.subr.mxu0 0.0
  %2349 = vmatpush1.msra.mxu0 %v2262
  %2350 = vmatprep.subr.mxu0 0.0
  %2351 = vmatpush1.msra.mxu0 0.0
  %2352 = vmatprep.subr.mxu0 0.0
  %2353 = vmatpush1.msra.mxu0 0.0
  %2354 = vmatprep.subr.mxu0 0.0
  %2355 = vmatpush1.msra.mxu0 0.0
  %2356 = vmatprep.subr.mxu0 0.0
  %2357 = vmatpush1.msra.mxu0 0.0
  %2358 = vmatprep.subr.mxu0 0.0
  %2359 = vmatpush1.msra.mxu0 0.0
  %2360 = vmatprep.subr.mxu0 0.0
  %2361 = vmatpush1.msra.mxu0 0.0
  %2362 = vmatprep.subr.mxu0 0.0
  %2363 = vmatpush1.msra.mxu0 0.0
  %2364 = vmatprep.subr.mxu0 0.0
  %2365 = vmatpush1.msra.mxu0 0.0
  %2366 = vmatprep.subr.mxu0 0.0
  %2367 = vmatpush1.msra.mxu0 0.0
  %2368 = vmatprep.subr.mxu0 0.0
  %2369 = vmatpush1.msra.mxu0 0.0
  %2370 = vmatprep.subr.mxu0 0.0
  %2371 = vmatpush1.msra.mxu0 0.0
  %2372 = vmatprep.subr.mxu0 0.0
  %2373 = vmatpush1.msra.mxu0 0.0
  %2374 = vmatprep.subr.mxu0 0.0
  %2375 = vmatpush1.msra.mxu0 0.0
  %2376 = vmatprep.subr.mxu0 0.0
  %2377 = vmatpush1.msra.mxu0 0.0
  %2378 = vmatprep.subr.mxu0 0.0
  %2379 = vmatpush1.msra.mxu0 0.0
  %2380 = vmatprep.subr.mxu0 0.0
  %2381 = vmatpush1.msra.mxu0 0.0
  %2382 = vmatprep.subr.mxu0 0.0
  %2383 = vmatpush1.msra.mxu0 0.0
  %2384 = vmatprep.subr.mxu0 0.0
  %2385 = vmatpush1.msra.mxu0 0.0
  %2386 = vmatprep.subr.mxu0 0.0
  %2387 = vmatpush1.msra.mxu0 0.0
  %2388 = vmatprep.subr.mxu0 0.0
  %2389 = vmatpush1.msra.mxu0 0.0
  %2390 = vmatprep.subr.mxu0 0.0
  %2391 = vmatpush1.msra.mxu0 0.0
  %2392 = vmatprep.subr.mxu0 0.0
  %2393 = vmatpush1.msra.mxu0 0.0
  %2394 = vmatprep.subr.mxu0 0.0
  %2395 = vmatpush1.msra.mxu0 0.0
  %2396 = vmatprep.subr.mxu0 0.0
  %2397 = vmatpush1.msra.mxu0 0.0
  %2398 = vmatprep.subr.mxu0 0.0
  %2399 = vmatpush1.msra.mxu0 0.0
  %2400 = vmatprep.subr.mxu0 0.0
  %2401 = vmatpush1.msra.mxu0 0.0
  %2402 = vmatprep.subr.mxu0 0.0
  %2403 = vmatpush1.msra.mxu0 0.0
  %2404 = vmatprep.subr.mxu0 0.0
  %2405 = vmatpush1.msra.mxu0 0.0
  %2406 = vmatprep.subr.mxu0 0.0
  %2407 = vmatpush1.msra.mxu0 0.0
  %2408 = vmatprep.subr.mxu0 0.0
  %2409 = vmatpush1.msra.mxu0 0.0
  %2410 = vmatprep.mubr.f32.mxu0 0.0
  %2411 = vmatmul.mubr.f32.gmra.mrb[0].mxu0 %v2314
  %v2412 = vpop.f32.mrb[0].mxu0
  %v2413 = vadd.f32 0.0, %v2412
  %v2414 = vpop.f32.mrb[0].mxu0
  %2415 = vmatprep.mubr.f32.mxu0 0.0
  %2416 = vmatmul.mubr.f32.gmra.mrb[0].mxu0 %v2316
  %v2417 = vpop.f32.mrb[0].mxu0
  %v2418 = vadd.f32 0.0, %v2417
  %v2419 = vpop.f32.mrb[0].mxu0
  %2420 = vmatprep.mubr.f32.mxu0 0.0
  %2421 = vmatmul.mubr.f32.gmra.mrb[0].mxu0 %v2318
  %v2422 = vpop.f32.mrb[0].mxu0
  %v2423 = vadd.f32 0.0, %v2422
  %v2424 = vpop.f32.mrb[0].mxu0
  %2425 = vmatprep.mubr.f32.mxu0 0.0
  %2426 = vmatmul.mubr.f32.gmra.mrb[0].mxu0 %v2320
  %v2427 = vpop.f32.mrb[0].mxu0
  %v2428 = vadd.f32 0.0, %v2427
  %v2429 = vpop.f32.mrb[0].mxu0
  %2430 = vmatprep.mubr.f32.mxu0 0.0
  %2431 = vmatmul.mubr.f32.gmra.mrb[0].mxu0 %v2322
  %v2432 = vpop.f32.mrb[0].mxu0
  %v2433 = vadd.f32 0.0, %v2432
  %v2434 = vpop.f32.mrb[0].mxu0
  %2435 = vmatprep.mubr.f32.mxu0 0.0
  %2436 = vmatmul.mubr.f32.gmra.mrb[0].mxu0 %v2324
  %v2437 = vpop.f32.mrb[0].mxu0
  %v2438 = vadd.f32 0.0, %v2437
  %v2439 = vpop.f32.mrb[0].mxu0
  %2440 = vmatprep.mubr.f32.mxu0 0.0
  %2441 = vmatmul.mubr.f32.gmra.mrb[0].mxu0 %v2326
  %v2442 = vpop.f32.mrb[0].mxu0
  %v2443 = vadd.f32 0.0, %v2442
  %v2444 = vpop.f32.mrb[0].mxu0
  %2445 = vmatprep.mubr.f32.mxu0 0.0
  %2446 = vmatmul.mubr.f32.gmra.mrb[0].mxu0 %v2328
  %v2447 = vpop.f32.mrb[0].mxu0
  %v2448 = vadd.f32 0.0, %v2447
  %v2449 = vpop.f32.mrb[0].mxu0
  %2450 = vmatprep.mubr.f32.mxu0 0.0
  %2451 = vmatmul.mubr.f32.gmra.mrb[0].mxu0 %v2330
  %v2452 = vpop.f32.mrb[0].mxu0
  %v2453 = vadd.f32 0.0, %v2452
  %v2454 = vpop.f32.mrb[0].mxu0
  %2455 = vmatprep.mubr.f32.mxu0 0.0
  %2456 = vmatmul.mubr.f32.gmra.mrb[0].mxu0 %v2332
  %v2457 = vpop.f32.mrb[0].mxu0
  %v2458 = vadd.f32 0.0, %v2457
  %v2459 = vpop.f32.mrb[0].mxu0
  %2460 = vmatprep.mubr.f32.mxu0 0.0
  %2461 = vmatmul.mubr.f32.gmra.mrb[0].mxu0 %v2334
  %v2462 = vpop.f32.mrb[0].mxu0
  %v2463 = vadd.f32 0.0, %v2462
  %v2464 = vpop.f32.mrb[0].mxu0
  %2465 = vmatprep.mubr.f32.mxu0 0.0
  %2466 = vmatmul.mubr.f32.gmra.mrb[0].mxu0 %v2336
  %v2467 = vpop.f32.mrb[0].mxu0
  %v2468 = vadd.f32 0.0, %v2467
  %v2469 = vpop.f32.mrb[0].mxu0
  %2470 = vmatprep.mubr.f32.mxu0 0.0
  %2471 = vmatmul.mubr.f32.gmra.mrb[0].mxu0 %v2338
  %v2472 = vpop.f32.mrb[0].mxu0
  %v2473 = vadd.f32 0.0, %v2472
  %v2474 = vpop.f32.mrb[0].mxu0
  %2475 = vmatprep.mubr.f32.mxu0 0.0
  %2476 = vmatmul.mubr.f32.gmra.mrb[0].mxu0 %v2340
  %v2477 = vpop.f32.mrb[0].mxu0
  %v2478 = vadd.f32 0.0, %v2477
  %v2479 = vpop.f32.mrb[0].mxu0
  %2480 = vmatprep.mubr.f32.mxu0 0.0
  %2481 = vmatmul.mubr.f32.gmra.mrb[0].mxu0 %v2342
  %v2482 = vpop.f32.mrb[0].mxu0
  %v2483 = vadd.f32 0.0, %v2482
  %v2484 = vpop.f32.mrb[0].mxu0
  %2485 = vmatprep.mubr.f32.mxu0 0.0
  %2486 = vmatmul.mubr.f32.gmra.mrb[0].mxu0 %v2344
  %v2487 = vpop.f32.mrb[0].mxu0
  %v2488 = vadd.f32 0.0, %v2487
  %v2489 = vpop.f32.mrb[0].mxu0
  %2490 = vdwg.mxu0
  %v2491 = vmul.f32 %v2483, %v312
  %v2492 = vmul.f32 %v2488, %v314
  %v2493 = vmul.f32 %v2413, %v316
  %v2494 = vmul.f32 %v2418, %v318
  %v2495 = vmul.f32 %v2423, %v320
  %v2496 = vmul.f32 %v2428, %v322
  %v2497 = vmul.f32 %v2433, %v324
  %v2498 = vmul.f32 %v2438, %v326
  %v2499 = vmul.f32 %v2443, %v328
  %v2500 = vmul.f32 %v2448, %v330
  %v2501 = vmul.f32 %v2453, %v332
  %v2502 = vmul.f32 %v2458, %v334
  %v2503 = vmul.f32 %v2463, %v336
  %v2504 = vmul.f32 %v2468, %v338
  %v2505 = vmul.f32 %v2473, %v340
  %v2506 = vmul.f32 %v2478, %v342
  %v2507 = vmul.f32 %v2483, %v341
  %v2508 = vmul.f32 %v2488, %v379
  %v2509 = vmul.f32 %v2413, %v383
  %v2510 = vmul.f32 %v2418, %v387
  %v2511 = vmul.f32 %v2423, %v391
  %v2512 = vmul.f32 %v2428, %v395
  %v2513 = vmul.f32 %v2433, %v399
  %v2514 = vmul.f32 %v2438, %v403
  %v2515 = vmul.f32 %v2443, %v407
  %v2516 = vmul.f32 %v2448, %v411
  %v2517 = vmul.f32 %v2453, %v415
  %v2518 = vmul.f32 %v2458, %v419
  %v2519 = vmul.f32 %v2463, %v423
  %v2520 = vmul.f32 %v2468, %v427
  %v2521 = vmul.f32 %v2473, %v431
  %v2522 = vmul.f32 %v2478, %v435
  %v2523 = vmul.f32 %v2483, %v439
  %v2540 = vrot.slane %v2508, 1
  %v2541 = vrot.slane %v2509, 1
  %v2542 = vsel %vm311, %v2540, %v2541
  %v2543 = vrot.slane %v2510, 1
  %v2544 = vsel %vm311, %v2541, %v2543
  %v2545 = vrot.slane %v2511, 1
  %v2546 = vsel %vm311, %v2543, %v2545
  %v2547 = vrot.slane %v2512, 1
  %v2548 = vsel %vm311, %v2545, %v2547
  %v2549 = vrot.slane %v2513, 1
  %v2550 = vsel %vm311, %v2547, %v2549
  %v2551 = vrot.slane %v2514, 1
  %v2552 = vsel %vm311, %v2549, %v2551
  %v2553 = vrot.slane %v2515, 1
  %v2554 = vsel %vm311, %v2551, %v2553
  %v2555 = vrot.slane %v2516, 1
  %v2556 = vsel %vm311, %v2553, %v2555
  %v2557 = vrot.slane %v2517, 1
  %v2558 = vsel %vm311, %v2555, %v2557
  %v2559 = vrot.slane %v2518, 1
  %v2560 = vsel %vm311, %v2557, %v2559
  %v2561 = vrot.slane %v2519, 1
  %v2562 = vsel %vm311, %v2559, %v2561
  %v2563 = vrot.slane %v2520, 1
  %v2564 = vsel %vm311, %v2561, %v2563
  %v2565 = vrot.slane %v2521, 1
  %v2566 = vsel %vm311, %v2563, %v2565
  %v2567 = vrot.slane %v2522, 1
  %v2568 = vsel %vm311, %v2565, %v2567
  %v2569 = vrot.slane %v2523, 1
  %v2570 = vsel %vm311, %v2567, %v2569
  %2571 = vrot.lane.b32.xlu0 %v2540, 112
  %v2572 = vpop.permute.xlu0 %2571
  %2573 = vrot.lane.b32.xlu0 %v2542, 112
  %v2574 = vpop.permute.xlu0 %2573
  %2575 = vrot.lane.b32.xlu0 %v2544, 112
  %v2576 = vpop.permute.xlu0 %2575
  %2577 = vrot.lane.b32.xlu0 %v2546, 112
  %v2578 = vpop.permute.xlu0 %2577
  %2579 = vrot.lane.b32.xlu0 %v2548, 112
  %v2580 = vpop.permute.xlu0 %2579
  %2581 = vrot.lane.b32.xlu0 %v2550, 112
  %v2582 = vpop.permute.xlu0 %2581
  %2583 = vrot.lane.b32.xlu0 %v2552, 112
  %v2584 = vpop.permute.xlu0 %2583
  %2585 = vrot.lane.b32.xlu0 %v2554, 112
  %v2586 = vpop.permute.xlu0 %2585
  %2587 = vrot.lane.b32.xlu0 %v2556, 112
  %v2588 = vpop.permute.xlu0 %2587
  %2589 = vrot.lane.b32.xlu0 %v2558, 112
  %v2590 = vpop.permute.xlu0 %2589
  %2591 = vrot.lane.b32.xlu0 %v2560, 112
  %v2592 = vpop.permute.xlu0 %2591
  %2593 = vrot.lane.b32.xlu0 %v2562, 112
  %v2594 = vpop.permute.xlu0 %2593
  %2595 = vrot.lane.b32.xlu0 %v2564, 112
  %v2596 = vpop.permute.xlu0 %2595
  %2597 = vrot.lane.b32.xlu0 %v2566, 112
  %v2598 = vpop.permute.xlu0 %2597
  %2599 = vrot.lane.b32.xlu0 %v2568, 112
  %v2600 = vpop.permute.xlu0 %2599
  %2601 = vrot.lane.b32.xlu0 %v2570, 112
  %v2602 = vpop.permute.xlu0 %2601
  %2603 = vrot.lane.b32.xlu0 %v2569, 112
  %v2604 = vpop.permute.xlu0 %2603
  %v2622 = vadd.f32 %v2491, %v2572
  %v2623 = vadd.f32 %v2492, %v2574
  %v2624 = vadd.f32 %v2493, %v2576
  %v2625 = vadd.f32 %v2494, %v2578
  %v2626 = vadd.f32 %v2495, %v2580
  %v2627 = vadd.f32 %v2496, %v2582
  %v2628 = vadd.f32 %v2497, %v2584
  %v2629 = vadd.f32 %v2498, %v2586
  %v2630 = vadd.f32 %v2499, %v2588
  %v2631 = vadd.f32 %v2500, %v2590
  %v2632 = vadd.f32 %v2501, %v2592
  %v2633 = vadd.f32 %v2502, %v2594
  %v2634 = vadd.f32 %v2503, %v2596
  %v2635 = vadd.f32 %v2504, %v2598
  %v2636 = vadd.f32 %v2505, %v2600
  %v2637 = vadd.f32 %v2506, %v2602
  %v2638 = vadd.f32 %v2507, %v2604
  %v2639 = vmul.f32 %v2488, %v621
  %v2640 = vmul.f32 %v2413, %v623
  %v2641 = vmul.f32 %v2418, %v625
  %v2642 = vmul.f32 %v2423, %v627
  %v2643 = vmul.f32 %v2428, %v629
  %v2644 = vmul.f32 %v2433, %v631
  %v2645 = vmul.f32 %v2438, %v633
  %v2646 = vmul.f32 %v2443, %v635
  %v2647 = vmul.f32 %v2448, %v637
  %v2648 = vmul.f32 %v2453, %v639
  %v2649 = vmul.f32 %v2458, %v641
  %v2650 = vmul.f32 %v2463, %v643
  %v2651 = vmul.f32 %v2468, %v645
  %v2652 = vmul.f32 %v2473, %v647
  %v2653 = vmul.f32 %v2478, %v649
  %v2654 = vmul.f32 %v2483, %v651
  %v2655 = vmul.f32 %v2488, %v650
  %v2673 = vrot.slane %v2639, 2
  %v2674 = vrot.slane %v2640, 2
  %v2675 = vsel %vm703, %v2673, %v2674
  %v2676 = vrot.slane %v2641, 2
  %v2677 = vsel %vm703, %v2674, %v2676
  %v2678 = vrot.slane %v2642, 2
  %v2679 = vsel %vm703, %v2676, %v2678
  %v2680 = vrot.slane %v2643, 2
  %v2681 = vsel %vm703, %v2678, %v2680
  %v2682 = vrot.slane %v2644, 2
  %v2683 = vsel %vm703, %v2680, %v2682
  %v2684 = vrot.slane %v2645, 2
  %v2685 = vsel %vm703, %v2682, %v2684
  %v2686 = vrot.slane %v2646, 2
  %v2687 = vsel %vm703, %v2684, %v2686
  %v2688 = vrot.slane %v2647, 2
  %v2689 = vsel %vm703, %v2686, %v2688
  %v2690 = vrot.slane %v2648, 2
  %v2691 = vsel %vm703, %v2688, %v2690
  %v2692 = vrot.slane %v2649, 2
  %v2693 = vsel %vm703, %v2690, %v2692
  %v2694 = vrot.slane %v2650, 2
  %v2695 = vsel %vm703, %v2692, %v2694
  %v2696 = vrot.slane %v2651, 2
  %v2697 = vsel %vm703, %v2694, %v2696
  %v2698 = vrot.slane %v2652, 2
  %v2699 = vsel %vm703, %v2696, %v2698
  %v2700 = vrot.slane %v2653, 2
  %v2701 = vsel %vm703, %v2698, %v2700
  %v2702 = vrot.slane %v2654, 2
  %v2703 = vsel %vm703, %v2700, %v2702
  %v2704 = vrot.slane %v2655, 2
  %v2705 = vsel %vm703, %v2702, %v2704
  %2706 = vrot.lane.b32.xlu0 %v2673, 96
  %v2707 = vpop.permute.xlu0 %2706
  %2708 = vrot.lane.b32.xlu0 %v2675, 96
  %v2709 = vpop.permute.xlu0 %2708
  %2710 = vrot.lane.b32.xlu0 %v2677, 96
  %v2711 = vpop.permute.xlu0 %2710
  %2712 = vrot.lane.b32.xlu0 %v2679, 96
  %v2713 = vpop.permute.xlu0 %2712
  %2714 = vrot.lane.b32.xlu0 %v2681, 96
  %v2715 = vpop.permute.xlu0 %2714
  %2716 = vrot.lane.b32.xlu0 %v2683, 96
  %v2717 = vpop.permute.xlu0 %2716
  %2718 = vrot.lane.b32.xlu0 %v2685, 96
  %v2719 = vpop.permute.xlu0 %2718
  %2720 = vrot.lane.b32.xlu0 %v2687, 96
  %v2721 = vpop.permute.xlu0 %2720
  %2722 = vrot.lane.b32.xlu0 %v2689, 96
  %v2723 = vpop.permute.xlu0 %2722
  %2724 = vrot.lane.b32.xlu0 %v2691, 96
  %v2725 = vpop.permute.xlu0 %2724
  %2726 = vrot.lane.b32.xlu0 %v2693, 96
  %v2727 = vpop.permute.xlu0 %2726
  %2728 = vrot.lane.b32.xlu0 %v2695, 96
  %v2729 = vpop.permute.xlu0 %2728
  %2730 = vrot.lane.b32.xlu0 %v2697, 96
  %v2731 = vpop.permute.xlu0 %2730
  %2732 = vrot.lane.b32.xlu0 %v2699, 96
  %v2733 = vpop.permute.xlu0 %2732
  %2734 = vrot.lane.b32.xlu0 %v2701, 96
  %v2735 = vpop.permute.xlu0 %2734
  %2736 = vrot.lane.b32.xlu0 %v2703, 96
  %v2737 = vpop.permute.xlu0 %2736
  %2738 = vrot.lane.b32.xlu0 %v2705, 96
  %v2739 = vpop.permute.xlu0 %2738
  %v2757 = vadd.f32 %v2622, %v2707
  %v2758 = vadd.f32 %v2623, %v2709
  %v2759 = vadd.f32 %v2624, %v2711
  %v2760 = vadd.f32 %v2625, %v2713
  %v2761 = vadd.f32 %v2626, %v2715
  %v2762 = vadd.f32 %v2627, %v2717
  %v2763 = vadd.f32 %v2628, %v2719
  %v2764 = vadd.f32 %v2629, %v2721
  %v2765 = vadd.f32 %v2630, %v2723
  %v2766 = vadd.f32 %v2631, %v2725
  %v2767 = vadd.f32 %v2632, %v2727
  %v2768 = vadd.f32 %v2633, %v2729
  %v2769 = vadd.f32 %v2634, %v2731
  %v2770 = vadd.f32 %v2635, %v2733
  %v2771 = vadd.f32 %v2636, %v2735
  %v2772 = vadd.f32 %v2637, %v2737
  %v2773 = vadd.f32 %v2638, %v2739
  %2776 = vrot.lane.b32.xlu0 %v2261, 80
  %v2777 = vpop.permute.xlu0 %2776
  %2778 = vrot.lane.b32.xlu0 %v2262, 80
  %v2779 = vpop.permute.xlu0 %2778
  %2782 = vmatprep.subr.mxu0 0.0
  %2783 = vmatpush1.msra.mxu0 %v2777
  %2784 = vmatprep.subr.mxu0 0.0
  %2785 = vmatpush1.msra.mxu0 %v2779
  %2786 = vmatprep.subr.mxu0 0.0
  %2787 = vmatpush1.msra.mxu0 0.0
  %2788 = vmatprep.subr.mxu0 0.0
  %2789 = vmatpush1.msra.mxu0 0.0
  %2790 = vmatprep.subr.mxu0 0.0
  %2791 = vmatpush1.msra.mxu0 0.0
  %2792 = vmatprep.subr.mxu0 0.0
  %2793 = vmatpush1.msra.mxu0 0.0
  %2794 = vmatprep.subr.mxu0 0.0
  %2795 = vmatpush1.msra.mxu0 0.0
  %2796 = vmatprep.subr.mxu0 0.0
  %2797 = vmatpush1.msra.mxu0 0.0
  %2798 = vmatprep.subr.mxu0 0.0
  %2799 = vmatpush1.msra.mxu0 0.0
  %2800 = vmatprep.subr.mxu0 0.0
  %2801 = vmatpush1.msra.mxu0 0.0
  %2802 = vmatprep.subr.mxu0 0.0
  %2803 = vmatpush1.msra.mxu0 0.0
  %2804 = vmatprep.subr.mxu0 0.0
  %2805 = vmatpush1.msra.mxu0 0.0
  %2806 = vmatprep.subr.mxu0 0.0
  %2807 = vmatpush1.msra.mxu0 0.0
  %2808 = vmatprep.subr.mxu0 0.0
  %2809 = vmatpush1.msra.mxu0 0.0
  %2810 = vmatprep.subr.mxu0 0.0
  %2811 = vmatpush1.msra.mxu0 0.0
  %2812 = vmatprep.subr.mxu0 0.0
  %2813 = vmatpush1.msra.mxu0 0.0
  %2814 = vmatprep.subr.mxu0 0.0
  %2815 = vmatpush1.msra.mxu0 0.0
  %2816 = vmatprep.subr.mxu0 0.0
  %2817 = vmatpush1.msra.mxu0 0.0
  %2818 = vmatprep.subr.mxu0 0.0
  %2819 = vmatpush1.msra.mxu0 0.0
  %2820 = vmatprep.subr.mxu0 0.0
  %2821 = vmatpush1.msra.mxu0 0.0
  %2822 = vmatprep.subr.mxu0 0.0
  %2823 = vmatpush1.msra.mxu0 0.0
  %2824 = vmatprep.subr.mxu0 0.0
  %2825 = vmatpush1.msra.mxu0 0.0
  %2826 = vmatprep.subr.mxu0 0.0
  %2827 = vmatpush1.msra.mxu0 0.0
  %2828 = vmatprep.subr.mxu0 0.0
  %2829 = vmatpush1.msra.mxu0 0.0
  %2830 = vmatprep.subr.mxu0 0.0
  %2831 = vmatpush1.msra.mxu0 0.0
  %2832 = vmatprep.subr.mxu0 0.0
  %2833 = vmatpush1.msra.mxu0 0.0
  %2834 = vmatprep.subr.mxu0 0.0
  %2835 = vmatpush1.msra.mxu0 0.0
  %2836 = vmatprep.subr.mxu0 0.0
  %2837 = vmatpush1.msra.mxu0 0.0
  %2838 = vmatprep.subr.mxu0 0.0
  %2839 = vmatpush1.msra.mxu0 0.0
  %2840 = vmatprep.subr.mxu0 0.0
  %2841 = vmatpush1.msra.mxu0 0.0
  %2842 = vmatprep.subr.mxu0 0.0
  %2843 = vmatpush1.msra.mxu0 0.0
  %2844 = vmatprep.subr.mxu0 0.0
  %2845 = vmatpush1.msra.mxu0 0.0
  %2846 = vmatprep.mubr.f32.mxu0 0.0
  %2847 = vmatmul.mubr.f32.gmra.mrb[0].mxu0 %v2314
  %v2848 = vpop.f32.mrb[0].mxu0
  %v2849 = vadd.f32 0.0, %v2848
  %v2850 = vpop.f32.mrb[0].mxu0
  %2851 = vmatprep.mubr.f32.mxu0 0.0
  %2852 = vmatmul.mubr.f32.gmra.mrb[0].mxu0 %v2316
  %v2853 = vpop.f32.mrb[0].mxu0
  %v2854 = vadd.f32 0.0, %v2853
  %v2855 = vpop.f32.mrb[0].mxu0
  %2856 = vmatprep.mubr.f32.mxu0 0.0
  %2857 = vmatmul.mubr.f32.gmra.mrb[0].mxu0 %v2318
  %v2858 = vpop.f32.mrb[0].mxu0
  %v2859 = vadd.f32 0.0, %v2858
  %v2860 = vpop.f32.mrb[0].mxu0
  %2861 = vmatprep.mubr.f32.mxu0 0.0
  %2862 = vmatmul.mubr.f32.gmra.mrb[0].mxu0 %v2320
  %v2863 = vpop.f32.mrb[0].mxu0
  %v2864 = vadd.f32 0.0, %v2863
  %v2865 = vpop.f32.mrb[0].mxu0
  %2866 = vmatprep.mubr.f32.mxu0 0.0
  %2867 = vmatmul.mubr.f32.gmra.mrb[0].mxu0 %v2322
  %v2868 = vpop.f32.mrb[0].mxu0
  %v2869 = vadd.f32 0.0, %v2868
  %v2870 = vpop.f32.mrb[0].mxu0
  %2871 = vmatprep.mubr.f32.mxu0 0.0
  %2872 = vmatmul.mubr.f32.gmra.mrb[0].mxu0 %v2324
  %v2873 = vpop.f32.mrb[0].mxu0
  %v2874 = vadd.f32 0.0, %v2873
  %v2875 = vpop.f32.mrb[0].mxu0
  %2876 = vmatprep.mubr.f32.mxu0 0.0
  %2877 = vmatmul.mubr.f32.gmra.mrb[0].mxu0 %v2326
  %v2878 = vpop.f32.mrb[0].mxu0
  %v2879 = vadd.f32 0.0, %v2878
  %v2880 = vpop.f32.mrb[0].mxu0
  %2881 = vmatprep.mubr.f32.mxu0 0.0
  %2882 = vmatmul.mubr.f32.gmra.mrb[0].mxu0 %v2328
  %v2883 = vpop.f32.mrb[0].mxu0
  %v2884 = vadd.f32 0.0, %v2883
  %v2885 = vpop.f32.mrb[0].mxu0
  %2886 = vmatprep.mubr.f32.mxu0 0.0
  %2887 = vmatmul.mubr.f32.gmra.mrb[0].mxu0 %v2330
  %v2888 = vpop.f32.mrb[0].mxu0
  %v2889 = vadd.f32 0.0, %v2888
  %v2890 = vpop.f32.mrb[0].mxu0
  %2891 = vmatprep.mubr.f32.mxu0 0.0
  %2892 = vmatmul.mubr.f32.gmra.mrb[0].mxu0 %v2332
  %v2893 = vpop.f32.mrb[0].mxu0
  %v2894 = vadd.f32 0.0, %v2893
  %v2895 = vpop.f32.mrb[0].mxu0
  %2896 = vmatprep.mubr.f32.mxu0 0.0
  %2897 = vmatmul.mubr.f32.gmra.mrb[0].mxu0 %v2334
  %v2898 = vpop.f32.mrb[0].mxu0
  %v2899 = vadd.f32 0.0, %v2898
  %v2900 = vpop.f32.mrb[0].mxu0
  %2901 = vmatprep.mubr.f32.mxu0 0.0
  %2902 = vmatmul.mubr.f32.gmra.mrb[0].mxu0 %v2336
  %v2903 = vpop.f32.mrb[0].mxu0
  %v2904 = vadd.f32 0.0, %v2903
  %v2905 = vpop.f32.mrb[0].mxu0
  %2906 = vmatprep.mubr.f32.mxu0 0.0
  %2907 = vmatmul.mubr.f32.gmra.mrb[0].mxu0 %v2338
  %v2908 = vpop.f32.mrb[0].mxu0
  %v2909 = vadd.f32 0.0, %v2908
  %v2910 = vpop.f32.mrb[0].mxu0
  %2911 = vmatprep.mubr.f32.mxu0 0.0
  %2912 = vmatmul.mubr.f32.gmra.mrb[0].mxu0 %v2340
  %v2913 = vpop.f32.mrb[0].mxu0
  %v2914 = vadd.f32 0.0, %v2913
  %v2915 = vpop.f32.mrb[0].mxu0
  %2916 = vmatprep.mubr.f32.mxu0 0.0
  %2917 = vmatmul.mubr.f32.gmra.mrb[0].mxu0 %v2342
  %v2918 = vpop.f32.mrb[0].mxu0
  %v2919 = vadd.f32 0.0, %v2918
  %v2920 = vpop.f32.mrb[0].mxu0
  %2921 = vmatprep.mubr.f32.mxu0 0.0
  %2922 = vmatmul.mubr.f32.gmra.mrb[0].mxu0 %v2344
  %v2923 = vpop.f32.mrb[0].mxu0
  %v2924 = vadd.f32 0.0, %v2923
  %v2925 = vpop.f32.mrb[0].mxu0
  %2926 = vdwg.mxu0
  %v2927 = vmul.f32 %v2924, %v1002
  %v2928 = vmul.f32 %v2849, %v1004
  %v2929 = vmul.f32 %v2854, %v1006
  %v2930 = vmul.f32 %v2859, %v1008
  %v2931 = vmul.f32 %v2864, %v1010
  %v2932 = vmul.f32 %v2869, %v1012
  %v2933 = vmul.f32 %v2874, %v1014
  %v2934 = vmul.f32 %v2879, %v1016
  %v2935 = vmul.f32 %v2884, %v1018
  %v2936 = vmul.f32 %v2889, %v1020
  %v2937 = vmul.f32 %v2894, %v1022
  %v2938 = vmul.f32 %v2899, %v1024
  %v2939 = vmul.f32 %v2904, %v1026
  %v2940 = vmul.f32 %v2909, %v1028
  %v2941 = vmul.f32 %v2914, %v1030
  %v2942 = vmul.f32 %v2919, %v1032
  %v2943 = vmul.f32 %v2924, %v1031
  %v2944 = vadd.f32 %v2757, %v2927
  %v2945 = vadd.f32 %v2758, %v2928
  %v2946 = vadd.f32 %v2759, %v2929
  %v2947 = vadd.f32 %v2760, %v2930
  %v2948 = vadd.f32 %v2761, %v2931
  %v2949 = vadd.f32 %v2762, %v2932
  %v2950 = vadd.f32 %v2763, %v2933
  %v2951 = vadd.f32 %v2764, %v2934
  %v2952 = vadd.f32 %v2765, %v2935
  %v2953 = vadd.f32 %v2766, %v2936
  %v2954 = vadd.f32 %v2767, %v2937
  %v2955 = vadd.f32 %v2768, %v2938
  %v2956 = vadd.f32 %v2769, %v2939
  %v2957 = vadd.f32 %v2770, %v2940
  %v2958 = vadd.f32 %v2771, %v2941
  %v2959 = vadd.f32 %v2772, %v2942
  %v2960 = vadd.f32 %v2773, %v2943
  %v2961 = vmul.f32 %v2849, %v1086
  %v2962 = vmul.f32 %v2854, %v1090
  %v2963 = vmul.f32 %v2859, %v1094
  %v2964 = vmul.f32 %v2864, %v1098
  %v2965 = vmul.f32 %v2869, %v1102
  %v2966 = vmul.f32 %v2874, %v1106
  %v2967 = vmul.f32 %v2879, %v1110
  %v2968 = vmul.f32 %v2884, %v1114
  %v2969 = vmul.f32 %v2889, %v1118
  %v2970 = vmul.f32 %v2894, %v1122
  %v2971 = vmul.f32 %v2899, %v1126
  %v2972 = vmul.f32 %v2904, %v1130
  %v2973 = vmul.f32 %v2909, %v1134
  %v2974 = vmul.f32 %v2914, %v1138
  %v2975 = vmul.f32 %v2919, %v1142
  %v2976 = vmul.f32 %v2924, %v1146
  %v2993 = vrot.slane %v2961, 1
  %v2994 = vrot.slane %v2962, 1
  %v2995 = vsel %vm311, %v2993, %v2994
  %v2996 = vrot.slane %v2963, 1
  %v2997 = vsel %vm311, %v2994, %v2996
  %v2998 = vrot.slane %v2964, 1
  %v2999 = vsel %vm311, %v2996, %v2998
  %v3000 = vrot.slane %v2965, 1
  %v3001 = vsel %vm311, %v2998, %v3000
  %v3002 = vrot.slane %v2966, 1
  %v3003 = vsel %vm311, %v3000, %v3002
  %v3004 = vrot.slane %v2967, 1
  %v3005 = vsel %vm311, %v3002, %v3004
  %v3006 = vrot.slane %v2968, 1
  %v3007 = vsel %vm311, %v3004, %v3006
  %v3008 = vrot.slane %v2969, 1
  %v3009 = vsel %vm311, %v3006, %v3008
  %v3010 = vrot.slane %v2970, 1
  %v3011 = vsel %vm311, %v3008, %v3010
  %v3012 = vrot.slane %v2971, 1
  %v3013 = vsel %vm311, %v3010, %v3012
  %v3014 = vrot.slane %v2972, 1
  %v3015 = vsel %vm311, %v3012, %v3014
  %v3016 = vrot.slane %v2973, 1
  %v3017 = vsel %vm311, %v3014, %v3016
  %v3018 = vrot.slane %v2974, 1
  %v3019 = vsel %vm311, %v3016, %v3018
  %v3020 = vrot.slane %v2975, 1
  %v3021 = vsel %vm311, %v3018, %v3020
  %v3022 = vrot.slane %v2976, 1
  %v3023 = vsel %vm311, %v3020, %v3022
  %3024 = vrot.lane.b32.xlu0 %v2993, 112
  %v3025 = vpop.permute.xlu0 %3024
  %3026 = vrot.lane.b32.xlu0 %v2995, 112
  %v3027 = vpop.permute.xlu0 %3026
  %3028 = vrot.lane.b32.xlu0 %v2997, 112
  %v3029 = vpop.permute.xlu0 %3028
  %3030 = vrot.lane.b32.xlu0 %v2999, 112
  %v3031 = vpop.permute.xlu0 %3030
  %3032 = vrot.lane.b32.xlu0 %v3001, 112
  %v3033 = vpop.permute.xlu0 %3032
  %3034 = vrot.lane.b32.xlu0 %v3003, 112
  %v3035 = vpop.permute.xlu0 %3034
  %3036 = vrot.lane.b32.xlu0 %v3005, 112
  %v3037 = vpop.permute.xlu0 %3036
  %3038 = vrot.lane.b32.xlu0 %v3007, 112
  %v3039 = vpop.permute.xlu0 %3038
  %3040 = vrot.lane.b32.xlu0 %v3009, 112
  %v3041 = vpop.permute.xlu0 %3040
  %3042 = vrot.lane.b32.xlu0 %v3011, 112
  %v3043 = vpop.permute.xlu0 %3042
  %3044 = vrot.lane.b32.xlu0 %v3013, 112
  %v3045 = vpop.permute.xlu0 %3044
  %3046 = vrot.lane.b32.xlu0 %v3015, 112
  %v3047 = vpop.permute.xlu0 %3046
  %3048 = vrot.lane.b32.xlu0 %v3017, 112
  %v3049 = vpop.permute.xlu0 %3048
  %3050 = vrot.lane.b32.xlu0 %v3019, 112
  %v3051 = vpop.permute.xlu0 %3050
  %3052 = vrot.lane.b32.xlu0 %v3021, 112
  %v3053 = vpop.permute.xlu0 %3052
  %3054 = vrot.lane.b32.xlu0 %v3023, 112
  %v3055 = vpop.permute.xlu0 %3054
  %3056 = vrot.lane.b32.xlu0 %v3022, 112
  %v3057 = vpop.permute.xlu0 %3056
  %v3075 = vadd.f32 %v2944, %v3025
  %v3076 = vadd.f32 %v2945, %v3027
  %v3077 = vadd.f32 %v2946, %v3029
  %v3078 = vadd.f32 %v2947, %v3031
  %v3079 = vadd.f32 %v2948, %v3033
  %v3080 = vadd.f32 %v2949, %v3035
  %v3081 = vadd.f32 %v2950, %v3037
  %v3082 = vadd.f32 %v2951, %v3039
  %v3083 = vadd.f32 %v2952, %v3041
  %v3084 = vadd.f32 %v2953, %v3043
  %v3085 = vadd.f32 %v2954, %v3045
  %v3086 = vadd.f32 %v2955, %v3047
  %v3087 = vadd.f32 %v2956, %v3049
  %v3088 = vadd.f32 %v2957, %v3051
  %v3089 = vadd.f32 %v2958, %v3053
  %v3090 = vadd.f32 %v2959, %v3055
  %v3091 = vadd.f32 %v2960, %v3057
  %v3092 = vmul.f32 %v2849, %v1327
  %v3093 = vmul.f32 %v2854, %v1329
  %v3094 = vmul.f32 %v2859, %v1331
  %v3095 = vmul.f32 %v2864, %v1333
  %v3096 = vmul.f32 %v2869, %v1335
  %v3097 = vmul.f32 %v2874, %v1337
  %v3098 = vmul.f32 %v2879, %v1339
  %v3099 = vmul.f32 %v2884, %v1341
  %v3100 = vmul.f32 %v2889, %v1343
  %v3101 = vmul.f32 %v2894, %v1345
  %v3102 = vmul.f32 %v2899, %v1347
  %v3103 = vmul.f32 %v2904, %v1349
  %v3104 = vmul.f32 %v2909, %v1351
  %v3105 = vmul.f32 %v2914, %v1353
  %v3106 = vmul.f32 %v2919, %v1355
  %v3107 = vmul.f32 %v2924, %v1357
  %v3108 = vmul.f32 %v2849, %v1356
  %v3126 = vrot.slane %v3092, 2
  %v3127 = vrot.slane %v3093, 2
  %v3128 = vsel %vm703, %v3126, %v3127
  %v3129 = vrot.slane %v3094, 2
  %v3130 = vsel %vm703, %v3127, %v3129
  %v3131 = vrot.slane %v3095, 2
  %v3132 = vsel %vm703, %v3129, %v3131
  %v3133 = vrot.slane %v3096, 2
  %v3134 = vsel %vm703, %v3131, %v3133
  %v3135 = vrot.slane %v3097, 2
  %v3136 = vsel %vm703, %v3133, %v3135
  %v3137 = vrot.slane %v3098, 2
  %v3138 = vsel %vm703, %v3135, %v3137
  %v3139 = vrot.slane %v3099, 2
  %v3140 = vsel %vm703, %v3137, %v3139
  %v3141 = vrot.slane %v3100, 2
  %v3142 = vsel %vm703, %v3139, %v3141
  %v3143 = vrot.slane %v3101, 2
  %v3144 = vsel %vm703, %v3141, %v3143
  %v3145 = vrot.slane %v3102, 2
  %v3146 = vsel %vm703, %v3143, %v3145
  %v3147 = vrot.slane %v3103, 2
  %v3148 = vsel %vm703, %v3145, %v3147
  %v3149 = vrot.slane %v3104, 2
  %v3150 = vsel %vm703, %v3147, %v3149
  %v3151 = vrot.slane %v3105, 2
  %v3152 = vsel %vm703, %v3149, %v3151
  %v3153 = vrot.slane %v3106, 2
  %v3154 = vsel %vm703, %v3151, %v3153
  %v3155 = vrot.slane %v3107, 2
  %v3156 = vsel %vm703, %v3153, %v3155
  %v3157 = vrot.slane %v3108, 2
  %v3158 = vsel %vm703, %v3155, %v3157
  %3159 = vrot.lane.b32.xlu0 %v3126, 96
  %v3160 = vpop.permute.xlu0 %3159
  %3161 = vrot.lane.b32.xlu0 %v3128, 96
  %v3162 = vpop.permute.xlu0 %3161
  %3163 = vrot.lane.b32.xlu0 %v3130, 96
  %v3164 = vpop.permute.xlu0 %3163
  %3165 = vrot.lane.b32.xlu0 %v3132, 96
  %v3166 = vpop.permute.xlu0 %3165
  %3167 = vrot.lane.b32.xlu0 %v3134, 96
  %v3168 = vpop.permute.xlu0 %3167
  %3169 = vrot.lane.b32.xlu0 %v3136, 96
  %v3170 = vpop.permute.xlu0 %3169
  %3171 = vrot.lane.b32.xlu0 %v3138, 96
  %v3172 = vpop.permute.xlu0 %3171
  %3173 = vrot.lane.b32.xlu0 %v3140, 96
  %v3174 = vpop.permute.xlu0 %3173
  %3175 = vrot.lane.b32.xlu0 %v3142, 96
  %v3176 = vpop.permute.xlu0 %3175
  %3177 = vrot.lane.b32.xlu0 %v3144, 96
  %v3178 = vpop.permute.xlu0 %3177
  %3179 = vrot.lane.b32.xlu0 %v3146, 96
  %v3180 = vpop.permute.xlu0 %3179
  %3181 = vrot.lane.b32.xlu0 %v3148, 96
  %v3182 = vpop.permute.xlu0 %3181
  %3183 = vrot.lane.b32.xlu0 %v3150, 96
  %v3184 = vpop.permute.xlu0 %3183
  %3185 = vrot.lane.b32.xlu0 %v3152, 96
  %v3186 = vpop.permute.xlu0 %3185
  %3187 = vrot.lane.b32.xlu0 %v3154, 96
  %v3188 = vpop.permute.xlu0 %3187
  %3189 = vrot.lane.b32.xlu0 %v3156, 96
  %v3190 = vpop.permute.xlu0 %3189
  %3191 = vrot.lane.b32.xlu0 %v3158, 96
  %v3192 = vpop.permute.xlu0 %3191
  %v3210 = vadd.f32 %v3075, %v3160
  %v3211 = vadd.f32 %v3076, %v3162
  %v3212 = vadd.f32 %v3077, %v3164
  %v3213 = vadd.f32 %v3078, %v3166
  %v3214 = vadd.f32 %v3079, %v3168
  %v3215 = vadd.f32 %v3080, %v3170
  %v3216 = vadd.f32 %v3081, %v3172
  %v3217 = vadd.f32 %v3082, %v3174
  %v3218 = vadd.f32 %v3083, %v3176
  %v3219 = vadd.f32 %v3084, %v3178
  %v3220 = vadd.f32 %v3085, %v3180
  %v3221 = vadd.f32 %v3086, %v3182
  %v3222 = vadd.f32 %v3087, %v3184
  %v3223 = vadd.f32 %v3088, %v3186
  %v3224 = vadd.f32 %v3089, %v3188
  %v3225 = vadd.f32 %v3090, %v3190
  %v3226 = vadd.f32 %v3091, %v3192
  %v3227 = vld [vmem:[%s1 + $0x28] sm:$0xff]
  %v3228 = vld [vmem:[%s1 + $0x30] sm:$0xff]
  %v3229 = vld [vmem:[%s1 + $0x50] sm:$0xff]
  %v3230 = vld [vmem:[%s1 + $0x58] sm:$0xff]
  %3235 = vrot.lane.b32.xlu0 %v3227, 32
  %v3236 = vpop.permute.xlu0 %3235
  %3237 = vrot.lane.b32.xlu0 %v3228, 32
  %v3238 = vpop.permute.xlu0 %3237
  %3239 = vrot.lane.b32.xlu0 %v3229, 32
  %v3240 = vpop.permute.xlu0 %3239
  %3241 = vrot.lane.b32.xlu0 %v3230, 32
  %v3242 = vpop.permute.xlu0 %3241
  %v3243 = vsel %vm1518, %v3236, %v3238
  %v3244 = vsel %vm1518, %v3240, %v3242
  %3247 = vmatprep.subr.mxu0 0.0
  %3248 = vmatpush1.msra.mxu0 %v3243
  %3249 = vmatprep.subr.mxu0 0.0
  %3250 = vmatpush1.msra.mxu0 %v3244
  %3251 = vmatprep.subr.mxu0 0.0
  %3252 = vmatpush1.msra.mxu0 0.0
  %3253 = vmatprep.subr.mxu0 0.0
  %3254 = vmatpush1.msra.mxu0 0.0
  %3255 = vmatprep.subr.mxu0 0.0
  %3256 = vmatpush1.msra.mxu0 0.0
  %3257 = vmatprep.subr.mxu0 0.0
  %3258 = vmatpush1.msra.mxu0 0.0
  %3259 = vmatprep.subr.mxu0 0.0
  %3260 = vmatpush1.msra.mxu0 0.0
  %3261 = vmatprep.subr.mxu0 0.0
  %3262 = vmatpush1.msra.mxu0 0.0
  %3263 = vmatprep.subr.mxu0 0.0
  %3264 = vmatpush1.msra.mxu0 0.0
  %3265 = vmatprep.subr.mxu0 0.0
  %3266 = vmatpush1.msra.mxu0 0.0
  %3267 = vmatprep.subr.mxu0 0.0
  %3268 = vmatpush1.msra.mxu0 0.0
  %3269 = vmatprep.subr.mxu0 0.0
  %3270 = vmatpush1.msra.mxu0 0.0
  %3271 = vmatprep.subr.mxu0 0.0
  %3272 = vmatpush1.msra.mxu0 0.0
  %3273 = vmatprep.subr.mxu0 0.0
  %3274 = vmatpush1.msra.mxu0 0.0
  %3275 = vmatprep.subr.mxu0 0.0
  %3276 = vmatpush1.msra.mxu0 0.0
  %3277 = vmatprep.subr.mxu0 0.0
  %3278 = vmatpush1.msra.mxu0 0.0
  %3279 = vmatprep.subr.mxu0 0.0
  %3280 = vmatpush1.msra.mxu0 0.0
  %3281 = vmatprep.subr.mxu0 0.0
  %3282 = vmatpush1.msra.mxu0 0.0
  %3283 = vmatprep.subr.mxu0 0.0
  %3284 = vmatpush1.msra.mxu0 0.0
  %3285 = vmatprep.subr.mxu0 0.0
  %3286 = vmatpush1.msra.mxu0 0.0
  %3287 = vmatprep.subr.mxu0 0.0
  %3288 = vmatpush1.msra.mxu0 0.0
  %3289 = vmatprep.subr.mxu0 0.0
  %3290 = vmatpush1.msra.mxu0 0.0
  %3291 = vmatprep.subr.mxu0 0.0
  %3292 = vmatpush1.msra.mxu0 0.0
  %3293 = vmatprep.subr.mxu0 0.0
  %3294 = vmatpush1.msra.mxu0 0.0
  %3295 = vmatprep.subr.mxu0 0.0
  %3296 = vmatpush1.msra.mxu0 0.0
  %3297 = vmatprep.subr.mxu0 0.0
  %3298 = vmatpush1.msra.mxu0 0.0
  %3299 = vmatprep.subr.mxu0 0.0
  %3300 = vmatpush1.msra.mxu0 0.0
  %3301 = vmatprep.subr.mxu0 0.0
  %3302 = vmatpush1.msra.mxu0 0.0
  %3303 = vmatprep.subr.mxu0 0.0
  %3304 = vmatpush1.msra.mxu0 0.0
  %3305 = vmatprep.subr.mxu0 0.0
  %3306 = vmatpush1.msra.mxu0 0.0
  %3307 = vmatprep.subr.mxu0 0.0
  %3308 = vmatpush1.msra.mxu0 0.0
  %3309 = vmatprep.subr.mxu0 0.0
  %3310 = vmatpush1.msra.mxu0 0.0
  %3311 = vmatprep.mubr.f32.mxu0 0.0
  %3312 = vmatmul.mubr.f32.gmra.mrb[0].mxu0 %v2314
  %v3313 = vpop.f32.mrb[0].mxu0
  %v3314 = vadd.f32 0.0, %v3313
  %v3315 = vpop.f32.mrb[0].mxu0
  %3316 = vmatprep.mubr.f32.mxu0 0.0
  %3317 = vmatmul.mubr.f32.gmra.mrb[0].mxu0 %v2316
  %v3318 = vpop.f32.mrb[0].mxu0
  %v3319 = vadd.f32 0.0, %v3318
  %v3320 = vpop.f32.mrb[0].mxu0
  %3321 = vmatprep.mubr.f32.mxu0 0.0
  %3322 = vmatmul.mubr.f32.gmra.mrb[0].mxu0 %v2318
  %v3323 = vpop.f32.mrb[0].mxu0
  %v3324 = vadd.f32 0.0, %v3323
  %v3325 = vpop.f32.mrb[0].mxu0
  %3326 = vmatprep.mubr.f32.mxu0 0.0
  %3327 = vmatmul.mubr.f32.gmra.mrb[0].mxu0 %v2320
  %v3328 = vpop.f32.mrb[0].mxu0
  %v3329 = vadd.f32 0.0, %v3328
  %v3330 = vpop.f32.mrb[0].mxu0
  %3331 = vmatprep.mubr.f32.mxu0 0.0
  %3332 = vmatmul.mubr.f32.gmra.mrb[0].mxu0 %v2322
  %v3333 = vpop.f32.mrb[0].mxu0
  %v3334 = vadd.f32 0.0, %v3333
  %v3335 = vpop.f32.mrb[0].mxu0
  %3336 = vmatprep.mubr.f32.mxu0 0.0
  %3337 = vmatmul.mubr.f32.gmra.mrb[0].mxu0 %v2324
  %v3338 = vpop.f32.mrb[0].mxu0
  %v3339 = vadd.f32 0.0, %v3338
  %v3340 = vpop.f32.mrb[0].mxu0
  %3341 = vmatprep.mubr.f32.mxu0 0.0
  %3342 = vmatmul.mubr.f32.gmra.mrb[0].mxu0 %v2326
  %v3343 = vpop.f32.mrb[0].mxu0
  %v3344 = vadd.f32 0.0, %v3343
  %v3345 = vpop.f32.mrb[0].mxu0
  %3346 = vmatprep.mubr.f32.mxu0 0.0
  %3347 = vmatmul.mubr.f32.gmra.mrb[0].mxu0 %v2328
  %v3348 = vpop.f32.mrb[0].mxu0
  %v3349 = vadd.f32 0.0, %v3348
  %v3350 = vpop.f32.mrb[0].mxu0
  %3351 = vmatprep.mubr.f32.mxu0 0.0
  %3352 = vmatmul.mubr.f32.gmra.mrb[0].mxu0 %v2330
  %v3353 = vpop.f32.mrb[0].mxu0
  %v3354 = vadd.f32 0.0, %v3353
  %v3355 = vpop.f32.mrb[0].mxu0
  %3356 = vmatprep.mubr.f32.mxu0 0.0
  %3357 = vmatmul.mubr.f32.gmra.mrb[0].mxu0 %v2332
  %v3358 = vpop.f32.mrb[0].mxu0
  %v3359 = vadd.f32 0.0, %v3358
  %v3360 = vpop.f32.mrb[0].mxu0
  %3361 = vmatprep.mubr.f32.mxu0 0.0
  %3362 = vmatmul.mubr.f32.gmra.mrb[0].mxu0 %v2334
  %v3363 = vpop.f32.mrb[0].mxu0
  %v3364 = vadd.f32 0.0, %v3363
  %v3365 = vpop.f32.mrb[0].mxu0
  %3366 = vmatprep.mubr.f32.mxu0 0.0
  %3367 = vmatmul.mubr.f32.gmra.mrb[0].mxu0 %v2336
  %v3368 = vpop.f32.mrb[0].mxu0
  %v3369 = vadd.f32 0.0, %v3368
  %v3370 = vpop.f32.mrb[0].mxu0
  %3371 = vmatprep.mubr.f32.mxu0 0.0
  %3372 = vmatmul.mubr.f32.gmra.mrb[0].mxu0 %v2338
  %v3373 = vpop.f32.mrb[0].mxu0
  %v3374 = vadd.f32 0.0, %v3373
  %v3375 = vpop.f32.mrb[0].mxu0
  %3376 = vmatprep.mubr.f32.mxu0 0.0
  %3377 = vmatmul.mubr.f32.gmra.mrb[0].mxu0 %v2340
  %v3378 = vpop.f32.mrb[0].mxu0
  %v3379 = vadd.f32 0.0, %v3378
  %v3380 = vpop.f32.mrb[0].mxu0
  %3381 = vmatprep.mubr.f32.mxu0 0.0
  %3382 = vmatmul.mubr.f32.gmra.mrb[0].mxu0 %v2342
  %v3383 = vpop.f32.mrb[0].mxu0
  %v3384 = vadd.f32 0.0, %v3383
  %v3385 = vpop.f32.mrb[0].mxu0
  %3386 = vmatprep.mubr.f32.mxu0 0.0
  %3387 = vmatmul.mubr.f32.gmra.mrb[0].mxu0 %v2344
  %v3388 = vpop.f32.mrb[0].mxu0
  %v3389 = vadd.f32 0.0, %v3388
  %v3390 = vpop.f32.mrb[0].mxu0
  %3391 = vdwg.mxu0
  %v3392 = vmul.f32 %v3314, %v1714
  %v3393 = vmul.f32 %v3319, %v1716
  %v3394 = vmul.f32 %v3324, %v1718
  %v3395 = vmul.f32 %v3329, %v1720
  %v3396 = vmul.f32 %v3334, %v1722
  %v3397 = vmul.f32 %v3339, %v1724
  %v3398 = vmul.f32 %v3344, %v1726
  %v3399 = vmul.f32 %v3349, %v1728
  %v3400 = vmul.f32 %v3354, %v1730
  %v3401 = vmul.f32 %v3359, %v1732
  %v3402 = vmul.f32 %v3364, %v1734
  %v3403 = vmul.f32 %v3369, %v1736
  %v3404 = vmul.f32 %v3374, %v1738
  %v3405 = vmul.f32 %v3379, %v1740
  %v3406 = vmul.f32 %v3384, %v1742
  %v3407 = vmul.f32 %v3389, %v1744
  %v3408 = vmul.f32 %v3314, %v1743
  %v3409 = vadd.f32 %v3210, %v3392
  %v3410 = vadd.f32 %v3211, %v3393
  %v3411 = vadd.f32 %v3212, %v3394
  %v3412 = vadd.f32 %v3213, %v3395
  %v3413 = vadd.f32 %v3214, %v3396
  %v3414 = vadd.f32 %v3215, %v3397
  %v3415 = vadd.f32 %v3216, %v3398
  %v3416 = vadd.f32 %v3217, %v3399
  %v3417 = vadd.f32 %v3218, %v3400
  %v3418 = vadd.f32 %v3219, %v3401
  %v3419 = vadd.f32 %v3220, %v3402
  %v3420 = vadd.f32 %v3221, %v3403
  %v3421 = vadd.f32 %v3222, %v3404
  %v3422 = vadd.f32 %v3223, %v3405
  %v3423 = vadd.f32 %v3224, %v3406
  %v3424 = vadd.f32 %v3225, %v3407
  %v3425 = vadd.f32 %v3226, %v3408
  %v3426 = vmul.f32 %v3319, %v1798
  %v3427 = vmul.f32 %v3324, %v1802
  %v3428 = vmul.f32 %v3329, %v1806
  %v3429 = vmul.f32 %v3334, %v1810
  %v3430 = vmul.f32 %v3339, %v1814
  %v3431 = vmul.f32 %v3344, %v1818
  %v3432 = vmul.f32 %v3349, %v1822
  %v3433 = vmul.f32 %v3354, %v1826
  %v3434 = vmul.f32 %v3359, %v1830
  %v3435 = vmul.f32 %v3364, %v1834
  %v3436 = vmul.f32 %v3369, %v1838
  %v3437 = vmul.f32 %v3374, %v1842
  %v3438 = vmul.f32 %v3379, %v1846
  %v3439 = vmul.f32 %v3384, %v1850
  %v3440 = vmul.f32 %v3389, %v1854
  %v3441 = vmul.f32 %v3314, %v1858
  %v3458 = vrot.slane %v3426, 1
  %v3459 = vrot.slane %v3427, 1
  %v3460 = vsel %vm311, %v3458, %v3459
  %v3461 = vrot.slane %v3428, 1
  %v3462 = vsel %vm311, %v3459, %v3461
  %v3463 = vrot.slane %v3429, 1
  %v3464 = vsel %vm311, %v3461, %v3463
  %v3465 = vrot.slane %v3430, 1
  %v3466 = vsel %vm311, %v3463, %v3465
  %v3467 = vrot.slane %v3431, 1
  %v3468 = vsel %vm311, %v3465, %v3467
  %v3469 = vrot.slane %v3432, 1
  %v3470 = vsel %vm311, %v3467, %v3469
  %v3471 = vrot.slane %v3433, 1
  %v3472 = vsel %vm311, %v3469, %v3471
  %v3473 = vrot.slane %v3434, 1
  %v3474 = vsel %vm311, %v3471, %v3473
  %v3475 = vrot.slane %v3435, 1
  %v3476 = vsel %vm311, %v3473, %v3475
  %v3477 = vrot.slane %v3436, 1
  %v3478 = vsel %vm311, %v3475, %v3477
  %v3479 = vrot.slane %v3437, 1
  %v3480 = vsel %vm311, %v3477, %v3479
  %v3481 = vrot.slane %v3438, 1
  %v3482 = vsel %vm311, %v3479, %v3481
  %v3483 = vrot.slane %v3439, 1
  %v3484 = vsel %vm311, %v3481, %v3483
  %v3485 = vrot.slane %v3440, 1
  %v3486 = vsel %vm311, %v3483, %v3485
  %v3487 = vrot.slane %v3441, 1
  %v3488 = vsel %vm311, %v3485, %v3487
  %3489 = vrot.lane.b32.xlu0 %v3458, 112
  %v3490 = vpop.permute.xlu0 %3489
  %3491 = vrot.lane.b32.xlu0 %v3460, 112
  %v3492 = vpop.permute.xlu0 %3491
  %3493 = vrot.lane.b32.xlu0 %v3462, 112
  %v3494 = vpop.permute.xlu0 %3493
  %3495 = vrot.lane.b32.xlu0 %v3464, 112
  %v3496 = vpop.permute.xlu0 %3495
  %3497 = vrot.lane.b32.xlu0 %v3466, 112
  %v3498 = vpop.permute.xlu0 %3497
  %3499 = vrot.lane.b32.xlu0 %v3468, 112
  %v3500 = vpop.permute.xlu0 %3499
  %3501 = vrot.lane.b32.xlu0 %v3470, 112
  %v3502 = vpop.permute.xlu0 %3501
  %3503 = vrot.lane.b32.xlu0 %v3472, 112
  %v3504 = vpop.permute.xlu0 %3503
  %3505 = vrot.lane.b32.xlu0 %v3474, 112
  %v3506 = vpop.permute.xlu0 %3505
  %3507 = vrot.lane.b32.xlu0 %v3476, 112
  %v3508 = vpop.permute.xlu0 %3507
  %3509 = vrot.lane.b32.xlu0 %v3478, 112
  %v3510 = vpop.permute.xlu0 %3509
  %3511 = vrot.lane.b32.xlu0 %v3480, 112
  %v3512 = vpop.permute.xlu0 %3511
  %3513 = vrot.lane.b32.xlu0 %v3482, 112
  %v3514 = vpop.permute.xlu0 %3513
  %3515 = vrot.lane.b32.xlu0 %v3484, 112
  %v3516 = vpop.permute.xlu0 %3515
  %3517 = vrot.lane.b32.xlu0 %v3486, 112
  %v3518 = vpop.permute.xlu0 %3517
  %3519 = vrot.lane.b32.xlu0 %v3488, 112
  %v3520 = vpop.permute.xlu0 %3519
  %3521 = vrot.lane.b32.xlu0 %v3487, 112
  %v3522 = vpop.permute.xlu0 %3521
  %v3540 = vadd.f32 %v3409, %v3490
  %v3541 = vadd.f32 %v3410, %v3492
  %v3542 = vadd.f32 %v3411, %v3494
  %v3543 = vadd.f32 %v3412, %v3496
  %v3544 = vadd.f32 %v3413, %v3498
  %v3545 = vadd.f32 %v3414, %v3500
  %v3546 = vadd.f32 %v3415, %v3502
  %v3547 = vadd.f32 %v3416, %v3504
  %v3548 = vadd.f32 %v3417, %v3506
  %v3549 = vadd.f32 %v3418, %v3508
  %v3550 = vadd.f32 %v3419, %v3510
  %v3551 = vadd.f32 %v3420, %v3512
  %v3552 = vadd.f32 %v3421, %v3514
  %v3553 = vadd.f32 %v3422, %v3516
  %v3554 = vadd.f32 %v3423, %v3518
  %v3555 = vadd.f32 %v3424, %v3520
  %v3556 = vadd.f32 %v3425, %v3522
  %v3557 = vmul.f32 %v3319, %v2039
  %v3558 = vmul.f32 %v3324, %v2041
  %v3559 = vmul.f32 %v3329, %v2043
  %v3560 = vmul.f32 %v3334, %v2045
  %v3561 = vmul.f32 %v3339, %v2047
  %v3562 = vmul.f32 %v3344, %v2049
  %v3563 = vmul.f32 %v3349, %v2051
  %v3564 = vmul.f32 %v3354, %v2053
  %v3565 = vmul.f32 %v3359, %v2055
  %v3566 = vmul.f32 %v3364, %v2057
  %v3567 = vmul.f32 %v3369, %v2059
  %v3568 = vmul.f32 %v3374, %v2061
  %v3569 = vmul.f32 %v3379, %v2063
  %v3570 = vmul.f32 %v3384, %v2065
  %v3571 = vmul.f32 %v3389, %v2067
  %v3572 = vmul.f32 %v3314, %v2069
  %v3573 = vmul.f32 %v3319, %v2068
  %v3591 = vrot.slane %v3557, 2
  %v3592 = vrot.slane %v3558, 2
  %v3593 = vsel %vm703, %v3591, %v3592
  %v3594 = vrot.slane %v3559, 2
  %v3595 = vsel %vm703, %v3592, %v3594
  %v3596 = vrot.slane %v3560, 2
  %v3597 = vsel %vm703, %v3594, %v3596
  %v3598 = vrot.slane %v3561, 2
  %v3599 = vsel %vm703, %v3596, %v3598
  %v3600 = vrot.slane %v3562, 2
  %v3601 = vsel %vm703, %v3598, %v3600
  %v3602 = vrot.slane %v3563, 2
  %v3603 = vsel %vm703, %v3600, %v3602
  %v3604 = vrot.slane %v3564, 2
  %v3605 = vsel %vm703, %v3602, %v3604
  %v3606 = vrot.slane %v3565, 2
  %v3607 = vsel %vm703, %v3604, %v3606
  %v3608 = vrot.slane %v3566, 2
  %v3609 = vsel %vm703, %v3606, %v3608
  %v3610 = vrot.slane %v3567, 2
  %v3611 = vsel %vm703, %v3608, %v3610
  %v3612 = vrot.slane %v3568, 2
  %v3613 = vsel %vm703, %v3610, %v3612
  %v3614 = vrot.slane %v3569, 2
  %v3615 = vsel %vm703, %v3612, %v3614
  %v3616 = vrot.slane %v3570, 2
  %v3617 = vsel %vm703, %v3614, %v3616
  %v3618 = vrot.slane %v3571, 2
  %v3619 = vsel %vm703, %v3616, %v3618
  %v3620 = vrot.slane %v3572, 2
  %v3621 = vsel %vm703, %v3618, %v3620
  %v3622 = vrot.slane %v3573, 2
  %v3623 = vsel %vm703, %v3620, %v3622
  %3624 = vrot.lane.b32.xlu0 %v3591, 96
  %v3625 = vpop.permute.xlu0 %3624
  %3626 = vrot.lane.b32.xlu0 %v3593, 96
  %v3627 = vpop.permute.xlu0 %3626
  %3628 = vrot.lane.b32.xlu0 %v3595, 96
  %v3629 = vpop.permute.xlu0 %3628
  %3630 = vrot.lane.b32.xlu0 %v3597, 96
  %v3631 = vpop.permute.xlu0 %3630
  %3632 = vrot.lane.b32.xlu0 %v3599, 96
  %v3633 = vpop.permute.xlu0 %3632
  %3634 = vrot.lane.b32.xlu0 %v3601, 96
  %v3635 = vpop.permute.xlu0 %3634
  %3636 = vrot.lane.b32.xlu0 %v3603, 96
  %v3637 = vpop.permute.xlu0 %3636
  %3638 = vrot.lane.b32.xlu0 %v3605, 96
  %v3639 = vpop.permute.xlu0 %3638
  %3640 = vrot.lane.b32.xlu0 %v3607, 96
  %v3641 = vpop.permute.xlu0 %3640
  %3642 = vrot.lane.b32.xlu0 %v3609, 96
  %v3643 = vpop.permute.xlu0 %3642
  %3644 = vrot.lane.b32.xlu0 %v3611, 96
  %v3645 = vpop.permute.xlu0 %3644
  %3646 = vrot.lane.b32.xlu0 %v3613, 96
  %v3647 = vpop.permute.xlu0 %3646
  %3648 = vrot.lane.b32.xlu0 %v3615, 96
  %v3649 = vpop.permute.xlu0 %3648
  %3650 = vrot.lane.b32.xlu0 %v3617, 96
  %v3651 = vpop.permute.xlu0 %3650
  %3652 = vrot.lane.b32.xlu0 %v3619, 96
  %v3653 = vpop.permute.xlu0 %3652
  %3654 = vrot.lane.b32.xlu0 %v3621, 96
  %v3655 = vpop.permute.xlu0 %3654
  %3656 = vrot.lane.b32.xlu0 %v3623, 96
  %v3657 = vpop.permute.xlu0 %3656
  %v3675 = vadd.f32 %v3540, %v3625
  %v3676 = vadd.f32 %v3541, %v3627
  %v3677 = vadd.f32 %v3542, %v3629
  %v3678 = vadd.f32 %v3543, %v3631
  %v3679 = vadd.f32 %v3544, %v3633
  %v3680 = vadd.f32 %v3545, %v3635
  %v3681 = vadd.f32 %v3546, %v3637
  %v3682 = vadd.f32 %v3547, %v3639
  %v3683 = vadd.f32 %v3548, %v3641
  %v3684 = vadd.f32 %v3549, %v3643
  %v3685 = vadd.f32 %v3550, %v3645
  %v3686 = vadd.f32 %v3551, %v3647
  %v3687 = vadd.f32 %v3552, %v3649
  %v3688 = vadd.f32 %v3553, %v3651
  %v3689 = vadd.f32 %v3554, %v3653
  %v3690 = vadd.f32 %v3555, %v3655
  %v3691 = vadd.f32 %v3556, %v3657
  %v3692 = vld [vmem:[%s2 + $0x1] sm:$0x1]
  %v3693 = vlaneseq
  %v3694 = vshrl.u32 %v3693, 7
  %v3695 = vsub.s32 0, %v3694
  %v3696 = vrot.slane %v3692, %v3695
  %v3697 = vadd.f32 %v3675, %v3696
  %v3698 = vadd.f32 %v3676, %v3696
  %v3699 = vadd.f32 %v3677, %v3696
  %v3700 = vadd.f32 %v3678, %v3696
  %v3701 = vadd.f32 %v3679, %v3696
  %v3702 = vadd.f32 %v3680, %v3696
  %v3703 = vadd.f32 %v3681, %v3696
  %v3704 = vadd.f32 %v3682, %v3696
  %v3705 = vadd.f32 %v3683, %v3696
  %v3706 = vadd.f32 %v3684, %v3696
  %v3707 = vadd.f32 %v3685, %v3696
  %v3708 = vadd.f32 %v3686, %v3696
  %v3709 = vadd.f32 %v3687, %v3696
  %v3710 = vadd.f32 %v3688, %v3696
  %v3711 = vadd.f32 %v3689, %v3696
  %v3712 = vadd.f32 %v3690, %v3696
  %v3713 = vadd.f32 %v3691, %v3696
  %v3714 = vmax.f32 %v3697, 0.0
  %v3715 = vmax.f32 %v3698, 0.0
  %v3716 = vmax.f32 %v3699, 0.0
  %v3717 = vmax.f32 %v3700, 0.0
  %v3718 = vmax.f32 %v3701, 0.0
  %v3719 = vmax.f32 %v3702, 0.0
  %v3720 = vmax.f32 %v3703, 0.0
  %v3721 = vmax.f32 %v3704, 0.0
  %v3722 = vmax.f32 %v3705, 0.0
  %v3723 = vmax.f32 %v3706, 0.0
  %v3724 = vmax.f32 %v3707, 0.0
  %v3725 = vmax.f32 %v3708, 0.0
  %v3726 = vmax.f32 %v3709, 0.0
  %v3727 = vmax.f32 %v3710, 0.0
  %v3728 = vmax.f32 %v3711, 0.0
  %v3729 = vmax.f32 %v3712, 0.0
  %v3730 = vmax.f32 %v3713, 0.0
  %v3731 = vld [vmem:[%s1 + $0x78] sm:$0xff]
  %v3732 = vld [vmem:[%s1 + $0xa0] sm:$0xff]
  %v3750 = vrot.slane %v3714, 7
  %v3751 = vrot.slane %v3715, 7
  %v3752 = vsel %vm620, %v3750, %v3751
  %v3753 = vrot.slane %v3716, 7
  %v3754 = vsel %vm620, %v3751, %v3753
  %v3755 = vrot.slane %v3717, 7
  %v3756 = vsel %vm620, %v3753, %v3755
  %v3757 = vrot.slane %v3718, 7
  %v3758 = vsel %vm620, %v3755, %v3757
  %v3759 = vrot.slane %v3719, 7
  %v3760 = vsel %vm620, %v3757, %v3759
  %v3761 = vrot.slane %v3720, 7
  %v3762 = vsel %vm620, %v3759, %v3761
  %v3763 = vrot.slane %v3721, 7
  %v3764 = vsel %vm620, %v3761, %v3763
  %v3765 = vrot.slane %v3722, 7
  %v3766 = vsel %vm620, %v3763, %v3765
  %v3767 = vrot.slane %v3723, 7
  %v3768 = vsel %vm620, %v3765, %v3767
  %v3769 = vrot.slane %v3724, 7
  %v3770 = vsel %vm620, %v3767, %v3769
  %v3771 = vrot.slane %v3725, 7
  %v3772 = vsel %vm620, %v3769, %v3771
  %v3773 = vrot.slane %v3726, 7
  %v3774 = vsel %vm620, %v3771, %v3773
  %v3775 = vrot.slane %v3727, 7
  %v3776 = vsel %vm620, %v3773, %v3775
  %v3777 = vrot.slane %v3728, 7
  %v3778 = vsel %vm620, %v3775, %v3777
  %v3779 = vrot.slane %v3729, 7
  %v3780 = vsel %vm620, %v3777, %v3779
  %v3781 = vrot.slane %v3730, 7
  %v3782 = vsel %vm620, %v3779, %v3781
  %v3783 = vsel %vm2313, %v3752, 0
  %v3785 = vsel %vm2313, %v3754, 0
  %v3787 = vsel %vm2313, %v3756, 0
  %v3789 = vsel %vm2313, %v3758, 0
  %v3791 = vsel %vm2313, %v3760, 0
  %v3793 = vsel %vm2313, %v3762, 0
  %v3795 = vsel %vm2313, %v3764, 0
  %v3797 = vsel %vm2313, %v3766, 0
  %v3799 = vsel %vm2313, %v3768, 0
  %v3801 = vsel %vm2313, %v3770, 0
  %v3803 = vsel %vm2313, %v3772, 0
  %v3805 = vsel %vm2313, %v3774, 0
  %v3807 = vsel %vm2313, %v3776, 0
  %v3809 = vsel %vm2313, %v3778, 0
  %v3811 = vsel %vm2313, %v3780, 0
  %v3813 = vsel %vm2313, %v3782, 0
  %3815 = vmatprep.subr.mxu0 0.0
  %3816 = vmatpush1.msra.mxu0 %v3731
  %3817 = vmatprep.subr.mxu0 0.0
  %3818 = vmatpush1.msra.mxu0 %v3732
  %3819 = vmatprep.subr.mxu0 0.0
  %3820 = vmatpush1.msra.mxu0 0.0
  %3821 = vmatprep.subr.mxu0 0.0
  %3822 = vmatpush1.msra.mxu0 0.0
  %3823 = vmatprep.subr.mxu0 0.0
  %3824 = vmatpush1.msra.mxu0 0.0
  %3825 = vmatprep.subr.mxu0 0.0
  %3826 = vmatpush1.msra.mxu0 0.0
  %3827 = vmatprep.subr.mxu0 0.0
  %3828 = vmatpush1.msra.mxu0 0.0
  %3829 = vmatprep.subr.mxu0 0.0
  %3830 = vmatpush1.msra.mxu0 0.0
  %3831 = vmatprep.subr.mxu0 0.0
  %3832 = vmatpush1.msra.mxu0 0.0
  %3833 = vmatprep.subr.mxu0 0.0
  %3834 = vmatpush1.msra.mxu0 0.0
  %3835 = vmatprep.subr.mxu0 0.0
  %3836 = vmatpush1.msra.mxu0 0.0
  %3837 = vmatprep.subr.mxu0 0.0
  %3838 = vmatpush1.msra.mxu0 0.0
  %3839 = vmatprep.subr.mxu0 0.0
  %3840 = vmatpush1.msra.mxu0 0.0
  %3841 = vmatprep.subr.mxu0 0.0
  %3842 = vmatpush1.msra.mxu0 0.0
  %3843 = vmatprep.subr.mxu0 0.0
  %3844 = vmatpush1.msra.mxu0 0.0
  %3845 = vmatprep.subr.mxu0 0.0
  %3846 = vmatpush1.msra.mxu0 0.0
  %3847 = vmatprep.subr.mxu0 0.0
  %3848 = vmatpush1.msra.mxu0 0.0
  %3849 = vmatprep.subr.mxu0 0.0
  %3850 = vmatpush1.msra.mxu0 0.0
  %3851 = vmatprep.subr.mxu0 0.0
  %3852 = vmatpush1.msra.mxu0 0.0
  %3853 = vmatprep.subr.mxu0 0.0
  %3854 = vmatpush1.msra.mxu0 0.0
  %3855 = vmatprep.subr.mxu0 0.0
  %3856 = vmatpush1.msra.mxu0 0.0
  %3857 = vmatprep.subr.mxu0 0.0
  %3858 = vmatpush1.msra.mxu0 0.0
  %3859 = vmatprep.subr.mxu0 0.0
  %3860 = vmatpush1.msra.mxu0 0.0
  %3861 = vmatprep.subr.mxu0 0.0
  %3862 = vmatpush1.msra.mxu0 0.0
  %3863 = vmatprep.subr.mxu0 0.0
  %3864 = vmatpush1.msra.mxu0 0.0
  %3865 = vmatprep.subr.mxu0 0.0
  %3866 = vmatpush1.msra.mxu0 0.0
  %3867 = vmatprep.subr.mxu0 0.0
  %3868 = vmatpush1.msra.mxu0 0.0
  %3869 = vmatprep.subr.mxu0 0.0
  %3870 = vmatpush1.msra.mxu0 0.0
  %3871 = vmatprep.subr.mxu0 0.0
  %3872 = vmatpush1.msra.mxu0 0.0
  %3873 = vmatprep.subr.mxu0 0.0
  %3874 = vmatpush1.msra.mxu0 0.0
  %3875 = vmatprep.subr.mxu0 0.0
  %3876 = vmatpush1.msra.mxu0 0.0
  %3877 = vmatprep.subr.mxu0 0.0
  %3878 = vmatpush1.msra.mxu0 0.0
  %3879 = vmatprep.mubr.f32.mxu0 0.0
  %3880 = vmatmul.mubr.f32.gmra.mrb[0].mxu0 %v3783
  %v3881 = vpop.f32.mrb[0].mxu0
  %v3882 = vadd.f32 0.0, %v3881
  %v3883 = vpop.f32.mrb[0].mxu0
  %3884 = vmatprep.mubr.f32.mxu0 0.0
  %3885 = vmatmul.mubr.f32.gmra.mrb[0].mxu0 %v3785
  %v3886 = vpop.f32.mrb[0].mxu0
  %v3887 = vadd.f32 0.0, %v3886
  %v3888 = vpop.f32.mrb[0].mxu0
  %3889 = vmatprep.mubr.f32.mxu0 0.0
  %3890 = vmatmul.mubr.f32.gmra.mrb[0].mxu0 %v3787
  %v3891 = vpop.f32.mrb[0].mxu0
  %v3892 = vadd.f32 0.0, %v3891
  %v3893 = vpop.f32.mrb[0].mxu0
  %3894 = vmatprep.mubr.f32.mxu0 0.0
  %3895 = vmatmul.mubr.f32.gmra.mrb[0].mxu0 %v3789
  %v3896 = vpop.f32.mrb[0].mxu0
  %v3897 = vadd.f32 0.0, %v3896
  %v3898 = vpop.f32.mrb[0].mxu0
  %3899 = vmatprep.mubr.f32.mxu0 0.0
  %3900 = vmatmul.mubr.f32.gmra.mrb[0].mxu0 %v3791
  %v3901 = vpop.f32.mrb[0].mxu0
  %v3902 = vadd.f32 0.0, %v3901
  %v3903 = vpop.f32.mrb[0].mxu0
  %3904 = vmatprep.mubr.f32.mxu0 0.0
  %3905 = vmatmul.mubr.f32.gmra.mrb[0].mxu0 %v3793
  %v3906 = vpop.f32.mrb[0].mxu0
  %v3907 = vadd.f32 0.0, %v3906
  %v3908 = vpop.f32.mrb[0].mxu0
  %3909 = vmatprep.mubr.f32.mxu0 0.0
  %3910 = vmatmul.mubr.f32.gmra.mrb[0].mxu0 %v3795
  %v3911 = vpop.f32.mrb[0].mxu0
  %v3912 = vadd.f32 0.0, %v3911
  %v3913 = vpop.f32.mrb[0].mxu0
  %3914 = vmatprep.mubr.f32.mxu0 0.0
  %3915 = vmatmul.mubr.f32.gmra.mrb[0].mxu0 %v3797
  %v3916 = vpop.f32.mrb[0].mxu0
  %v3917 = vadd.f32 0.0, %v3916
  %v3918 = vpop.f32.mrb[0].mxu0
  %3919 = vmatprep.mubr.f32.mxu0 0.0
  %3920 = vmatmul.mubr.f32.gmra.mrb[0].mxu0 %v3799
  %v3921 = vpop.f32.mrb[0].mxu0
  %v3922 = vadd.f32 0.0, %v3921
  %v3923 = vpop.f32.mrb[0].mxu0
  %3924 = vmatprep.mubr.f32.mxu0 0.0
  %3925 = vmatmul.mubr.f32.gmra.mrb[0].mxu0 %v3801
  %v3926 = vpop.f32.mrb[0].mxu0
  %v3927 = vadd.f32 0.0, %v3926
  %v3928 = vpop.f32.mrb[0].mxu0
  %3929 = vmatprep.mubr.f32.mxu0 0.0
  %3930 = vmatmul.mubr.f32.gmra.mrb[0].mxu0 %v3803
  %v3931 = vpop.f32.mrb[0].mxu0
  %v3932 = vadd.f32 0.0, %v3931
  %v3933 = vpop.f32.mrb[0].mxu0
  %3934 = vmatprep.mubr.f32.mxu0 0.0
  %3935 = vmatmul.mubr.f32.gmra.mrb[0].mxu0 %v3805
  %v3936 = vpop.f32.mrb[0].mxu0
  %v3937 = vadd.f32 0.0, %v3936
  %v3938 = vpop.f32.mrb[0].mxu0
  %3939 = vmatprep.mubr.f32.mxu0 0.0
  %3940 = vmatmul.mubr.f32.gmra.mrb[0].mxu0 %v3807
  %v3941 = vpop.f32.mrb[0].mxu0
  %v3942 = vadd.f32 0.0, %v3941
  %v3943 = vpop.f32.mrb[0].mxu0
  %3944 = vmatprep.mubr.f32.mxu0 0.0
  %3945 = vmatmul.mubr.f32.gmra.mrb[0].mxu0 %v3809
  %v3946 = vpop.f32.mrb[0].mxu0
  %v3947 = vadd.f32 0.0, %v3946
  %v3948 = vpop.f32.mrb[0].mxu0
  %3949 = vmatprep.mubr.f32.mxu0 0.0
  %3950 = vmatmul.mubr.f32.gmra.mrb[0].mxu0 %v3811
  %v3951 = vpop.f32.mrb[0].mxu0
  %v3952 = vadd.f32 0.0, %v3951
  %v3953 = vpop.f32.mrb[0].mxu0
  %3954 = vmatprep.mubr.f32.mxu0 0.0
  %3955 = vmatmul.mubr.f32.gmra.mrb[0].mxu0 %v3813
  %v3956 = vpop.f32.mrb[0].mxu0
  %v3957 = vadd.f32 0.0, %v3956
  %v3958 = vpop.f32.mrb[0].mxu0
  %3959 = vdwg.mxu0
  %v3960 = vmul.f32 %v3952, %v312
  %v3961 = vmul.f32 %v3957, %v314
  %v3962 = vmul.f32 %v3882, %v316
  %v3963 = vmul.f32 %v3887, %v318
  %v3964 = vmul.f32 %v3892, %v320
  %v3965 = vmul.f32 %v3897, %v322
  %v3966 = vmul.f32 %v3902, %v324
  %v3967 = vmul.f32 %v3907, %v326
  %v3968 = vmul.f32 %v3912, %v328
  %v3969 = vmul.f32 %v3917, %v330
  %v3970 = vmul.f32 %v3922, %v332
  %v3971 = vmul.f32 %v3927, %v334
  %v3972 = vmul.f32 %v3932, %v336
  %v3973 = vmul.f32 %v3937, %v338
  %v3974 = vmul.f32 %v3942, %v340
  %v3975 = vmul.f32 %v3947, %v342
  %v3976 = vmul.f32 %v3952, %v341
  %v3977 = vmul.f32 %v3957, %v379
  %v3978 = vmul.f32 %v3882, %v383
  %v3979 = vmul.f32 %v3887, %v387
  %v3980 = vmul.f32 %v3892, %v391
  %v3981 = vmul.f32 %v3897, %v395
  %v3982 = vmul.f32 %v3902, %v399
  %v3983 = vmul.f32 %v3907, %v403
  %v3984 = vmul.f32 %v3912, %v407
  %v3985 = vmul.f32 %v3917, %v411
  %v3986 = vmul.f32 %v3922, %v415
  %v3987 = vmul.f32 %v3927, %v419
  %v3988 = vmul.f32 %v3932, %v423
  %v3989 = vmul.f32 %v3937, %v427
  %v3990 = vmul.f32 %v3942, %v431
  %v3991 = vmul.f32 %v3947, %v435
  %v3992 = vmul.f32 %v3952, %v439
  %v4009 = vrot.slane %v3977, 1
  %v4010 = vrot.slane %v3978, 1
  %v4011 = vsel %vm311, %v4009, %v4010
  %v4012 = vrot.slane %v3979, 1
  %v4013 = vsel %vm311, %v4010, %v4012
  %v4014 = vrot.slane %v3980, 1
  %v4015 = vsel %vm311, %v4012, %v4014
  %v4016 = vrot.slane %v3981, 1
  %v4017 = vsel %vm311, %v4014, %v4016
  %v4018 = vrot.slane %v3982, 1
  %v4019 = vsel %vm311, %v4016, %v4018
  %v4020 = vrot.slane %v3983, 1
  %v4021 = vsel %vm311, %v4018, %v4020
  %v4022 = vrot.slane %v3984, 1
  %v4023 = vsel %vm311, %v4020, %v4022
  %v4024 = vrot.slane %v3985, 1
  %v4025 = vsel %vm311, %v4022, %v4024
  %v4026 = vrot.slane %v3986, 1
  %v4027 = vsel %vm311, %v4024, %v4026
  %v4028 = vrot.slane %v3987, 1
  %v4029 = vsel %vm311, %v4026, %v4028
  %v4030 = vrot.slane %v3988, 1
  %v4031 = vsel %vm311, %v4028, %v4030
  %v4032 = vrot.slane %v3989, 1
  %v4033 = vsel %vm311, %v4030, %v4032
  %v4034 = vrot.slane %v3990, 1
  %v4035 = vsel %vm311, %v4032, %v4034
  %v4036 = vrot.slane %v3991, 1
  %v4037 = vsel %vm311, %v4034, %v4036
  %v4038 = vrot.slane %v3992, 1
  %v4039 = vsel %vm311, %v4036, %v4038
  %4040 = vrot.lane.b32.xlu0 %v4009, 96
  %v4041 = vpop.permute.xlu0 %4040
  %4042 = vrot.lane.b32.xlu0 %v4011, 96
  %v4043 = vpop.permute.xlu0 %4042
  %4044 = vrot.lane.b32.xlu0 %v4013, 96
  %v4045 = vpop.permute.xlu0 %4044
  %4046 = vrot.lane.b32.xlu0 %v4015, 96
  %v4047 = vpop.permute.xlu0 %4046
  %4048 = vrot.lane.b32.xlu0 %v4017, 96
  %v4049 = vpop.permute.xlu0 %4048
  %4050 = vrot.lane.b32.xlu0 %v4019, 96
  %v4051 = vpop.permute.xlu0 %4050
  %4052 = vrot.lane.b32.xlu0 %v4021, 96
  %v4053 = vpop.permute.xlu0 %4052
  %4054 = vrot.lane.b32.xlu0 %v4023, 96
  %v4055 = vpop.permute.xlu0 %4054
  %4056 = vrot.lane.b32.xlu0 %v4025, 96
  %v4057 = vpop.permute.xlu0 %4056
  %4058 = vrot.lane.b32.xlu0 %v4027, 96
  %v4059 = vpop.permute.xlu0 %4058
  %4060 = vrot.lane.b32.xlu0 %v4029, 96
  %v4061 = vpop.permute.xlu0 %4060
  %4062 = vrot.lane.b32.xlu0 %v4031, 96
  %v4063 = vpop.permute.xlu0 %4062
  %4064 = vrot.lane.b32.xlu0 %v4033, 96
  %v4065 = vpop.permute.xlu0 %4064
  %4066 = vrot.lane.b32.xlu0 %v4035, 96
  %v4067 = vpop.permute.xlu0 %4066
  %4068 = vrot.lane.b32.xlu0 %v4037, 96
  %v4069 = vpop.permute.xlu0 %4068
  %4070 = vrot.lane.b32.xlu0 %v4039, 96
  %v4071 = vpop.permute.xlu0 %4070
  %4072 = vrot.lane.b32.xlu0 %v4038, 96
  %v4073 = vpop.permute.xlu0 %4072
  %v4091 = vadd.f32 %v3960, %v4041
  %v4092 = vadd.f32 %v3961, %v4043
  %v4093 = vadd.f32 %v3962, %v4045
  %v4094 = vadd.f32 %v3963, %v4047
  %v4095 = vadd.f32 %v3964, %v4049
  %v4096 = vadd.f32 %v3965, %v4051
  %v4097 = vadd.f32 %v3966, %v4053
  %v4098 = vadd.f32 %v3967, %v4055
  %v4099 = vadd.f32 %v3968, %v4057
  %v4100 = vadd.f32 %v3969, %v4059
  %v4101 = vadd.f32 %v3970, %v4061
  %v4102 = vadd.f32 %v3971, %v4063
  %v4103 = vadd.f32 %v3972, %v4065
  %v4104 = vadd.f32 %v3973, %v4067
  %v4105 = vadd.f32 %v3974, %v4069
  %v4106 = vadd.f32 %v3975, %v4071
  %v4107 = vadd.f32 %v3976, %v4073
  %v4108 = vmul.f32 %v3957, %v621
  %v4109 = vmul.f32 %v3882, %v623
  %v4110 = vmul.f32 %v3887, %v625
  %v4111 = vmul.f32 %v3892, %v627
  %v4112 = vmul.f32 %v3897, %v629
  %v4113 = vmul.f32 %v3902, %v631
  %v4114 = vmul.f32 %v3907, %v633
  %v4115 = vmul.f32 %v3912, %v635
  %v4116 = vmul.f32 %v3917, %v637
  %v4117 = vmul.f32 %v3922, %v639
  %v4118 = vmul.f32 %v3927, %v641
  %v4119 = vmul.f32 %v3932, %v643
  %v4120 = vmul.f32 %v3937, %v645
  %v4121 = vmul.f32 %v3942, %v647
  %v4122 = vmul.f32 %v3947, %v649
  %v4123 = vmul.f32 %v3952, %v651
  %v4124 = vmul.f32 %v3957, %v650
  %v4142 = vrot.slane %v4108, 2
  %v4143 = vrot.slane %v4109, 2
  %v4144 = vsel %vm703, %v4142, %v4143
  %v4145 = vrot.slane %v4110, 2
  %v4146 = vsel %vm703, %v4143, %v4145
  %v4147 = vrot.slane %v4111, 2
  %v4148 = vsel %vm703, %v4145, %v4147
  %v4149 = vrot.slane %v4112, 2
  %v4150 = vsel %vm703, %v4147, %v4149
  %v4151 = vrot.slane %v4113, 2
  %v4152 = vsel %vm703, %v4149, %v4151
  %v4153 = vrot.slane %v4114, 2
  %v4154 = vsel %vm703, %v4151, %v4153
  %v4155 = vrot.slane %v4115, 2
  %v4156 = vsel %vm703, %v4153, %v4155
  %v4157 = vrot.slane %v4116, 2
  %v4158 = vsel %vm703, %v4155, %v4157
  %v4159 = vrot.slane %v4117, 2
  %v4160 = vsel %vm703, %v4157, %v4159
  %v4161 = vrot.slane %v4118, 2
  %v4162 = vsel %vm703, %v4159, %v4161
  %v4163 = vrot.slane %v4119, 2
  %v4164 = vsel %vm703, %v4161, %v4163
  %v4165 = vrot.slane %v4120, 2
  %v4166 = vsel %vm703, %v4163, %v4165
  %v4167 = vrot.slane %v4121, 2
  %v4168 = vsel %vm703, %v4165, %v4167
  %v4169 = vrot.slane %v4122, 2
  %v4170 = vsel %vm703, %v4167, %v4169
  %v4171 = vrot.slane %v4123, 2
  %v4172 = vsel %vm703, %v4169, %v4171
  %v4173 = vrot.slane %v4124, 2
  %v4174 = vsel %vm703, %v4171, %v4173
  %4175 = vrot.lane.b32.xlu0 %v4142, 64
  %v4176 = vpop.permute.xlu0 %4175
  %4177 = vrot.lane.b32.xlu0 %v4144, 64
  %v4178 = vpop.permute.xlu0 %4177
  %4179 = vrot.lane.b32.xlu0 %v4146, 64
  %v4180 = vpop.permute.xlu0 %4179
  %4181 = vrot.lane.b32.xlu0 %v4148, 64
  %v4182 = vpop.permute.xlu0 %4181
  %4183 = vrot.lane.b32.xlu0 %v4150, 64
  %v4184 = vpop.permute.xlu0 %4183
  %4185 = vrot.lane.b32.xlu0 %v4152, 64
  %v4186 = vpop.permute.xlu0 %4185
  %4187 = vrot.lane.b32.xlu0 %v4154, 64
  %v4188 = vpop.permute.xlu0 %4187
  %4189 = vrot.lane.b32.xlu0 %v4156, 64
  %v4190 = vpop.permute.xlu0 %4189
  %4191 = vrot.lane.b32.xlu0 %v4158, 64
  %v4192 = vpop.permute.xlu0 %4191
  %4193 = vrot.lane.b32.xlu0 %v4160, 64
  %v4194 = vpop.permute.xlu0 %4193
  %4195 = vrot.lane.b32.xlu0 %v4162, 64
  %v4196 = vpop.permute.xlu0 %4195
  %4197 = vrot.lane.b32.xlu0 %v4164, 64
  %v4198 = vpop.permute.xlu0 %4197
  %4199 = vrot.lane.b32.xlu0 %v4166, 64
  %v4200 = vpop.permute.xlu0 %4199
  %4201 = vrot.lane.b32.xlu0 %v4168, 64
  %v4202 = vpop.permute.xlu0 %4201
  %4203 = vrot.lane.b32.xlu0 %v4170, 64
  %v4204 = vpop.permute.xlu0 %4203
  %4205 = vrot.lane.b32.xlu0 %v4172, 64
  %v4206 = vpop.permute.xlu0 %4205
  %4207 = vrot.lane.b32.xlu0 %v4174, 64
  %v4208 = vpop.permute.xlu0 %4207
  %v4226 = vadd.f32 %v4091, %v4176
  %v4227 = vadd.f32 %v4092, %v4178
  %v4228 = vadd.f32 %v4093, %v4180
  %v4229 = vadd.f32 %v4094, %v4182
  %v4230 = vadd.f32 %v4095, %v4184
  %v4231 = vadd.f32 %v4096, %v4186
  %v4232 = vadd.f32 %v4097, %v4188
  %v4233 = vadd.f32 %v4098, %v4190
  %v4234 = vadd.f32 %v4099, %v4192
  %v4235 = vadd.f32 %v4100, %v4194
  %v4236 = vadd.f32 %v4101, %v4196
  %v4237 = vadd.f32 %v4102, %v4198
  %v4238 = vadd.f32 %v4103, %v4200
  %v4239 = vadd.f32 %v4104, %v4202
  %v4240 = vadd.f32 %v4105, %v4204
  %v4241 = vadd.f32 %v4106, %v4206
  %v4242 = vadd.f32 %v4107, %v4208
  %v4243 = vld [vmem:[%s1 + $0x78] sm:$0xff]
  %v4244 = vld [vmem:[%s1 + $0x80] sm:$0xff]
  %v4245 = vld [vmem:[%s1 + $0xa0] sm:$0xff]
  %v4246 = vld [vmem:[%s1 + $0xa8] sm:$0xff]
  %4251 = vrot.lane.b32.xlu0 %v4243, 32
  %v4252 = vpop.permute.xlu0 %4251
  %4253 = vrot.lane.b32.xlu0 %v4244, 32
  %v4254 = vpop.permute.xlu0 %4253
  %4255 = vrot.lane.b32.xlu0 %v4245, 32
  %v4256 = vpop.permute.xlu0 %4255
  %4257 = vrot.lane.b32.xlu0 %v4246, 32
  %v4258 = vpop.permute.xlu0 %4257
  %v4259 = vsel %vm1518, %v4252, %v4254
  %v4260 = vsel %vm1518, %v4256, %v4258
  %4263 = vmatprep.subr.mxu0 0.0
  %4264 = vmatpush1.msra.mxu0 %v4259
  %4265 = vmatprep.subr.mxu0 0.0
  %4266 = vmatpush1.msra.mxu0 %v4260
  %4267 = vmatprep.subr.mxu0 0.0
  %4268 = vmatpush1.msra.mxu0 0.0
  %4269 = vmatprep.subr.mxu0 0.0
  %4270 = vmatpush1.msra.mxu0 0.0
  %4271 = vmatprep.subr.mxu0 0.0
  %4272 = vmatpush1.msra.mxu0 0.0
  %4273 = vmatprep.subr.mxu0 0.0
  %4274 = vmatpush1.msra.mxu0 0.0
  %4275 = vmatprep.subr.mxu0 0.0
  %4276 = vmatpush1.msra.mxu0 0.0
  %4277 = vmatprep.subr.mxu0 0.0
  %4278 = vmatpush1.msra.mxu0 0.0
  %4279 = vmatprep.subr.mxu0 0.0
  %4280 = vmatpush1.msra.mxu0 0.0
  %4281 = vmatprep.subr.mxu0 0.0
  %4282 = vmatpush1.msra.mxu0 0.0
  %4283 = vmatprep.subr.mxu0 0.0
  %4284 = vmatpush1.msra.mxu0 0.0
  %4285 = vmatprep.subr.mxu0 0.0
  %4286 = vmatpush1.msra.mxu0 0.0
  %4287 = vmatprep.subr.mxu0 0.0
  %4288 = vmatpush1.msra.mxu0 0.0
  %4289 = vmatprep.subr.mxu0 0.0
  %4290 = vmatpush1.msra.mxu0 0.0
  %4291 = vmatprep.subr.mxu0 0.0
  %4292 = vmatpush1.msra.mxu0 0.0
  %4293 = vmatprep.subr.mxu0 0.0
  %4294 = vmatpush1.msra.mxu0 0.0
  %4295 = vmatprep.subr.mxu0 0.0
  %4296 = vmatpush1.msra.mxu0 0.0
  %4297 = vmatprep.subr.mxu0 0.0
  %4298 = vmatpush1.msra.mxu0 0.0
  %4299 = vmatprep.subr.mxu0 0.0
  %4300 = vmatpush1.msra.mxu0 0.0
  %4301 = vmatprep.subr.mxu0 0.0
  %4302 = vmatpush1.msra.mxu0 0.0
  %4303 = vmatprep.subr.mxu0 0.0
  %4304 = vmatpush1.msra.mxu0 0.0
  %4305 = vmatprep.subr.mxu0 0.0
  %4306 = vmatpush1.msra.mxu0 0.0
  %4307 = vmatprep.subr.mxu0 0.0
  %4308 = vmatpush1.msra.mxu0 0.0
  %4309 = vmatprep.subr.mxu0 0.0
  %4310 = vmatpush1.msra.mxu0 0.0
  %4311 = vmatprep.subr.mxu0 0.0
  %4312 = vmatpush1.msra.mxu0 0.0
  %4313 = vmatprep.subr.mxu0 0.0
  %4314 = vmatpush1.msra.mxu0 0.0
  %4315 = vmatprep.subr.mxu0 0.0
  %4316 = vmatpush1.msra.mxu0 0.0
  %4317 = vmatprep.subr.mxu0 0.0
  %4318 = vmatpush1.msra.mxu0 0.0
  %4319 = vmatprep.subr.mxu0 0.0
  %4320 = vmatpush1.msra.mxu0 0.0
  %4321 = vmatprep.subr.mxu0 0.0
  %4322 = vmatpush1.msra.mxu0 0.0
  %4323 = vmatprep.subr.mxu0 0.0
  %4324 = vmatpush1.msra.mxu0 0.0
  %4325 = vmatprep.subr.mxu0 0.0
  %4326 = vmatpush1.msra.mxu0 0.0
  %4327 = vmatprep.mubr.f32.mxu0 0.0
  %4328 = vmatmul.mubr.f32.gmra.mrb[0].mxu0 %v3783
  %v4329 = vpop.f32.mrb[0].mxu0
  %v4330 = vadd.f32 0.0, %v4329
  %v4331 = vpop.f32.mrb[0].mxu0
  %4332 = vmatprep.mubr.f32.mxu0 0.0
  %4333 = vmatmul.mubr.f32.gmra.mrb[0].mxu0 %v3785
  %v4334 = vpop.f32.mrb[0].mxu0
  %v4335 = vadd.f32 0.0, %v4334
  %v4336 = vpop.f32.mrb[0].mxu0
  %4337 = vmatprep.mubr.f32.mxu0 0.0
  %4338 = vmatmul.mubr.f32.gmra.mrb[0].mxu0 %v3787
  %v4339 = vpop.f32.mrb[0].mxu0
  %v4340 = vadd.f32 0.0, %v4339
  %v4341 = vpop.f32.mrb[0].mxu0
  %4342 = vmatprep.mubr.f32.mxu0 0.0
  %4343 = vmatmul.mubr.f32.gmra.mrb[0].mxu0 %v3789
  %v4344 = vpop.f32.mrb[0].mxu0
  %v4345 = vadd.f32 0.0, %v4344
  %v4346 = vpop.f32.mrb[0].mxu0
  %4347 = vmatprep.mubr.f32.mxu0 0.0
  %4348 = vmatmul.mubr.f32.gmra.mrb[0].mxu0 %v3791
  %v4349 = vpop.f32.mrb[0].mxu0
  %v4350 = vadd.f32 0.0, %v4349
  %v4351 = vpop.f32.mrb[0].mxu0
  %4352 = vmatprep.mubr.f32.mxu0 0.0
  %4353 = vmatmul.mubr.f32.gmra.mrb[0].mxu0 %v3793
  %v4354 = vpop.f32.mrb[0].mxu0
  %v4355 = vadd.f32 0.0, %v4354
  %v4356 = vpop.f32.mrb[0].mxu0
  %4357 = vmatprep.mubr.f32.mxu0 0.0
  %4358 = vmatmul.mubr.f32.gmra.mrb[0].mxu0 %v3795
  %v4359 = vpop.f32.mrb[0].mxu0
  %v4360 = vadd.f32 0.0, %v4359
  %v4361 = vpop.f32.mrb[0].mxu0
  %4362 = vmatprep.mubr.f32.mxu0 0.0
  %4363 = vmatmul.mubr.f32.gmra.mrb[0].mxu0 %v3797
  %v4364 = vpop.f32.mrb[0].mxu0
  %v4365 = vadd.f32 0.0, %v4364
  %v4366 = vpop.f32.mrb[0].mxu0
  %4367 = vmatprep.mubr.f32.mxu0 0.0
  %4368 = vmatmul.mubr.f32.gmra.mrb[0].mxu0 %v3799
  %v4369 = vpop.f32.mrb[0].mxu0
  %v4370 = vadd.f32 0.0, %v4369
  %v4371 = vpop.f32.mrb[0].mxu0
  %4372 = vmatprep.mubr.f32.mxu0 0.0
  %4373 = vmatmul.mubr.f32.gmra.mrb[0].mxu0 %v3801
  %v4374 = vpop.f32.mrb[0].mxu0
  %v4375 = vadd.f32 0.0, %v4374
  %v4376 = vpop.f32.mrb[0].mxu0
  %4377 = vmatprep.mubr.f32.mxu0 0.0
  %4378 = vmatmul.mubr.f32.gmra.mrb[0].mxu0 %v3803
  %v4379 = vpop.f32.mrb[0].mxu0
  %v4380 = vadd.f32 0.0, %v4379
  %v4381 = vpop.f32.mrb[0].mxu0
  %4382 = vmatprep.mubr.f32.mxu0 0.0
  %4383 = vmatmul.mubr.f32.gmra.mrb[0].mxu0 %v3805
  %v4384 = vpop.f32.mrb[0].mxu0
  %v4385 = vadd.f32 0.0, %v4384
  %v4386 = vpop.f32.mrb[0].mxu0
  %4387 = vmatprep.mubr.f32.mxu0 0.0
  %4388 = vmatmul.mubr.f32.gmra.mrb[0].mxu0 %v3807
  %v4389 = vpop.f32.mrb[0].mxu0
  %v4390 = vadd.f32 0.0, %v4389
  %v4391 = vpop.f32.mrb[0].mxu0
  %4392 = vmatprep.mubr.f32.mxu0 0.0
  %4393 = vmatmul.mubr.f32.gmra.mrb[0].mxu0 %v3809
  %v4394 = vpop.f32.mrb[0].mxu0
  %v4395 = vadd.f32 0.0, %v4394
  %v4396 = vpop.f32.mrb[0].mxu0
  %4397 = vmatprep.mubr.f32.mxu0 0.0
  %4398 = vmatmul.mubr.f32.gmra.mrb[0].mxu0 %v3811
  %v4399 = vpop.f32.mrb[0].mxu0
  %v4400 = vadd.f32 0.0, %v4399
  %v4401 = vpop.f32.mrb[0].mxu0
  %4402 = vmatprep.mubr.f32.mxu0 0.0
  %4403 = vmatmul.mubr.f32.gmra.mrb[0].mxu0 %v3813
  %v4404 = vpop.f32.mrb[0].mxu0
  %v4405 = vadd.f32 0.0, %v4404
  %v4406 = vpop.f32.mrb[0].mxu0
  %4407 = vdwg.mxu0
  %v4408 = vmul.f32 %v4405, %v1002
  %v4409 = vmul.f32 %v4330, %v1004
  %v4410 = vmul.f32 %v4335, %v1006
  %v4411 = vmul.f32 %v4340, %v1008
  %v4412 = vmul.f32 %v4345, %v1010
  %v4413 = vmul.f32 %v4350, %v1012
  %v4414 = vmul.f32 %v4355, %v1014
  %v4415 = vmul.f32 %v4360, %v1016
  %v4416 = vmul.f32 %v4365, %v1018
  %v4417 = vmul.f32 %v4370, %v1020
  %v4418 = vmul.f32 %v4375, %v1022
  %v4419 = vmul.f32 %v4380, %v1024
  %v4420 = vmul.f32 %v4385, %v1026
  %v4421 = vmul.f32 %v4390, %v1028
  %v4422 = vmul.f32 %v4395, %v1030
  %v4423 = vmul.f32 %v4400, %v1032
  %v4424 = vmul.f32 %v4405, %v1031
  %v4425 = vadd.f32 %v4226, %v4408
  %v4426 = vadd.f32 %v4227, %v4409
  %v4427 = vadd.f32 %v4228, %v4410
  %v4428 = vadd.f32 %v4229, %v4411
  %v4429 = vadd.f32 %v4230, %v4412
  %v4430 = vadd.f32 %v4231, %v4413
  %v4431 = vadd.f32 %v4232, %v4414
  %v4432 = vadd.f32 %v4233, %v4415
  %v4433 = vadd.f32 %v4234, %v4416
  %v4434 = vadd.f32 %v4235, %v4417
  %v4435 = vadd.f32 %v4236, %v4418
  %v4436 = vadd.f32 %v4237, %v4419
  %v4437 = vadd.f32 %v4238, %v4420
  %v4438 = vadd.f32 %v4239, %v4421
  %v4439 = vadd.f32 %v4240, %v4422
  %v4440 = vadd.f32 %v4241, %v4423
  %v4441 = vadd.f32 %v4242, %v4424
  %v4442 = vmul.f32 %v4330, %v1086
  %v4443 = vmul.f32 %v4335, %v1090
  %v4444 = vmul.f32 %v4340, %v1094
  %v4445 = vmul.f32 %v4345, %v1098
  %v4446 = vmul.f32 %v4350, %v1102
  %v4447 = vmul.f32 %v4355, %v1106
  %v4448 = vmul.f32 %v4360, %v1110
  %v4449 = vmul.f32 %v4365, %v1114
  %v4450 = vmul.f32 %v4370, %v1118
  %v4451 = vmul.f32 %v4375, %v1122
  %v4452 = vmul.f32 %v4380, %v1126
  %v4453 = vmul.f32 %v4385, %v1130
  %v4454 = vmul.f32 %v4390, %v1134
  %v4455 = vmul.f32 %v4395, %v1138
  %v4456 = vmul.f32 %v4400, %v1142
  %v4457 = vmul.f32 %v4405, %v1146
  %v4474 = vrot.slane %v4442, 1
  %v4475 = vrot.slane %v4443, 1
  %v4476 = vsel %vm311, %v4474, %v4475
  %v4477 = vrot.slane %v4444, 1
  %v4478 = vsel %vm311, %v4475, %v4477
  %v4479 = vrot.slane %v4445, 1
  %v4480 = vsel %vm311, %v4477, %v4479
  %v4481 = vrot.slane %v4446, 1
  %v4482 = vsel %vm311, %v4479, %v4481
  %v4483 = vrot.slane %v4447, 1
  %v4484 = vsel %vm311, %v4481, %v4483
  %v4485 = vrot.slane %v4448, 1
  %v4486 = vsel %vm311, %v4483, %v4485
  %v4487 = vrot.slane %v4449, 1
  %v4488 = vsel %vm311, %v4485, %v4487
  %v4489 = vrot.slane %v4450, 1
  %v4490 = vsel %vm311, %v4487, %v4489
  %v4491 = vrot.slane %v4451, 1
  %v4492 = vsel %vm311, %v4489, %v4491
  %v4493 = vrot.slane %v4452, 1
  %v4494 = vsel %vm311, %v4491, %v4493
  %v4495 = vrot.slane %v4453, 1
  %v4496 = vsel %vm311, %v4493, %v4495
  %v4497 = vrot.slane %v4454, 1
  %v4498 = vsel %vm311, %v4495, %v4497
  %v4499 = vrot.slane %v4455, 1
  %v4500 = vsel %vm311, %v4497, %v4499
  %v4501 = vrot.slane %v4456, 1
  %v4502 = vsel %vm311, %v4499, %v4501
  %v4503 = vrot.slane %v4457, 1
  %v4504 = vsel %vm311, %v4501, %v4503
  %4505 = vrot.lane.b32.xlu0 %v4474, 96
  %v4506 = vpop.permute.xlu0 %4505
  %4507 = vrot.lane.b32.xlu0 %v4476, 96
  %v4508 = vpop.permute.xlu0 %4507
  %4509 = vrot.lane.b32.xlu0 %v4478, 96
  %v4510 = vpop.permute.xlu0 %4509
  %4511 = vrot.lane.b32.xlu0 %v4480, 96
  %v4512 = vpop.permute.xlu0 %4511
  %4513 = vrot.lane.b32.xlu0 %v4482, 96
  %v4514 = vpop.permute.xlu0 %4513
  %4515 = vrot.lane.b32.xlu0 %v4484, 96
  %v4516 = vpop.permute.xlu0 %4515
  %4517 = vrot.lane.b32.xlu0 %v4486, 96
  %v4518 = vpop.permute.xlu0 %4517
  %4519 = vrot.lane.b32.xlu0 %v4488, 96
  %v4520 = vpop.permute.xlu0 %4519
  %4521 = vrot.lane.b32.xlu0 %v4490, 96
  %v4522 = vpop.permute.xlu0 %4521
  %4523 = vrot.lane.b32.xlu0 %v4492, 96
  %v4524 = vpop.permute.xlu0 %4523
  %4525 = vrot.lane.b32.xlu0 %v4494, 96
  %v4526 = vpop.permute.xlu0 %4525
  %4527 = vrot.lane.b32.xlu0 %v4496, 96
  %v4528 = vpop.permute.xlu0 %4527
  %4529 = vrot.lane.b32.xlu0 %v4498, 96
  %v4530 = vpop.permute.xlu0 %4529
  %4531 = vrot.lane.b32.xlu0 %v4500, 96
  %v4532 = vpop.permute.xlu0 %4531
  %4533 = vrot.lane.b32.xlu0 %v4502, 96
  %v4534 = vpop.permute.xlu0 %4533
  %4535 = vrot.lane.b32.xlu0 %v4504, 96
  %v4536 = vpop.permute.xlu0 %4535
  %4537 = vrot.lane.b32.xlu0 %v4503, 96
  %v4538 = vpop.permute.xlu0 %4537
  %v4556 = vadd.f32 %v4425, %v4506
  %v4557 = vadd.f32 %v4426, %v4508
  %v4558 = vadd.f32 %v4427, %v4510
  %v4559 = vadd.f32 %v4428, %v4512
  %v4560 = vadd.f32 %v4429, %v4514
  %v4561 = vadd.f32 %v4430, %v4516
  %v4562 = vadd.f32 %v4431, %v4518
  %v4563 = vadd.f32 %v4432, %v4520
  %v4564 = vadd.f32 %v4433, %v4522
  %v4565 = vadd.f32 %v4434, %v4524
  %v4566 = vadd.f32 %v4435, %v4526
  %v4567 = vadd.f32 %v4436, %v4528
  %v4568 = vadd.f32 %v4437, %v4530
  %v4569 = vadd.f32 %v4438, %v4532
  %v4570 = vadd.f32 %v4439, %v4534
  %v4571 = vadd.f32 %v4440, %v4536
  %v4572 = vadd.f32 %v4441, %v4538
  %v4573 = vmul.f32 %v4330, %v1327
  %v4574 = vmul.f32 %v4335, %v1329
  %v4575 = vmul.f32 %v4340, %v1331
  %v4576 = vmul.f32 %v4345, %v1333
  %v4577 = vmul.f32 %v4350, %v1335
  %v4578 = vmul.f32 %v4355, %v1337
  %v4579 = vmul.f32 %v4360, %v1339
  %v4580 = vmul.f32 %v4365, %v1341
  %v4581 = vmul.f32 %v4370, %v1343
  %v4582 = vmul.f32 %v4375, %v1345
  %v4583 = vmul.f32 %v4380, %v1347
  %v4584 = vmul.f32 %v4385, %v1349
  %v4585 = vmul.f32 %v4390, %v1351
  %v4586 = vmul.f32 %v4395, %v1353
  %v4587 = vmul.f32 %v4400, %v1355
  %v4588 = vmul.f32 %v4405, %v1357
  %v4589 = vmul.f32 %v4330, %v1356
  %v4607 = vrot.slane %v4573, 2
  %v4608 = vrot.slane %v4574, 2
  %v4609 = vsel %vm703, %v4607, %v4608
  %v4610 = vrot.slane %v4575, 2
  %v4611 = vsel %vm703, %v4608, %v4610
  %v4612 = vrot.slane %v4576, 2
  %v4613 = vsel %vm703, %v4610, %v4612
  %v4614 = vrot.slane %v4577, 2
  %v4615 = vsel %vm703, %v4612, %v4614
  %v4616 = vrot.slane %v4578, 2
  %v4617 = vsel %vm703, %v4614, %v4616
  %v4618 = vrot.slane %v4579, 2
  %v4619 = vsel %vm703, %v4616, %v4618
  %v4620 = vrot.slane %v4580, 2
  %v4621 = vsel %vm703, %v4618, %v4620
  %v4622 = vrot.slane %v4581, 2
  %v4623 = vsel %vm703, %v4620, %v4622
  %v4624 = vrot.slane %v4582, 2
  %v4625 = vsel %vm703, %v4622, %v4624
  %v4626 = vrot.slane %v4583, 2
  %v4627 = vsel %vm703, %v4624, %v4626
  %v4628 = vrot.slane %v4584, 2
  %v4629 = vsel %vm703, %v4626, %v4628
  %v4630 = vrot.slane %v4585, 2
  %v4631 = vsel %vm703, %v4628, %v4630
  %v4632 = vrot.slane %v4586, 2
  %v4633 = vsel %vm703, %v4630, %v4632
  %v4634 = vrot.slane %v4587, 2
  %v4635 = vsel %vm703, %v4632, %v4634
  %v4636 = vrot.slane %v4588, 2
  %v4637 = vsel %vm703, %v4634, %v4636
  %v4638 = vrot.slane %v4589, 2
  %v4639 = vsel %vm703, %v4636, %v4638
  %4640 = vrot.lane.b32.xlu0 %v4607, 64
  %v4641 = vpop.permute.xlu0 %4640
  %4642 = vrot.lane.b32.xlu0 %v4609, 64
  %v4643 = vpop.permute.xlu0 %4642
  %4644 = vrot.lane.b32.xlu0 %v4611, 64
  %v4645 = vpop.permute.xlu0 %4644
  %4646 = vrot.lane.b32.xlu0 %v4613, 64
  %v4647 = vpop.permute.xlu0 %4646
  %4648 = vrot.lane.b32.xlu0 %v4615, 64
  %v4649 = vpop.permute.xlu0 %4648
  %4650 = vrot.lane.b32.xlu0 %v4617, 64
  %v4651 = vpop.permute.xlu0 %4650
  %4652 = vrot.lane.b32.xlu0 %v4619, 64
  %v4653 = vpop.permute.xlu0 %4652
  %4654 = vrot.lane.b32.xlu0 %v4621, 64
  %v4655 = vpop.permute.xlu0 %4654
  %4656 = vrot.lane.b32.xlu0 %v4623, 64
  %v4657 = vpop.permute.xlu0 %4656
  %4658 = vrot.lane.b32.xlu0 %v4625, 64
  %v4659 = vpop.permute.xlu0 %4658
  %4660 = vrot.lane.b32.xlu0 %v4627, 64
  %v4661 = vpop.permute.xlu0 %4660
  %4662 = vrot.lane.b32.xlu0 %v4629, 64
  %v4663 = vpop.permute.xlu0 %4662
  %4664 = vrot.lane.b32.xlu0 %v4631, 64
  %v4665 = vpop.permute.xlu0 %4664
  %4666 = vrot.lane.b32.xlu0 %v4633, 64
  %v4667 = vpop.permute.xlu0 %4666
  %4668 = vrot.lane.b32.xlu0 %v4635, 64
  %v4669 = vpop.permute.xlu0 %4668
  %4670 = vrot.lane.b32.xlu0 %v4637, 64
  %v4671 = vpop.permute.xlu0 %4670
  %4672 = vrot.lane.b32.xlu0 %v4639, 64
  %v4673 = vpop.permute.xlu0 %4672
  %v4691 = vadd.f32 %v4556, %v4641
  %v4692 = vadd.f32 %v4557, %v4643
  %v4693 = vadd.f32 %v4558, %v4645
  %v4694 = vadd.f32 %v4559, %v4647
  %v4695 = vadd.f32 %v4560, %v4649
  %v4696 = vadd.f32 %v4561, %v4651
  %v4697 = vadd.f32 %v4562, %v4653
  %v4698 = vadd.f32 %v4563, %v4655
  %v4699 = vadd.f32 %v4564, %v4657
  %v4700 = vadd.f32 %v4565, %v4659
  %v4701 = vadd.f32 %v4566, %v4661
  %v4702 = vadd.f32 %v4567, %v4663
  %v4703 = vadd.f32 %v4568, %v4665
  %v4704 = vadd.f32 %v4569, %v4667
  %v4705 = vadd.f32 %v4570, %v4669
  %v4706 = vadd.f32 %v4571, %v4671
  %v4707 = vadd.f32 %v4572, %v4673
  %v4708 = vld [vmem:[%s1 + $0x80] sm:$0xff]
  %v4709 = vld [vmem:[%s1 + $0x88] sm:$0xff]
  %v4710 = vld [vmem:[%s1 + $0xa8] sm:$0xff]
  %v4711 = vld [vmem:[%s1 + $0xb0] sm:$0xff]
  %4716 = vrot.lane.b32.xlu0 %v4708, 64
  %v4717 = vpop.permute.xlu0 %4716
  %4718 = vrot.lane.b32.xlu0 %v4709, 64
  %v4719 = vpop.permute.xlu0 %4718
  %4720 = vrot.lane.b32.xlu0 %v4710, 64
  %v4721 = vpop.permute.xlu0 %4720
  %4722 = vrot.lane.b32.xlu0 %v4711, 64
  %v4723 = vpop.permute.xlu0 %4722
  %vm4724 = vcmask 523264
  %v4725 = vsel %vm4724, %v4717, %v4719
  %v4726 = vsel %vm4724, %v4721, %v4723
  %4729 = vmatprep.subr.mxu0 0.0
  %4730 = vmatpush1.msra.mxu0 %v4725
  %4731 = vmatprep.subr.mxu0 0.0
  %4732 = vmatpush1.msra.mxu0 %v4726
  %4733 = vmatprep.subr.mxu0 0.0
  %4734 = vmatpush1.msra.mxu0 0.0
  %4735 = vmatprep.subr.mxu0 0.0
  %4736 = vmatpush1.msra.mxu0 0.0
  %4737 = vmatprep.subr.mxu0 0.0
  %4738 = vmatpush1.msra.mxu0 0.0
  %4739 = vmatprep.subr.mxu0 0.0
  %4740 = vmatpush1.msra.mxu0 0.0
  %4741 = vmatprep.subr.mxu0 0.0
  %4742 = vmatpush1.msra.mxu0 0.0
  %4743 = vmatprep.subr.mxu0 0.0
  %4744 = vmatpush1.msra.mxu0 0.0
  %4745 = vmatprep.subr.mxu0 0.0
  %4746 = vmatpush1.msra.mxu0 0.0
  %4747 = vmatprep.subr.mxu0 0.0
  %4748 = vmatpush1.msra.mxu0 0.0
  %4749 = vmatprep.subr.mxu0 0.0
  %4750 = vmatpush1.msra.mxu0 0.0
  %4751 = vmatprep.subr.mxu0 0.0
  %4752 = vmatpush1.msra.mxu0 0.0
  %4753 = vmatprep.subr.mxu0 0.0
  %4754 = vmatpush1.msra.mxu0 0.0
  %4755 = vmatprep.subr.mxu0 0.0
  %4756 = vmatpush1.msra.mxu0 0.0
  %4757 = vmatprep.subr.mxu0 0.0
  %4758 = vmatpush1.msra.mxu0 0.0
  %4759 = vmatprep.subr.mxu0 0.0
  %4760 = vmatpush1.msra.mxu0 0.0
  %4761 = vmatprep.subr.mxu0 0.0
  %4762 = vmatpush1.msra.mxu0 0.0
  %4763 = vmatprep.subr.mxu0 0.0
  %4764 = vmatpush1.msra.mxu0 0.0
  %4765 = vmatprep.subr.mxu0 0.0
  %4766 = vmatpush1.msra.mxu0 0.0
  %4767 = vmatprep.subr.mxu0 0.0
  %4768 = vmatpush1.msra.mxu0 0.0
  %4769 = vmatprep.subr.mxu0 0.0
  %4770 = vmatpush1.msra.mxu0 0.0
  %4771 = vmatprep.subr.mxu0 0.0
  %4772 = vmatpush1.msra.mxu0 0.0
  %4773 = vmatprep.subr.mxu0 0.0
  %4774 = vmatpush1.msra.mxu0 0.0
  %4775 = vmatprep.subr.mxu0 0.0
  %4776 = vmatpush1.msra.mxu0 0.0
  %4777 = vmatprep.subr.mxu0 0.0
  %4778 = vmatpush1.msra.mxu0 0.0
  %4779 = vmatprep.subr.mxu0 0.0
  %4780 = vmatpush1.msra.mxu0 0.0
  %4781 = vmatprep.subr.mxu0 0.0
  %4782 = vmatpush1.msra.mxu0 0.0
  %4783 = vmatprep.subr.mxu0 0.0
  %4784 = vmatpush1.msra.mxu0 0.0
  %4785 = vmatprep.subr.mxu0 0.0
  %4786 = vmatpush1.msra.mxu0 0.0
  %4787 = vmatprep.subr.mxu0 0.0
  %4788 = vmatpush1.msra.mxu0 0.0
  %4789 = vmatprep.subr.mxu0 0.0
  %4790 = vmatpush1.msra.mxu0 0.0
  %4791 = vmatprep.subr.mxu0 0.0
  %4792 = vmatpush1.msra.mxu0 0.0
  %4793 = vmatprep.mubr.f32.mxu0 0.0
  %4794 = vmatmul.mubr.f32.gmra.mrb[0].mxu0 %v3783
  %v4795 = vpop.f32.mrb[0].mxu0
  %v4796 = vadd.f32 0.0, %v4795
  %v4797 = vpop.f32.mrb[0].mxu0
  %4798 = vmatprep.mubr.f32.mxu0 0.0
  %4799 = vmatmul.mubr.f32.gmra.mrb[0].mxu0 %v3785
  %v4800 = vpop.f32.mrb[0].mxu0
  %v4801 = vadd.f32 0.0, %v4800
  %v4802 = vpop.f32.mrb[0].mxu0
  %4803 = vmatprep.mubr.f32.mxu0 0.0
  %4804 = vmatmul.mubr.f32.gmra.mrb[0].mxu0 %v3787
  %v4805 = vpop.f32.mrb[0].mxu0
  %v4806 = vadd.f32 0.0, %v4805
  %v4807 = vpop.f32.mrb[0].mxu0
  %4808 = vmatprep.mubr.f32.mxu0 0.0
  %4809 = vmatmul.mubr.f32.gmra.mrb[0].mxu0 %v3789
  %v4810 = vpop.f32.mrb[0].mxu0
  %v4811 = vadd.f32 0.0, %v4810
  %v4812 = vpop.f32.mrb[0].mxu0
  %4813 = vmatprep.mubr.f32.mxu0 0.0
  %4814 = vmatmul.mubr.f32.gmra.mrb[0].mxu0 %v3791
  %v4815 = vpop.f32.mrb[0].mxu0
  %v4816 = vadd.f32 0.0, %v4815
  %v4817 = vpop.f32.mrb[0].mxu0
  %4818 = vmatprep.mubr.f32.mxu0 0.0
  %4819 = vmatmul.mubr.f32.gmra.mrb[0].mxu0 %v3793
  %v4820 = vpop.f32.mrb[0].mxu0
  %v4821 = vadd.f32 0.0, %v4820
  %v4822 = vpop.f32.mrb[0].mxu0
  %4823 = vmatprep.mubr.f32.mxu0 0.0
  %4824 = vmatmul.mubr.f32.gmra.mrb[0].mxu0 %v3795
  %v4825 = vpop.f32.mrb[0].mxu0
  %v4826 = vadd.f32 0.0, %v4825
  %v4827 = vpop.f32.mrb[0].mxu0
  %4828 = vmatprep.mubr.f32.mxu0 0.0
  %4829 = vmatmul.mubr.f32.gmra.mrb[0].mxu0 %v3797
  %v4830 = vpop.f32.mrb[0].mxu0
  %v4831 = vadd.f32 0.0, %v4830
  %v4832 = vpop.f32.mrb[0].mxu0
  %4833 = vmatprep.mubr.f32.mxu0 0.0
  %4834 = vmatmul.mubr.f32.gmra.mrb[0].mxu0 %v3799
  %v4835 = vpop.f32.mrb[0].mxu0
  %v4836 = vadd.f32 0.0, %v4835
  %v4837 = vpop.f32.mrb[0].mxu0
  %4838 = vmatprep.mubr.f32.mxu0 0.0
  %4839 = vmatmul.mubr.f32.gmra.mrb[0].mxu0 %v3801
  %v4840 = vpop.f32.mrb[0].mxu0
  %v4841 = vadd.f32 0.0, %v4840
  %v4842 = vpop.f32.mrb[0].mxu0
  %4843 = vmatprep.mubr.f32.mxu0 0.0
  %4844 = vmatmul.mubr.f32.gmra.mrb[0].mxu0 %v3803
  %v4845 = vpop.f32.mrb[0].mxu0
  %v4846 = vadd.f32 0.0, %v4845
  %v4847 = vpop.f32.mrb[0].mxu0
  %4848 = vmatprep.mubr.f32.mxu0 0.0
  %4849 = vmatmul.mubr.f32.gmra.mrb[0].mxu0 %v3805
  %v4850 = vpop.f32.mrb[0].mxu0
  %v4851 = vadd.f32 0.0, %v4850
  %v4852 = vpop.f32.mrb[0].mxu0
  %4853 = vmatprep.mubr.f32.mxu0 0.0
  %4854 = vmatmul.mubr.f32.gmra.mrb[0].mxu0 %v3807
  %v4855 = vpop.f32.mrb[0].mxu0
  %v4856 = vadd.f32 0.0, %v4855
  %v4857 = vpop.f32.mrb[0].mxu0
  %4858 = vmatprep.mubr.f32.mxu0 0.0
  %4859 = vmatmul.mubr.f32.gmra.mrb[0].mxu0 %v3809
  %v4860 = vpop.f32.mrb[0].mxu0
  %v4861 = vadd.f32 0.0, %v4860
  %v4862 = vpop.f32.mrb[0].mxu0
  %4863 = vmatprep.mubr.f32.mxu0 0.0
  %4864 = vmatmul.mubr.f32.gmra.mrb[0].mxu0 %v3811
  %v4865 = vpop.f32.mrb[0].mxu0
  %v4866 = vadd.f32 0.0, %v4865
  %v4867 = vpop.f32.mrb[0].mxu0
  %4868 = vmatprep.mubr.f32.mxu0 0.0
  %4869 = vmatmul.mubr.f32.gmra.mrb[0].mxu0 %v3813
  %v4870 = vpop.f32.mrb[0].mxu0
  %v4871 = vadd.f32 0.0, %v4870
  %v4872 = vpop.f32.mrb[0].mxu0
  %4873 = vdwg.mxu0
  %v4874 = vmul.f32 %v4796, %v1714
  %v4875 = vmul.f32 %v4801, %v1716
  %v4876 = vmul.f32 %v4806, %v1718
  %v4877 = vmul.f32 %v4811, %v1720
  %v4878 = vmul.f32 %v4816, %v1722
  %v4879 = vmul.f32 %v4821, %v1724
  %v4880 = vmul.f32 %v4826, %v1726
  %v4881 = vmul.f32 %v4831, %v1728
  %v4882 = vmul.f32 %v4836, %v1730
  %v4883 = vmul.f32 %v4841, %v1732
  %v4884 = vmul.f32 %v4846, %v1734
  %v4885 = vmul.f32 %v4851, %v1736
  %v4886 = vmul.f32 %v4856, %v1738
  %v4887 = vmul.f32 %v4861, %v1740
  %v4888 = vmul.f32 %v4866, %v1742
  %v4889 = vmul.f32 %v4871, %v1744
  %v4890 = vmul.f32 %v4796, %v1743
  %v4891 = vadd.f32 %v4691, %v4874
  %v4892 = vadd.f32 %v4692, %v4875
  %v4893 = vadd.f32 %v4693, %v4876
  %v4894 = vadd.f32 %v4694, %v4877
  %v4895 = vadd.f32 %v4695, %v4878
  %v4896 = vadd.f32 %v4696, %v4879
  %v4897 = vadd.f32 %v4697, %v4880
  %v4898 = vadd.f32 %v4698, %v4881
  %v4899 = vadd.f32 %v4699, %v4882
  %v4900 = vadd.f32 %v4700, %v4883
  %v4901 = vadd.f32 %v4701, %v4884
  %v4902 = vadd.f32 %v4702, %v4885
  %v4903 = vadd.f32 %v4703, %v4886
  %v4904 = vadd.f32 %v4704, %v4887
  %v4905 = vadd.f32 %v4705, %v4888
  %v4906 = vadd.f32 %v4706, %v4889
  %v4907 = vadd.f32 %v4707, %v4890
  %v4908 = vmul.f32 %v4801, %v1798
  %v4909 = vmul.f32 %v4806, %v1802
  %v4910 = vmul.f32 %v4811, %v1806
  %v4911 = vmul.f32 %v4816, %v1810
  %v4912 = vmul.f32 %v4821, %v1814
  %v4913 = vmul.f32 %v4826, %v1818
  %v4914 = vmul.f32 %v4831, %v1822
  %v4915 = vmul.f32 %v4836, %v1826
  %v4916 = vmul.f32 %v4841, %v1830
  %v4917 = vmul.f32 %v4846, %v1834
  %v4918 = vmul.f32 %v4851, %v1838
  %v4919 = vmul.f32 %v4856, %v1842
  %v4920 = vmul.f32 %v4861, %v1846
  %v4921 = vmul.f32 %v4866, %v1850
  %v4922 = vmul.f32 %v4871, %v1854
  %v4923 = vmul.f32 %v4796, %v1858
  %v4940 = vrot.slane %v4908, 1
  %v4941 = vrot.slane %v4909, 1
  %v4942 = vsel %vm311, %v4940, %v4941
  %v4943 = vrot.slane %v4910, 1
  %v4944 = vsel %vm311, %v4941, %v4943
  %v4945 = vrot.slane %v4911, 1
  %v4946 = vsel %vm311, %v4943, %v4945
  %v4947 = vrot.slane %v4912, 1
  %v4948 = vsel %vm311, %v4945, %v4947
  %v4949 = vrot.slane %v4913, 1
  %v4950 = vsel %vm311, %v4947, %v4949
  %v4951 = vrot.slane %v4914, 1
  %v4952 = vsel %vm311, %v4949, %v4951
  %v4953 = vrot.slane %v4915, 1
  %v4954 = vsel %vm311, %v4951, %v4953
  %v4955 = vrot.slane %v4916, 1
  %v4956 = vsel %vm311, %v4953, %v4955
  %v4957 = vrot.slane %v4917, 1
  %v4958 = vsel %vm311, %v4955, %v4957
  %v4959 = vrot.slane %v4918, 1
  %v4960 = vsel %vm311, %v4957, %v4959
  %v4961 = vrot.slane %v4919, 1
  %v4962 = vsel %vm311, %v4959, %v4961
  %v4963 = vrot.slane %v4920, 1
  %v4964 = vsel %vm311, %v4961, %v4963
  %v4965 = vrot.slane %v4921, 1
  %v4966 = vsel %vm311, %v4963, %v4965
  %v4967 = vrot.slane %v4922, 1
  %v4968 = vsel %vm311, %v4965, %v4967
  %v4969 = vrot.slane %v4923, 1
  %v4970 = vsel %vm311, %v4967, %v4969
  %4971 = vrot.lane.b32.xlu0 %v4940, 96
  %v4972 = vpop.permute.xlu0 %4971
  %4973 = vrot.lane.b32.xlu0 %v4942, 96
  %v4974 = vpop.permute.xlu0 %4973
  %4975 = vrot.lane.b32.xlu0 %v4944, 96
  %v4976 = vpop.permute.xlu0 %4975
  %4977 = vrot.lane.b32.xlu0 %v4946, 96
  %v4978 = vpop.permute.xlu0 %4977
  %4979 = vrot.lane.b32.xlu0 %v4948, 96
  %v4980 = vpop.permute.xlu0 %4979
  %4981 = vrot.lane.b32.xlu0 %v4950, 96
  %v4982 = vpop.permute.xlu0 %4981
  %4983 = vrot.lane.b32.xlu0 %v4952, 96
  %v4984 = vpop.permute.xlu0 %4983
  %4985 = vrot.lane.b32.xlu0 %v4954, 96
  %v4986 = vpop.permute.xlu0 %4985
  %4987 = vrot.lane.b32.xlu0 %v4956, 96
  %v4988 = vpop.permute.xlu0 %4987
  %4989 = vrot.lane.b32.xlu0 %v4958, 96
  %v4990 = vpop.permute.xlu0 %4989
  %4991 = vrot.lane.b32.xlu0 %v4960, 96
  %v4992 = vpop.permute.xlu0 %4991
  %4993 = vrot.lane.b32.xlu0 %v4962, 96
  %v4994 = vpop.permute.xlu0 %4993
  %4995 = vrot.lane.b32.xlu0 %v4964, 96
  %v4996 = vpop.permute.xlu0 %4995
  %4997 = vrot.lane.b32.xlu0 %v4966, 96
  %v4998 = vpop.permute.xlu0 %4997
  %4999 = vrot.lane.b32.xlu0 %v4968, 96
  %v5000 = vpop.permute.xlu0 %4999
  %5001 = vrot.lane.b32.xlu0 %v4970, 96
  %v5002 = vpop.permute.xlu0 %5001
  %5003 = vrot.lane.b32.xlu0 %v4969, 96
  %v5004 = vpop.permute.xlu0 %5003
  %v5022 = vadd.f32 %v4891, %v4972
  %v5023 = vadd.f32 %v4892, %v4974
  %v5024 = vadd.f32 %v4893, %v4976
  %v5025 = vadd.f32 %v4894, %v4978
  %v5026 = vadd.f32 %v4895, %v4980
  %v5027 = vadd.f32 %v4896, %v4982
  %v5028 = vadd.f32 %v4897, %v4984
  %v5029 = vadd.f32 %v4898, %v4986
  %v5030 = vadd.f32 %v4899, %v4988
  %v5031 = vadd.f32 %v4900, %v4990
  %v5032 = vadd.f32 %v4901, %v4992
  %v5033 = vadd.f32 %v4902, %v4994
  %v5034 = vadd.f32 %v4903, %v4996
  %v5035 = vadd.f32 %v4904, %v4998
  %v5036 = vadd.f32 %v4905, %v5000
  %v5037 = vadd.f32 %v4906, %v5002
  %v5038 = vadd.f32 %v4907, %v5004
  %v5039 = vmul.f32 %v4801, %v2039
  %v5040 = vmul.f32 %v4806, %v2041
  %v5041 = vmul.f32 %v4811, %v2043
  %v5042 = vmul.f32 %v4816, %v2045
  %v5043 = vmul.f32 %v4821, %v2047
  %v5044 = vmul.f32 %v4826, %v2049
  %v5045 = vmul.f32 %v4831, %v2051
  %v5046 = vmul.f32 %v4836, %v2053
  %v5047 = vmul.f32 %v4841, %v2055
  %v5048 = vmul.f32 %v4846, %v2057
  %v5049 = vmul.f32 %v4851, %v2059
  %v5050 = vmul.f32 %v4856, %v2061
  %v5051 = vmul.f32 %v4861, %v2063
  %v5052 = vmul.f32 %v4866, %v2065
  %v5053 = vmul.f32 %v4871, %v2067
  %v5054 = vmul.f32 %v4796, %v2069
  %v5055 = vmul.f32 %v4801, %v2068
  %v5073 = vrot.slane %v5039, 2
  %v5074 = vrot.slane %v5040, 2
  %v5075 = vsel %vm703, %v5073, %v5074
  %v5076 = vrot.slane %v5041, 2
  %v5077 = vsel %vm703, %v5074, %v5076
  %v5078 = vrot.slane %v5042, 2
  %v5079 = vsel %vm703, %v5076, %v5078
  %v5080 = vrot.slane %v5043, 2
  %v5081 = vsel %vm703, %v5078, %v5080
  %v5082 = vrot.slane %v5044, 2
  %v5083 = vsel %vm703, %v5080, %v5082
  %v5084 = vrot.slane %v5045, 2
  %v5085 = vsel %vm703, %v5082, %v5084
  %v5086 = vrot.slane %v5046, 2
  %v5087 = vsel %vm703, %v5084, %v5086
  %v5088 = vrot.slane %v5047, 2
  %v5089 = vsel %vm703, %v5086, %v5088
  %v5090 = vrot.slane %v5048, 2
  %v5091 = vsel %vm703, %v5088, %v5090
  %v5092 = vrot.slane %v5049, 2
  %v5093 = vsel %vm703, %v5090, %v5092
  %v5094 = vrot.slane %v5050, 2
  %v5095 = vsel %vm703, %v5092, %v5094
  %v5096 = vrot.slane %v5051, 2
  %v5097 = vsel %vm703, %v5094, %v5096
  %v5098 = vrot.slane %v5052, 2
  %v5099 = vsel %vm703, %v5096, %v5098
  %v5100 = vrot.slane %v5053, 2
  %v5101 = vsel %vm703, %v5098, %v5100
  %v5102 = vrot.slane %v5054, 2
  %v5103 = vsel %vm703, %v5100, %v5102
  %v5104 = vrot.slane %v5055, 2
  %v5105 = vsel %vm703, %v5102, %v5104
  %5106 = vrot.lane.b32.xlu0 %v5073, 64
  %v5107 = vpop.permute.xlu0 %5106
  %5108 = vrot.lane.b32.xlu0 %v5075, 64
  %v5109 = vpop.permute.xlu0 %5108
  %5110 = vrot.lane.b32.xlu0 %v5077, 64
  %v5111 = vpop.permute.xlu0 %5110
  %5112 = vrot.lane.b32.xlu0 %v5079, 64
  %v5113 = vpop.permute.xlu0 %5112
  %5114 = vrot.lane.b32.xlu0 %v5081, 64
  %v5115 = vpop.permute.xlu0 %5114
  %5116 = vrot.lane.b32.xlu0 %v5083, 64
  %v5117 = vpop.permute.xlu0 %5116
  %5118 = vrot.lane.b32.xlu0 %v5085, 64
  %v5119 = vpop.permute.xlu0 %5118
  %5120 = vrot.lane.b32.xlu0 %v5087, 64
  %v5121 = vpop.permute.xlu0 %5120
  %5122 = vrot.lane.b32.xlu0 %v5089, 64
  %v5123 = vpop.permute.xlu0 %5122
  %5124 = vrot.lane.b32.xlu0 %v5091, 64
  %v5125 = vpop.permute.xlu0 %5124
  %5126 = vrot.lane.b32.xlu0 %v5093, 64
  %v5127 = vpop.permute.xlu0 %5126
  %5128 = vrot.lane.b32.xlu0 %v5095, 64
  %v5129 = vpop.permute.xlu0 %5128
  %5130 = vrot.lane.b32.xlu0 %v5097, 64
  %v5131 = vpop.permute.xlu0 %5130
  %5132 = vrot.lane.b32.xlu0 %v5099, 64
  %v5133 = vpop.permute.xlu0 %5132
  %5134 = vrot.lane.b32.xlu0 %v5101, 64
  %v5135 = vpop.permute.xlu0 %5134
  %5136 = vrot.lane.b32.xlu0 %v5103, 64
  %v5137 = vpop.permute.xlu0 %5136
  %5138 = vrot.lane.b32.xlu0 %v5105, 64
  %v5139 = vpop.permute.xlu0 %5138
  %v5157 = vadd.f32 %v5022, %v5107
  %v5158 = vadd.f32 %v5023, %v5109
  %v5159 = vadd.f32 %v5024, %v5111
  %v5160 = vadd.f32 %v5025, %v5113
  %v5161 = vadd.f32 %v5026, %v5115
  %v5162 = vadd.f32 %v5027, %v5117
  %v5163 = vadd.f32 %v5028, %v5119
  %v5164 = vadd.f32 %v5029, %v5121
  %v5165 = vadd.f32 %v5030, %v5123
  %v5166 = vadd.f32 %v5031, %v5125
  %v5167 = vadd.f32 %v5032, %v5127
  %v5168 = vadd.f32 %v5033, %v5129
  %v5169 = vadd.f32 %v5034, %v5131
  %v5170 = vadd.f32 %v5035, %v5133
  %v5171 = vadd.f32 %v5036, %v5135
  %v5172 = vadd.f32 %v5037, %v5137
  %v5173 = vadd.f32 %v5038, %v5139
  %v5174 = vld [vmem:[%s2 + $0x2] sm:$0x1]
  %v5175 = vlaneseq
  %v5176 = vshrl.u32 %v5175, 7
  %v5177 = vsub.s32 0, %v5176
  %v5178 = vrot.slane %v5174, %v5177
  %v5179 = vadd.f32 %v5157, %v5178
  %v5180 = vadd.f32 %v5158, %v5178
  %v5181 = vadd.f32 %v5159, %v5178
  %v5182 = vadd.f32 %v5160, %v5178
  %v5183 = vadd.f32 %v5161, %v5178
  %v5184 = vadd.f32 %v5162, %v5178
  %v5185 = vadd.f32 %v5163, %v5178
  %v5186 = vadd.f32 %v5164, %v5178
  %v5187 = vadd.f32 %v5165, %v5178
  %v5188 = vadd.f32 %v5166, %v5178
  %v5189 = vadd.f32 %v5167, %v5178
  %v5190 = vadd.f32 %v5168, %v5178
  %v5191 = vadd.f32 %v5169, %v5178
  %v5192 = vadd.f32 %v5170, %v5178
  %v5193 = vadd.f32 %v5171, %v5178
  %v5194 = vadd.f32 %v5172, %v5178
  %v5195 = vadd.f32 %v5173, %v5178
  %v5196 = vmax.f32 %v5179, 0.0
  %v5197 = vmax.f32 %v5180, 0.0
  %v5198 = vmax.f32 %v5181, 0.0
  %v5199 = vmax.f32 %v5182, 0.0
  %v5200 = vmax.f32 %v5183, 0.0
  %v5201 = vmax.f32 %v5184, 0.0
  %v5202 = vmax.f32 %v5185, 0.0
  %v5203 = vmax.f32 %v5186, 0.0
  %v5204 = vmax.f32 %v5187, 0.0
  %v5205 = vmax.f32 %v5188, 0.0
  %v5206 = vmax.f32 %v5189, 0.0
  %v5207 = vmax.f32 %v5190, 0.0
  %v5208 = vmax.f32 %v5191, 0.0
  %v5209 = vmax.f32 %v5192, 0.0
  %v5210 = vmax.f32 %v5193, 0.0
  %v5211 = vmax.f32 %v5194, 0.0
  %v5212 = vmax.f32 %v5195, 0.0
  %v5213 = vld [vmem:[%s4] sm:$0xff]
  %v5214 = vld [vmem:[%s4 + $0x8] sm:$0xff]
  %v5215 = vld [vmem:[%s4 + $0x10] sm:$0xff]
  %v5216 = vld [vmem:[%s4 + $0x18] sm:$0xff]
  %v5234 = vrot.slane %v5196, 7
  %v5235 = vrot.slane %v5197, 7
  %v5236 = vsel %vm620, %v5234, %v5235
  %v5237 = vrot.slane %v5198, 7
  %v5238 = vsel %vm620, %v5235, %v5237
  %v5239 = vrot.slane %v5199, 7
  %v5240 = vsel %vm620, %v5237, %v5239
  %v5241 = vrot.slane %v5200, 7
  %v5242 = vsel %vm620, %v5239, %v5241
  %v5243 = vrot.slane %v5201, 7
  %v5244 = vsel %vm620, %v5241, %v5243
  %v5245 = vrot.slane %v5202, 7
  %v5246 = vsel %vm620, %v5243, %v5245
  %v5247 = vrot.slane %v5203, 7
  %v5248 = vsel %vm620, %v5245, %v5247
  %v5249 = vrot.slane %v5204, 7
  %v5250 = vsel %vm620, %v5247, %v5249
  %v5251 = vrot.slane %v5205, 7
  %v5252 = vsel %vm620, %v5249, %v5251
  %v5253 = vrot.slane %v5206, 7
  %v5254 = vsel %vm620, %v5251, %v5253
  %v5255 = vrot.slane %v5207, 7
  %v5256 = vsel %vm620, %v5253, %v5255
  %v5257 = vrot.slane %v5208, 7
  %v5258 = vsel %vm620, %v5255, %v5257
  %v5259 = vrot.slane %v5209, 7
  %v5260 = vsel %vm620, %v5257, %v5259
  %v5261 = vrot.slane %v5210, 7
  %v5262 = vsel %vm620, %v5259, %v5261
  %v5263 = vrot.slane %v5211, 7
  %v5264 = vsel %vm620, %v5261, %v5263
  %v5265 = vrot.slane %v5212, 7
  %v5266 = vsel %vm620, %v5263, %v5265
  %v5267 = vrot.slane %v5236, 2
  %v5268 = vrot.slane %v5238, 2
  %v5269 = vsel %vm703, %v5267, %v5268
  %v5270 = vrot.slane %v5240, 2
  %v5271 = vsel %vm703, %v5268, %v5270
  %v5272 = vrot.slane %v5242, 2
  %v5273 = vsel %vm703, %v5270, %v5272
  %v5274 = vrot.slane %v5244, 2
  %v5275 = vsel %vm703, %v5272, %v5274
  %v5276 = vrot.slane %v5246, 2
  %v5277 = vsel %vm703, %v5274, %v5276
  %v5278 = vrot.slane %v5248, 2
  %v5279 = vsel %vm703, %v5276, %v5278
  %v5280 = vrot.slane %v5250, 2
  %v5281 = vsel %vm703, %v5278, %v5280
  %v5282 = vrot.slane %v5252, 2
  %v5283 = vsel %vm703, %v5280, %v5282
  %v5284 = vrot.slane %v5254, 2
  %v5285 = vsel %vm703, %v5282, %v5284
  %v5286 = vrot.slane %v5256, 2
  %v5287 = vsel %vm703, %v5284, %v5286
  %v5288 = vrot.slane %v5258, 2
  %v5289 = vsel %vm703, %v5286, %v5288
  %v5290 = vrot.slane %v5260, 2
  %v5291 = vsel %vm703, %v5288, %v5290
  %v5292 = vrot.slane %v5262, 2
  %v5293 = vsel %vm703, %v5290, %v5292
  %v5294 = vrot.slane %v5264, 2
  %v5295 = vsel %vm703, %v5292, %v5294
  %v5296 = vrot.slane %v5266, 2
  %v5297 = vsel %vm703, %v5294, %v5296
  %v5298 = vsel %vm703, %v5296, %v5267
  %v5316 = vmax.f32 %v5196, %v5267
  %v5317 = vmax.f32 %v5197, %v5269
  %v5318 = vmax.f32 %v5198, %v5271
  %v5319 = vmax.f32 %v5199, %v5273
  %v5320 = vmax.f32 %v5200, %v5275
  %v5321 = vmax.f32 %v5201, %v5277
  %v5322 = vmax.f32 %v5202, %v5279
  %v5323 = vmax.f32 %v5203, %v5281
  %v5324 = vmax.f32 %v5204, %v5283
  %v5325 = vmax.f32 %v5205, %v5285
  %v5326 = vmax.f32 %v5206, %v5287
  %v5327 = vmax.f32 %v5207, %v5289
  %v5328 = vmax.f32 %v5208, %v5291
  %v5329 = vmax.f32 %v5209, %v5293
  %v5330 = vmax.f32 %v5210, %v5295
  %v5331 = vmax.f32 %v5211, %v5297
  %v5332 = vmax.f32 %v5212, %v5298
  %v5349 = vrot.slane %v5317, 7
  %v5350 = vrot.slane %v5318, 7
  %v5351 = vsel %vm620, %v5349, %v5350
  %v5352 = vrot.slane %v5319, 7
  %v5353 = vsel %vm620, %v5350, %v5352
  %v5354 = vrot.slane %v5320, 7
  %v5355 = vsel %vm620, %v5352, %v5354
  %v5356 = vrot.slane %v5321, 7
  %v5357 = vsel %vm620, %v5354, %v5356
  %v5358 = vrot.slane %v5322, 7
  %v5359 = vsel %vm620, %v5356, %v5358
  %v5360 = vrot.slane %v5323, 7
  %v5361 = vsel %vm620, %v5358, %v5360
  %v5362 = vrot.slane %v5324, 7
  %v5363 = vsel %vm620, %v5360, %v5362
  %v5364 = vrot.slane %v5325, 7
  %v5365 = vsel %vm620, %v5362, %v5364
  %v5366 = vrot.slane %v5326, 7
  %v5367 = vsel %vm620, %v5364, %v5366
  %v5368 = vrot.slane %v5327, 7
  %v5369 = vsel %vm620, %v5366, %v5368
  %v5370 = vrot.slane %v5328, 7
  %v5371 = vsel %vm620, %v5368, %v5370
  %v5372 = vrot.slane %v5329, 7
  %v5373 = vsel %vm620, %v5370, %v5372
  %v5374 = vrot.slane %v5330, 7
  %v5375 = vsel %vm620, %v5372, %v5374
  %v5376 = vrot.slane %v5331, 7
  %v5377 = vsel %vm620, %v5374, %v5376
  %v5378 = vrot.slane %v5332, 7
  %v5379 = vsel %vm620, %v5376, %v5378
  %v5381 = vrot.slane %v5316, 7
  %v5382 = vsel %vm620, %v5381, %v5349
  %v5383 = vrot.slane %v5351, 1
  %v5384 = vrot.slane %v5353, 1
  %v5385 = vsel %vm311, %v5383, %v5384
  %v5386 = vrot.slane %v5355, 1
  %v5387 = vsel %vm311, %v5384, %v5386
  %v5388 = vrot.slane %v5357, 1
  %v5389 = vsel %vm311, %v5386, %v5388
  %v5390 = vrot.slane %v5359, 1
  %v5391 = vsel %vm311, %v5388, %v5390
  %v5392 = vrot.slane %v5361, 1
  %v5393 = vsel %vm311, %v5390, %v5392
  %v5394 = vrot.slane %v5363, 1
  %v5395 = vsel %vm311, %v5392, %v5394
  %v5396 = vrot.slane %v5365, 1
  %v5397 = vsel %vm311, %v5394, %v5396
  %v5398 = vrot.slane %v5367, 1
  %v5399 = vsel %vm311, %v5396, %v5398
  %v5400 = vrot.slane %v5369, 1
  %v5401 = vsel %vm311, %v5398, %v5400
  %v5402 = vrot.slane %v5371, 1
  %v5403 = vsel %vm311, %v5400, %v5402
  %v5404 = vrot.slane %v5373, 1
  %v5405 = vsel %vm311, %v5402, %v5404
  %v5406 = vrot.slane %v5375, 1
  %v5407 = vsel %vm311, %v5404, %v5406
  %v5408 = vrot.slane %v5377, 1
  %v5409 = vsel %vm311, %v5406, %v5408
  %v5410 = vrot.slane %v5379, 1
  %v5411 = vsel %vm311, %v5408, %v5410
  %v5412 = vrot.slane %v5382, 1
  %v5413 = vsel %vm311, %v5410, %v5412
  %v5431 = vmax.f32 %v5316, %v5383
  %v5432 = vmax.f32 %v5317, %v5385
  %v5433 = vmax.f32 %v5318, %v5387
  %v5434 = vmax.f32 %v5319, %v5389
  %v5435 = vmax.f32 %v5320, %v5391
  %v5436 = vmax.f32 %v5321, %v5393
  %v5437 = vmax.f32 %v5322, %v5395
  %v5438 = vmax.f32 %v5323, %v5397
  %v5439 = vmax.f32 %v5324, %v5399
  %v5440 = vmax.f32 %v5325, %v5401
  %v5441 = vmax.f32 %v5326, %v5403
  %v5442 = vmax.f32 %v5327, %v5405
  %v5443 = vmax.f32 %v5328, %v5407
  %v5444 = vmax.f32 %v5329, %v5409
  %v5445 = vmax.f32 %v5330, %v5411
  %v5446 = vmax.f32 %v5331, %v5413
  %v5447 = vmax.f32 %v5332, %v5412
  %v5465 = vrot.slane %v5431, 7
  %v5466 = vrot.slane %v5432, 7
  %v5467 = vsel %vm620, %v5465, %v5466
  %v5468 = vrot.slane %v5433, 7
  %v5469 = vsel %vm620, %v5466, %v5468
  %v5470 = vrot.slane %v5434, 7
  %v5471 = vsel %vm620, %v5468, %v5470
  %v5472 = vrot.slane %v5435, 7
  %v5473 = vsel %vm620, %v5470, %v5472
  %v5474 = vrot.slane %v5436, 7
  %v5475 = vsel %vm620, %v5472, %v5474
  %v5476 = vrot.slane %v5437, 7
  %v5477 = vsel %vm620, %v5474, %v5476
  %v5478 = vrot.slane %v5438, 7
  %v5479 = vsel %vm620, %v5476, %v5478
  %v5480 = vrot.slane %v5439, 7
  %v5481 = vsel %vm620, %v5478, %v5480
  %v5482 = vrot.slane %v5440, 7
  %v5483 = vsel %vm620, %v5480, %v5482
  %v5484 = vrot.slane %v5441, 7
  %v5485 = vsel %vm620, %v5482, %v5484
  %v5486 = vrot.slane %v5442, 7
  %v5487 = vsel %vm620, %v5484, %v5486
  %v5488 = vrot.slane %v5443, 7
  %v5489 = vsel %vm620, %v5486, %v5488
  %v5490 = vrot.slane %v5444, 7
  %v5491 = vsel %vm620, %v5488, %v5490
  %v5492 = vrot.slane %v5445, 7
  %v5493 = vsel %vm620, %v5490, %v5492
  %v5494 = vrot.slane %v5446, 7
  %v5495 = vsel %vm620, %v5492, %v5494
  %v5496 = vrot.slane %v5447, 7
  %v5497 = vsel %vm620, %v5494, %v5496
  %5514 = vmatprep.subr.mxu0 0.0
  %5515 = vmatpush1.msra.mxu0 %v5467
  %5516 = vmatprep.subr.mxu0 0.0
  %5517 = vmatpush1.msra.mxu0 %v5469
  %5518 = vmatprep.subr.mxu0 0.0
  %5519 = vmatpush1.msra.mxu0 %v5471
  %5520 = vmatprep.subr.mxu0 0.0
  %5521 = vmatpush1.msra.mxu0 %v5473
  %5522 = vmatprep.subr.mxu0 0.0
  %5523 = vmatpush1.msra.mxu0 %v5475
  %5524 = vmatprep.subr.mxu0 0.0
  %5525 = vmatpush1.msra.mxu0 %v5477
  %5526 = vmatprep.subr.mxu0 0.0
  %5527 = vmatpush1.msra.mxu0 %v5479
  %5528 = vmatprep.subr.mxu0 0.0
  %5529 = vmatpush1.msra.mxu0 %v5481
  %5530 = vmatprep.subr.mxu0 0.0
  %5531 = vmatpush1.msra.mxu0 %v5483
  %5532 = vmatprep.subr.mxu0 0.0
  %5533 = vmatpush1.msra.mxu0 %v5485
  %5534 = vmatprep.subr.mxu0 0.0
  %5535 = vmatpush1.msra.mxu0 %v5487
  %5536 = vmatprep.subr.mxu0 0.0
  %5537 = vmatpush1.msra.mxu0 %v5489
  %5538 = vmatprep.subr.mxu0 0.0
  %5539 = vmatpush1.msra.mxu0 %v5491
  %5540 = vmatprep.subr.mxu0 0.0
  %5541 = vmatpush1.msra.mxu0 %v5493
  %5542 = vmatprep.subr.mxu0 0.0
  %5543 = vmatpush1.msra.mxu0 %v5495
  %5544 = vmatprep.subr.mxu0 0.0
  %5545 = vmatpush1.msra.mxu0 %v5497
  %5546 = vmatprep.subr.mxu0 0.0
  %5547 = vmatpush1.msra.mxu0 0.0
  %5548 = vmatprep.subr.mxu0 0.0
  %5549 = vmatpush1.msra.mxu0 0.0
  %5550 = vmatprep.subr.mxu0 0.0
  %5551 = vmatpush1.msra.mxu0 0.0
  %5552 = vmatprep.subr.mxu0 0.0
  %5553 = vmatpush1.msra.mxu0 0.0
  %5554 = vmatprep.subr.mxu0 0.0
  %5555 = vmatpush1.msra.mxu0 0.0
  %5556 = vmatprep.subr.mxu0 0.0
  %5557 = vmatpush1.msra.mxu0 0.0
  %5558 = vmatprep.subr.mxu0 0.0
  %5559 = vmatpush1.msra.mxu0 0.0
  %5560 = vmatprep.subr.mxu0 0.0
  %5561 = vmatpush1.msra.mxu0 0.0
  %5562 = vmatprep.subr.mxu0 0.0
  %5563 = vmatpush1.msra.mxu0 0.0
  %5564 = vmatprep.subr.mxu0 0.0
  %5565 = vmatpush1.msra.mxu0 0.0
  %5566 = vmatprep.subr.mxu0 0.0
  %5567 = vmatpush1.msra.mxu0 0.0
  %5568 = vmatprep.subr.mxu0 0.0
  %5569 = vmatpush1.msra.mxu0 0.0
  %5570 = vmatprep.subr.mxu0 0.0
  %5571 = vmatpush1.msra.mxu0 0.0
  %5572 = vmatprep.subr.mxu0 0.0
  %5573 = vmatpush1.msra.mxu0 0.0
  %5574 = vmatprep.subr.mxu0 0.0
  %5575 = vmatpush1.msra.mxu0 0.0
  %5576 = vmatprep.subr.mxu0 0.0
  %5577 = vmatpush1.msra.mxu0 0.0
  %5578 = vmatprep.mubr.f32.mxu0 0.0
  %5579 = vmatmul.mubr.f32.gmra.mrb[0].mxu0 %v5213
  %v5580 = vpop.f32.mrb[0].mxu0
  %v5581 = vadd.f32 0.0, %v5580
  %v5582 = vpop.f32.mrb[0].mxu0
  %5583 = vmatprep.mubr.f32.mxu0 0.0
  %5584 = vmatmul.mubr.f32.gmra.mrb[0].mxu0 %v5214
  %v5585 = vpop.f32.mrb[0].mxu0
  %v5586 = vadd.f32 0.0, %v5585
  %v5587 = vpop.f32.mrb[0].mxu0
  %5588 = vmatprep.mubr.f32.mxu0 0.0
  %5589 = vmatmul.mubr.f32.gmra.mrb[0].mxu0 %v5215
  %v5590 = vpop.f32.mrb[0].mxu0
  %v5591 = vadd.f32 0.0, %v5590
  %v5592 = vpop.f32.mrb[0].mxu0
  %5593 = vmatprep.mubr.f32.mxu0 0.0
  %5594 = vmatmul.mubr.f32.gmra.mrb[0].mxu0 %v5216
  %v5595 = vpop.f32.mrb[0].mxu0
  %v5596 = vadd.f32 0.0, %v5595
  %v5597 = vpop.f32.mrb[0].mxu0
  %5598 = vdwg.mxu0
  %v5599 = vld [vmem:[%s3 + $0x80] sm:$0xff]
  %v5600 = vld [vmem:[%s3 + $0x88] sm:$0xff]
  %v5601 = vld [vmem:[%s3 + $0x90] sm:$0xff]
  %v5602 = vld [vmem:[%s3 + $0x98] sm:$0xff]
  %v5603 = vld [vmem:[%s1 + $0xc8] sm:$0xff]
  %v5604 = vld [vmem:[%s1 + $0xf0] sm:$0xff]
  %v5605 = vld [vmem:[%s1 + $0x118] sm:$0xff]
  %v5606 = vld [vmem:[%s1 + $0x140] sm:$0xff]
  %v5608 = vsel %vm1518, %v5581, 0
  %v5611 = vsel %vm1518, %v5586, 0
  %v5614 = vsel %vm1518, %v5591, 0
  %v5617 = vsel %vm1518, %v5596, 0
  %5619 = vmatprep.subr.mxu0 0.0
  %5620 = vmatpush1.msra.mxu0 %v5603
  %5621 = vmatprep.subr.mxu0 0.0
  %5622 = vmatpush1.msra.mxu0 %v5604
  %5623 = vmatprep.subr.mxu0 0.0
  %5624 = vmatpush1.msra.mxu0 %v5605
  %5625 = vmatprep.subr.mxu0 0.0
  %5626 = vmatpush1.msra.mxu0 %v5606
  %5627 = vmatprep.subr.mxu0 0.0
  %5628 = vmatpush1.msra.mxu0 0.0
  %5629 = vmatprep.subr.mxu0 0.0
  %5630 = vmatpush1.msra.mxu0 0.0
  %5631 = vmatprep.subr.mxu0 0.0
  %5632 = vmatpush1.msra.mxu0 0.0
  %5633 = vmatprep.subr.mxu0 0.0
  %5634 = vmatpush1.msra.mxu0 0.0
  %5635 = vmatprep.subr.mxu0 0.0
  %5636 = vmatpush1.msra.mxu0 0.0
  %5637 = vmatprep.subr.mxu0 0.0
  %5638 = vmatpush1.msra.mxu0 0.0
  %5639 = vmatprep.subr.mxu0 0.0
  %5640 = vmatpush1.msra.mxu0 0.0
  %5641 = vmatprep.subr.mxu0 0.0
  %5642 = vmatpush1.msra.mxu0 0.0
  %5643 = vmatprep.subr.mxu0 0.0
  %5644 = vmatpush1.msra.mxu0 0.0
  %5645 = vmatprep.subr.mxu0 0.0
  %5646 = vmatpush1.msra.mxu0 0.0
  %5647 = vmatprep.subr.mxu0 0.0
  %5648 = vmatpush1.msra.mxu0 0.0
  %5649 = vmatprep.subr.mxu0 0.0
  %5650 = vmatpush1.msra.mxu0 0.0
  %5651 = vmatprep.subr.mxu0 0.0
  %5652 = vmatpush1.msra.mxu0 0.0
  %5653 = vmatprep.subr.mxu0 0.0
  %5654 = vmatpush1.msra.mxu0 0.0
  %5655 = vmatprep.subr.mxu0 0.0
  %5656 = vmatpush1.msra.mxu0 0.0
  %5657 = vmatprep.subr.mxu0 0.0
  %5658 = vmatpush1.msra.mxu0 0.0
  %5659 = vmatprep.subr.mxu0 0.0
  %5660 = vmatpush1.msra.mxu0 0.0
  %5661 = vmatprep.subr.mxu0 0.0
  %5662 = vmatpush1.msra.mxu0 0.0
  %5663 = vmatprep.subr.mxu0 0.0
  %5664 = vmatpush1.msra.mxu0 0.0
  %5665 = vmatprep.subr.mxu0 0.0
  %5666 = vmatpush1.msra.mxu0 0.0
  %5667 = vmatprep.subr.mxu0 0.0
  %5668 = vmatpush1.msra.mxu0 0.0
  %5669 = vmatprep.subr.mxu0 0.0
  %5670 = vmatpush1.msra.mxu0 0.0
  %5671 = vmatprep.subr.mxu0 0.0
  %5672 = vmatpush1.msra.mxu0 0.0
  %5673 = vmatprep.subr.mxu0 0.0
  %5674 = vmatpush1.msra.mxu0 0.0
  %5675 = vmatprep.subr.mxu0 0.0
  %5676 = vmatpush1.msra.mxu0 0.0
  %5677 = vmatprep.subr.mxu0 0.0
  %5678 = vmatpush1.msra.mxu0 0.0
  %5679 = vmatprep.subr.mxu0 0.0
  %5680 = vmatpush1.msra.mxu0 0.0
  %5681 = vmatprep.subr.mxu0 0.0
  %5682 = vmatpush1.msra.mxu0 0.0
  %5683 = vmatprep.mubr.f32.mxu0 0.0
  %5684 = vmatmul.mubr.f32.gmra.mrb[0].mxu0 %v5608
  %v5685 = vpop.f32.mrb[0].mxu0
  %v5686 = vadd.f32 0.0, %v5685
  %v5687 = vpop.f32.mrb[0].mxu0
  %5688 = vmatprep.mubr.f32.mxu0 0.0
  %5689 = vmatmul.mubr.f32.gmra.mrb[0].mxu0 %v5611
  %v5690 = vpop.f32.mrb[0].mxu0
  %v5691 = vadd.f32 0.0, %v5690
  %v5692 = vpop.f32.mrb[0].mxu0
  %5693 = vmatprep.mubr.f32.mxu0 0.0
  %5694 = vmatmul.mubr.f32.gmra.mrb[0].mxu0 %v5614
  %v5695 = vpop.f32.mrb[0].mxu0
  %v5696 = vadd.f32 0.0, %v5695
  %v5697 = vpop.f32.mrb[0].mxu0
  %5698 = vmatprep.mubr.f32.mxu0 0.0
  %5699 = vmatmul.mubr.f32.gmra.mrb[0].mxu0 %v5617
  %v5700 = vpop.f32.mrb[0].mxu0
  %v5701 = vadd.f32 0.0, %v5700
  %v5702 = vpop.f32.mrb[0].mxu0
  %5703 = vdwg.mxu0
  %5705 = vset.pattern.permute.xlu0 0
  %5706 = vperm.xlu0 %5705, %v5599
  %v5707 = vpop.permute.xlu0 %5706
  %5709 = vset.pattern.permute.xlu0 0
  %5710 = vperm.xlu0 %5709, %v5600
  %v5711 = vpop.permute.xlu0 %5710
  %5713 = vset.pattern.permute.xlu0 0
  %5714 = vperm.xlu0 %5713, %v5601
  %v5715 = vpop.permute.xlu0 %5714
  %5717 = vset.pattern.permute.xlu0 0
  %5718 = vperm.xlu0 %5717, %v5602
  %v5719 = vpop.permute.xlu0 %5718
  %vm5720 = vcmask 1042432
  %v5721 = vrot.slane %v5707, 5
  %v5722 = vrot.slane %v5711, 5
  %v5723 = vsel %vm5720, %v5721, %v5722
  %v5724 = vrot.slane %v5715, 5
  %v5725 = vsel %vm5720, %v5722, %v5724
  %v5726 = vrot.slane %v5719, 5
  %v5727 = vsel %vm5720, %v5724, %v5726
  %v5733 = vmul.f32 %v5701, %v5721
  %v5734 = vmul.f32 %v5686, %v5723
  %v5735 = vmul.f32 %v5691, %v5725
  %v5736 = vmul.f32 %v5696, %v5727
  %v5737 = vmul.f32 %v5701, %v5726
  %5738 = vset.pattern.permute.xlu0 1
  %5739 = vperm.xlu0 %5738, %v5599
  %v5740 = vpop.permute.xlu0 %5739
  %5741 = vset.pattern.permute.xlu0 1
  %5742 = vperm.xlu0 %5741, %v5600
  %v5743 = vpop.permute.xlu0 %5742
  %5744 = vset.pattern.permute.xlu0 1
  %5745 = vperm.xlu0 %5744, %v5601
  %v5746 = vpop.permute.xlu0 %5745
  %5747 = vset.pattern.permute.xlu0 1
  %5748 = vperm.xlu0 %5747, %v5602
  %v5749 = vpop.permute.xlu0 %5748
  %vm5750 = vcmask 1043456
  %v5751 = vrot.slane %v5740, 4
  %v5752 = vrot.slane %v5743, 4
  %v5753 = vsel %vm5750, %v5751, %v5752
  %v5754 = vrot.slane %v5746, 4
  %v5755 = vsel %vm5750, %v5752, %v5754
  %v5756 = vrot.slane %v5749, 4
  %v5757 = vsel %vm5750, %v5754, %v5756
  %v5763 = vmul.f32 %v5701, %v5751
  %v5764 = vmul.f32 %v5686, %v5753
  %v5765 = vmul.f32 %v5691, %v5755
  %v5766 = vmul.f32 %v5696, %v5757
  %v5767 = vmul.f32 %v5701, %v5756
  %v5773 = vrot.slane %v5763, 1
  %v5774 = vrot.slane %v5764, 1
  %v5775 = vsel %vm311, %v5773, %v5774
  %v5776 = vrot.slane %v5765, 1
  %v5777 = vsel %vm311, %v5774, %v5776
  %v5778 = vrot.slane %v5766, 1
  %v5779 = vsel %vm311, %v5776, %v5778
  %v5780 = vrot.slane %v5767, 1
  %v5781 = vsel %vm311, %v5778, %v5780
  %5782 = vrot.lane.b32.xlu0 %v5775, 96
  %v5783 = vpop.permute.xlu0 %5782
  %5784 = vrot.lane.b32.xlu0 %v5777, 96
  %v5785 = vpop.permute.xlu0 %5784
  %5786 = vrot.lane.b32.xlu0 %v5779, 96
  %v5787 = vpop.permute.xlu0 %5786
  %5788 = vrot.lane.b32.xlu0 %v5781, 96
  %v5789 = vpop.permute.xlu0 %5788
  %5790 = vrot.lane.b32.xlu0 %v5780, 96
  %v5791 = vpop.permute.xlu0 %5790
  %v5797 = vadd.f32 %v5733, %v5783
  %v5798 = vadd.f32 %v5734, %v5785
  %v5799 = vadd.f32 %v5735, %v5787
  %v5800 = vadd.f32 %v5736, %v5789
  %v5801 = vadd.f32 %v5737, %v5791
  %5802 = vset.pattern.permute.xlu0 2
  %5803 = vperm.xlu0 %5802, %v5599
  %v5804 = vpop.permute.xlu0 %5803
  %5805 = vset.pattern.permute.xlu0 2
  %5806 = vperm.xlu0 %5805, %v5600
  %v5807 = vpop.permute.xlu0 %5806
  %5808 = vset.pattern.permute.xlu0 2
  %5809 = vperm.xlu0 %5808, %v5601
  %v5810 = vpop.permute.xlu0 %5809
  %5811 = vset.pattern.permute.xlu0 2
  %5812 = vperm.xlu0 %5811, %v5602
  %v5813 = vpop.permute.xlu0 %5812
  %vm5814 = vcmask 1044480
  %v5815 = vrot.slane %v5804, 3
  %v5816 = vrot.slane %v5807, 3
  %v5817 = vsel %vm5814, %v5815, %v5816
  %v5818 = vrot.slane %v5810, 3
  %v5819 = vsel %vm5814, %v5816, %v5818
  %v5820 = vrot.slane %v5813, 3
  %v5821 = vsel %vm5814, %v5818, %v5820
  %v5827 = vmul.f32 %v5701, %v5815
  %v5828 = vmul.f32 %v5686, %v5817
  %v5829 = vmul.f32 %v5691, %v5819
  %v5830 = vmul.f32 %v5696, %v5821
  %v5831 = vmul.f32 %v5701, %v5820
  %v5837 = vrot.slane %v5827, 2
  %v5838 = vrot.slane %v5828, 2
  %v5839 = vsel %vm703, %v5837, %v5838
  %v5840 = vrot.slane %v5829, 2
  %v5841 = vsel %vm703, %v5838, %v5840
  %v5842 = vrot.slane %v5830, 2
  %v5843 = vsel %vm703, %v5840, %v5842
  %v5844 = vrot.slane %v5831, 2
  %v5845 = vsel %vm703, %v5842, %v5844
  %5846 = vrot.lane.b32.xlu0 %v5839, 64
  %v5847 = vpop.permute.xlu0 %5846
  %5848 = vrot.lane.b32.xlu0 %v5841, 64
  %v5849 = vpop.permute.xlu0 %5848
  %5850 = vrot.lane.b32.xlu0 %v5843, 64
  %v5851 = vpop.permute.xlu0 %5850
  %5852 = vrot.lane.b32.xlu0 %v5845, 64
  %v5853 = vpop.permute.xlu0 %5852
  %5854 = vrot.lane.b32.xlu0 %v5844, 64
  %v5855 = vpop.permute.xlu0 %5854
  %v5861 = vadd.f32 %v5797, %v5847
  %v5862 = vadd.f32 %v5798, %v5849
  %v5863 = vadd.f32 %v5799, %v5851
  %v5864 = vadd.f32 %v5800, %v5853
  %v5865 = vadd.f32 %v5801, %v5855
  %v5866 = vld [vmem:[%s1 + $0xc8] sm:$0xff]
  %v5867 = vld [vmem:[%s1 + $0xd0] sm:$0xff]
  %v5868 = vld [vmem:[%s1 + $0xf0] sm:$0xff]
  %v5869 = vld [vmem:[%s1 + $0xf8] sm:$0xff]
  %v5870 = vld [vmem:[%s1 + $0x118] sm:$0xff]
  %v5871 = vld [vmem:[%s1 + $0x120] sm:$0xff]
  %v5872 = vld [vmem:[%s1 + $0x140] sm:$0xff]
  %v5873 = vld [vmem:[%s1 + $0x148] sm:$0xff]
  %5882 = vrot.lane.b32.xlu0 %v5866, 32
  %v5883 = vpop.permute.xlu0 %5882
  %5884 = vrot.lane.b32.xlu0 %v5867, 32
  %v5885 = vpop.permute.xlu0 %5884
  %5886 = vrot.lane.b32.xlu0 %v5868, 32
  %v5887 = vpop.permute.xlu0 %5886
  %5888 = vrot.lane.b32.xlu0 %v5869, 32
  %v5889 = vpop.permute.xlu0 %5888
  %5890 = vrot.lane.b32.xlu0 %v5870, 32
  %v5891 = vpop.permute.xlu0 %5890
  %5892 = vrot.lane.b32.xlu0 %v5871, 32
  %v5893 = vpop.permute.xlu0 %5892
  %5894 = vrot.lane.b32.xlu0 %v5872, 32
  %v5895 = vpop.permute.xlu0 %5894
  %5896 = vrot.lane.b32.xlu0 %v5873, 32
  %v5897 = vpop.permute.xlu0 %5896
  %v5898 = vsel %vm1518, %v5883, %v5885
  %v5899 = vsel %vm1518, %v5887, %v5889
  %v5900 = vsel %vm1518, %v5891, %v5893
  %v5901 = vsel %vm1518, %v5895, %v5897
  %5906 = vmatprep.subr.mxu0 0.0
  %5907 = vmatpush1.msra.mxu0 %v5898
  %5908 = vmatprep.subr.mxu0 0.0
  %5909 = vmatpush1.msra.mxu0 %v5899
  %5910 = vmatprep.subr.mxu0 0.0
  %5911 = vmatpush1.msra.mxu0 %v5900
  %5912 = vmatprep.subr.mxu0 0.0
  %5913 = vmatpush1.msra.mxu0 %v5901
  %5914 = vmatprep.subr.mxu0 0.0
  %5915 = vmatpush1.msra.mxu0 0.0
  %5916 = vmatprep.subr.mxu0 0.0
  %5917 = vmatpush1.msra.mxu0 0.0
  %5918 = vmatprep.subr.mxu0 0.0
  %5919 = vmatpush1.msra.mxu0 0.0
  %5920 = vmatprep.subr.mxu0 0.0
  %5921 = vmatpush1.msra.mxu0 0.0
  %5922 = vmatprep.subr.mxu0 0.0
  %5923 = vmatpush1.msra.mxu0 0.0
  %5924 = vmatprep.subr.mxu0 0.0
  %5925 = vmatpush1.msra.mxu0 0.0
  %5926 = vmatprep.subr.mxu0 0.0
  %5927 = vmatpush1.msra.mxu0 0.0
  %5928 = vmatprep.subr.mxu0 0.0
  %5929 = vmatpush1.msra.mxu0 0.0
  %5930 = vmatprep.subr.mxu0 0.0
  %5931 = vmatpush1.msra.mxu0 0.0
  %5932 = vmatprep.subr.mxu0 0.0
  %5933 = vmatpush1.msra.mxu0 0.0
  %5934 = vmatprep.subr.mxu0 0.0
  %5935 = vmatpush1.msra.mxu0 0.0
  %5936 = vmatprep.subr.mxu0 0.0
  %5937 = vmatpush1.msra.mxu0 0.0
  %5938 = vmatprep.subr.mxu0 0.0
  %5939 = vmatpush1.msra.mxu0 0.0
  %5940 = vmatprep.subr.mxu0 0.0
  %5941 = vmatpush1.msra.mxu0 0.0
  %5942 = vmatprep.subr.mxu0 0.0
  %5943 = vmatpush1.msra.mxu0 0.0
  %5944 = vmatprep.subr.mxu0 0.0
  %5945 = vmatpush1.msra.mxu0 0.0
  %5946 = vmatprep.subr.mxu0 0.0
  %5947 = vmatpush1.msra.mxu0 0.0
  %5948 = vmatprep.subr.mxu0 0.0
  %5949 = vmatpush1.msra.mxu0 0.0
  %5950 = vmatprep.subr.mxu0 0.0
  %5951 = vmatpush1.msra.mxu0 0.0
  %5952 = vmatprep.subr.mxu0 0.0
  %5953 = vmatpush1.msra.mxu0 0.0
  %5954 = vmatprep.subr.mxu0 0.0
  %5955 = vmatpush1.msra.mxu0 0.0
  %5956 = vmatprep.subr.mxu0 0.0
  %5957 = vmatpush1.msra.mxu0 0.0
  %5958 = vmatprep.subr.mxu0 0.0
  %5959 = vmatpush1.msra.mxu0 0.0
  %5960 = vmatprep.subr.mxu0 0.0
  %5961 = vmatpush1.msra.mxu0 0.0
  %5962 = vmatprep.subr.mxu0 0.0
  %5963 = vmatpush1.msra.mxu0 0.0
  %5964 = vmatprep.subr.mxu0 0.0
  %5965 = vmatpush1.msra.mxu0 0.0
  %5966 = vmatprep.subr.mxu0 0.0
  %5967 = vmatpush1.msra.mxu0 0.0
  %5968 = vmatprep.subr.mxu0 0.0
  %5969 = vmatpush1.msra.mxu0 0.0
  %5970 = vmatprep.mubr.f32.mxu0 0.0
  %5971 = vmatmul.mubr.f32.gmra.mrb[0].mxu0 %v5608
  %v5972 = vpop.f32.mrb[0].mxu0
  %v5973 = vadd.f32 0.0, %v5972
  %v5974 = vpop.f32.mrb[0].mxu0
  %5975 = vmatprep.mubr.f32.mxu0 0.0
  %5976 = vmatmul.mubr.f32.gmra.mrb[0].mxu0 %v5611
  %v5977 = vpop.f32.mrb[0].mxu0
  %v5978 = vadd.f32 0.0, %v5977
  %v5979 = vpop.f32.mrb[0].mxu0
  %5980 = vmatprep.mubr.f32.mxu0 0.0
  %5981 = vmatmul.mubr.f32.gmra.mrb[0].mxu0 %v5614
  %v5982 = vpop.f32.mrb[0].mxu0
  %v5983 = vadd.f32 0.0, %v5982
  %v5984 = vpop.f32.mrb[0].mxu0
  %5985 = vmatprep.mubr.f32.mxu0 0.0
  %5986 = vmatmul.mubr.f32.gmra.mrb[0].mxu0 %v5617
  %v5987 = vpop.f32.mrb[0].mxu0
  %v5988 = vadd.f32 0.0, %v5987
  %v5989 = vpop.f32.mrb[0].mxu0
  %5990 = vdwg.mxu0
  %5991 = vset.pattern.permute.xlu0 3
  %5992 = vperm.xlu0 %5991, %v5599
  %v5993 = vpop.permute.xlu0 %5992
  %5994 = vset.pattern.permute.xlu0 3
  %5995 = vperm.xlu0 %5994, %v5600
  %v5996 = vpop.permute.xlu0 %5995
  %5997 = vset.pattern.permute.xlu0 3
  %5998 = vperm.xlu0 %5997, %v5601
  %v5999 = vpop.permute.xlu0 %5998
  %6000 = vset.pattern.permute.xlu0 3
  %6001 = vperm.xlu0 %6000, %v5602
  %v6002 = vpop.permute.xlu0 %6001
  %v6003 = vrot.slane %v5993, 1
  %v6004 = vrot.slane %v5996, 1
  %v6005 = vsel %vm311, %v6003, %v6004
  %v6006 = vrot.slane %v5999, 1
  %v6007 = vsel %vm311, %v6004, %v6006
  %v6008 = vrot.slane %v6002, 1
  %v6009 = vsel %vm311, %v6006, %v6008
  %v6015 = vmul.f32 %v5988, %v6003
  %v6016 = vmul.f32 %v5973, %v6005
  %v6017 = vmul.f32 %v5978, %v6007
  %v6018 = vmul.f32 %v5983, %v6009
  %v6019 = vmul.f32 %v5988, %v6008
  %v6025 = vrot.slane %v6015, 4
  %v6026 = vrot.slane %v6016, 4
  %v6027 = vsel %vm5750, %v6025, %v6026
  %v6028 = vrot.slane %v6017, 4
  %v6029 = vsel %vm5750, %v6026, %v6028
  %v6030 = vrot.slane %v6018, 4
  %v6031 = vsel %vm5750, %v6028, %v6030
  %v6032 = vrot.slane %v6019, 4
  %v6033 = vsel %vm5750, %v6030, %v6032
  %v6039 = vadd.f32 %v5861, %v6027
  %v6040 = vadd.f32 %v5862, %v6029
  %v6041 = vadd.f32 %v5863, %v6031
  %v6042 = vadd.f32 %v5864, %v6033
  %v6043 = vadd.f32 %v5865, %v6032
  %6044 = vset.pattern.permute.xlu0 4
  %6045 = vperm.xlu0 %6044, %v5599
  %v6046 = vpop.permute.xlu0 %6045
  %6048 = vset.pattern.permute.xlu0 4
  %6049 = vperm.xlu0 %6048, %v5600
  %v6050 = vpop.permute.xlu0 %6049
  %6052 = vset.pattern.permute.xlu0 4
  %6053 = vperm.xlu0 %6052, %v5601
  %v6054 = vpop.permute.xlu0 %6053
  %6056 = vset.pattern.permute.xlu0 4
  %6057 = vperm.xlu0 %6056, %v5602
  %v6058 = vpop.permute.xlu0 %6057
  %v6060 = vmul.f32 %v5973, %v6046
  %v6061 = vmul.f32 %v5978, %v6050
  %v6062 = vmul.f32 %v5983, %v6054
  %v6063 = vmul.f32 %v5988, %v6058
  %v6068 = vrot.slane %v6060, 5
  %v6069 = vrot.slane %v6061, 5
  %v6070 = vsel %vm5720, %v6068, %v6069
  %v6071 = vrot.slane %v6062, 5
  %v6072 = vsel %vm5720, %v6069, %v6071
  %v6073 = vrot.slane %v6063, 5
  %v6074 = vsel %vm5720, %v6071, %v6073
  %6075 = vrot.lane.b32.xlu0 %v6068, 96
  %v6076 = vpop.permute.xlu0 %6075
  %6077 = vrot.lane.b32.xlu0 %v6070, 96
  %v6078 = vpop.permute.xlu0 %6077
  %6079 = vrot.lane.b32.xlu0 %v6072, 96
  %v6080 = vpop.permute.xlu0 %6079
  %6081 = vrot.lane.b32.xlu0 %v6074, 96
  %v6082 = vpop.permute.xlu0 %6081
  %6083 = vrot.lane.b32.xlu0 %v6073, 96
  %v6084 = vpop.permute.xlu0 %6083
  %v6090 = vadd.f32 %v6039, %v6076
  %v6091 = vadd.f32 %v6040, %v6078
  %v6092 = vadd.f32 %v6041, %v6080
  %v6093 = vadd.f32 %v6042, %v6082
  %v6094 = vadd.f32 %v6043, %v6084
  %6095 = vset.pattern.permute.xlu0 5
  %6096 = vperm.xlu0 %6095, %v5599
  %v6097 = vpop.permute.xlu0 %6096
  %6098 = vset.pattern.permute.xlu0 5
  %6099 = vperm.xlu0 %6098, %v5600
  %v6100 = vpop.permute.xlu0 %6099
  %6101 = vset.pattern.permute.xlu0 5
  %6102 = vperm.xlu0 %6101, %v5601
  %v6103 = vpop.permute.xlu0 %6102
  %6104 = vset.pattern.permute.xlu0 5
  %6105 = vperm.xlu0 %6104, %v5602
  %v6106 = vpop.permute.xlu0 %6105
  %v6107 = vrot.slane %v6097, 7
  %v6108 = vrot.slane %v6100, 7
  %v6109 = vsel %vm620, %v6107, %v6108
  %v6110 = vrot.slane %v6103, 7
  %v6111 = vsel %vm620, %v6108, %v6110
  %v6112 = vrot.slane %v6106, 7
  %v6113 = vsel %vm620, %v6110, %v6112
  %v6119 = vmul.f32 %v5973, %v6107
  %v6120 = vmul.f32 %v5978, %v6109
  %v6121 = vmul.f32 %v5983, %v6111
  %v6122 = vmul.f32 %v5988, %v6113
  %v6123 = vmul.f32 %v5973, %v6112
  %vm6129 = vcmask 1041408
  %v6130 = vrot.slane %v6119, 6
  %v6131 = vrot.slane %v6120, 6
  %v6132 = vsel %vm6129, %v6130, %v6131
  %v6133 = vrot.slane %v6121, 6
  %v6134 = vsel %vm6129, %v6131, %v6133
  %v6135 = vrot.slane %v6122, 6
  %v6136 = vsel %vm6129, %v6133, %v6135
  %v6137 = vrot.slane %v6123, 6
  %v6138 = vsel %vm6129, %v6135, %v6137
  %6139 = vrot.lane.b32.xlu0 %v6130, 64
  %v6140 = vpop.permute.xlu0 %6139
  %6141 = vrot.lane.b32.xlu0 %v6132, 64
  %v6142 = vpop.permute.xlu0 %6141
  %6143 = vrot.lane.b32.xlu0 %v6134, 64
  %v6144 = vpop.permute.xlu0 %6143
  %6145 = vrot.lane.b32.xlu0 %v6136, 64
  %v6146 = vpop.permute.xlu0 %6145
  %6147 = vrot.lane.b32.xlu0 %v6138, 64
  %v6148 = vpop.permute.xlu0 %6147
  %v6154 = vadd.f32 %v6090, %v6140
  %v6155 = vadd.f32 %v6091, %v6142
  %v6156 = vadd.f32 %v6092, %v6144
  %v6157 = vadd.f32 %v6093, %v6146
  %v6158 = vadd.f32 %v6094, %v6148
  %v6159 = vld [vmem:[%s1 + $0xd0] sm:$0xff]
  %v6160 = vld [vmem:[%s1 + $0xd8] sm:$0xff]
  %v6161 = vld [vmem:[%s1 + $0xf8] sm:$0xff]
  %v6162 = vld [vmem:[%s1 + $0x100] sm:$0xff]
  %v6163 = vld [vmem:[%s1 + $0x120] sm:$0xff]
  %v6164 = vld [vmem:[%s1 + $0x128] sm:$0xff]
  %v6165 = vld [vmem:[%s1 + $0x148] sm:$0xff]
  %v6166 = vld [vmem:[%s1 + $0x150] sm:$0xff]
  %6175 = vrot.lane.b32.xlu0 %v6159, 64
  %v6176 = vpop.permute.xlu0 %6175
  %6177 = vrot.lane.b32.xlu0 %v6160, 64
  %v6178 = vpop.permute.xlu0 %6177
  %6179 = vrot.lane.b32.xlu0 %v6161, 64
  %v6180 = vpop.permute.xlu0 %6179
  %6181 = vrot.lane.b32.xlu0 %v6162, 64
  %v6182 = vpop.permute.xlu0 %6181
  %6183 = vrot.lane.b32.xlu0 %v6163, 64
  %v6184 = vpop.permute.xlu0 %6183
  %6185 = vrot.lane.b32.xlu0 %v6164, 64
  %v6186 = vpop.permute.xlu0 %6185
  %6187 = vrot.lane.b32.xlu0 %v6165, 64
  %v6188 = vpop.permute.xlu0 %6187
  %6189 = vrot.lane.b32.xlu0 %v6166, 64
  %v6190 = vpop.permute.xlu0 %6189
  %v6191 = vsel %vm4724, %v6176, %v6178
  %v6192 = vsel %vm4724, %v6180, %v6182
  %v6193 = vsel %vm4724, %v6184, %v6186
  %v6194 = vsel %vm4724, %v6188, %v6190
  %6199 = vmatprep.subr.mxu0 0.0
  %6200 = vmatpush1.msra.mxu0 %v6191
  %6201 = vmatprep.subr.mxu0 0.0
  %6202 = vmatpush1.msra.mxu0 %v6192
  %6203 = vmatprep.subr.mxu0 0.0
  %6204 = vmatpush1.msra.mxu0 %v6193
  %6205 = vmatprep.subr.mxu0 0.0
  %6206 = vmatpush1.msra.mxu0 %v6194
  %6207 = vmatprep.subr.mxu0 0.0
  %6208 = vmatpush1.msra.mxu0 0.0
  %6209 = vmatprep.subr.mxu0 0.0
  %6210 = vmatpush1.msra.mxu0 0.0
  %6211 = vmatprep.subr.mxu0 0.0
  %6212 = vmatpush1.msra.mxu0 0.0
  %6213 = vmatprep.subr.mxu0 0.0
  %6214 = vmatpush1.msra.mxu0 0.0
  %6215 = vmatprep.subr.mxu0 0.0
  %6216 = vmatpush1.msra.mxu0 0.0
  %6217 = vmatprep.subr.mxu0 0.0
  %6218 = vmatpush1.msra.mxu0 0.0
  %6219 = vmatprep.subr.mxu0 0.0
  %6220 = vmatpush1.msra.mxu0 0.0
  %6221 = vmatprep.subr.mxu0 0.0
  %6222 = vmatpush1.msra.mxu0 0.0
  %6223 = vmatprep.subr.mxu0 0.0
  %6224 = vmatpush1.msra.mxu0 0.0
  %6225 = vmatprep.subr.mxu0 0.0
  %6226 = vmatpush1.msra.mxu0 0.0
  %6227 = vmatprep.subr.mxu0 0.0
  %6228 = vmatpush1.msra.mxu0 0.0
  %6229 = vmatprep.subr.mxu0 0.0
  %6230 = vmatpush1.msra.mxu0 0.0
  %6231 = vmatprep.subr.mxu0 0.0
  %6232 = vmatpush1.msra.mxu0 0.0
  %6233 = vmatprep.subr.mxu0 0.0
  %6234 = vmatpush1.msra.mxu0 0.0
  %6235 = vmatprep.subr.mxu0 0.0
  %6236 = vmatpush1.msra.mxu0 0.0
  %6237 = vmatprep.subr.mxu0 0.0
  %6238 = vmatpush1.msra.mxu0 0.0
  %6239 = vmatprep.subr.mxu0 0.0
  %6240 = vmatpush1.msra.mxu0 0.0
  %6241 = vmatprep.subr.mxu0 0.0
  %6242 = vmatpush1.msra.mxu0 0.0
  %6243 = vmatprep.subr.mxu0 0.0
  %6244 = vmatpush1.msra.mxu0 0.0
  %6245 = vmatprep.subr.mxu0 0.0
  %6246 = vmatpush1.msra.mxu0 0.0
  %6247 = vmatprep.subr.mxu0 0.0
  %6248 = vmatpush1.msra.mxu0 0.0
  %6249 = vmatprep.subr.mxu0 0.0
  %6250 = vmatpush1.msra.mxu0 0.0
  %6251 = vmatprep.subr.mxu0 0.0
  %6252 = vmatpush1.msra.mxu0 0.0
  %6253 = vmatprep.subr.mxu0 0.0
  %6254 = vmatpush1.msra.mxu0 0.0
  %6255 = vmatprep.subr.mxu0 0.0
  %6256 = vmatpush1.msra.mxu0 0.0
  %6257 = vmatprep.subr.mxu0 0.0
  %6258 = vmatpush1.msra.mxu0 0.0
  %6259 = vmatprep.subr.mxu0 0.0
  %6260 = vmatpush1.msra.mxu0 0.0
  %6261 = vmatprep.subr.mxu0 0.0
  %6262 = vmatpush1.msra.mxu0 0.0
  %6263 = vmatprep.mubr.f32.mxu0 0.0
  %6264 = vmatmul.mubr.f32.gmra.mrb[0].mxu0 %v5608
  %v6265 = vpop.f32.mrb[0].mxu0
  %v6266 = vadd.f32 0.0, %v6265
  %v6267 = vpop.f32.mrb[0].mxu0
  %6268 = vmatprep.mubr.f32.mxu0 0.0
  %6269 = vmatmul.mubr.f32.gmra.mrb[0].mxu0 %v5611
  %v6270 = vpop.f32.mrb[0].mxu0
  %v6271 = vadd.f32 0.0, %v6270
  %v6272 = vpop.f32.mrb[0].mxu0
  %6273 = vmatprep.mubr.f32.mxu0 0.0
  %6274 = vmatmul.mubr.f32.gmra.mrb[0].mxu0 %v5614
  %v6275 = vpop.f32.mrb[0].mxu0
  %v6276 = vadd.f32 0.0, %v6275
  %v6277 = vpop.f32.mrb[0].mxu0
  %6278 = vmatprep.mubr.f32.mxu0 0.0
  %6279 = vmatmul.mubr.f32.gmra.mrb[0].mxu0 %v5617
  %v6280 = vpop.f32.mrb[0].mxu0
  %v6281 = vadd.f32 0.0, %v6280
  %v6282 = vpop.f32.mrb[0].mxu0
  %6283 = vdwg.mxu0
  %6284 = vset.pattern.permute.xlu0 6
  %6285 = vperm.xlu0 %6284, %v5599
  %v6286 = vpop.permute.xlu0 %6285
  %6287 = vset.pattern.permute.xlu0 6
  %6288 = vperm.xlu0 %6287, %v5600
  %v6289 = vpop.permute.xlu0 %6288
  %6290 = vset.pattern.permute.xlu0 6
  %6291 = vperm.xlu0 %6290, %v5601
  %v6292 = vpop.permute.xlu0 %6291
  %6293 = vset.pattern.permute.xlu0 6
  %6294 = vperm.xlu0 %6293, %v5602
  %v6295 = vpop.permute.xlu0 %6294
  %v6296 = vrot.slane %v6286, 5
  %v6297 = vrot.slane %v6289, 5
  %v6298 = vsel %vm5720, %v6296, %v6297
  %v6299 = vrot.slane %v6292, 5
  %v6300 = vsel %vm5720, %v6297, %v6299
  %v6301 = vrot.slane %v6295, 5
  %v6302 = vsel %vm5720, %v6299, %v6301
  %v6308 = vmul.f32 %v6266, %v6296
  %v6309 = vmul.f32 %v6271, %v6298
  %v6310 = vmul.f32 %v6276, %v6300
  %v6311 = vmul.f32 %v6281, %v6302
  %v6312 = vmul.f32 %v6266, %v6301
  %v6313 = vadd.f32 %v6154, %v6308
  %v6314 = vadd.f32 %v6155, %v6309
  %v6315 = vadd.f32 %v6156, %v6310
  %v6316 = vadd.f32 %v6157, %v6311
  %v6317 = vadd.f32 %v6158, %v6312
  %6318 = vset.pattern.permute.xlu0 7
  %6319 = vperm.xlu0 %6318, %v5599
  %v6320 = vpop.permute.xlu0 %6319
  %6321 = vset.pattern.permute.xlu0 7
  %6322 = vperm.xlu0 %6321, %v5600
  %v6323 = vpop.permute.xlu0 %6322
  %6324 = vset.pattern.permute.xlu0 7
  %6325 = vperm.xlu0 %6324, %v5601
  %v6326 = vpop.permute.xlu0 %6325
  %6327 = vset.pattern.permute.xlu0 7
  %6328 = vperm.xlu0 %6327, %v5602
  %v6329 = vpop.permute.xlu0 %6328
  %v6330 = vrot.slane %v6320, 4
  %v6331 = vrot.slane %v6323, 4
  %v6332 = vsel %vm5750, %v6330, %v6331
  %v6333 = vrot.slane %v6326, 4
  %v6334 = vsel %vm5750, %v6331, %v6333
  %v6335 = vrot.slane %v6329, 4
  %v6336 = vsel %vm5750, %v6333, %v6335
  %v6342 = vmul.f32 %v6266, %v6330
  %v6343 = vmul.f32 %v6271, %v6332
  %v6344 = vmul.f32 %v6276, %v6334
  %v6345 = vmul.f32 %v6281, %v6336
  %v6346 = vmul.f32 %v6266, %v6335
  %v6352 = vrot.slane %v6342, 1
  %v6353 = vrot.slane %v6343, 1
  %v6354 = vsel %vm311, %v6352, %v6353
  %v6355 = vrot.slane %v6344, 1
  %v6356 = vsel %vm311, %v6353, %v6355
  %v6357 = vrot.slane %v6345, 1
  %v6358 = vsel %vm311, %v6355, %v6357
  %v6359 = vrot.slane %v6346, 1
  %v6360 = vsel %vm311, %v6357, %v6359
  %6361 = vrot.lane.b32.xlu0 %v6354, 96
  %v6362 = vpop.permute.xlu0 %6361
  %6363 = vrot.lane.b32.xlu0 %v6356, 96
  %v6364 = vpop.permute.xlu0 %6363
  %6365 = vrot.lane.b32.xlu0 %v6358, 96
  %v6366 = vpop.permute.xlu0 %6365
  %6367 = vrot.lane.b32.xlu0 %v6360, 96
  %v6368 = vpop.permute.xlu0 %6367
  %6369 = vrot.lane.b32.xlu0 %v6359, 96
  %v6370 = vpop.permute.xlu0 %6369
  %v6376 = vadd.f32 %v6313, %v6362
  %v6377 = vadd.f32 %v6314, %v6364
  %v6378 = vadd.f32 %v6315, %v6366
  %v6379 = vadd.f32 %v6316, %v6368
  %v6380 = vadd.f32 %v6317, %v6370
  %6381 = vset.pattern.permute.xlu0 8
  %6382 = vperm.xlu0 %6381, %v5599
  %v6383 = vpop.permute.xlu0 %6382
  %6384 = vset.pattern.permute.xlu0 8
  %6385 = vperm.xlu0 %6384, %v5600
  %v6386 = vpop.permute.xlu0 %6385
  %6387 = vset.pattern.permute.xlu0 8
  %6388 = vperm.xlu0 %6387, %v5601
  %v6389 = vpop.permute.xlu0 %6388
  %6390 = vset.pattern.permute.xlu0 8
  %6391 = vperm.xlu0 %6390, %v5602
  %v6392 = vpop.permute.xlu0 %6391
  %v6393 = vrot.slane %v6383, 3
  %v6394 = vrot.slane %v6386, 3
  %v6395 = vsel %vm5814, %v6393, %v6394
  %v6396 = vrot.slane %v6389, 3
  %v6397 = vsel %vm5814, %v6394, %v6396
  %v6398 = vrot.slane %v6392, 3
  %v6399 = vsel %vm5814, %v6396, %v6398
  %v6405 = vmul.f32 %v6266, %v6393
  %v6406 = vmul.f32 %v6271, %v6395
  %v6407 = vmul.f32 %v6276, %v6397
  %v6408 = vmul.f32 %v6281, %v6399
  %v6409 = vmul.f32 %v6266, %v6398
  %v6415 = vrot.slane %v6405, 2
  %v6416 = vrot.slane %v6406, 2
  %v6417 = vsel %vm703, %v6415, %v6416
  %v6418 = vrot.slane %v6407, 2
  %v6419 = vsel %vm703, %v6416, %v6418
  %v6420 = vrot.slane %v6408, 2
  %v6421 = vsel %vm703, %v6418, %v6420
  %v6422 = vrot.slane %v6409, 2
  %v6423 = vsel %vm703, %v6420, %v6422
  %6424 = vrot.lane.b32.xlu0 %v6417, 64
  %v6425 = vpop.permute.xlu0 %6424
  %6426 = vrot.lane.b32.xlu0 %v6419, 64
  %v6427 = vpop.permute.xlu0 %6426
  %6428 = vrot.lane.b32.xlu0 %v6421, 64
  %v6429 = vpop.permute.xlu0 %6428
  %6430 = vrot.lane.b32.xlu0 %v6423, 64
  %v6431 = vpop.permute.xlu0 %6430
  %6432 = vrot.lane.b32.xlu0 %v6422, 64
  %v6433 = vpop.permute.xlu0 %6432
  %v6439 = vadd.f32 %v6376, %v6425
  %v6440 = vadd.f32 %v6377, %v6427
  %v6441 = vadd.f32 %v6378, %v6429
  %v6442 = vadd.f32 %v6379, %v6431
  %v6443 = vadd.f32 %v6380, %v6433
  %v6444 = vld [vmem:[%s2 + $0x3] sm:$0x1]
  %v6445 = vlaneseq
  %v6446 = vshrl.u32 %v6445, 7
  %v6447 = vsub.s32 0, %v6446
  %v6448 = vrot.slane %v6444, %v6447
  %v6449 = vadd.f32 %v6439, %v6448
  %v6450 = vadd.f32 %v6440, %v6448
  %v6451 = vadd.f32 %v6441, %v6448
  %v6452 = vadd.f32 %v6442, %v6448
  %v6453 = vadd.f32 %v6443, %v6448
  %v6454 = vmax.f32 %v6449, 0.0
  %v6455 = vmax.f32 %v6450, 0.0
  %v6456 = vmax.f32 %v6451, 0.0
  %v6457 = vmax.f32 %v6452, 0.0
  %v6458 = vmax.f32 %v6453, 0.0
  %v6459 = vld [vmem:[%s1 + $0x168] sm:$0xff]
  %v6460 = vld [vmem:[%s1 + $0x190] sm:$0xff]
  %v6461 = vld [vmem:[%s1 + $0x1b8] sm:$0xff]
  %v6462 = vld [vmem:[%s1 + $0x1e0] sm:$0xff]
  %v6468 = vrot.slane %v6454, 3
  %v6469 = vrot.slane %v6455, 3
  %v6470 = vsel %vm5814, %v6468, %v6469
  %v6471 = vrot.slane %v6456, 3
  %v6472 = vsel %vm5814, %v6469, %v6471
  %v6473 = vrot.slane %v6457, 3
  %v6474 = vsel %vm5814, %v6471, %v6473
  %v6475 = vrot.slane %v6458, 3
  %v6476 = vsel %vm5814, %v6473, %v6475
  %v6477 = vsel %vm1518, %v6470, 0
  %v6479 = vsel %vm1518, %v6472, 0
  %v6481 = vsel %vm1518, %v6474, 0
  %v6483 = vsel %vm1518, %v6476, 0
  %6485 = vmatprep.subr.mxu0 0.0
  %6486 = vmatpush1.msra.mxu0 %v6459
  %6487 = vmatprep.subr.mxu0 0.0
  %6488 = vmatpush1.msra.mxu0 %v6460
  %6489 = vmatprep.subr.mxu0 0.0
  %6490 = vmatpush1.msra.mxu0 %v6461
  %6491 = vmatprep.subr.mxu0 0.0
  %6492 = vmatpush1.msra.mxu0 %v6462
  %6493 = vmatprep.subr.mxu0 0.0
  %6494 = vmatpush1.msra.mxu0 0.0
  %6495 = vmatprep.subr.mxu0 0.0
  %6496 = vmatpush1.msra.mxu0 0.0
  %6497 = vmatprep.subr.mxu0 0.0
  %6498 = vmatpush1.msra.mxu0 0.0
  %6499 = vmatprep.subr.mxu0 0.0
  %6500 = vmatpush1.msra.mxu0 0.0
  %6501 = vmatprep.subr.mxu0 0.0
  %6502 = vmatpush1.msra.mxu0 0.0
  %6503 = vmatprep.subr.mxu0 0.0
  %6504 = vmatpush1.msra.mxu0 0.0
  %6505 = vmatprep.subr.mxu0 0.0
  %6506 = vmatpush1.msra.mxu0 0.0
  %6507 = vmatprep.subr.mxu0 0.0
  %6508 = vmatpush1.msra.mxu0 0.0
  %6509 = vmatprep.subr.mxu0 0.0
  %6510 = vmatpush1.msra.mxu0 0.0
  %6511 = vmatprep.subr.mxu0 0.0
  %6512 = vmatpush1.msra.mxu0 0.0
  %6513 = vmatprep.subr.mxu0 0.0
  %6514 = vmatpush1.msra.mxu0 0.0
  %6515 = vmatprep.subr.mxu0 0.0
  %6516 = vmatpush1.msra.mxu0 0.0
  %6517 = vmatprep.subr.mxu0 0.0
  %6518 = vmatpush1.msra.mxu0 0.0
  %6519 = vmatprep.subr.mxu0 0.0
  %6520 = vmatpush1.msra.mxu0 0.0
  %6521 = vmatprep.subr.mxu0 0.0
  %6522 = vmatpush1.msra.mxu0 0.0
  %6523 = vmatprep.subr.mxu0 0.0
  %6524 = vmatpush1.msra.mxu0 0.0
  %6525 = vmatprep.subr.mxu0 0.0
  %6526 = vmatpush1.msra.mxu0 0.0
  %6527 = vmatprep.subr.mxu0 0.0
  %6528 = vmatpush1.msra.mxu0 0.0
  %6529 = vmatprep.subr.mxu0 0.0
  %6530 = vmatpush1.msra.mxu0 0.0
  %6531 = vmatprep.subr.mxu0 0.0
  %6532 = vmatpush1.msra.mxu0 0.0
  %6533 = vmatprep.subr.mxu0 0.0
  %6534 = vmatpush1.msra.mxu0 0.0
  %6535 = vmatprep.subr.mxu0 0.0
  %6536 = vmatpush1.msra.mxu0 0.0
  %6537 = vmatprep.subr.mxu0 0.0
  %6538 = vmatpush1.msra.mxu0 0.0
  %6539 = vmatprep.subr.mxu0 0.0
  %6540 = vmatpush1.msra.mxu0 0.0
  %6541 = vmatprep.subr.mxu0 0.0
  %6542 = vmatpush1.msra.mxu0 0.0
  %6543 = vmatprep.subr.mxu0 0.0
  %6544 = vmatpush1.msra.mxu0 0.0
  %6545 = vmatprep.subr.mxu0 0.0
  %6546 = vmatpush1.msra.mxu0 0.0
  %6547 = vmatprep.subr.mxu0 0.0
  %6548 = vmatpush1.msra.mxu0 0.0
  %6549 = vmatprep.mubr.f32.mxu0 0.0
  %6550 = vmatmul.mubr.f32.gmra.mrb[0].mxu0 %v6477
  %v6551 = vpop.f32.mrb[0].mxu0
  %v6552 = vadd.f32 0.0, %v6551
  %v6553 = vpop.f32.mrb[0].mxu0
  %6554 = vmatprep.mubr.f32.mxu0 0.0
  %6555 = vmatmul.mubr.f32.gmra.mrb[0].mxu0 %v6479
  %v6556 = vpop.f32.mrb[0].mxu0
  %v6557 = vadd.f32 0.0, %v6556
  %v6558 = vpop.f32.mrb[0].mxu0
  %6559 = vmatprep.mubr.f32.mxu0 0.0
  %6560 = vmatmul.mubr.f32.gmra.mrb[0].mxu0 %v6481
  %v6561 = vpop.f32.mrb[0].mxu0
  %v6562 = vadd.f32 0.0, %v6561
  %v6563 = vpop.f32.mrb[0].mxu0
  %6564 = vmatprep.mubr.f32.mxu0 0.0
  %6565 = vmatmul.mubr.f32.gmra.mrb[0].mxu0 %v6483
  %v6566 = vpop.f32.mrb[0].mxu0
  %v6567 = vadd.f32 0.0, %v6566
  %v6568 = vpop.f32.mrb[0].mxu0
  %6569 = vdwg.mxu0
  %v6570 = vmul.f32 %v6567, %v5721
  %v6571 = vmul.f32 %v6552, %v5723
  %v6572 = vmul.f32 %v6557, %v5725
  %v6573 = vmul.f32 %v6562, %v5727
  %v6574 = vmul.f32 %v6567, %v5726
  %v6575 = vmul.f32 %v6567, %v5751
  %v6576 = vmul.f32 %v6552, %v5753
  %v6577 = vmul.f32 %v6557, %v5755
  %v6578 = vmul.f32 %v6562, %v5757
  %v6579 = vmul.f32 %v6567, %v5756
  %v6585 = vrot.slane %v6575, 1
  %v6586 = vrot.slane %v6576, 1
  %v6587 = vsel %vm311, %v6585, %v6586
  %v6588 = vrot.slane %v6577, 1
  %v6589 = vsel %vm311, %v6586, %v6588
  %v6590 = vrot.slane %v6578, 1
  %v6591 = vsel %vm311, %v6588, %v6590
  %v6592 = vrot.slane %v6579, 1
  %v6593 = vsel %vm311, %v6590, %v6592
  %6594 = vrot.lane.b32.xlu0 %v6587, 96
  %v6595 = vpop.permute.xlu0 %6594
  %6596 = vrot.lane.b32.xlu0 %v6589, 96
  %v6597 = vpop.permute.xlu0 %6596
  %6598 = vrot.lane.b32.xlu0 %v6591, 96
  %v6599 = vpop.permute.xlu0 %6598
  %6600 = vrot.lane.b32.xlu0 %v6593, 96
  %v6601 = vpop.permute.xlu0 %6600
  %6602 = vrot.lane.b32.xlu0 %v6592, 96
  %v6603 = vpop.permute.xlu0 %6602
  %v6609 = vadd.f32 %v6570, %v6595
  %v6610 = vadd.f32 %v6571, %v6597
  %v6611 = vadd.f32 %v6572, %v6599
  %v6612 = vadd.f32 %v6573, %v6601
  %v6613 = vadd.f32 %v6574, %v6603
  %v6614 = vmul.f32 %v6567, %v5815
  %v6615 = vmul.f32 %v6552, %v5817
  %v6616 = vmul.f32 %v6557, %v5819
  %v6617 = vmul.f32 %v6562, %v5821
  %v6618 = vmul.f32 %v6567, %v5820
  %v6624 = vrot.slane %v6614, 2
  %v6625 = vrot.slane %v6615, 2
  %v6626 = vsel %vm703, %v6624, %v6625
  %v6627 = vrot.slane %v6616, 2
  %v6628 = vsel %vm703, %v6625, %v6627
  %v6629 = vrot.slane %v6617, 2
  %v6630 = vsel %vm703, %v6627, %v6629
  %v6631 = vrot.slane %v6618, 2
  %v6632 = vsel %vm703, %v6629, %v6631
  %6633 = vrot.lane.b32.xlu0 %v6626, 64
  %v6634 = vpop.permute.xlu0 %6633
  %6635 = vrot.lane.b32.xlu0 %v6628, 64
  %v6636 = vpop.permute.xlu0 %6635
  %6637 = vrot.lane.b32.xlu0 %v6630, 64
  %v6638 = vpop.permute.xlu0 %6637
  %6639 = vrot.lane.b32.xlu0 %v6632, 64
  %v6640 = vpop.permute.xlu0 %6639
  %6641 = vrot.lane.b32.xlu0 %v6631, 64
  %v6642 = vpop.permute.xlu0 %6641
  %v6648 = vadd.f32 %v6609, %v6634
  %v6649 = vadd.f32 %v6610, %v6636
  %v6650 = vadd.f32 %v6611, %v6638
  %v6651 = vadd.f32 %v6612, %v6640
  %v6652 = vadd.f32 %v6613, %v6642
  %v6653 = vld [vmem:[%s1 + $0x168] sm:$0xff]
  %v6654 = vld [vmem:[%s1 + $0x170] sm:$0xff]
  %v6655 = vld [vmem:[%s1 + $0x190] sm:$0xff]
  %v6656 = vld [vmem:[%s1 + $0x198] sm:$0xff]
  %v6657 = vld [vmem:[%s1 + $0x1b8] sm:$0xff]
  %v6658 = vld [vmem:[%s1 + $0x1c0] sm:$0xff]
  %v6659 = vld [vmem:[%s1 + $0x1e0] sm:$0xff]
  %v6660 = vld [vmem:[%s1 + $0x1e8] sm:$0xff]
  %6669 = vrot.lane.b32.xlu0 %v6653, 32
  %v6670 = vpop.permute.xlu0 %6669
  %6671 = vrot.lane.b32.xlu0 %v6654, 32
  %v6672 = vpop.permute.xlu0 %6671
  %6673 = vrot.lane.b32.xlu0 %v6655, 32
  %v6674 = vpop.permute.xlu0 %6673
  %6675 = vrot.lane.b32.xlu0 %v6656, 32
  %v6676 = vpop.permute.xlu0 %6675
  %6677 = vrot.lane.b32.xlu0 %v6657, 32
  %v6678 = vpop.permute.xlu0 %6677
  %6679 = vrot.lane.b32.xlu0 %v6658, 32
  %v6680 = vpop.permute.xlu0 %6679
  %6681 = vrot.lane.b32.xlu0 %v6659, 32
  %v6682 = vpop.permute.xlu0 %6681
  %6683 = vrot.lane.b32.xlu0 %v6660, 32
  %v6684 = vpop.permute.xlu0 %6683
  %v6685 = vsel %vm1518, %v6670, %v6672
  %v6686 = vsel %vm1518, %v6674, %v6676
  %v6687 = vsel %vm1518, %v6678, %v6680
  %v6688 = vsel %vm1518, %v6682, %v6684
  %6693 = vmatprep.subr.mxu0 0.0
  %6694 = vmatpush1.msra.mxu0 %v6685
  %6695 = vmatprep.subr.mxu0 0.0
  %6696 = vmatpush1.msra.mxu0 %v6686
  %6697 = vmatprep.subr.mxu0 0.0
  %6698 = vmatpush1.msra.mxu0 %v6687
  %6699 = vmatprep.subr.mxu0 0.0
  %6700 = vmatpush1.msra.mxu0 %v6688
  %6701 = vmatprep.subr.mxu0 0.0
  %6702 = vmatpush1.msra.mxu0 0.0
  %6703 = vmatprep.subr.mxu0 0.0
  %6704 = vmatpush1.msra.mxu0 0.0
  %6705 = vmatprep.subr.mxu0 0.0
  %6706 = vmatpush1.msra.mxu0 0.0
  %6707 = vmatprep.subr.mxu0 0.0
  %6708 = vmatpush1.msra.mxu0 0.0
  %6709 = vmatprep.subr.mxu0 0.0
  %6710 = vmatpush1.msra.mxu0 0.0
  %6711 = vmatprep.subr.mxu0 0.0
  %6712 = vmatpush1.msra.mxu0 0.0
  %6713 = vmatprep.subr.mxu0 0.0
  %6714 = vmatpush1.msra.mxu0 0.0
  %6715 = vmatprep.subr.mxu0 0.0
  %6716 = vmatpush1.msra.mxu0 0.0
  %6717 = vmatprep.subr.mxu0 0.0
  %6718 = vmatpush1.msra.mxu0 0.0
  %6719 = vmatprep.subr.mxu0 0.0
  %6720 = vmatpush1.msra.mxu0 0.0
  %6721 = vmatprep.subr.mxu0 0.0
  %6722 = vmatpush1.msra.mxu0 0.0
  %6723 = vmatprep.subr.mxu0 0.0
  %6724 = vmatpush1.msra.mxu0 0.0
  %6725 = vmatprep.subr.mxu0 0.0
  %6726 = vmatpush1.msra.mxu0 0.0
  %6727 = vmatprep.subr.mxu0 0.0
  %6728 = vmatpush1.msra.mxu0 0.0
  %6729 = vmatprep.subr.mxu0 0.0
  %6730 = vmatpush1.msra.mxu0 0.0
  %6731 = vmatprep.subr.mxu0 0.0
  %6732 = vmatpush1.msra.mxu0 0.0
  %6733 = vmatprep.subr.mxu0 0.0
  %6734 = vmatpush1.msra.mxu0 0.0
  %6735 = vmatprep.subr.mxu0 0.0
  %6736 = vmatpush1.msra.mxu0 0.0
  %6737 = vmatprep.subr.mxu0 0.0
  %6738 = vmatpush1.msra.mxu0 0.0
  %6739 = vmatprep.subr.mxu0 0.0
  %6740 = vmatpush1.msra.mxu0 0.0
  %6741 = vmatprep.subr.mxu0 0.0
  %6742 = vmatpush1.msra.mxu0 0.0
  %6743 = vmatprep.subr.mxu0 0.0
  %6744 = vmatpush1.msra.mxu0 0.0
  %6745 = vmatprep.subr.mxu0 0.0
  %6746 = vmatpush1.msra.mxu0 0.0
  %6747 = vmatprep.subr.mxu0 0.0
  %6748 = vmatpush1.msra.mxu0 0.0
  %6749 = vmatprep.subr.mxu0 0.0
  %6750 = vmatpush1.msra.mxu0 0.0
  %6751 = vmatprep.subr.mxu0 0.0
  %6752 = vmatpush1.msra.mxu0 0.0
  %6753 = vmatprep.subr.mxu0 0.0
  %6754 = vmatpush1.msra.mxu0 0.0
  %6755 = vmatprep.subr.mxu0 0.0
  %6756 = vmatpush1.msra.mxu0 0.0
  %6757 = vmatprep.mubr.f32.mxu0 0.0
  %6758 = vmatmul.mubr.f32.gmra.mrb[0].mxu0 %v6477
  %v6759 = vpop.f32.mrb[0].mxu0
  %v6760 = vadd.f32 0.0, %v6759
  %v6761 = vpop.f32.mrb[0].mxu0
  %6762 = vmatprep.mubr.f32.mxu0 0.0
  %6763 = vmatmul.mubr.f32.gmra.mrb[0].mxu0 %v6479
  %v6764 = vpop.f32.mrb[0].mxu0
  %v6765 = vadd.f32 0.0, %v6764
  %v6766 = vpop.f32.mrb[0].mxu0
  %6767 = vmatprep.mubr.f32.mxu0 0.0
  %6768 = vmatmul.mubr.f32.gmra.mrb[0].mxu0 %v6481
  %v6769 = vpop.f32.mrb[0].mxu0
  %v6770 = vadd.f32 0.0, %v6769
  %v6771 = vpop.f32.mrb[0].mxu0
  %6772 = vmatprep.mubr.f32.mxu0 0.0
  %6773 = vmatmul.mubr.f32.gmra.mrb[0].mxu0 %v6483
  %v6774 = vpop.f32.mrb[0].mxu0
  %v6775 = vadd.f32 0.0, %v6774
  %v6776 = vpop.f32.mrb[0].mxu0
  %6777 = vdwg.mxu0
  %v6778 = vmul.f32 %v6775, %v6003
  %v6779 = vmul.f32 %v6760, %v6005
  %v6780 = vmul.f32 %v6765, %v6007
  %v6781 = vmul.f32 %v6770, %v6009
  %v6782 = vmul.f32 %v6775, %v6008
  %v6788 = vrot.slane %v6778, 4
  %v6789 = vrot.slane %v6779, 4
  %v6790 = vsel %vm5750, %v6788, %v6789
  %v6791 = vrot.slane %v6780, 4
  %v6792 = vsel %vm5750, %v6789, %v6791
  %v6793 = vrot.slane %v6781, 4
  %v6794 = vsel %vm5750, %v6791, %v6793
  %v6795 = vrot.slane %v6782, 4
  %v6796 = vsel %vm5750, %v6793, %v6795
  %v6802 = vadd.f32 %v6648, %v6790
  %v6803 = vadd.f32 %v6649, %v6792
  %v6804 = vadd.f32 %v6650, %v6794
  %v6805 = vadd.f32 %v6651, %v6796
  %v6806 = vadd.f32 %v6652, %v6795
  %v6807 = vmul.f32 %v6760, %v6046
  %v6808 = vmul.f32 %v6765, %v6050
  %v6809 = vmul.f32 %v6770, %v6054
  %v6810 = vmul.f32 %v6775, %v6058
  %v6815 = vrot.slane %v6807, 5
  %v6816 = vrot.slane %v6808, 5
  %v6817 = vsel %vm5720, %v6815, %v6816
  %v6818 = vrot.slane %v6809, 5
  %v6819 = vsel %vm5720, %v6816, %v6818
  %v6820 = vrot.slane %v6810, 5
  %v6821 = vsel %vm5720, %v6818, %v6820
  %6822 = vrot.lane.b32.xlu0 %v6815, 96
  %v6823 = vpop.permute.xlu0 %6822
  %6824 = vrot.lane.b32.xlu0 %v6817, 96
  %v6825 = vpop.permute.xlu0 %6824
  %6826 = vrot.lane.b32.xlu0 %v6819, 96
  %v6827 = vpop.permute.xlu0 %6826
  %6828 = vrot.lane.b32.xlu0 %v6821, 96
  %v6829 = vpop.permute.xlu0 %6828
  %6830 = vrot.lane.b32.xlu0 %v6820, 96
  %v6831 = vpop.permute.xlu0 %6830
  %v6837 = vadd.f32 %v6802, %v6823
  %v6838 = vadd.f32 %v6803, %v6825
  %v6839 = vadd.f32 %v6804, %v6827
  %v6840 = vadd.f32 %v6805, %v6829
  %v6841 = vadd.f32 %v6806, %v6831
  %v6842 = vmul.f32 %v6760, %v6107
  %v6843 = vmul.f32 %v6765, %v6109
  %v6844 = vmul.f32 %v6770, %v6111
  %v6845 = vmul.f32 %v6775, %v6113
  %v6846 = vmul.f32 %v6760, %v6112
  %v6852 = vrot.slane %v6842, 6
  %v6853 = vrot.slane %v6843, 6
  %v6854 = vsel %vm6129, %v6852, %v6853
  %v6855 = vrot.slane %v6844, 6
  %v6856 = vsel %vm6129, %v6853, %v6855
  %v6857 = vrot.slane %v6845, 6
  %v6858 = vsel %vm6129, %v6855, %v6857
  %v6859 = vrot.slane %v6846, 6
  %v6860 = vsel %vm6129, %v6857, %v6859
  %6861 = vrot.lane.b32.xlu0 %v6852, 64
  %v6862 = vpop.permute.xlu0 %6861
  %6863 = vrot.lane.b32.xlu0 %v6854, 64
  %v6864 = vpop.permute.xlu0 %6863
  %6865 = vrot.lane.b32.xlu0 %v6856, 64
  %v6866 = vpop.permute.xlu0 %6865
  %6867 = vrot.lane.b32.xlu0 %v6858, 64
  %v6868 = vpop.permute.xlu0 %6867
  %6869 = vrot.lane.b32.xlu0 %v6860, 64
  %v6870 = vpop.permute.xlu0 %6869
  %v6876 = vadd.f32 %v6837, %v6862
  %v6877 = vadd.f32 %v6838, %v6864
  %v6878 = vadd.f32 %v6839, %v6866
  %v6879 = vadd.f32 %v6840, %v6868
  %v6880 = vadd.f32 %v6841, %v6870
  %v6881 = vld [vmem:[%s1 + $0x170] sm:$0xff]
  %v6882 = vld [vmem:[%s1 + $0x178] sm:$0xff]
  %v6883 = vld [vmem:[%s1 + $0x198] sm:$0xff]
  %v6884 = vld [vmem:[%s1 + $0x1a0] sm:$0xff]
  %v6885 = vld [vmem:[%s1 + $0x1c0] sm:$0xff]
  %v6886 = vld [vmem:[%s1 + $0x1c8] sm:$0xff]
  %v6887 = vld [vmem:[%s1 + $0x1e8] sm:$0xff]
  %v6888 = vld [vmem:[%s1 + $0x1f0] sm:$0xff]
  %6897 = vrot.lane.b32.xlu0 %v6881, 64
  %v6898 = vpop.permute.xlu0 %6897
  %6899 = vrot.lane.b32.xlu0 %v6882, 64
  %v6900 = vpop.permute.xlu0 %6899
  %6901 = vrot.lane.b32.xlu0 %v6883, 64
  %v6902 = vpop.permute.xlu0 %6901
  %6903 = vrot.lane.b32.xlu0 %v6884, 64
  %v6904 = vpop.permute.xlu0 %6903
  %6905 = vrot.lane.b32.xlu0 %v6885, 64
  %v6906 = vpop.permute.xlu0 %6905
  %6907 = vrot.lane.b32.xlu0 %v6886, 64
  %v6908 = vpop.permute.xlu0 %6907
  %6909 = vrot.lane.b32.xlu0 %v6887, 64
  %v6910 = vpop.permute.xlu0 %6909
  %6911 = vrot.lane.b32.xlu0 %v6888, 64
  %v6912 = vpop.permute.xlu0 %6911
  %v6913 = vsel %vm4724, %v6898, %v6900
  %v6914 = vsel %vm4724, %v6902, %v6904
  %v6915 = vsel %vm4724, %v6906, %v6908
  %v6916 = vsel %vm4724, %v6910, %v6912
  %6921 = vmatprep.subr.mxu0 0.0
  %6922 = vmatpush1.msra.mxu0 %v6913
  %6923 = vmatprep.subr.mxu0 0.0
  %6924 = vmatpush1.msra.mxu0 %v6914
  %6925 = vmatprep.subr.mxu0 0.0
  %6926 = vmatpush1.msra.mxu0 %v6915
  %6927 = vmatprep.subr.mxu0 0.0
  %6928 = vmatpush1.msra.mxu0 %v6916
  %6929 = vmatprep.subr.mxu0 0.0
  %6930 = vmatpush1.msra.mxu0 0.0
  %6931 = vmatprep.subr.mxu0 0.0
  %6932 = vmatpush1.msra.mxu0 0.0
  %6933 = vmatprep.subr.mxu0 0.0
  %6934 = vmatpush1.msra.mxu0 0.0
  %6935 = vmatprep.subr.mxu0 0.0
  %6936 = vmatpush1.msra.mxu0 0.0
  %6937 = vmatprep.subr.mxu0 0.0
  %6938 = vmatpush1.msra.mxu0 0.0
  %6939 = vmatprep.subr.mxu0 0.0
  %6940 = vmatpush1.msra.mxu0 0.0
  %6941 = vmatprep.subr.mxu0 0.0
  %6942 = vmatpush1.msra.mxu0 0.0
  %6943 = vmatprep.subr.mxu0 0.0
  %6944 = vmatpush1.msra.mxu0 0.0
  %6945 = vmatprep.subr.mxu0 0.0
  %6946 = vmatpush1.msra.mxu0 0.0
  %6947 = vmatprep.subr.mxu0 0.0
  %6948 = vmatpush1.msra.mxu0 0.0
  %6949 = vmatprep.subr.mxu0 0.0
  %6950 = vmatpush1.msra.mxu0 0.0
  %6951 = vmatprep.subr.mxu0 0.0
  %6952 = vmatpush1.msra.mxu0 0.0
  %6953 = vmatprep.subr.mxu0 0.0
  %6954 = vmatpush1.msra.mxu0 0.0
  %6955 = vmatprep.subr.mxu0 0.0
  %6956 = vmatpush1.msra.mxu0 0.0
  %6957 = vmatprep.subr.mxu0 0.0
  %6958 = vmatpush1.msra.mxu0 0.0
  %6959 = vmatprep.subr.mxu0 0.0
  %6960 = vmatpush1.msra.mxu0 0.0
  %6961 = vmatprep.subr.mxu0 0.0
  %6962 = vmatpush1.msra.mxu0 0.0
  %6963 = vmatprep.subr.mxu0 0.0
  %6964 = vmatpush1.msra.mxu0 0.0
  %6965 = vmatprep.subr.mxu0 0.0
  %6966 = vmatpush1.msra.mxu0 0.0
  %6967 = vmatprep.subr.mxu0 0.0
  %6968 = vmatpush1.msra.mxu0 0.0
  %6969 = vmatprep.subr.mxu0 0.0
  %6970 = vmatpush1.msra.mxu0 0.0
  %6971 = vmatprep.subr.mxu0 0.0
  %6972 = vmatpush1.msra.mxu0 0.0
  %6973 = vmatprep.subr.mxu0 0.0
  %6974 = vmatpush1.msra.mxu0 0.0
  %6975 = vmatprep.subr.mxu0 0.0
  %6976 = vmatpush1.msra.mxu0 0.0
  %6977 = vmatprep.subr.mxu0 0.0
  %6978 = vmatpush1.msra.mxu0 0.0
  %6979 = vmatprep.subr.mxu0 0.0
  %6980 = vmatpush1.msra.mxu0 0.0
  %6981 = vmatprep.subr.mxu0 0.0
  %6982 = vmatpush1.msra.mxu0 0.0
  %6983 = vmatprep.subr.mxu0 0.0
  %6984 = vmatpush1.msra.mxu0 0.0
  %6985 = vmatprep.mubr.f32.mxu0 0.0
  %6986 = vmatmul.mubr.f32.gmra.mrb[0].mxu0 %v6477
  %v6987 = vpop.f32.mrb[0].mxu0
  %v6988 = vadd.f32 0.0, %v6987
  %v6989 = vpop.f32.mrb[0].mxu0
  %6990 = vmatprep.mubr.f32.mxu0 0.0
  %6991 = vmatmul.mubr.f32.gmra.mrb[0].mxu0 %v6479
  %v6992 = vpop.f32.mrb[0].mxu0
  %v6993 = vadd.f32 0.0, %v6992
  %v6994 = vpop.f32.mrb[0].mxu0
  %6995 = vmatprep.mubr.f32.mxu0 0.0
  %6996 = vmatmul.mubr.f32.gmra.mrb[0].mxu0 %v6481
  %v6997 = vpop.f32.mrb[0].mxu0
  %v6998 = vadd.f32 0.0, %v6997
  %v6999 = vpop.f32.mrb[0].mxu0
  %7000 = vmatprep.mubr.f32.mxu0 0.0
  %7001 = vmatmul.mubr.f32.gmra.mrb[0].mxu0 %v6483
  %v7002 = vpop.f32.mrb[0].mxu0
  %v7003 = vadd.f32 0.0, %v7002
  %v7004 = vpop.f32.mrb[0].mxu0
  %7005 = vdwg.mxu0
  %v7006 = vmul.f32 %v6988, %v6296
  %v7007 = vmul.f32 %v6993, %v6298
  %v7008 = vmul.f32 %v6998, %v6300
  %v7009 = vmul.f32 %v7003, %v6302
  %v7010 = vmul.f32 %v6988, %v6301
  %v7011 = vadd.f32 %v6876, %v7006
  %v7012 = vadd.f32 %v6877, %v7007
  %v7013 = vadd.f32 %v6878, %v7008
  %v7014 = vadd.f32 %v6879, %v7009
  %v7015 = vadd.f32 %v6880, %v7010
  %v7016 = vmul.f32 %v6988, %v6330
  %v7017 = vmul.f32 %v6993, %v6332
  %v7018 = vmul.f32 %v6998, %v6334
  %v7019 = vmul.f32 %v7003, %v6336
  %v7020 = vmul.f32 %v6988, %v6335
  %v7026 = vrot.slane %v7016, 1
  %v7027 = vrot.slane %v7017, 1
  %v7028 = vsel %vm311, %v7026, %v7027
  %v7029 = vrot.slane %v7018, 1
  %v7030 = vsel %vm311, %v7027, %v7029
  %v7031 = vrot.slane %v7019, 1
  %v7032 = vsel %vm311, %v7029, %v7031
  %v7033 = vrot.slane %v7020, 1
  %v7034 = vsel %vm311, %v7031, %v7033
  %7035 = vrot.lane.b32.xlu0 %v7028, 96
  %v7036 = vpop.permute.xlu0 %7035
  %7037 = vrot.lane.b32.xlu0 %v7030, 96
  %v7038 = vpop.permute.xlu0 %7037
  %7039 = vrot.lane.b32.xlu0 %v7032, 96
  %v7040 = vpop.permute.xlu0 %7039
  %7041 = vrot.lane.b32.xlu0 %v7034, 96
  %v7042 = vpop.permute.xlu0 %7041
  %7043 = vrot.lane.b32.xlu0 %v7033, 96
  %v7044 = vpop.permute.xlu0 %7043
  %v7050 = vadd.f32 %v7011, %v7036
  %v7051 = vadd.f32 %v7012, %v7038
  %v7052 = vadd.f32 %v7013, %v7040
  %v7053 = vadd.f32 %v7014, %v7042
  %v7054 = vadd.f32 %v7015, %v7044
  %v7055 = vmul.f32 %v6988, %v6393
  %v7056 = vmul.f32 %v6993, %v6395
  %v7057 = vmul.f32 %v6998, %v6397
  %v7058 = vmul.f32 %v7003, %v6399
  %v7059 = vmul.f32 %v6988, %v6398
  %v7065 = vrot.slane %v7055, 2
  %v7066 = vrot.slane %v7056, 2
  %v7067 = vsel %vm703, %v7065, %v7066
  %v7068 = vrot.slane %v7057, 2
  %v7069 = vsel %vm703, %v7066, %v7068
  %v7070 = vrot.slane %v7058, 2
  %v7071 = vsel %vm703, %v7068, %v7070
  %v7072 = vrot.slane %v7059, 2
  %v7073 = vsel %vm703, %v7070, %v7072
  %7074 = vrot.lane.b32.xlu0 %v7067, 64
  %v7075 = vpop.permute.xlu0 %7074
  %7076 = vrot.lane.b32.xlu0 %v7069, 64
  %v7077 = vpop.permute.xlu0 %7076
  %7078 = vrot.lane.b32.xlu0 %v7071, 64
  %v7079 = vpop.permute.xlu0 %7078
  %7080 = vrot.lane.b32.xlu0 %v7073, 64
  %v7081 = vpop.permute.xlu0 %7080
  %7082 = vrot.lane.b32.xlu0 %v7072, 64
  %v7083 = vpop.permute.xlu0 %7082
  %v7089 = vadd.f32 %v7050, %v7075
  %v7090 = vadd.f32 %v7051, %v7077
  %v7091 = vadd.f32 %v7052, %v7079
  %v7092 = vadd.f32 %v7053, %v7081
  %v7093 = vadd.f32 %v7054, %v7083
  %v7094 = vld [vmem:[%s2 + $0x4] sm:$0x1]
  %v7095 = vlaneseq
  %v7096 = vshrl.u32 %v7095, 7
  %v7097 = vsub.s32 0, %v7096
  %v7098 = vrot.slane %v7094, %v7097
  %v7099 = vadd.f32 %v7089, %v7098
  %v7100 = vadd.f32 %v7090, %v7098
  %v7101 = vadd.f32 %v7091, %v7098
  %v7102 = vadd.f32 %v7092, %v7098
  %v7103 = vadd.f32 %v7093, %v7098
  %v7104 = vmax.f32 %v7099, 0.0
  %v7105 = vmax.f32 %v7100, 0.0
  %v7106 = vmax.f32 %v7101, 0.0
  %v7107 = vmax.f32 %v7102, 0.0
  %v7108 = vmax.f32 %v7103, 0.0
  %v7109 = vld [vmem:[%s1 + $0x208] sm:$0xff]
  %v7110 = vld [vmem:[%s1 + $0x210] sm:$0xff]
  %v7111 = vld [vmem:[%s1 + $0x230] sm:$0xff]
  %v7112 = vld [vmem:[%s1 + $0x238] sm:$0xff]
  %v7113 = vld [vmem:[%s1 + $0x258] sm:$0xff]
  %v7114 = vld [vmem:[%s1 + $0x260] sm:$0xff]
  %v7115 = vld [vmem:[%s1 + $0x280] sm:$0xff]
  %v7116 = vld [vmem:[%s1 + $0x288] sm:$0xff]
  %v7122 = vrot.slane %v7104, 3
  %v7123 = vrot.slane %v7105, 3
  %v7124 = vsel %vm5814, %v7122, %v7123
  %v7125 = vrot.slane %v7106, 3
  %v7126 = vsel %vm5814, %v7123, %v7125
  %v7127 = vrot.slane %v7107, 3
  %v7128 = vsel %vm5814, %v7125, %v7127
  %v7129 = vrot.slane %v7108, 3
  %v7130 = vsel %vm5814, %v7127, %v7129
  %v7131 = vsel %vm1518, %v7124, 0
  %v7133 = vsel %vm1518, %v7126, 0
  %v7135 = vsel %vm1518, %v7128, 0
  %v7137 = vsel %vm1518, %v7130, 0
  %7139 = vmatprep.subr.mxu0 %v7110
  %7140 = vmatpush1.msra.mxu0 %v7109
  %7141 = vmatprep.subr.mxu0 %v7112
  %7142 = vmatpush1.msra.mxu0 %v7111
  %7143 = vmatprep.subr.mxu0 %v7114
  %7144 = vmatpush1.msra.mxu0 %v7113
  %7145 = vmatprep.subr.mxu0 %v7116
  %7146 = vmatpush1.msra.mxu0 %v7115
  %7147 = vmatprep.subr.mxu0 0.0
  %7148 = vmatpush1.msra.mxu0 0.0
  %7149 = vmatprep.subr.mxu0 0.0
  %7150 = vmatpush1.msra.mxu0 0.0
  %7151 = vmatprep.subr.mxu0 0.0
  %7152 = vmatpush1.msra.mxu0 0.0
  %7153 = vmatprep.subr.mxu0 0.0
  %7154 = vmatpush1.msra.mxu0 0.0
  %7155 = vmatprep.subr.mxu0 0.0
  %7156 = vmatpush1.msra.mxu0 0.0
  %7157 = vmatprep.subr.mxu0 0.0
  %7158 = vmatpush1.msra.mxu0 0.0
  %7159 = vmatprep.subr.mxu0 0.0
  %7160 = vmatpush1.msra.mxu0 0.0
  %7161 = vmatprep.subr.mxu0 0.0
  %7162 = vmatpush1.msra.mxu0 0.0
  %7163 = vmatprep.subr.mxu0 0.0
  %7164 = vmatpush1.msra.mxu0 0.0
  %7165 = vmatprep.subr.mxu0 0.0
  %7166 = vmatpush1.msra.mxu0 0.0
  %7167 = vmatprep.subr.mxu0 0.0
  %7168 = vmatpush1.msra.mxu0 0.0
  %7169 = vmatprep.subr.mxu0 0.0
  %7170 = vmatpush1.msra.mxu0 0.0
  %7171 = vmatprep.subr.mxu0 0.0
  %7172 = vmatpush1.msra.mxu0 0.0
  %7173 = vmatprep.subr.mxu0 0.0
  %7174 = vmatpush1.msra.mxu0 0.0
  %7175 = vmatprep.subr.mxu0 0.0
  %7176 = vmatpush1.msra.mxu0 0.0
  %7177 = vmatprep.subr.mxu0 0.0
  %7178 = vmatpush1.msra.mxu0 0.0
  %7179 = vmatprep.subr.mxu0 0.0
  %7180 = vmatpush1.msra.mxu0 0.0
  %7181 = vmatprep.subr.mxu0 0.0
  %7182 = vmatpush1.msra.mxu0 0.0
  %7183 = vmatprep.subr.mxu0 0.0
  %7184 = vmatpush1.msra.mxu0 0.0
  %7185 = vmatprep.subr.mxu0 0.0
  %7186 = vmatpush1.msra.mxu0 0.0
  %7187 = vmatprep.subr.mxu0 0.0
  %7188 = vmatpush1.msra.mxu0 0.0
  %7189 = vmatprep.subr.mxu0 0.0
  %7190 = vmatpush1.msra.mxu0 0.0
  %7191 = vmatprep.subr.mxu0 0.0
  %7192 = vmatpush1.msra.mxu0 0.0
  %7193 = vmatprep.subr.mxu0 0.0
  %7194 = vmatpush1.msra.mxu0 0.0
  %7195 = vmatprep.subr.mxu0 0.0
  %7196 = vmatpush1.msra.mxu0 0.0
  %7197 = vmatprep.subr.mxu0 0.0
  %7198 = vmatpush1.msra.mxu0 0.0
  %7199 = vmatprep.subr.mxu0 0.0
  %7200 = vmatpush1.msra.mxu0 0.0
  %7201 = vmatprep.subr.mxu0 0.0
  %7202 = vmatpush1.msra.mxu0 0.0
  %7203 = vmatprep.mubr.f32.mxu0 0.0
  %7204 = vmatmul.mubr.f32.gmra.mrb[0].mxu0 %v7131
  %v7205 = vpop.f32.mrb[0].mxu0
  %v7206 = vadd.f32 0.0, %v7205
  %v7207 = vpop.f32.mrb[0].mxu0
  %v7208 = vadd.f32 0.0, %v7207
  %7209 = vmatprep.mubr.f32.mxu0 0.0
  %7210 = vmatmul.mubr.f32.gmra.mrb[0].mxu0 %v7133
  %v7211 = vpop.f32.mrb[0].mxu0
  %v7212 = vadd.f32 0.0, %v7211
  %v7213 = vpop.f32.mrb[0].mxu0
  %v7214 = vadd.f32 0.0, %v7213
  %7215 = vmatprep.mubr.f32.mxu0 0.0
  %7216 = vmatmul.mubr.f32.gmra.mrb[0].mxu0 %v7135
  %v7217 = vpop.f32.mrb[0].mxu0
  %v7218 = vadd.f32 0.0, %v7217
  %v7219 = vpop.f32.mrb[0].mxu0
  %v7220 = vadd.f32 0.0, %v7219
  %7221 = vmatprep.mubr.f32.mxu0 0.0
  %7222 = vmatmul.mubr.f32.gmra.mrb[0].mxu0 %v7137
  %v7223 = vpop.f32.mrb[0].mxu0
  %v7224 = vadd.f32 0.0, %v7223
  %v7225 = vpop.f32.mrb[0].mxu0
  %v7226 = vadd.f32 0.0, %v7225
  %7227 = vdwg.mxu0
  %v7228 = vmul.f32 %v7224, %v5721
  %v7229 = vmul.f32 %v7206, %v5723
  %v7230 = vmul.f32 %v7212, %v5725
  %v7231 = vmul.f32 %v7218, %v5727
  %v7232 = vmul.f32 %v7224, %v5726
  %v7233 = vmul.f32 %v7224, %v5751
  %v7234 = vmul.f32 %v7206, %v5753
  %v7235 = vmul.f32 %v7212, %v5755
  %v7236 = vmul.f32 %v7218, %v5757
  %v7237 = vmul.f32 %v7224, %v5756
  %v7243 = vrot.slane %v7233, 1
  %v7244 = vrot.slane %v7234, 1
  %v7245 = vsel %vm311, %v7243, %v7244
  %v7246 = vrot.slane %v7235, 1
  %v7247 = vsel %vm311, %v7244, %v7246
  %v7248 = vrot.slane %v7236, 1
  %v7249 = vsel %vm311, %v7246, %v7248
  %v7250 = vrot.slane %v7237, 1
  %v7251 = vsel %vm311, %v7248, %v7250
  %7252 = vrot.lane.b32.xlu0 %v7245, 64
  %v7253 = vpop.permute.xlu0 %7252
  %7254 = vrot.lane.b32.xlu0 %v7247, 64
  %v7255 = vpop.permute.xlu0 %7254
  %7256 = vrot.lane.b32.xlu0 %v7249, 64
  %v7257 = vpop.permute.xlu0 %7256
  %7258 = vrot.lane.b32.xlu0 %v7251, 64
  %v7259 = vpop.permute.xlu0 %7258
  %7260 = vrot.lane.b32.xlu0 %v7250, 64
  %v7261 = vpop.permute.xlu0 %7260
  %v7267 = vadd.f32 %v7228, %v7253
  %v7268 = vadd.f32 %v7229, %v7255
  %v7269 = vadd.f32 %v7230, %v7257
  %v7270 = vadd.f32 %v7231, %v7259
  %v7271 = vadd.f32 %v7232, %v7261
  %v7272 = vmul.f32 %v7226, %v5815
  %v7273 = vmul.f32 %v7208, %v5817
  %v7274 = vmul.f32 %v7214, %v5819
  %v7275 = vmul.f32 %v7220, %v5821
  %v7276 = vmul.f32 %v7226, %v5820
  %v7282 = vrot.slane %v7272, 2
  %v7283 = vrot.slane %v7273, 2
  %v7284 = vsel %vm703, %v7282, %v7283
  %v7285 = vrot.slane %v7274, 2
  %v7286 = vsel %vm703, %v7283, %v7285
  %v7287 = vrot.slane %v7275, 2
  %v7288 = vsel %vm703, %v7285, %v7287
  %v7289 = vrot.slane %v7276, 2
  %v7290 = vsel %vm703, %v7287, %v7289
  %v7296 = vadd.f32 %v7267, %v7284
  %v7297 = vadd.f32 %v7268, %v7286
  %v7298 = vadd.f32 %v7269, %v7288
  %v7299 = vadd.f32 %v7270, %v7290
  %v7300 = vadd.f32 %v7271, %v7289
  %v7301 = vld [vmem:[%s1 + $0x210] sm:$0xff]
  %v7302 = vld [vmem:[%s1 + $0x218] sm:$0xff]
  %v7303 = vld [vmem:[%s1 + $0x238] sm:$0xff]
  %v7304 = vld [vmem:[%s1 + $0x240] sm:$0xff]
  %v7305 = vld [vmem:[%s1 + $0x260] sm:$0xff]
  %v7306 = vld [vmem:[%s1 + $0x268] sm:$0xff]
  %v7307 = vld [vmem:[%s1 + $0x288] sm:$0xff]
  %v7308 = vld [vmem:[%s1 + $0x290] sm:$0xff]
  %7317 = vrot.lane.b32.xlu0 %v7301, 64
  %v7318 = vpop.permute.xlu0 %7317
  %7319 = vrot.lane.b32.xlu0 %v7302, 64
  %v7320 = vpop.permute.xlu0 %7319
  %7321 = vrot.lane.b32.xlu0 %v7303, 64
  %v7322 = vpop.permute.xlu0 %7321
  %7323 = vrot.lane.b32.xlu0 %v7304, 64
  %v7324 = vpop.permute.xlu0 %7323
  %7325 = vrot.lane.b32.xlu0 %v7305, 64
  %v7326 = vpop.permute.xlu0 %7325
  %7327 = vrot.lane.b32.xlu0 %v7306, 64
  %v7328 = vpop.permute.xlu0 %7327
  %7329 = vrot.lane.b32.xlu0 %v7307, 64
  %v7330 = vpop.permute.xlu0 %7329
  %7331 = vrot.lane.b32.xlu0 %v7308, 64
  %v7332 = vpop.permute.xlu0 %7331
  %v7333 = vsel %vm4724, %v7318, %v7320
  %v7334 = vsel %vm4724, %v7322, %v7324
  %v7335 = vsel %vm4724, %v7326, %v7328
  %v7336 = vsel %vm4724, %v7330, %v7332
  %7345 = vmatprep.subr.mxu0 %v7320
  %7346 = vmatpush1.msra.mxu0 %v7333
  %7347 = vmatprep.subr.mxu0 %v7324
  %7348 = vmatpush1.msra.mxu0 %v7334
  %7349 = vmatprep.subr.mxu0 %v7328
  %7350 = vmatpush1.msra.mxu0 %v7335
  %7351 = vmatprep.subr.mxu0 %v7332
  %7352 = vmatpush1.msra.mxu0 %v7336
  %7353 = vmatprep.subr.mxu0 0.0
  %7354 = vmatpush1.msra.mxu0 0.0
  %7355 = vmatprep.subr.mxu0 0.0
  %7356 = vmatpush1.msra.mxu0 0.0
  %7357 = vmatprep.subr.mxu0 0.0
  %7358 = vmatpush1.msra.mxu0 0.0
  %7359 = vmatprep.subr.mxu0 0.0
  %7360 = vmatpush1.msra.mxu0 0.0
  %7361 = vmatprep.subr.mxu0 0.0
  %7362 = vmatpush1.msra.mxu0 0.0
  %7363 = vmatprep.subr.mxu0 0.0
  %7364 = vmatpush1.msra.mxu0 0.0
  %7365 = vmatprep.subr.mxu0 0.0
  %7366 = vmatpush1.msra.mxu0 0.0
  %7367 = vmatprep.subr.mxu0 0.0
  %7368 = vmatpush1.msra.mxu0 0.0
  %7369 = vmatprep.subr.mxu0 0.0
  %7370 = vmatpush1.msra.mxu0 0.0
  %7371 = vmatprep.subr.mxu0 0.0
  %7372 = vmatpush1.msra.mxu0 0.0
  %7373 = vmatprep.subr.mxu0 0.0
  %7374 = vmatpush1.msra.mxu0 0.0
  %7375 = vmatprep.subr.mxu0 0.0
  %7376 = vmatpush1.msra.mxu0 0.0
  %7377 = vmatprep.subr.mxu0 0.0
  %7378 = vmatpush1.msra.mxu0 0.0
  %7379 = vmatprep.subr.mxu0 0.0
  %7380 = vmatpush1.msra.mxu0 0.0
  %7381 = vmatprep.subr.mxu0 0.0
  %7382 = vmatpush1.msra.mxu0 0.0
  %7383 = vmatprep.subr.mxu0 0.0
  %7384 = vmatpush1.msra.mxu0 0.0
  %7385 = vmatprep.subr.mxu0 0.0
  %7386 = vmatpush1.msra.mxu0 0.0
  %7387 = vmatprep.subr.mxu0 0.0
  %7388 = vmatpush1.msra.mxu0 0.0
  %7389 = vmatprep.subr.mxu0 0.0
  %7390 = vmatpush1.msra.mxu0 0.0
  %7391 = vmatprep.subr.mxu0 0.0
  %7392 = vmatpush1.msra.mxu0 0.0
  %7393 = vmatprep.subr.mxu0 0.0
  %7394 = vmatpush1.msra.mxu0 0.0
  %7395 = vmatprep.subr.mxu0 0.0
  %7396 = vmatpush1.msra.mxu0 0.0
  %7397 = vmatprep.subr.mxu0 0.0
  %7398 = vmatpush1.msra.mxu0 0.0
  %7399 = vmatprep.subr.mxu0 0.0
  %7400 = vmatpush1.msra.mxu0 0.0
  %7401 = vmatprep.subr.mxu0 0.0
  %7402 = vmatpush1.msra.mxu0 0.0
  %7403 = vmatprep.subr.mxu0 0.0
  %7404 = vmatpush1.msra.mxu0 0.0
  %7405 = vmatprep.subr.mxu0 0.0
  %7406 = vmatpush1.msra.mxu0 0.0
  %7407 = vmatprep.subr.mxu0 0.0
  %7408 = vmatpush1.msra.mxu0 0.0
  %7409 = vmatprep.mubr.f32.mxu0 0.0
  %7410 = vmatmul.mubr.f32.gmra.mrb[0].mxu0 %v7131
  %v7411 = vpop.f32.mrb[0].mxu0
  %v7412 = vadd.f32 0.0, %v7411
  %v7413 = vpop.f32.mrb[0].mxu0
  %v7414 = vadd.f32 0.0, %v7413
  %7415 = vmatprep.mubr.f32.mxu0 0.0
  %7416 = vmatmul.mubr.f32.gmra.mrb[0].mxu0 %v7133
  %v7417 = vpop.f32.mrb[0].mxu0
  %v7418 = vadd.f32 0.0, %v7417
  %v7419 = vpop.f32.mrb[0].mxu0
  %v7420 = vadd.f32 0.0, %v7419
  %7421 = vmatprep.mubr.f32.mxu0 0.0
  %7422 = vmatmul.mubr.f32.gmra.mrb[0].mxu0 %v7135
  %v7423 = vpop.f32.mrb[0].mxu0
  %v7424 = vadd.f32 0.0, %v7423
  %v7425 = vpop.f32.mrb[0].mxu0
  %v7426 = vadd.f32 0.0, %v7425
  %7427 = vmatprep.mubr.f32.mxu0 0.0
  %7428 = vmatmul.mubr.f32.gmra.mrb[0].mxu0 %v7137
  %v7429 = vpop.f32.mrb[0].mxu0
  %v7430 = vadd.f32 0.0, %v7429
  %v7431 = vpop.f32.mrb[0].mxu0
  %v7432 = vadd.f32 0.0, %v7431
  %7433 = vdwg.mxu0
  %v7434 = vmul.f32 %v7430, %v6003
  %v7435 = vmul.f32 %v7412, %v6005
  %v7436 = vmul.f32 %v7418, %v6007
  %v7437 = vmul.f32 %v7424, %v6009
  %v7438 = vmul.f32 %v7430, %v6008
  %v7444 = vrot.slane %v7434, 4
  %v7445 = vrot.slane %v7435, 4
  %v7446 = vsel %vm5750, %v7444, %v7445
  %v7447 = vrot.slane %v7436, 4
  %v7448 = vsel %vm5750, %v7445, %v7447
  %v7449 = vrot.slane %v7437, 4
  %v7450 = vsel %vm5750, %v7447, %v7449
  %v7451 = vrot.slane %v7438, 4
  %v7452 = vsel %vm5750, %v7449, %v7451
  %v7458 = vadd.f32 %v7296, %v7446
  %v7459 = vadd.f32 %v7297, %v7448
  %v7460 = vadd.f32 %v7298, %v7450
  %v7461 = vadd.f32 %v7299, %v7452
  %v7462 = vadd.f32 %v7300, %v7451
  %v7463 = vmul.f32 %v7412, %v6046
  %v7464 = vmul.f32 %v7418, %v6050
  %v7465 = vmul.f32 %v7424, %v6054
  %v7466 = vmul.f32 %v7430, %v6058
  %v7471 = vrot.slane %v7463, 5
  %v7472 = vrot.slane %v7464, 5
  %v7473 = vsel %vm5720, %v7471, %v7472
  %v7474 = vrot.slane %v7465, 5
  %v7475 = vsel %vm5720, %v7472, %v7474
  %v7476 = vrot.slane %v7466, 5
  %v7477 = vsel %vm5720, %v7474, %v7476
  %7478 = vrot.lane.b32.xlu0 %v7471, 64
  %v7479 = vpop.permute.xlu0 %7478
  %7480 = vrot.lane.b32.xlu0 %v7473, 64
  %v7481 = vpop.permute.xlu0 %7480
  %7482 = vrot.lane.b32.xlu0 %v7475, 64
  %v7483 = vpop.permute.xlu0 %7482
  %7484 = vrot.lane.b32.xlu0 %v7477, 64
  %v7485 = vpop.permute.xlu0 %7484
  %7486 = vrot.lane.b32.xlu0 %v7476, 64
  %v7487 = vpop.permute.xlu0 %7486
  %v7493 = vadd.f32 %v7458, %v7479
  %v7494 = vadd.f32 %v7459, %v7481
  %v7495 = vadd.f32 %v7460, %v7483
  %v7496 = vadd.f32 %v7461, %v7485
  %v7497 = vadd.f32 %v7462, %v7487
  %v7498 = vmul.f32 %v7414, %v6107
  %v7499 = vmul.f32 %v7420, %v6109
  %v7500 = vmul.f32 %v7426, %v6111
  %v7501 = vmul.f32 %v7432, %v6113
  %v7502 = vmul.f32 %v7414, %v6112
  %v7508 = vrot.slane %v7498, 6
  %v7509 = vrot.slane %v7499, 6
  %v7510 = vsel %vm6129, %v7508, %v7509
  %v7511 = vrot.slane %v7500, 6
  %v7512 = vsel %vm6129, %v7509, %v7511
  %v7513 = vrot.slane %v7501, 6
  %v7514 = vsel %vm6129, %v7511, %v7513
  %v7515 = vrot.slane %v7502, 6
  %v7516 = vsel %vm6129, %v7513, %v7515
  %v7522 = vadd.f32 %v7493, %v7508
  %v7523 = vadd.f32 %v7494, %v7510
  %v7524 = vadd.f32 %v7495, %v7512
  %v7525 = vadd.f32 %v7496, %v7514
  %v7526 = vadd.f32 %v7497, %v7516
  %v7527 = vld [vmem:[%s1 + $0x220] sm:$0xff]
  %v7528 = vld [vmem:[%s1 + $0x228] sm:$0xff]
  %v7529 = vld [vmem:[%s1 + $0x248] sm:$0xff]
  %v7530 = vld [vmem:[%s1 + $0x250] sm:$0xff]
  %v7531 = vld [vmem:[%s1 + $0x270] sm:$0xff]
  %v7532 = vld [vmem:[%s1 + $0x278] sm:$0xff]
  %v7533 = vld [vmem:[%s1 + $0x298] sm:$0xff]
  %v7534 = vld [vmem:[%s1 + $0x2a0] sm:$0xff]
  %7535 = vmatprep.subr.mxu0 %v7528
  %7536 = vmatpush1.msra.mxu0 %v7527
  %7537 = vmatprep.subr.mxu0 %v7530
  %7538 = vmatpush1.msra.mxu0 %v7529
  %7539 = vmatprep.subr.mxu0 %v7532
  %7540 = vmatpush1.msra.mxu0 %v7531
  %7541 = vmatprep.subr.mxu0 %v7534
  %7542 = vmatpush1.msra.mxu0 %v7533
  %7543 = vmatprep.subr.mxu0 0.0
  %7544 = vmatpush1.msra.mxu0 0.0
  %7545 = vmatprep.subr.mxu0 0.0
  %7546 = vmatpush1.msra.mxu0 0.0
  %7547 = vmatprep.subr.mxu0 0.0
  %7548 = vmatpush1.msra.mxu0 0.0
  %7549 = vmatprep.subr.mxu0 0.0
  %7550 = vmatpush1.msra.mxu0 0.0
  %7551 = vmatprep.subr.mxu0 0.0
  %7552 = vmatpush1.msra.mxu0 0.0
  %7553 = vmatprep.subr.mxu0 0.0
  %7554 = vmatpush1.msra.mxu0 0.0
  %7555 = vmatprep.subr.mxu0 0.0
  %7556 = vmatpush1.msra.mxu0 0.0
  %7557 = vmatprep.subr.mxu0 0.0
  %7558 = vmatpush1.msra.mxu0 0.0
  %7559 = vmatprep.subr.mxu0 0.0
  %7560 = vmatpush1.msra.mxu0 0.0
  %7561 = vmatprep.subr.mxu0 0.0
  %7562 = vmatpush1.msra.mxu0 0.0
  %7563 = vmatprep.subr.mxu0 0.0
  %7564 = vmatpush1.msra.mxu0 0.0
  %7565 = vmatprep.subr.mxu0 0.0
  %7566 = vmatpush1.msra.mxu0 0.0
  %7567 = vmatprep.subr.mxu0 0.0
  %7568 = vmatpush1.msra.mxu0 0.0
  %7569 = vmatprep.subr.mxu0 0.0
  %7570 = vmatpush1.msra.mxu0 0.0
  %7571 = vmatprep.subr.mxu0 0.0
  %7572 = vmatpush1.msra.mxu0 0.0
  %7573 = vmatprep.subr.mxu0 0.0
  %7574 = vmatpush1.msra.mxu0 0.0
  %7575 = vmatprep.subr.mxu0 0.0
  %7576 = vmatpush1.msra.mxu0 0.0
  %7577 = vmatprep.subr.mxu0 0.0
  %7578 = vmatpush1.msra.mxu0 0.0
  %7579 = vmatprep.subr.mxu0 0.0
  %7580 = vmatpush1.msra.mxu0 0.0
  %7581 = vmatprep.subr.mxu0 0.0
  %7582 = vmatpush1.msra.mxu0 0.0
  %7583 = vmatprep.subr.mxu0 0.0
  %7584 = vmatpush1.msra.mxu0 0.0
  %7585 = vmatprep.subr.mxu0 0.0
  %7586 = vmatpush1.msra.mxu0 0.0
  %7587 = vmatprep.subr.mxu0 0.0
  %7588 = vmatpush1.msra.mxu0 0.0
  %7589 = vmatprep.subr.mxu0 0.0
  %7590 = vmatpush1.msra.mxu0 0.0
  %7591 = vmatprep.subr.mxu0 0.0
  %7592 = vmatpush1.msra.mxu0 0.0
  %7593 = vmatprep.subr.mxu0 0.0
  %7594 = vmatpush1.msra.mxu0 0.0
  %7595 = vmatprep.subr.mxu0 0.0
  %7596 = vmatpush1.msra.mxu0 0.0
  %7597 = vmatprep.subr.mxu0 0.0
  %7598 = vmatpush1.msra.mxu0 0.0
  %7599 = vmatprep.mubr.f32.mxu0 0.0
  %7600 = vmatmul.mubr.f32.gmra.mrb[0].mxu0 %v7131
  %v7601 = vpop.f32.mrb[0].mxu0
  %v7602 = vadd.f32 0.0, %v7601
  %v7603 = vpop.f32.mrb[0].mxu0
  %v7604 = vadd.f32 0.0, %v7603
  %7605 = vmatprep.mubr.f32.mxu0 0.0
  %7606 = vmatmul.mubr.f32.gmra.mrb[0].mxu0 %v7133
  %v7607 = vpop.f32.mrb[0].mxu0
  %v7608 = vadd.f32 0.0, %v7607
  %v7609 = vpop.f32.mrb[0].mxu0
  %v7610 = vadd.f32 0.0, %v7609
  %7611 = vmatprep.mubr.f32.mxu0 0.0
  %7612 = vmatmul.mubr.f32.gmra.mrb[0].mxu0 %v7135
  %v7613 = vpop.f32.mrb[0].mxu0
  %v7614 = vadd.f32 0.0, %v7613
  %v7615 = vpop.f32.mrb[0].mxu0
  %v7616 = vadd.f32 0.0, %v7615
  %7617 = vmatprep.mubr.f32.mxu0 0.0
  %7618 = vmatmul.mubr.f32.gmra.mrb[0].mxu0 %v7137
  %v7619 = vpop.f32.mrb[0].mxu0
  %v7620 = vadd.f32 0.0, %v7619
  %v7621 = vpop.f32.mrb[0].mxu0
  %v7622 = vadd.f32 0.0, %v7621
  %7623 = vdwg.mxu0
  %v7624 = vmul.f32 %v7602, %v6296
  %v7625 = vmul.f32 %v7608, %v6298
  %v7626 = vmul.f32 %v7614, %v6300
  %v7627 = vmul.f32 %v7620, %v6302
  %v7628 = vmul.f32 %v7602, %v6301
  %v7629 = vadd.f32 %v7522, %v7624
  %v7630 = vadd.f32 %v7523, %v7625
  %v7631 = vadd.f32 %v7524, %v7626
  %v7632 = vadd.f32 %v7525, %v7627
  %v7633 = vadd.f32 %v7526, %v7628
  %v7634 = vmul.f32 %v7602, %v6330
  %v7635 = vmul.f32 %v7608, %v6332
  %v7636 = vmul.f32 %v7614, %v6334
  %v7637 = vmul.f32 %v7620, %v6336
  %v7638 = vmul.f32 %v7602, %v6335
  %v7644 = vrot.slane %v7634, 1
  %v7645 = vrot.slane %v7635, 1
  %v7646 = vsel %vm311, %v7644, %v7645
  %v7647 = vrot.slane %v7636, 1
  %v7648 = vsel %vm311, %v7645, %v7647
  %v7649 = vrot.slane %v7637, 1
  %v7650 = vsel %vm311, %v7647, %v7649
  %v7651 = vrot.slane %v7638, 1
  %v7652 = vsel %vm311, %v7649, %v7651
  %7653 = vrot.lane.b32.xlu0 %v7646, 64
  %v7654 = vpop.permute.xlu0 %7653
  %7655 = vrot.lane.b32.xlu0 %v7648, 64
  %v7656 = vpop.permute.xlu0 %7655
  %7657 = vrot.lane.b32.xlu0 %v7650, 64
  %v7658 = vpop.permute.xlu0 %7657
  %7659 = vrot.lane.b32.xlu0 %v7652, 64
  %v7660 = vpop.permute.xlu0 %7659
  %7661 = vrot.lane.b32.xlu0 %v7651, 64
  %v7662 = vpop.permute.xlu0 %7661
  %v7668 = vadd.f32 %v7629, %v7654
  %v7669 = vadd.f32 %v7630, %v7656
  %v7670 = vadd.f32 %v7631, %v7658
  %v7671 = vadd.f32 %v7632, %v7660
  %v7672 = vadd.f32 %v7633, %v7662
  %v7673 = vmul.f32 %v7604, %v6393
  %v7674 = vmul.f32 %v7610, %v6395
  %v7675 = vmul.f32 %v7616, %v6397
  %v7676 = vmul.f32 %v7622, %v6399
  %v7677 = vmul.f32 %v7604, %v6398
  %v7683 = vrot.slane %v7673, 2
  %v7684 = vrot.slane %v7674, 2
  %v7685 = vsel %vm703, %v7683, %v7684
  %v7686 = vrot.slane %v7675, 2
  %v7687 = vsel %vm703, %v7684, %v7686
  %v7688 = vrot.slane %v7676, 2
  %v7689 = vsel %vm703, %v7686, %v7688
  %v7690 = vrot.slane %v7677, 2
  %v7691 = vsel %vm703, %v7688, %v7690
  %v7697 = vadd.f32 %v7668, %v7685
  %v7698 = vadd.f32 %v7669, %v7687
  %v7699 = vadd.f32 %v7670, %v7689
  %v7700 = vadd.f32 %v7671, %v7691
  %v7701 = vadd.f32 %v7672, %v7690
  %v7702 = vld [vmem:[%s2 + $0x5] sm:$0x1]
  %v7703 = vlaneseq
  %v7704 = vshrl.u32 %v7703, 7
  %v7705 = vsub.s32 0, %v7704
  %v7706 = vrot.slane %v7702, %v7705
  %v7707 = vadd.f32 %v7697, %v7706
  %v7708 = vadd.f32 %v7698, %v7706
  %v7709 = vadd.f32 %v7699, %v7706
  %v7710 = vadd.f32 %v7700, %v7706
  %v7711 = vadd.f32 %v7701, %v7706
  %v7712 = vmax.f32 %v7707, 0.0
  %v7713 = vmax.f32 %v7708, 0.0
  %v7714 = vmax.f32 %v7709, 0.0
  %v7715 = vmax.f32 %v7710, 0.0
  %v7716 = vmax.f32 %v7711, 0.0
  %v7717 = vld [vmem:[%s4 + $0x20] sm:$0xff]
  %v7718 = vld [vmem:[%s4 + $0x28] sm:$0xff]
  %v7719 = vld [vmem:[%s4 + $0x30] sm:$0xff]
  %v7720 = vld [vmem:[%s4 + $0x38] sm:$0xff]
  %v7726 = vrot.slane %v7712, 3
  %v7727 = vrot.slane %v7713, 3
  %v7728 = vsel %vm5814, %v7726, %v7727
  %v7729 = vrot.slane %v7714, 3
  %v7730 = vsel %vm5814, %v7727, %v7729
  %v7731 = vrot.slane %v7715, 3
  %v7732 = vsel %vm5814, %v7729, %v7731
  %v7733 = vrot.slane %v7716, 3
  %v7734 = vsel %vm5814, %v7731, %v7733
  %v7735 = vrot.slane %v7728, 6
  %v7736 = vrot.slane %v7730, 6
  %v7737 = vsel %vm6129, %v7735, %v7736
  %v7738 = vrot.slane %v7732, 6
  %v7739 = vsel %vm6129, %v7736, %v7738
  %v7740 = vrot.slane %v7734, 6
  %v7741 = vsel %vm6129, %v7738, %v7740
  %v7742 = vsel %vm6129, %v7740, %v7735
  %v7748 = vmax.f32 %v7712, %v7735
  %v7749 = vmax.f32 %v7713, %v7737
  %v7750 = vmax.f32 %v7714, %v7739
  %v7751 = vmax.f32 %v7715, %v7741
  %v7752 = vmax.f32 %v7716, %v7742
  %v7758 = vrot.slane %v7748, 3
  %v7759 = vrot.slane %v7749, 3
  %v7760 = vsel %vm5814, %v7758, %v7759
  %v7761 = vrot.slane %v7750, 3
  %v7762 = vsel %vm5814, %v7759, %v7761
  %v7763 = vrot.slane %v7751, 3
  %v7764 = vsel %vm5814, %v7761, %v7763
  %v7765 = vrot.slane %v7752, 3
  %v7766 = vsel %vm5814, %v7763, %v7765
  %v7767 = vrot.slane %v7760, 1
  %v7768 = vrot.slane %v7762, 1
  %v7769 = vsel %vm311, %v7767, %v7768
  %v7770 = vrot.slane %v7764, 1
  %v7771 = vsel %vm311, %v7768, %v7770
  %v7772 = vrot.slane %v7766, 1
  %v7773 = vsel %vm311, %v7770, %v7772
  %v7774 = vsel %vm311, %v7772, %v7767
  %v7780 = vmax.f32 %v7748, %v7769
  %v7781 = vmax.f32 %v7749, %v7771
  %v7782 = vmax.f32 %v7750, %v7773
  %v7783 = vmax.f32 %v7751, %v7774
  %v7784 = vmax.f32 %v7752, %v7767
  %v7790 = vrot.slane %v7780, 3
  %v7791 = vrot.slane %v7781, 3
  %v7792 = vsel %vm5814, %v7790, %v7791
  %v7793 = vrot.slane %v7782, 3
  %v7794 = vsel %vm5814, %v7791, %v7793
  %v7795 = vrot.slane %v7783, 3
  %v7796 = vsel %vm5814, %v7793, %v7795
  %v7797 = vrot.slane %v7784, 3
  %v7798 = vsel %vm5814, %v7795, %v7797
  %v7804 = vsel %vm1518, %v7717, 0
  %v7807 = vsel %vm1518, %v7718, 0
  %v7810 = vsel %vm1518, %v7719, 0
  %v7813 = vsel %vm1518, %v7720, 0
  %7815 = vmatprep.subr.mxu0 0.0
  %7816 = vmatpush1.msra.mxu0 %v7792
  %7817 = vmatprep.subr.mxu0 0.0
  %7818 = vmatpush1.msra.mxu0 %v7794
  %7819 = vmatprep.subr.mxu0 0.0
  %7820 = vmatpush1.msra.mxu0 %v7796
  %7821 = vmatprep.subr.mxu0 0.0
  %7822 = vmatpush1.msra.mxu0 %v7798
  %7823 = vmatprep.subr.mxu0 0.0
  %7824 = vmatpush1.msra.mxu0 0.0
  %7825 = vmatprep.subr.mxu0 0.0
  %7826 = vmatpush1.msra.mxu0 0.0
  %7827 = vmatprep.subr.mxu0 0.0
  %7828 = vmatpush1.msra.mxu0 0.0
  %7829 = vmatprep.subr.mxu0 0.0
  %7830 = vmatpush1.msra.mxu0 0.0
  %7831 = vmatprep.subr.mxu0 0.0
  %7832 = vmatpush1.msra.mxu0 0.0
  %7833 = vmatprep.subr.mxu0 0.0
  %7834 = vmatpush1.msra.mxu0 0.0
  %7835 = vmatprep.subr.mxu0 0.0
  %7836 = vmatpush1.msra.mxu0 0.0
  %7837 = vmatprep.subr.mxu0 0.0
  %7838 = vmatpush1.msra.mxu0 0.0
  %7839 = vmatprep.subr.mxu0 0.0
  %7840 = vmatpush1.msra.mxu0 0.0
  %7841 = vmatprep.subr.mxu0 0.0
  %7842 = vmatpush1.msra.mxu0 0.0
  %7843 = vmatprep.subr.mxu0 0.0
  %7844 = vmatpush1.msra.mxu0 0.0
  %7845 = vmatprep.subr.mxu0 0.0
  %7846 = vmatpush1.msra.mxu0 0.0
  %7847 = vmatprep.subr.mxu0 0.0
  %7848 = vmatpush1.msra.mxu0 0.0
  %7849 = vmatprep.subr.mxu0 0.0
  %7850 = vmatpush1.msra.mxu0 0.0
  %7851 = vmatprep.subr.mxu0 0.0
  %7852 = vmatpush1.msra.mxu0 0.0
  %7853 = vmatprep.subr.mxu0 0.0
  %7854 = vmatpush1.msra.mxu0 0.0
  %7855 = vmatprep.subr.mxu0 0.0
  %7856 = vmatpush1.msra.mxu0 0.0
  %7857 = vmatprep.subr.mxu0 0.0
  %7858 = vmatpush1.msra.mxu0 0.0
  %7859 = vmatprep.subr.mxu0 0.0
  %7860 = vmatpush1.msra.mxu0 0.0
  %7861 = vmatprep.subr.mxu0 0.0
  %7862 = vmatpush1.msra.mxu0 0.0
  %7863 = vmatprep.subr.mxu0 0.0
  %7864 = vmatpush1.msra.mxu0 0.0
  %7865 = vmatprep.subr.mxu0 0.0
  %7866 = vmatpush1.msra.mxu0 0.0
  %7867 = vmatprep.subr.mxu0 0.0
  %7868 = vmatpush1.msra.mxu0 0.0
  %7869 = vmatprep.subr.mxu0 0.0
  %7870 = vmatpush1.msra.mxu0 0.0
  %7871 = vmatprep.subr.mxu0 0.0
  %7872 = vmatpush1.msra.mxu0 0.0
  %7873 = vmatprep.subr.mxu0 0.0
  %7874 = vmatpush1.msra.mxu0 0.0
  %7875 = vmatprep.subr.mxu0 0.0
  %7876 = vmatpush1.msra.mxu0 0.0
  %7877 = vmatprep.subr.mxu0 0.0
  %7878 = vmatpush1.msra.mxu0 0.0
  %7879 = vmatprep.mubr.f32.mxu0 0.0
  %7880 = vmatmul.mubr.f32.gmra.mrb[0].mxu0 %v7804
  %v7881 = vpop.f32.mrb[0].mxu0
  %v7882 = vadd.f32 0.0, %v7881
  %v7883 = vpop.f32.mrb[0].mxu0
  %7884 = vmatprep.mubr.f32.mxu0 0.0
  %7885 = vmatmul.mubr.f32.gmra.mrb[0].mxu0 %v7807
  %v7886 = vpop.f32.mrb[0].mxu0
  %v7887 = vadd.f32 0.0, %v7886
  %v7888 = vpop.f32.mrb[0].mxu0
  %7889 = vmatprep.mubr.f32.mxu0 0.0
  %7890 = vmatmul.mubr.f32.gmra.mrb[0].mxu0 %v7810
  %v7891 = vpop.f32.mrb[0].mxu0
  %v7892 = vadd.f32 0.0, %v7891
  %v7893 = vpop.f32.mrb[0].mxu0
  %7894 = vmatprep.mubr.f32.mxu0 0.0
  %7895 = vmatmul.mubr.f32.gmra.mrb[0].mxu0 %v7813
  %v7896 = vpop.f32.mrb[0].mxu0
  %v7897 = vadd.f32 0.0, %v7896
  %v7898 = vpop.f32.mrb[0].mxu0
  %7899 = vdwg.mxu0
  %v7900 = vld [vmem:[%s3 + $0xa0] sm:$0xff]
  %v7901 = vld [vmem:[%s3 + $0xa8] sm:$0xff]
  %v7902 = vld [vmem:[%s3 + $0xb0] sm:$0xff]
  %v7903 = vld [vmem:[%s3 + $0xb8] sm:$0xff]
  %v7904 = vld [vmem:[%s1 + $0x2a8] sm:$0xff]
  %v7905 = vld [vmem:[%s1 + $0x2d0] sm:$0xff]
  %v7906 = vld [vmem:[%s1 + $0x2f8] sm:$0xff]
  %v7907 = vld [vmem:[%s1 + $0x320] sm:$0xff]
  %v7908 = vld [vmem:[%s1 + $0x348] sm:$0xff]
  %v7909 = vld [vmem:[%s1 + $0x370] sm:$0xff]
  %v7910 = vld [vmem:[%s1 + $0x398] sm:$0xff]
  %v7911 = vld [vmem:[%s1 + $0x3c0] sm:$0xff]
  %v7913 = vsel %vm4724, %v7882, 0
  %v7916 = vsel %vm4724, %v7887, 0
  %v7919 = vsel %vm4724, %v7892, 0
  %v7922 = vsel %vm4724, %v7897, 0
  %7924 = vmatprep.subr.mxu0 0.0
  %7925 = vmatpush1.msra.mxu0 %v7904
  %7926 = vmatprep.subr.mxu0 0.0
  %7927 = vmatpush1.msra.mxu0 %v7905
  %7928 = vmatprep.subr.mxu0 0.0
  %7929 = vmatpush1.msra.mxu0 %v7906
  %7930 = vmatprep.subr.mxu0 0.0
  %7931 = vmatpush1.msra.mxu0 %v7907
  %7932 = vmatprep.subr.mxu0 0.0
  %7933 = vmatpush1.msra.mxu0 %v7908
  %7934 = vmatprep.subr.mxu0 0.0
  %7935 = vmatpush1.msra.mxu0 %v7909
  %7936 = vmatprep.subr.mxu0 0.0
  %7937 = vmatpush1.msra.mxu0 %v7910
  %7938 = vmatprep.subr.mxu0 0.0
  %7939 = vmatpush1.msra.mxu0 %v7911
  %7940 = vmatprep.subr.mxu0 0.0
  %7941 = vmatpush1.msra.mxu0 0.0
  %7942 = vmatprep.subr.mxu0 0.0
  %7943 = vmatpush1.msra.mxu0 0.0
  %7944 = vmatprep.subr.mxu0 0.0
  %7945 = vmatpush1.msra.mxu0 0.0
  %7946 = vmatprep.subr.mxu0 0.0
  %7947 = vmatpush1.msra.mxu0 0.0
  %7948 = vmatprep.subr.mxu0 0.0
  %7949 = vmatpush1.msra.mxu0 0.0
  %7950 = vmatprep.subr.mxu0 0.0
  %7951 = vmatpush1.msra.mxu0 0.0
  %7952 = vmatprep.subr.mxu0 0.0
  %7953 = vmatpush1.msra.mxu0 0.0
  %7954 = vmatprep.subr.mxu0 0.0
  %7955 = vmatpush1.msra.mxu0 0.0
  %7956 = vmatprep.subr.mxu0 0.0
  %7957 = vmatpush1.msra.mxu0 0.0
  %7958 = vmatprep.subr.mxu0 0.0
  %7959 = vmatpush1.msra.mxu0 0.0
  %7960 = vmatprep.subr.mxu0 0.0
  %7961 = vmatpush1.msra.mxu0 0.0
  %7962 = vmatprep.subr.mxu0 0.0
  %7963 = vmatpush1.msra.mxu0 0.0
  %7964 = vmatprep.subr.mxu0 0.0
  %7965 = vmatpush1.msra.mxu0 0.0
  %7966 = vmatprep.subr.mxu0 0.0
  %7967 = vmatpush1.msra.mxu0 0.0
  %7968 = vmatprep.subr.mxu0 0.0
  %7969 = vmatpush1.msra.mxu0 0.0
  %7970 = vmatprep.subr.mxu0 0.0
  %7971 = vmatpush1.msra.mxu0 0.0
  %7972 = vmatprep.subr.mxu0 0.0
  %7973 = vmatpush1.msra.mxu0 0.0
  %7974 = vmatprep.subr.mxu0 0.0
  %7975 = vmatpush1.msra.mxu0 0.0
  %7976 = vmatprep.subr.mxu0 0.0
  %7977 = vmatpush1.msra.mxu0 0.0
  %7978 = vmatprep.subr.mxu0 0.0
  %7979 = vmatpush1.msra.mxu0 0.0
  %7980 = vmatprep.subr.mxu0 0.0
  %7981 = vmatpush1.msra.mxu0 0.0
  %7982 = vmatprep.subr.mxu0 0.0
  %7983 = vmatpush1.msra.mxu0 0.0
  %7984 = vmatprep.subr.mxu0 0.0
  %7985 = vmatpush1.msra.mxu0 0.0
  %7986 = vmatprep.subr.mxu0 0.0
  %7987 = vmatpush1.msra.mxu0 0.0
  %7988 = vmatprep.mubr.f32.mxu0 0.0
  %7989 = vmatmul.mubr.f32.gmra.mrb[0].mxu0 %v7913
  %v7990 = vpop.f32.mrb[0].mxu0
  %v7991 = vadd.f32 0.0, %v7990
  %v7992 = vpop.f32.mrb[0].mxu0
  %7993 = vmatprep.mubr.f32.mxu0 0.0
  %7994 = vmatmul.mubr.f32.gmra.mrb[0].mxu0 %v7916
  %v7995 = vpop.f32.mrb[0].mxu0
  %v7996 = vadd.f32 0.0, %v7995
  %v7997 = vpop.f32.mrb[0].mxu0
  %7998 = vmatprep.mubr.f32.mxu0 0.0
  %7999 = vmatmul.mubr.f32.gmra.mrb[0].mxu0 %v7919
  %v8000 = vpop.f32.mrb[0].mxu0
  %v8001 = vadd.f32 0.0, %v8000
  %v8002 = vpop.f32.mrb[0].mxu0
  %8003 = vmatprep.mubr.f32.mxu0 0.0
  %8004 = vmatmul.mubr.f32.gmra.mrb[0].mxu0 %v7922
  %v8005 = vpop.f32.mrb[0].mxu0
  %v8006 = vadd.f32 0.0, %v8005
  %v8007 = vpop.f32.mrb[0].mxu0
  %8008 = vdwg.mxu0
  %8010 = vset.pattern.permute.xlu0 0
  %8011 = vperm.xlu0 %8010, %v7900
  %v8012 = vpop.permute.xlu0 %8011
  %8014 = vset.pattern.permute.xlu0 0
  %8015 = vperm.xlu0 %8014, %v7901
  %v8016 = vpop.permute.xlu0 %8015
  %8018 = vset.pattern.permute.xlu0 0
  %8019 = vperm.xlu0 %8018, %v7902
  %v8020 = vpop.permute.xlu0 %8019
  %8022 = vset.pattern.permute.xlu0 0
  %8023 = vperm.xlu0 %8022, %v7903
  %v8024 = vpop.permute.xlu0 %8023
  %v8025 = vrot.slane %v8012, 5
  %v8026 = vrot.slane %v8016, 5
  %v8027 = vsel %vm5720, %v8025, %v8026
  %v8028 = vrot.slane %v8020, 5
  %v8029 = vsel %vm5720, %v8026, %v8028
  %v8030 = vrot.slane %v8024, 5
  %v8031 = vsel %vm5720, %v8028, %v8030
  %v8037 = vmul.f32 %v8006, %v8025
  %v8038 = vmul.f32 %v7991, %v8027
  %v8039 = vmul.f32 %v7996, %v8029
  %v8040 = vmul.f32 %v8001, %v8031
  %v8041 = vmul.f32 %v8006, %v8030
  %8042 = vset.pattern.permute.xlu0 1
  %8043 = vperm.xlu0 %8042, %v7900
  %v8044 = vpop.permute.xlu0 %8043
  %8045 = vset.pattern.permute.xlu0 1
  %8046 = vperm.xlu0 %8045, %v7901
  %v8047 = vpop.permute.xlu0 %8046
  %8048 = vset.pattern.permute.xlu0 1
  %8049 = vperm.xlu0 %8048, %v7902
  %v8050 = vpop.permute.xlu0 %8049
  %8051 = vset.pattern.permute.xlu0 1
  %8052 = vperm.xlu0 %8051, %v7903
  %v8053 = vpop.permute.xlu0 %8052
  %v8054 = vrot.slane %v8044, 4
  %v8055 = vrot.slane %v8047, 4
  %v8056 = vsel %vm5750, %v8054, %v8055
  %v8057 = vrot.slane %v8050, 4
  %v8058 = vsel %vm5750, %v8055, %v8057
  %v8059 = vrot.slane %v8053, 4
  %v8060 = vsel %vm5750, %v8057, %v8059
  %v8066 = vmul.f32 %v8006, %v8054
  %v8067 = vmul.f32 %v7991, %v8056
  %v8068 = vmul.f32 %v7996, %v8058
  %v8069 = vmul.f32 %v8001, %v8060
  %v8070 = vmul.f32 %v8006, %v8059
  %v8076 = vrot.slane %v8066, 1
  %v8077 = vrot.slane %v8067, 1
  %v8078 = vsel %vm311, %v8076, %v8077
  %v8079 = vrot.slane %v8068, 1
  %v8080 = vsel %vm311, %v8077, %v8079
  %v8081 = vrot.slane %v8069, 1
  %v8082 = vsel %vm311, %v8079, %v8081
  %v8083 = vrot.slane %v8070, 1
  %v8084 = vsel %vm311, %v8081, %v8083
  %8085 = vrot.lane.b32.xlu0 %v8078, 64
  %v8086 = vpop.permute.xlu0 %8085
  %8087 = vrot.lane.b32.xlu0 %v8080, 64
  %v8088 = vpop.permute.xlu0 %8087
  %8089 = vrot.lane.b32.xlu0 %v8082, 64
  %v8090 = vpop.permute.xlu0 %8089
  %8091 = vrot.lane.b32.xlu0 %v8084, 64
  %v8092 = vpop.permute.xlu0 %8091
  %8093 = vrot.lane.b32.xlu0 %v8083, 64
  %v8094 = vpop.permute.xlu0 %8093
  %v8100 = vadd.f32 %v8037, %v8086
  %v8101 = vadd.f32 %v8038, %v8088
  %v8102 = vadd.f32 %v8039, %v8090
  %v8103 = vadd.f32 %v8040, %v8092
  %v8104 = vadd.f32 %v8041, %v8094
  %v8105 = vld [vmem:[%s1 + $0x2b0] sm:$0xff]
  %v8106 = vld [vmem:[%s1 + $0x2d8] sm:$0xff]
  %v8107 = vld [vmem:[%s1 + $0x300] sm:$0xff]
  %v8108 = vld [vmem:[%s1 + $0x328] sm:$0xff]
  %v8109 = vld [vmem:[%s1 + $0x350] sm:$0xff]
  %v8110 = vld [vmem:[%s1 + $0x378] sm:$0xff]
  %v8111 = vld [vmem:[%s1 + $0x3a0] sm:$0xff]
  %v8112 = vld [vmem:[%s1 + $0x3c8] sm:$0xff]
  %8113 = vmatprep.subr.mxu0 0.0
  %8114 = vmatpush1.msra.mxu0 %v8105
  %8115 = vmatprep.subr.mxu0 0.0
  %8116 = vmatpush1.msra.mxu0 %v8106
  %8117 = vmatprep.subr.mxu0 0.0
  %8118 = vmatpush1.msra.mxu0 %v8107
  %8119 = vmatprep.subr.mxu0 0.0
  %8120 = vmatpush1.msra.mxu0 %v8108
  %8121 = vmatprep.subr.mxu0 0.0
  %8122 = vmatpush1.msra.mxu0 %v8109
  %8123 = vmatprep.subr.mxu0 0.0
  %8124 = vmatpush1.msra.mxu0 %v8110
  %8125 = vmatprep.subr.mxu0 0.0
  %8126 = vmatpush1.msra.mxu0 %v8111
  %8127 = vmatprep.subr.mxu0 0.0
  %8128 = vmatpush1.msra.mxu0 %v8112
  %8129 = vmatprep.subr.mxu0 0.0
  %8130 = vmatpush1.msra.mxu0 0.0
  %8131 = vmatprep.subr.mxu0 0.0
  %8132 = vmatpush1.msra.mxu0 0.0
  %8133 = vmatprep.subr.mxu0 0.0
  %8134 = vmatpush1.msra.mxu0 0.0
  %8135 = vmatprep.subr.mxu0 0.0
  %8136 = vmatpush1.msra.mxu0 0.0
  %8137 = vmatprep.subr.mxu0 0.0
  %8138 = vmatpush1.msra.mxu0 0.0
  %8139 = vmatprep.subr.mxu0 0.0
  %8140 = vmatpush1.msra.mxu0 0.0
  %8141 = vmatprep.subr.mxu0 0.0
  %8142 = vmatpush1.msra.mxu0 0.0
  %8143 = vmatprep.subr.mxu0 0.0
  %8144 = vmatpush1.msra.mxu0 0.0
  %8145 = vmatprep.subr.mxu0 0.0
  %8146 = vmatpush1.msra.mxu0 0.0
  %8147 = vmatprep.subr.mxu0 0.0
  %8148 = vmatpush1.msra.mxu0 0.0
  %8149 = vmatprep.subr.mxu0 0.0
  %8150 = vmatpush1.msra.mxu0 0.0
  %8151 = vmatprep.subr.mxu0 0.0
  %8152 = vmatpush1.msra.mxu0 0.0
  %8153 = vmatprep.subr.mxu0 0.0
  %8154 = vmatpush1.msra.mxu0 0.0
  %8155 = vmatprep.subr.mxu0 0.0
  %8156 = vmatpush1.msra.mxu0 0.0
  %8157 = vmatprep.subr.mxu0 0.0
  %8158 = vmatpush1.msra.mxu0 0.0
  %8159 = vmatprep.subr.mxu0 0.0
  %8160 = vmatpush1.msra.mxu0 0.0
  %8161 = vmatprep.subr.mxu0 0.0
  %8162 = vmatpush1.msra.mxu0 0.0
  %8163 = vmatprep.subr.mxu0 0.0
  %8164 = vmatpush1.msra.mxu0 0.0
  %8165 = vmatprep.subr.mxu0 0.0
  %8166 = vmatpush1.msra.mxu0 0.0
  %8167 = vmatprep.subr.mxu0 0.0
  %8168 = vmatpush1.msra.mxu0 0.0
  %8169 = vmatprep.subr.mxu0 0.0
  %8170 = vmatpush1.msra.mxu0 0.0
  %8171 = vmatprep.subr.mxu0 0.0
  %8172 = vmatpush1.msra.mxu0 0.0
  %8173 = vmatprep.subr.mxu0 0.0
  %8174 = vmatpush1.msra.mxu0 0.0
  %8175 = vmatprep.subr.mxu0 0.0
  %8176 = vmatpush1.msra.mxu0 0.0
  %8177 = vmatprep.mubr.f32.mxu0 0.0
  %8178 = vmatmul.mubr.f32.gmra.mrb[0].mxu0 %v7913
  %v8179 = vpop.f32.mrb[0].mxu0
  %v8180 = vadd.f32 0.0, %v8179
  %v8181 = vpop.f32.mrb[0].mxu0
  %8182 = vmatprep.mubr.f32.mxu0 0.0
  %8183 = vmatmul.mubr.f32.gmra.mrb[0].mxu0 %v7916
  %v8184 = vpop.f32.mrb[0].mxu0
  %v8185 = vadd.f32 0.0, %v8184
  %v8186 = vpop.f32.mrb[0].mxu0
  %8187 = vmatprep.mubr.f32.mxu0 0.0
  %8188 = vmatmul.mubr.f32.gmra.mrb[0].mxu0 %v7919
  %v8189 = vpop.f32.mrb[0].mxu0
  %v8190 = vadd.f32 0.0, %v8189
  %v8191 = vpop.f32.mrb[0].mxu0
  %8192 = vmatprep.mubr.f32.mxu0 0.0
  %8193 = vmatmul.mubr.f32.gmra.mrb[0].mxu0 %v7922
  %v8194 = vpop.f32.mrb[0].mxu0
  %v8195 = vadd.f32 0.0, %v8194
  %v8196 = vpop.f32.mrb[0].mxu0
  %8197 = vdwg.mxu0
  %8198 = vset.pattern.permute.xlu0 2
  %8199 = vperm.xlu0 %8198, %v7900
  %v8200 = vpop.permute.xlu0 %8199
  %8201 = vset.pattern.permute.xlu0 2
  %8202 = vperm.xlu0 %8201, %v7901
  %v8203 = vpop.permute.xlu0 %8202
  %8204 = vset.pattern.permute.xlu0 2
  %8205 = vperm.xlu0 %8204, %v7902
  %v8206 = vpop.permute.xlu0 %8205
  %8207 = vset.pattern.permute.xlu0 2
  %8208 = vperm.xlu0 %8207, %v7903
  %v8209 = vpop.permute.xlu0 %8208
  %v8210 = vrot.slane %v8200, 1
  %v8211 = vrot.slane %v8203, 1
  %v8212 = vsel %vm311, %v8210, %v8211
  %v8213 = vrot.slane %v8206, 1
  %v8214 = vsel %vm311, %v8211, %v8213
  %v8215 = vrot.slane %v8209, 1
  %v8216 = vsel %vm311, %v8213, %v8215
  %v8222 = vmul.f32 %v8195, %v8210
  %v8223 = vmul.f32 %v8180, %v8212
  %v8224 = vmul.f32 %v8185, %v8214
  %v8225 = vmul.f32 %v8190, %v8216
  %v8226 = vmul.f32 %v8195, %v8215
  %v8232 = vrot.slane %v8222, 4
  %v8233 = vrot.slane %v8223, 4
  %v8234 = vsel %vm5750, %v8232, %v8233
  %v8235 = vrot.slane %v8224, 4
  %v8236 = vsel %vm5750, %v8233, %v8235
  %v8237 = vrot.slane %v8225, 4
  %v8238 = vsel %vm5750, %v8235, %v8237
  %v8239 = vrot.slane %v8226, 4
  %v8240 = vsel %vm5750, %v8237, %v8239
  %v8246 = vadd.f32 %v8100, %v8234
  %v8247 = vadd.f32 %v8101, %v8236
  %v8248 = vadd.f32 %v8102, %v8238
  %v8249 = vadd.f32 %v8103, %v8240
  %v8250 = vadd.f32 %v8104, %v8239
  %8251 = vset.pattern.permute.xlu0 3
  %8252 = vperm.xlu0 %8251, %v7900
  %v8253 = vpop.permute.xlu0 %8252
  %8255 = vset.pattern.permute.xlu0 3
  %8256 = vperm.xlu0 %8255, %v7901
  %v8257 = vpop.permute.xlu0 %8256
  %8259 = vset.pattern.permute.xlu0 3
  %8260 = vperm.xlu0 %8259, %v7902
  %v8261 = vpop.permute.xlu0 %8260
  %8263 = vset.pattern.permute.xlu0 3
  %8264 = vperm.xlu0 %8263, %v7903
  %v8265 = vpop.permute.xlu0 %8264
  %v8267 = vmul.f32 %v8180, %v8253
  %v8268 = vmul.f32 %v8185, %v8257
  %v8269 = vmul.f32 %v8190, %v8261
  %v8270 = vmul.f32 %v8195, %v8265
  %v8275 = vrot.slane %v8267, 5
  %v8276 = vrot.slane %v8268, 5
  %v8277 = vsel %vm5720, %v8275, %v8276
  %v8278 = vrot.slane %v8269, 5
  %v8279 = vsel %vm5720, %v8276, %v8278
  %v8280 = vrot.slane %v8270, 5
  %v8281 = vsel %vm5720, %v8278, %v8280
  %8282 = vrot.lane.b32.xlu0 %v8275, 64
  %v8283 = vpop.permute.xlu0 %8282
  %8284 = vrot.lane.b32.xlu0 %v8277, 64
  %v8285 = vpop.permute.xlu0 %8284
  %8286 = vrot.lane.b32.xlu0 %v8279, 64
  %v8287 = vpop.permute.xlu0 %8286
  %8288 = vrot.lane.b32.xlu0 %v8281, 64
  %v8289 = vpop.permute.xlu0 %8288
  %8290 = vrot.lane.b32.xlu0 %v8280, 64
  %v8291 = vpop.permute.xlu0 %8290
  %v8297 = vadd.f32 %v8246, %v8283
  %v8298 = vadd.f32 %v8247, %v8285
  %v8299 = vadd.f32 %v8248, %v8287
  %v8300 = vadd.f32 %v8249, %v8289
  %v8301 = vadd.f32 %v8250, %v8291
  %v8302 = vld [vmem:[%s2 + $0x6] sm:$0x1]
  %v8303 = vlaneseq
  %v8304 = vshrl.u32 %v8303, 7
  %v8305 = vsub.s32 0, %v8304
  %v8306 = vrot.slane %v8302, %v8305
  %v8307 = vadd.f32 %v8297, %v8306
  %v8308 = vadd.f32 %v8298, %v8306
  %v8309 = vadd.f32 %v8299, %v8306
  %v8310 = vadd.f32 %v8300, %v8306
  %v8311 = vadd.f32 %v8301, %v8306
  %v8312 = vmax.f32 %v8307, 0.0
  %v8313 = vmax.f32 %v8308, 0.0
  %v8314 = vmax.f32 %v8309, 0.0
  %v8315 = vmax.f32 %v8310, 0.0
  %v8316 = vmax.f32 %v8311, 0.0
  %v8317 = vld [vmem:[%s3 + $0xc0] sm:$0xff]
  %v8318 = vld [vmem:[%s3 + $0xc8] sm:$0xff]
  %v8319 = vld [vmem:[%s3 + $0xd0] sm:$0xff]
  %v8320 = vld [vmem:[%s3 + $0xd8] sm:$0xff]
  %v8321 = vld [vmem:[%s1 + $0x3e8] sm:$0xff]
  %v8322 = vld [vmem:[%s1 + $0x410] sm:$0xff]
  %v8323 = vld [vmem:[%s1 + $0x438] sm:$0xff]
  %v8324 = vld [vmem:[%s1 + $0x460] sm:$0xff]
  %v8325 = vld [vmem:[%s1 + $0x488] sm:$0xff]
  %v8326 = vld [vmem:[%s1 + $0x4b0] sm:$0xff]
  %v8327 = vld [vmem:[%s1 + $0x4d8] sm:$0xff]
  %v8328 = vld [vmem:[%s1 + $0x500] sm:$0xff]
  %v8334 = vrot.slane %v8312, 3
  %v8335 = vrot.slane %v8313, 3
  %v8336 = vsel %vm5814, %v8334, %v8335
  %v8337 = vrot.slane %v8314, 3
  %v8338 = vsel %vm5814, %v8335, %v8337
  %v8339 = vrot.slane %v8315, 3
  %v8340 = vsel %vm5814, %v8337, %v8339
  %v8341 = vrot.slane %v8316, 3
  %v8342 = vsel %vm5814, %v8339, %v8341
  %v8343 = vsel %vm4724, %v8336, 0
  %v8345 = vsel %vm4724, %v8338, 0
  %v8347 = vsel %vm4724, %v8340, 0
  %v8349 = vsel %vm4724, %v8342, 0
  %8351 = vmatprep.subr.mxu0 0.0
  %8352 = vmatpush1.msra.mxu0 %v8321
  %8353 = vmatprep.subr.mxu0 0.0
  %8354 = vmatpush1.msra.mxu0 %v8322
  %8355 = vmatprep.subr.mxu0 0.0
  %8356 = vmatpush1.msra.mxu0 %v8323
  %8357 = vmatprep.subr.mxu0 0.0
  %8358 = vmatpush1.msra.mxu0 %v8324
  %8359 = vmatprep.subr.mxu0 0.0
  %8360 = vmatpush1.msra.mxu0 %v8325
  %8361 = vmatprep.subr.mxu0 0.0
  %8362 = vmatpush1.msra.mxu0 %v8326
  %8363 = vmatprep.subr.mxu0 0.0
  %8364 = vmatpush1.msra.mxu0 %v8327
  %8365 = vmatprep.subr.mxu0 0.0
  %8366 = vmatpush1.msra.mxu0 %v8328
  %8367 = vmatprep.subr.mxu0 0.0
  %8368 = vmatpush1.msra.mxu0 0.0
  %8369 = vmatprep.subr.mxu0 0.0
  %8370 = vmatpush1.msra.mxu0 0.0
  %8371 = vmatprep.subr.mxu0 0.0
  %8372 = vmatpush1.msra.mxu0 0.0
  %8373 = vmatprep.subr.mxu0 0.0
  %8374 = vmatpush1.msra.mxu0 0.0
  %8375 = vmatprep.subr.mxu0 0.0
  %8376 = vmatpush1.msra.mxu0 0.0
  %8377 = vmatprep.subr.mxu0 0.0
  %8378 = vmatpush1.msra.mxu0 0.0
  %8379 = vmatprep.subr.mxu0 0.0
  %8380 = vmatpush1.msra.mxu0 0.0
  %8381 = vmatprep.subr.mxu0 0.0
  %8382 = vmatpush1.msra.mxu0 0.0
  %8383 = vmatprep.subr.mxu0 0.0
  %8384 = vmatpush1.msra.mxu0 0.0
  %8385 = vmatprep.subr.mxu0 0.0
  %8386 = vmatpush1.msra.mxu0 0.0
  %8387 = vmatprep.subr.mxu0 0.0
  %8388 = vmatpush1.msra.mxu0 0.0
  %8389 = vmatprep.subr.mxu0 0.0
  %8390 = vmatpush1.msra.mxu0 0.0
  %8391 = vmatprep.subr.mxu0 0.0
  %8392 = vmatpush1.msra.mxu0 0.0
  %8393 = vmatprep.subr.mxu0 0.0
  %8394 = vmatpush1.msra.mxu0 0.0
  %8395 = vmatprep.subr.mxu0 0.0
  %8396 = vmatpush1.msra.mxu0 0.0
  %8397 = vmatprep.subr.mxu0 0.0
  %8398 = vmatpush1.msra.mxu0 0.0
  %8399 = vmatprep.subr.mxu0 0.0
  %8400 = vmatpush1.msra.mxu0 0.0
  %8401 = vmatprep.subr.mxu0 0.0
  %8402 = vmatpush1.msra.mxu0 0.0
  %8403 = vmatprep.subr.mxu0 0.0
  %8404 = vmatpush1.msra.mxu0 0.0
  %8405 = vmatprep.subr.mxu0 0.0
  %8406 = vmatpush1.msra.mxu0 0.0
  %8407 = vmatprep.subr.mxu0 0.0
  %8408 = vmatpush1.msra.mxu0 0.0
  %8409 = vmatprep.subr.mxu0 0.0
  %8410 = vmatpush1.msra.mxu0 0.0
  %8411 = vmatprep.subr.mxu0 0.0
  %8412 = vmatpush1.msra.mxu0 0.0
  %8413 = vmatprep.subr.mxu0 0.0
  %8414 = vmatpush1.msra.mxu0 0.0
  %8415 = vmatprep.mubr.f32.mxu0 0.0
  %8416 = vmatmul.mubr.f32.gmra.mrb[0].mxu0 %v8343
  %v8417 = vpop.f32.mrb[0].mxu0
  %v8418 = vadd.f32 0.0, %v8417
  %v8419 = vpop.f32.mrb[0].mxu0
  %8420 = vmatprep.mubr.f32.mxu0 0.0
  %8421 = vmatmul.mubr.f32.gmra.mrb[0].mxu0 %v8345
  %v8422 = vpop.f32.mrb[0].mxu0
  %v8423 = vadd.f32 0.0, %v8422
  %v8424 = vpop.f32.mrb[0].mxu0
  %8425 = vmatprep.mubr.f32.mxu0 0.0
  %8426 = vmatmul.mubr.f32.gmra.mrb[0].mxu0 %v8347
  %v8427 = vpop.f32.mrb[0].mxu0
  %v8428 = vadd.f32 0.0, %v8427
  %v8429 = vpop.f32.mrb[0].mxu0
  %8430 = vmatprep.mubr.f32.mxu0 0.0
  %8431 = vmatmul.mubr.f32.gmra.mrb[0].mxu0 %v8349
  %v8432 = vpop.f32.mrb[0].mxu0
  %v8433 = vadd.f32 0.0, %v8432
  %v8434 = vpop.f32.mrb[0].mxu0
  %8435 = vdwg.mxu0
  %8437 = vset.pattern.permute.xlu0 0
  %8438 = vperm.xlu0 %8437, %v8317
  %v8439 = vpop.permute.xlu0 %8438
  %8441 = vset.pattern.permute.xlu0 0
  %8442 = vperm.xlu0 %8441, %v8318
  %v8443 = vpop.permute.xlu0 %8442
  %8445 = vset.pattern.permute.xlu0 0
  %8446 = vperm.xlu0 %8445, %v8319
  %v8447 = vpop.permute.xlu0 %8446
  %8449 = vset.pattern.permute.xlu0 0
  %8450 = vperm.xlu0 %8449, %v8320
  %v8451 = vpop.permute.xlu0 %8450
  %v8452 = vrot.slane %v8439, 5
  %v8453 = vrot.slane %v8443, 5
  %v8454 = vsel %vm5720, %v8452, %v8453
  %v8455 = vrot.slane %v8447, 5
  %v8456 = vsel %vm5720, %v8453, %v8455
  %v8457 = vrot.slane %v8451, 5
  %v8458 = vsel %vm5720, %v8455, %v8457
  %v8464 = vmul.f32 %v8433, %v8452
  %v8465 = vmul.f32 %v8418, %v8454
  %v8466 = vmul.f32 %v8423, %v8456
  %v8467 = vmul.f32 %v8428, %v8458
  %v8468 = vmul.f32 %v8433, %v8457
  %8469 = vset.pattern.permute.xlu0 1
  %8470 = vperm.xlu0 %8469, %v8317
  %v8471 = vpop.permute.xlu0 %8470
  %8472 = vset.pattern.permute.xlu0 1
  %8473 = vperm.xlu0 %8472, %v8318
  %v8474 = vpop.permute.xlu0 %8473
  %8475 = vset.pattern.permute.xlu0 1
  %8476 = vperm.xlu0 %8475, %v8319
  %v8477 = vpop.permute.xlu0 %8476
  %8478 = vset.pattern.permute.xlu0 1
  %8479 = vperm.xlu0 %8478, %v8320
  %v8480 = vpop.permute.xlu0 %8479
  %v8481 = vrot.slane %v8471, 4
  %v8482 = vrot.slane %v8474, 4
  %v8483 = vsel %vm5750, %v8481, %v8482
  %v8484 = vrot.slane %v8477, 4
  %v8485 = vsel %vm5750, %v8482, %v8484
  %v8486 = vrot.slane %v8480, 4
  %v8487 = vsel %vm5750, %v8484, %v8486
  %v8493 = vmul.f32 %v8433, %v8481
  %v8494 = vmul.f32 %v8418, %v8483
  %v8495 = vmul.f32 %v8423, %v8485
  %v8496 = vmul.f32 %v8428, %v8487
  %v8497 = vmul.f32 %v8433, %v8486
  %v8503 = vrot.slane %v8493, 1
  %v8504 = vrot.slane %v8494, 1
  %v8505 = vsel %vm311, %v8503, %v8504
  %v8506 = vrot.slane %v8495, 1
  %v8507 = vsel %vm311, %v8504, %v8506
  %v8508 = vrot.slane %v8496, 1
  %v8509 = vsel %vm311, %v8506, %v8508
  %v8510 = vrot.slane %v8497, 1
  %v8511 = vsel %vm311, %v8508, %v8510
  %8512 = vrot.lane.b32.xlu0 %v8505, 64
  %v8513 = vpop.permute.xlu0 %8512
  %8514 = vrot.lane.b32.xlu0 %v8507, 64
  %v8515 = vpop.permute.xlu0 %8514
  %8516 = vrot.lane.b32.xlu0 %v8509, 64
  %v8517 = vpop.permute.xlu0 %8516
  %8518 = vrot.lane.b32.xlu0 %v8511, 64
  %v8519 = vpop.permute.xlu0 %8518
  %8520 = vrot.lane.b32.xlu0 %v8510, 64
  %v8521 = vpop.permute.xlu0 %8520
  %v8527 = vadd.f32 %v8464, %v8513
  %v8528 = vadd.f32 %v8465, %v8515
  %v8529 = vadd.f32 %v8466, %v8517
  %v8530 = vadd.f32 %v8467, %v8519
  %v8531 = vadd.f32 %v8468, %v8521
  %v8532 = vld [vmem:[%s1 + $0x3f0] sm:$0xff]
  %v8533 = vld [vmem:[%s1 + $0x418] sm:$0xff]
  %v8534 = vld [vmem:[%s1 + $0x440] sm:$0xff]
  %v8535 = vld [vmem:[%s1 + $0x468] sm:$0xff]
  %v8536 = vld [vmem:[%s1 + $0x490] sm:$0xff]
  %v8537 = vld [vmem:[%s1 + $0x4b8] sm:$0xff]
  %v8538 = vld [vmem:[%s1 + $0x4e0] sm:$0xff]
  %v8539 = vld [vmem:[%s1 + $0x508] sm:$0xff]
  %8540 = vmatprep.subr.mxu0 0.0
  %8541 = vmatpush1.msra.mxu0 %v8532
  %8542 = vmatprep.subr.mxu0 0.0
  %8543 = vmatpush1.msra.mxu0 %v8533
  %8544 = vmatprep.subr.mxu0 0.0
  %8545 = vmatpush1.msra.mxu0 %v8534
  %8546 = vmatprep.subr.mxu0 0.0
  %8547 = vmatpush1.msra.mxu0 %v8535
  %8548 = vmatprep.subr.mxu0 0.0
  %8549 = vmatpush1.msra.mxu0 %v8536
  %8550 = vmatprep.subr.mxu0 0.0
  %8551 = vmatpush1.msra.mxu0 %v8537
  %8552 = vmatprep.subr.mxu0 0.0
  %8553 = vmatpush1.msra.mxu0 %v8538
  %8554 = vmatprep.subr.mxu0 0.0
  %8555 = vmatpush1.msra.mxu0 %v8539
  %8556 = vmatprep.subr.mxu0 0.0
  %8557 = vmatpush1.msra.mxu0 0.0
  %8558 = vmatprep.subr.mxu0 0.0
  %8559 = vmatpush1.msra.mxu0 0.0
  %8560 = vmatprep.subr.mxu0 0.0
  %8561 = vmatpush1.msra.mxu0 0.0
  %8562 = vmatprep.subr.mxu0 0.0
  %8563 = vmatpush1.msra.mxu0 0.0
  %8564 = vmatprep.subr.mxu0 0.0
  %8565 = vmatpush1.msra.mxu0 0.0
  %8566 = vmatprep.subr.mxu0 0.0
  %8567 = vmatpush1.msra.mxu0 0.0
  %8568 = vmatprep.subr.mxu0 0.0
  %8569 = vmatpush1.msra.mxu0 0.0
  %8570 = vmatprep.subr.mxu0 0.0
  %8571 = vmatpush1.msra.mxu0 0.0
  %8572 = vmatprep.subr.mxu0 0.0
  %8573 = vmatpush1.msra.mxu0 0.0
  %8574 = vmatprep.subr.mxu0 0.0
  %8575 = vmatpush1.msra.mxu0 0.0
  %8576 = vmatprep.subr.mxu0 0.0
  %8577 = vmatpush1.msra.mxu0 0.0
  %8578 = vmatprep.subr.mxu0 0.0
  %8579 = vmatpush1.msra.mxu0 0.0
  %8580 = vmatprep.subr.mxu0 0.0
  %8581 = vmatpush1.msra.mxu0 0.0
  %8582 = vmatprep.subr.mxu0 0.0
  %8583 = vmatpush1.msra.mxu0 0.0
  %8584 = vmatprep.subr.mxu0 0.0
  %8585 = vmatpush1.msra.mxu0 0.0
  %8586 = vmatprep.subr.mxu0 0.0
  %8587 = vmatpush1.msra.mxu0 0.0
  %8588 = vmatprep.subr.mxu0 0.0
  %8589 = vmatpush1.msra.mxu0 0.0
  %8590 = vmatprep.subr.mxu0 0.0
  %8591 = vmatpush1.msra.mxu0 0.0
  %8592 = vmatprep.subr.mxu0 0.0
  %8593 = vmatpush1.msra.mxu0 0.0
  %8594 = vmatprep.subr.mxu0 0.0
  %8595 = vmatpush1.msra.mxu0 0.0
  %8596 = vmatprep.subr.mxu0 0.0
  %8597 = vmatpush1.msra.mxu0 0.0
  %8598 = vmatprep.subr.mxu0 0.0
  %8599 = vmatpush1.msra.mxu0 0.0
  %8600 = vmatprep.subr.mxu0 0.0
  %8601 = vmatpush1.msra.mxu0 0.0
  %8602 = vmatprep.subr.mxu0 0.0
  %8603 = vmatpush1.msra.mxu0 0.0
  %8604 = vmatprep.mubr.f32.mxu0 0.0
  %8605 = vmatmul.mubr.f32.gmra.mrb[0].mxu0 %v8343
  %v8606 = vpop.f32.mrb[0].mxu0
  %v8607 = vadd.f32 0.0, %v8606
  %v8608 = vpop.f32.mrb[0].mxu0
  %8609 = vmatprep.mubr.f32.mxu0 0.0
  %8610 = vmatmul.mubr.f32.gmra.mrb[0].mxu0 %v8345
  %v8611 = vpop.f32.mrb[0].mxu0
  %v8612 = vadd.f32 0.0, %v8611
  %v8613 = vpop.f32.mrb[0].mxu0
  %8614 = vmatprep.mubr.f32.mxu0 0.0
  %8615 = vmatmul.mubr.f32.gmra.mrb[0].mxu0 %v8347
  %v8616 = vpop.f32.mrb[0].mxu0
  %v8617 = vadd.f32 0.0, %v8616
  %v8618 = vpop.f32.mrb[0].mxu0
  %8619 = vmatprep.mubr.f32.mxu0 0.0
  %8620 = vmatmul.mubr.f32.gmra.mrb[0].mxu0 %v8349
  %v8621 = vpop.f32.mrb[0].mxu0
  %v8622 = vadd.f32 0.0, %v8621
  %v8623 = vpop.f32.mrb[0].mxu0
  %8624 = vdwg.mxu0
  %8625 = vset.pattern.permute.xlu0 2
  %8626 = vperm.xlu0 %8625, %v8317
  %v8627 = vpop.permute.xlu0 %8626
  %8628 = vset.pattern.permute.xlu0 2
  %8629 = vperm.xlu0 %8628, %v8318
  %v8630 = vpop.permute.xlu0 %8629
  %8631 = vset.pattern.permute.xlu0 2
  %8632 = vperm.xlu0 %8631, %v8319
  %v8633 = vpop.permute.xlu0 %8632
  %8634 = vset.pattern.permute.xlu0 2
  %8635 = vperm.xlu0 %8634, %v8320
  %v8636 = vpop.permute.xlu0 %8635
  %v8637 = vrot.slane %v8627, 1
  %v8638 = vrot.slane %v8630, 1
  %v8639 = vsel %vm311, %v8637, %v8638
  %v8640 = vrot.slane %v8633, 1
  %v8641 = vsel %vm311, %v8638, %v8640
  %v8642 = vrot.slane %v8636, 1
  %v8643 = vsel %vm311, %v8640, %v8642
  %v8649 = vmul.f32 %v8622, %v8637
  %v8650 = vmul.f32 %v8607, %v8639
  %v8651 = vmul.f32 %v8612, %v8641
  %v8652 = vmul.f32 %v8617, %v8643
  %v8653 = vmul.f32 %v8622, %v8642
  %v8659 = vrot.slane %v8649, 4
  %v8660 = vrot.slane %v8650, 4
  %v8661 = vsel %vm5750, %v8659, %v8660
  %v8662 = vrot.slane %v8651, 4
  %v8663 = vsel %vm5750, %v8660, %v8662
  %v8664 = vrot.slane %v8652, 4
  %v8665 = vsel %vm5750, %v8662, %v8664
  %v8666 = vrot.slane %v8653, 4
  %v8667 = vsel %vm5750, %v8664, %v8666
  %v8673 = vadd.f32 %v8527, %v8661
  %v8674 = vadd.f32 %v8528, %v8663
  %v8675 = vadd.f32 %v8529, %v8665
  %v8676 = vadd.f32 %v8530, %v8667
  %v8677 = vadd.f32 %v8531, %v8666
  %8678 = vset.pattern.permute.xlu0 3
  %8679 = vperm.xlu0 %8678, %v8317
  %v8680 = vpop.permute.xlu0 %8679
  %8682 = vset.pattern.permute.xlu0 3
  %8683 = vperm.xlu0 %8682, %v8318
  %v8684 = vpop.permute.xlu0 %8683
  %8686 = vset.pattern.permute.xlu0 3
  %8687 = vperm.xlu0 %8686, %v8319
  %v8688 = vpop.permute.xlu0 %8687
  %8690 = vset.pattern.permute.xlu0 3
  %8691 = vperm.xlu0 %8690, %v8320
  %v8692 = vpop.permute.xlu0 %8691
  %v8694 = vmul.f32 %v8607, %v8680
  %v8695 = vmul.f32 %v8612, %v8684
  %v8696 = vmul.f32 %v8617, %v8688
  %v8697 = vmul.f32 %v8622, %v8692
  %v8702 = vrot.slane %v8694, 5
  %v8703 = vrot.slane %v8695, 5
  %v8704 = vsel %vm5720, %v8702, %v8703
  %v8705 = vrot.slane %v8696, 5
  %v8706 = vsel %vm5720, %v8703, %v8705
  %v8707 = vrot.slane %v8697, 5
  %v8708 = vsel %vm5720, %v8705, %v8707
  %8709 = vrot.lane.b32.xlu0 %v8702, 64
  %v8710 = vpop.permute.xlu0 %8709
  %8711 = vrot.lane.b32.xlu0 %v8704, 64
  %v8712 = vpop.permute.xlu0 %8711
  %8713 = vrot.lane.b32.xlu0 %v8706, 64
  %v8714 = vpop.permute.xlu0 %8713
  %8715 = vrot.lane.b32.xlu0 %v8708, 64
  %v8716 = vpop.permute.xlu0 %8715
  %8717 = vrot.lane.b32.xlu0 %v8707, 64
  %v8718 = vpop.permute.xlu0 %8717
  %v8724 = vadd.f32 %v8673, %v8710
  %v8725 = vadd.f32 %v8674, %v8712
  %v8726 = vadd.f32 %v8675, %v8714
  %v8727 = vadd.f32 %v8676, %v8716
  %v8728 = vadd.f32 %v8677, %v8718
  %v8729 = vld [vmem:[%s2 + $0x7] sm:$0x1]
  %v8730 = vlaneseq
  %v8731 = vshrl.u32 %v8730, 7
  %v8732 = vsub.s32 0, %v8731
  %v8733 = vrot.slane %v8729, %v8732
  %v8734 = vadd.f32 %v8724, %v8733
  %v8735 = vadd.f32 %v8725, %v8733
  %v8736 = vadd.f32 %v8726, %v8733
  %v8737 = vadd.f32 %v8727, %v8733
  %v8738 = vadd.f32 %v8728, %v8733
  %v8739 = vmax.f32 %v8734, 0.0
  %v8740 = vmax.f32 %v8735, 0.0
  %v8741 = vmax.f32 %v8736, 0.0
  %v8742 = vmax.f32 %v8737, 0.0
  %v8743 = vmax.f32 %v8738, 0.0
  %v8744 = vld [vmem:[%s3 + $0xe0] sm:$0xff]
  %v8745 = vld [vmem:[%s3 + $0xe8] sm:$0xff]
  %v8746 = vld [vmem:[%s3 + $0xf0] sm:$0xff]
  %v8747 = vld [vmem:[%s3 + $0xf8] sm:$0xff]
  %v8748 = vld [vmem:[%s1 + $0x528] sm:$0xff]
  %v8749 = vld [vmem:[%s1 + $0x530] sm:$0xff]
  %v8750 = vld [vmem:[%s1 + $0x550] sm:$0xff]
  %v8751 = vld [vmem:[%s1 + $0x558] sm:$0xff]
  %v8752 = vld [vmem:[%s1 + $0x578] sm:$0xff]
  %v8753 = vld [vmem:[%s1 + $0x580] sm:$0xff]
  %v8754 = vld [vmem:[%s1 + $0x5a0] sm:$0xff]
  %v8755 = vld [vmem:[%s1 + $0x5a8] sm:$0xff]
  %v8756 = vld [vmem:[%s1 + $0x5c8] sm:$0xff]
  %v8757 = vld [vmem:[%s1 + $0x5d0] sm:$0xff]
  %v8758 = vld [vmem:[%s1 + $0x5f0] sm:$0xff]
  %v8759 = vld [vmem:[%s1 + $0x5f8] sm:$0xff]
  %v8760 = vld [vmem:[%s1 + $0x618] sm:$0xff]
  %v8761 = vld [vmem:[%s1 + $0x620] sm:$0xff]
  %v8762 = vld [vmem:[%s1 + $0x640] sm:$0xff]
  %v8763 = vld [vmem:[%s1 + $0x648] sm:$0xff]
  %v8769 = vrot.slane %v8739, 3
  %v8770 = vrot.slane %v8740, 3
  %v8771 = vsel %vm5814, %v8769, %v8770
  %v8772 = vrot.slane %v8741, 3
  %v8773 = vsel %vm5814, %v8770, %v8772
  %v8774 = vrot.slane %v8742, 3
  %v8775 = vsel %vm5814, %v8772, %v8774
  %v8776 = vrot.slane %v8743, 3
  %v8777 = vsel %vm5814, %v8774, %v8776
  %v8778 = vsel %vm4724, %v8771, 0
  %v8780 = vsel %vm4724, %v8773, 0
  %v8782 = vsel %vm4724, %v8775, 0
  %v8784 = vsel %vm4724, %v8777, 0
  %8786 = vmatprep.subr.mxu0 %v8749
  %8787 = vmatpush1.msra.mxu0 %v8748
  %8788 = vmatprep.subr.mxu0 %v8751
  %8789 = vmatpush1.msra.mxu0 %v8750
  %8790 = vmatprep.subr.mxu0 %v8753
  %8791 = vmatpush1.msra.mxu0 %v8752
  %8792 = vmatprep.subr.mxu0 %v8755
  %8793 = vmatpush1.msra.mxu0 %v8754
  %8794 = vmatprep.subr.mxu0 %v8757
  %8795 = vmatpush1.msra.mxu0 %v8756
  %8796 = vmatprep.subr.mxu0 %v8759
  %8797 = vmatpush1.msra.mxu0 %v8758
  %8798 = vmatprep.subr.mxu0 %v8761
  %8799 = vmatpush1.msra.mxu0 %v8760
  %8800 = vmatprep.subr.mxu0 %v8763
  %8801 = vmatpush1.msra.mxu0 %v8762
  %8802 = vmatprep.subr.mxu0 0.0
  %8803 = vmatpush1.msra.mxu0 0.0
  %8804 = vmatprep.subr.mxu0 0.0
  %8805 = vmatpush1.msra.mxu0 0.0
  %8806 = vmatprep.subr.mxu0 0.0
  %8807 = vmatpush1.msra.mxu0 0.0
  %8808 = vmatprep.subr.mxu0 0.0
  %8809 = vmatpush1.msra.mxu0 0.0
  %8810 = vmatprep.subr.mxu0 0.0
  %8811 = vmatpush1.msra.mxu0 0.0
  %8812 = vmatprep.subr.mxu0 0.0
  %8813 = vmatpush1.msra.mxu0 0.0
  %8814 = vmatprep.subr.mxu0 0.0
  %8815 = vmatpush1.msra.mxu0 0.0
  %8816 = vmatprep.subr.mxu0 0.0
  %8817 = vmatpush1.msra.mxu0 0.0
  %8818 = vmatprep.subr.mxu0 0.0
  %8819 = vmatpush1.msra.mxu0 0.0
  %8820 = vmatprep.subr.mxu0 0.0
  %8821 = vmatpush1.msra.mxu0 0.0
  %8822 = vmatprep.subr.mxu0 0.0
  %8823 = vmatpush1.msra.mxu0 0.0
  %8824 = vmatprep.subr.mxu0 0.0
  %8825 = vmatpush1.msra.mxu0 0.0
  %8826 = vmatprep.subr.mxu0 0.0
  %8827 = vmatpush1.msra.mxu0 0.0
  %8828 = vmatprep.subr.mxu0 0.0
  %8829 = vmatpush1.msra.mxu0 0.0
  %8830 = vmatprep.subr.mxu0 0.0
  %8831 = vmatpush1.msra.mxu0 0.0
  %8832 = vmatprep.subr.mxu0 0.0
  %8833 = vmatpush1.msra.mxu0 0.0
  %8834 = vmatprep.subr.mxu0 0.0
  %8835 = vmatpush1.msra.mxu0 0.0
  %8836 = vmatprep.subr.mxu0 0.0
  %8837 = vmatpush1.msra.mxu0 0.0
  %8838 = vmatprep.subr.mxu0 0.0
  %8839 = vmatpush1.msra.mxu0 0.0
  %8840 = vmatprep.subr.mxu0 0.0
  %8841 = vmatpush1.msra.mxu0 0.0
  %8842 = vmatprep.subr.mxu0 0.0
  %8843 = vmatpush1.msra.mxu0 0.0
  %8844 = vmatprep.subr.mxu0 0.0
  %8845 = vmatpush1.msra.mxu0 0.0
  %8846 = vmatprep.subr.mxu0 0.0
  %8847 = vmatpush1.msra.mxu0 0.0
  %8848 = vmatprep.subr.mxu0 0.0
  %8849 = vmatpush1.msra.mxu0 0.0
  %8850 = vmatprep.mubr.f32.mxu0 0.0
  %8851 = vmatmul.mubr.f32.gmra.mrb[0].mxu0 %v8778
  %v8852 = vpop.f32.mrb[0].mxu0
  %v8853 = vadd.f32 0.0, %v8852
  %v8854 = vpop.f32.mrb[0].mxu0
  %v8855 = vadd.f32 0.0, %v8854
  %8856 = vmatprep.mubr.f32.mxu0 0.0
  %8857 = vmatmul.mubr.f32.gmra.mrb[0].mxu0 %v8780
  %v8858 = vpop.f32.mrb[0].mxu0
  %v8859 = vadd.f32 0.0, %v8858
  %v8860 = vpop.f32.mrb[0].mxu0
  %v8861 = vadd.f32 0.0, %v8860
  %8862 = vmatprep.mubr.f32.mxu0 0.0
  %8863 = vmatmul.mubr.f32.gmra.mrb[0].mxu0 %v8782
  %v8864 = vpop.f32.mrb[0].mxu0
  %v8865 = vadd.f32 0.0, %v8864
  %v8866 = vpop.f32.mrb[0].mxu0
  %v8867 = vadd.f32 0.0, %v8866
  %8868 = vmatprep.mubr.f32.mxu0 0.0
  %8869 = vmatmul.mubr.f32.gmra.mrb[0].mxu0 %v8784
  %v8870 = vpop.f32.mrb[0].mxu0
  %v8871 = vadd.f32 0.0, %v8870
  %v8872 = vpop.f32.mrb[0].mxu0
  %v8873 = vadd.f32 0.0, %v8872
  %8874 = vdwg.mxu0
  %8876 = vset.pattern.permute.xlu0 0
  %8877 = vperm.xlu0 %8876, %v8744
  %v8878 = vpop.permute.xlu0 %8877
  %8881 = vset.pattern.permute.xlu0 0
  %8882 = vperm.xlu0 %8881, %v8745
  %v8883 = vpop.permute.xlu0 %8882
  %8886 = vset.pattern.permute.xlu0 0
  %8887 = vperm.xlu0 %8886, %v8746
  %v8888 = vpop.permute.xlu0 %8887
  %8891 = vset.pattern.permute.xlu0 0
  %8892 = vperm.xlu0 %8891, %v8747
  %v8893 = vpop.permute.xlu0 %8892
  %v8895 = vmul.f32 %v8853, %v8878
  %v8896 = vmul.f32 %v8859, %v8883
  %v8897 = vmul.f32 %v8865, %v8888
  %v8898 = vmul.f32 %v8871, %v8893
  %8899 = vset.pattern.permute.xlu0 1
  %8900 = vperm.xlu0 %8899, %v8744
  %v8901 = vpop.permute.xlu0 %8900
  %8902 = vset.pattern.permute.xlu0 1
  %8903 = vperm.xlu0 %8902, %v8745
  %v8904 = vpop.permute.xlu0 %8903
  %8905 = vset.pattern.permute.xlu0 1
  %8906 = vperm.xlu0 %8905, %v8746
  %v8907 = vpop.permute.xlu0 %8906
  %8908 = vset.pattern.permute.xlu0 1
  %8909 = vperm.xlu0 %8908, %v8747
  %v8910 = vpop.permute.xlu0 %8909
  %v8911 = vrot.slane %v8901, 7
  %v8912 = vrot.slane %v8904, 7
  %v8913 = vsel %vm620, %v8911, %v8912
  %v8914 = vrot.slane %v8907, 7
  %v8915 = vsel %vm620, %v8912, %v8914
  %v8916 = vrot.slane %v8910, 7
  %v8917 = vsel %vm620, %v8914, %v8916
  %v8923 = vmul.f32 %v8855, %v8911
  %v8924 = vmul.f32 %v8861, %v8913
  %v8925 = vmul.f32 %v8867, %v8915
  %v8926 = vmul.f32 %v8873, %v8917
  %v8927 = vmul.f32 %v8855, %v8916
  %v8933 = vrot.slane %v8923, 1
  %v8934 = vrot.slane %v8924, 1
  %v8935 = vsel %vm311, %v8933, %v8934
  %v8936 = vrot.slane %v8925, 1
  %v8937 = vsel %vm311, %v8934, %v8936
  %v8938 = vrot.slane %v8926, 1
  %v8939 = vsel %vm311, %v8936, %v8938
  %v8940 = vrot.slane %v8927, 1
  %v8941 = vsel %vm311, %v8938, %v8940
  %v8946 = vadd.f32 %v8895, %v8935
  %v8947 = vadd.f32 %v8896, %v8937
  %v8948 = vadd.f32 %v8897, %v8939
  %v8949 = vadd.f32 %v8898, %v8941
  %v8950 = vld [vmem:[%s1 + $0x538] sm:$0xff]
  %v8951 = vld [vmem:[%s1 + $0x540] sm:$0xff]
  %v8952 = vld [vmem:[%s1 + $0x560] sm:$0xff]
  %v8953 = vld [vmem:[%s1 + $0x568] sm:$0xff]
  %v8954 = vld [vmem:[%s1 + $0x588] sm:$0xff]
  %v8955 = vld [vmem:[%s1 + $0x590] sm:$0xff]
  %v8956 = vld [vmem:[%s1 + $0x5b0] sm:$0xff]
  %v8957 = vld [vmem:[%s1 + $0x5b8] sm:$0xff]
  %v8958 = vld [vmem:[%s1 + $0x5d8] sm:$0xff]
  %v8959 = vld [vmem:[%s1 + $0x5e0] sm:$0xff]
  %v8960 = vld [vmem:[%s1 + $0x600] sm:$0xff]
  %v8961 = vld [vmem:[%s1 + $0x608] sm:$0xff]
  %v8962 = vld [vmem:[%s1 + $0x628] sm:$0xff]
  %v8963 = vld [vmem:[%s1 + $0x630] sm:$0xff]
  %v8964 = vld [vmem:[%s1 + $0x650] sm:$0xff]
  %v8965 = vld [vmem:[%s1 + $0x658] sm:$0xff]
  %8966 = vmatprep.subr.mxu0 %v8951
  %8967 = vmatpush1.msra.mxu0 %v8950
  %8968 = vmatprep.subr.mxu0 %v8953
  %8969 = vmatpush1.msra.mxu0 %v8952
  %8970 = vmatprep.subr.mxu0 %v8955
  %8971 = vmatpush1.msra.mxu0 %v8954
  %8972 = vmatprep.subr.mxu0 %v8957
  %8973 = vmatpush1.msra.mxu0 %v8956
  %8974 = vmatprep.subr.mxu0 %v8959
  %8975 = vmatpush1.msra.mxu0 %v8958
  %8976 = vmatprep.subr.mxu0 %v8961
  %8977 = vmatpush1.msra.mxu0 %v8960
  %8978 = vmatprep.subr.mxu0 %v8963
  %8979 = vmatpush1.msra.mxu0 %v8962
  %8980 = vmatprep.subr.mxu0 %v8965
  %8981 = vmatpush1.msra.mxu0 %v8964
  %8982 = vmatprep.subr.mxu0 0.0
  %8983 = vmatpush1.msra.mxu0 0.0
  %8984 = vmatprep.subr.mxu0 0.0
  %8985 = vmatpush1.msra.mxu0 0.0
  %8986 = vmatprep.subr.mxu0 0.0
  %8987 = vmatpush1.msra.mxu0 0.0
  %8988 = vmatprep.subr.mxu0 0.0
  %8989 = vmatpush1.msra.mxu0 0.0
  %8990 = vmatprep.subr.mxu0 0.0
  %8991 = vmatpush1.msra.mxu0 0.0
  %8992 = vmatprep.subr.mxu0 0.0
  %8993 = vmatpush1.msra.mxu0 0.0
  %8994 = vmatprep.subr.mxu0 0.0
  %8995 = vmatpush1.msra.mxu0 0.0
  %8996 = vmatprep.subr.mxu0 0.0
  %8997 = vmatpush1.msra.mxu0 0.0
  %8998 = vmatprep.subr.mxu0 0.0
  %8999 = vmatpush1.msra.mxu0 0.0
  %9000 = vmatprep.subr.mxu0 0.0
  %9001 = vmatpush1.msra.mxu0 0.0
  %9002 = vmatprep.subr.mxu0 0.0
  %9003 = vmatpush1.msra.mxu0 0.0
  %9004 = vmatprep.subr.mxu0 0.0
  %9005 = vmatpush1.msra.mxu0 0.0
  %9006 = vmatprep.subr.mxu0 0.0
  %9007 = vmatpush1.msra.mxu0 0.0
  %9008 = vmatprep.subr.mxu0 0.0
  %9009 = vmatpush1.msra.mxu0 0.0
  %9010 = vmatprep.subr.mxu0 0.0
  %9011 = vmatpush1.msra.mxu0 0.0
  %9012 = vmatprep.subr.mxu0 0.0
  %9013 = vmatpush1.msra.mxu0 0.0
  %9014 = vmatprep.subr.mxu0 0.0
  %9015 = vmatpush1.msra.mxu0 0.0
  %9016 = vmatprep.subr.mxu0 0.0
  %9017 = vmatpush1.msra.mxu0 0.0
  %9018 = vmatprep.subr.mxu0 0.0
  %9019 = vmatpush1.msra.mxu0 0.0
  %9020 = vmatprep.subr.mxu0 0.0
  %9021 = vmatpush1.msra.mxu0 0.0
  %9022 = vmatprep.subr.mxu0 0.0
  %9023 = vmatpush1.msra.mxu0 0.0
  %9024 = vmatprep.subr.mxu0 0.0
  %9025 = vmatpush1.msra.mxu0 0.0
  %9026 = vmatprep.subr.mxu0 0.0
  %9027 = vmatpush1.msra.mxu0 0.0
  %9028 = vmatprep.subr.mxu0 0.0
  %9029 = vmatpush1.msra.mxu0 0.0
  %9030 = vmatprep.mubr.f32.mxu0 0.0
  %9031 = vmatmul.mubr.f32.gmra.mrb[0].mxu0 %v8778
  %v9032 = vpop.f32.mrb[0].mxu0
  %v9033 = vadd.f32 0.0, %v9032
  %v9034 = vpop.f32.mrb[0].mxu0
  %v9035 = vadd.f32 0.0, %v9034
  %9036 = vmatprep.mubr.f32.mxu0 0.0
  %9037 = vmatmul.mubr.f32.gmra.mrb[0].mxu0 %v8780
  %v9038 = vpop.f32.mrb[0].mxu0
  %v9039 = vadd.f32 0.0, %v9038
  %v9040 = vpop.f32.mrb[0].mxu0
  %v9041 = vadd.f32 0.0, %v9040
  %9042 = vmatprep.mubr.f32.mxu0 0.0
  %9043 = vmatmul.mubr.f32.gmra.mrb[0].mxu0 %v8782
  %v9044 = vpop.f32.mrb[0].mxu0
  %v9045 = vadd.f32 0.0, %v9044
  %v9046 = vpop.f32.mrb[0].mxu0
  %v9047 = vadd.f32 0.0, %v9046
  %9048 = vmatprep.mubr.f32.mxu0 0.0
  %9049 = vmatmul.mubr.f32.gmra.mrb[0].mxu0 %v8784
  %v9050 = vpop.f32.mrb[0].mxu0
  %v9051 = vadd.f32 0.0, %v9050
  %v9052 = vpop.f32.mrb[0].mxu0
  %v9053 = vadd.f32 0.0, %v9052
  %9054 = vdwg.mxu0
  %9055 = vset.pattern.permute.xlu0 2
  %9056 = vperm.xlu0 %9055, %v8744
  %v9057 = vpop.permute.xlu0 %9056
  %9058 = vset.pattern.permute.xlu0 2
  %9059 = vperm.xlu0 %9058, %v8745
  %v9060 = vpop.permute.xlu0 %9059
  %9061 = vset.pattern.permute.xlu0 2
  %9062 = vperm.xlu0 %9061, %v8746
  %v9063 = vpop.permute.xlu0 %9062
  %9064 = vset.pattern.permute.xlu0 2
  %9065 = vperm.xlu0 %9064, %v8747
  %v9066 = vpop.permute.xlu0 %9065
  %v9067 = vrot.slane %v9057, 4
  %v9068 = vrot.slane %v9060, 4
  %v9069 = vsel %vm5750, %v9067, %v9068
  %v9070 = vrot.slane %v9063, 4
  %v9071 = vsel %vm5750, %v9068, %v9070
  %v9072 = vrot.slane %v9066, 4
  %v9073 = vsel %vm5750, %v9070, %v9072
  %v9079 = vmul.f32 %v9033, %v9067
  %v9080 = vmul.f32 %v9039, %v9069
  %v9081 = vmul.f32 %v9045, %v9071
  %v9082 = vmul.f32 %v9051, %v9073
  %v9083 = vmul.f32 %v9033, %v9072
  %v9089 = vrot.slane %v9079, 4
  %v9090 = vrot.slane %v9080, 4
  %v9091 = vsel %vm5750, %v9089, %v9090
  %v9092 = vrot.slane %v9081, 4
  %v9093 = vsel %vm5750, %v9090, %v9092
  %v9094 = vrot.slane %v9082, 4
  %v9095 = vsel %vm5750, %v9092, %v9094
  %v9096 = vrot.slane %v9083, 4
  %v9097 = vsel %vm5750, %v9094, %v9096
  %v9102 = vadd.f32 %v8946, %v9091
  %v9103 = vadd.f32 %v8947, %v9093
  %v9104 = vadd.f32 %v8948, %v9095
  %v9105 = vadd.f32 %v8949, %v9097
  %9106 = vset.pattern.permute.xlu0 3
  %9107 = vperm.xlu0 %9106, %v8744
  %v9108 = vpop.permute.xlu0 %9107
  %9109 = vset.pattern.permute.xlu0 3
  %9110 = vperm.xlu0 %9109, %v8745
  %v9111 = vpop.permute.xlu0 %9110
  %9112 = vset.pattern.permute.xlu0 3
  %9113 = vperm.xlu0 %9112, %v8746
  %v9114 = vpop.permute.xlu0 %9113
  %9115 = vset.pattern.permute.xlu0 3
  %9116 = vperm.xlu0 %9115, %v8747
  %v9117 = vpop.permute.xlu0 %9116
  %v9118 = vrot.slane %v9108, 3
  %v9119 = vrot.slane %v9111, 3
  %v9120 = vsel %vm5814, %v9118, %v9119
  %v9121 = vrot.slane %v9114, 3
  %v9122 = vsel %vm5814, %v9119, %v9121
  %v9123 = vrot.slane %v9117, 3
  %v9124 = vsel %vm5814, %v9121, %v9123
  %v9130 = vmul.f32 %v9035, %v9118
  %v9131 = vmul.f32 %v9041, %v9120
  %v9132 = vmul.f32 %v9047, %v9122
  %v9133 = vmul.f32 %v9053, %v9124
  %v9134 = vmul.f32 %v9035, %v9123
  %v9140 = vrot.slane %v9130, 5
  %v9141 = vrot.slane %v9131, 5
  %v9142 = vsel %vm5720, %v9140, %v9141
  %v9143 = vrot.slane %v9132, 5
  %v9144 = vsel %vm5720, %v9141, %v9143
  %v9145 = vrot.slane %v9133, 5
  %v9146 = vsel %vm5720, %v9143, %v9145
  %v9147 = vrot.slane %v9134, 5
  %v9148 = vsel %vm5720, %v9145, %v9147
  %v9153 = vadd.f32 %v9102, %v9142
  %v9154 = vadd.f32 %v9103, %v9144
  %v9155 = vadd.f32 %v9104, %v9146
  %v9156 = vadd.f32 %v9105, %v9148
  %v9157 = vld [vmem:[%s2 + $0x8] sm:$0x1]
  %v9158 = vlaneseq
  %v9159 = vshrl.u32 %v9158, 7
  %v9160 = vsub.s32 0, %v9159
  %v9161 = vrot.slane %v9157, %v9160
  %v9162 = vadd.f32 %v9153, %v9161
  %v9163 = vadd.f32 %v9154, %v9161
  %v9164 = vadd.f32 %v9155, %v9161
  %v9165 = vadd.f32 %v9156, %v9161
  %v9166 = vmax.f32 %v9162, 0.0
  %v9167 = vmax.f32 %v9163, 0.0
  %v9168 = vmax.f32 %v9164, 0.0
  %v9169 = vmax.f32 %v9165, 0.0
  %v9170 = vld [vmem:[%s4 + $0x40] sm:$0xff]
  %v9175 = vrot.slane %v9166, 1
  %v9176 = vrot.slane %v9167, 1
  %v9177 = vsel %vm311, %v9175, %v9176
  %v9178 = vrot.slane %v9168, 1
  %v9179 = vsel %vm311, %v9176, %v9178
  %v9180 = vrot.slane %v9169, 1
  %v9181 = vsel %vm311, %v9178, %v9180
  %v9182 = vsel %vm311, %v9180, %v9175
  %v9187 = vmax.f32 %v9166, %v9177
  %v9188 = vmax.f32 %v9167, %v9179
  %v9189 = vmax.f32 %v9168, %v9181
  %v9190 = vmax.f32 %v9169, %v9182
  %v9195 = vrot.slane %v9187, 4
  %v9196 = vrot.slane %v9188, 4
  %v9197 = vsel %vm5750, %v9195, %v9196
  %v9198 = vrot.slane %v9189, 4
  %v9199 = vsel %vm5750, %v9196, %v9198
  %v9200 = vrot.slane %v9190, 4
  %v9201 = vsel %vm5750, %v9198, %v9200
  %v9202 = vsel %vm5750, %v9200, %v9195
  %v9207 = vmax.f32 %v9187, %v9197
  %v9208 = vmax.f32 %v9188, %v9199
  %v9209 = vmax.f32 %v9189, %v9201
  %v9210 = vmax.f32 %v9190, %v9202
  %v9212 = vsel %vm1518, %v9170, 0
  %9214 = vmatprep.subr.mxu0 0.0
  %9215 = vmatpush1.msra.mxu0 %v9207
  %9216 = vmatprep.subr.mxu0 0.0
  %9217 = vmatpush1.msra.mxu0 %v9208
  %9218 = vmatprep.subr.mxu0 0.0
  %9219 = vmatpush1.msra.mxu0 %v9209
  %9220 = vmatprep.subr.mxu0 0.0
  %9221 = vmatpush1.msra.mxu0 %v9210
  %9222 = vmatprep.subr.mxu0 0.0
  %9223 = vmatpush1.msra.mxu0 0.0
  %9224 = vmatprep.subr.mxu0 0.0
  %9225 = vmatpush1.msra.mxu0 0.0
  %9226 = vmatprep.subr.mxu0 0.0
  %9227 = vmatpush1.msra.mxu0 0.0
  %9228 = vmatprep.subr.mxu0 0.0
  %9229 = vmatpush1.msra.mxu0 0.0
  %9230 = vmatprep.subr.mxu0 0.0
  %9231 = vmatpush1.msra.mxu0 0.0
  %9232 = vmatprep.subr.mxu0 0.0
  %9233 = vmatpush1.msra.mxu0 0.0
  %9234 = vmatprep.subr.mxu0 0.0
  %9235 = vmatpush1.msra.mxu0 0.0
  %9236 = vmatprep.subr.mxu0 0.0
  %9237 = vmatpush1.msra.mxu0 0.0
  %9238 = vmatprep.subr.mxu0 0.0
  %9239 = vmatpush1.msra.mxu0 0.0
  %9240 = vmatprep.subr.mxu0 0.0
  %9241 = vmatpush1.msra.mxu0 0.0
  %9242 = vmatprep.subr.mxu0 0.0
  %9243 = vmatpush1.msra.mxu0 0.0
  %9244 = vmatprep.subr.mxu0 0.0
  %9245 = vmatpush1.msra.mxu0 0.0
  %9246 = vmatprep.subr.mxu0 0.0
  %9247 = vmatpush1.msra.mxu0 0.0
  %9248 = vmatprep.subr.mxu0 0.0
  %9249 = vmatpush1.msra.mxu0 0.0
  %9250 = vmatprep.subr.mxu0 0.0
  %9251 = vmatpush1.msra.mxu0 0.0
  %9252 = vmatprep.subr.mxu0 0.0
  %9253 = vmatpush1.msra.mxu0 0.0
  %9254 = vmatprep.subr.mxu0 0.0
  %9255 = vmatpush1.msra.mxu0 0.0
  %9256 = vmatprep.subr.mxu0 0.0
  %9257 = vmatpush1.msra.mxu0 0.0
  %9258 = vmatprep.subr.mxu0 0.0
  %9259 = vmatpush1.msra.mxu0 0.0
  %9260 = vmatprep.subr.mxu0 0.0
  %9261 = vmatpush1.msra.mxu0 0.0
  %9262 = vmatprep.subr.mxu0 0.0
  %9263 = vmatpush1.msra.mxu0 0.0
  %9264 = vmatprep.subr.mxu0 0.0
  %9265 = vmatpush1.msra.mxu0 0.0
  %9266 = vmatprep.subr.mxu0 0.0
  %9267 = vmatpush1.msra.mxu0 0.0
  %9268 = vmatprep.subr.mxu0 0.0
  %9269 = vmatpush1.msra.mxu0 0.0
  %9270 = vmatprep.subr.mxu0 0.0
  %9271 = vmatpush1.msra.mxu0 0.0
  %9272 = vmatprep.subr.mxu0 0.0
  %9273 = vmatpush1.msra.mxu0 0.0
  %9274 = vmatprep.subr.mxu0 0.0
  %9275 = vmatpush1.msra.mxu0 0.0
  %9276 = vmatprep.subr.mxu0 0.0
  %9277 = vmatpush1.msra.mxu0 0.0
  %9278 = vmatprep.mubr.f32.mxu0 0.0
  %9279 = vmatmul.mubr.f32.gmra.mrb[0].mxu0 %v9212
  %v9280 = vpop.f32.mrb[0].mxu0
  %v9281 = vadd.f32 0.0, %v9280
  %v9282 = vpop.f32.mrb[0].mxu0
  %9283 = vdwg.mxu0
  %v9284 = vld [vmem:[%s1 + $0x668] sm:$0xff]
  %v9285 = vld [vmem:[%s1 + $0x690] sm:$0xff]
  %v9286 = vld [vmem:[%s1 + $0x6b8] sm:$0xff]
  %v9287 = vld [vmem:[%s1 + $0x6e0] sm:$0xff]
  %v9288 = vld [vmem:[%s1 + $0x708] sm:$0xff]
  %v9289 = vld [vmem:[%s1 + $0x730] sm:$0xff]
  %v9290 = vld [vmem:[%s1 + $0x758] sm:$0xff]
  %v9291 = vld [vmem:[%s1 + $0x780] sm:$0xff]
  %v9292 = vld [vmem:[%s1 + $0x7a8] sm:$0xff]
  %v9293 = vld [vmem:[%s1 + $0x7d0] sm:$0xff]
  %v9294 = vld [vmem:[%s1 + $0x7f8] sm:$0xff]
  %v9295 = vld [vmem:[%s1 + $0x820] sm:$0xff]
  %v9296 = vld [vmem:[%s1 + $0x848] sm:$0xff]
  %v9297 = vld [vmem:[%s1 + $0x870] sm:$0xff]
  %v9298 = vld [vmem:[%s1 + $0x898] sm:$0xff]
  %v9299 = vld [vmem:[%s1 + $0x8c0] sm:$0xff]
  %v9300 = vld [vmem:[%s2 + $0x9] sm:$0x1]
  %v9301 = vlaneseq
  %v9302 = vshrl.u32 %v9301, 7
  %v9303 = vsub.s32 0, %v9302
  %v9304 = vrot.slane %v9300, %v9303
  %9305 = vmatprep.subr.mxu0 0.0
  %9306 = vmatpush1.msra.mxu0 %v9284
  %9307 = vmatprep.subr.mxu0 0.0
  %9308 = vmatpush1.msra.mxu0 %v9285
  %9309 = vmatprep.subr.mxu0 0.0
  %9310 = vmatpush1.msra.mxu0 %v9286
  %9311 = vmatprep.subr.mxu0 0.0
  %9312 = vmatpush1.msra.mxu0 %v9287
  %9313 = vmatprep.subr.mxu0 0.0
  %9314 = vmatpush1.msra.mxu0 %v9288
  %9315 = vmatprep.subr.mxu0 0.0
  %9316 = vmatpush1.msra.mxu0 %v9289
  %9317 = vmatprep.subr.mxu0 0.0
  %9318 = vmatpush1.msra.mxu0 %v9290
  %9319 = vmatprep.subr.mxu0 0.0
  %9320 = vmatpush1.msra.mxu0 %v9291
  %9321 = vmatprep.subr.mxu0 0.0
  %9322 = vmatpush1.msra.mxu0 %v9292
  %9323 = vmatprep.subr.mxu0 0.0
  %9324 = vmatpush1.msra.mxu0 %v9293
  %9325 = vmatprep.subr.mxu0 0.0
  %9326 = vmatpush1.msra.mxu0 %v9294
  %9327 = vmatprep.subr.mxu0 0.0
  %9328 = vmatpush1.msra.mxu0 %v9295
  %9329 = vmatprep.subr.mxu0 0.0
  %9330 = vmatpush1.msra.mxu0 %v9296
  %9331 = vmatprep.subr.mxu0 0.0
  %9332 = vmatpush1.msra.mxu0 %v9297
  %9333 = vmatprep.subr.mxu0 0.0
  %9334 = vmatpush1.msra.mxu0 %v9298
  %9335 = vmatprep.subr.mxu0 0.0
  %9336 = vmatpush1.msra.mxu0 %v9299
  %9337 = vmatprep.subr.mxu0 0.0
  %9338 = vmatpush1.msra.mxu0 0.0
  %9339 = vmatprep.subr.mxu0 0.0
  %9340 = vmatpush1.msra.mxu0 0.0
  %9341 = vmatprep.subr.mxu0 0.0
  %9342 = vmatpush1.msra.mxu0 0.0
  %9343 = vmatprep.subr.mxu0 0.0
  %9344 = vmatpush1.msra.mxu0 0.0
  %9345 = vmatprep.subr.mxu0 0.0
  %9346 = vmatpush1.msra.mxu0 0.0
  %9347 = vmatprep.subr.mxu0 0.0
  %9348 = vmatpush1.msra.mxu0 0.0
  %9349 = vmatprep.subr.mxu0 0.0
  %9350 = vmatpush1.msra.mxu0 0.0
  %9351 = vmatprep.subr.mxu0 0.0
  %9352 = vmatpush1.msra.mxu0 0.0
  %9353 = vmatprep.subr.mxu0 0.0
  %9354 = vmatpush1.msra.mxu0 0.0
  %9355 = vmatprep.subr.mxu0 0.0
  %9356 = vmatpush1.msra.mxu0 0.0
  %9357 = vmatprep.subr.mxu0 0.0
  %9358 = vmatpush1.msra.mxu0 0.0
  %9359 = vmatprep.subr.mxu0 0.0
  %9360 = vmatpush1.msra.mxu0 0.0
  %9361 = vmatprep.subr.mxu0 0.0
  %9362 = vmatpush1.msra.mxu0 0.0
  %9363 = vmatprep.subr.mxu0 0.0
  %9364 = vmatpush1.msra.mxu0 0.0
  %9365 = vmatprep.subr.mxu0 0.0
  %9366 = vmatpush1.msra.mxu0 0.0
  %9367 = vmatprep.subr.mxu0 0.0
  %9368 = vmatpush1.msra.mxu0 0.0
  %9369 = vmatprep.mubr.f32.mxu0 0.0
  %9370 = vmatmul.mubr.f32.gmra.mrb[0].mxu0 %v9281
  %v9371 = vpop.f32.mrb[0].mxu0
  %v9372 = vadd.f32 %v9304, %v9371
  %v9373 = vpop.f32.mrb[0].mxu0
  %9374 = vdwg.mxu0
  %v9375 = vmax.f32 %v9372, 0.0
  %v9376 = vld [vmem:[%s1 + $0x8e8] sm:$0xff]
  %v9377 = vld [vmem:[%s1 + $0x910] sm:$0xff]
  %v9378 = vld [vmem:[%s1 + $0x938] sm:$0xff]
  %v9379 = vld [vmem:[%s1 + $0x960] sm:$0xff]
  %v9380 = vld [vmem:[%s1 + $0x988] sm:$0xff]
  %v9381 = vld [vmem:[%s1 + $0x9b0] sm:$0xff]
  %v9382 = vld [vmem:[%s1 + $0x9d8] sm:$0xff]
  %v9383 = vld [vmem:[%s1 + $0xa00] sm:$0xff]
  %v9384 = vld [vmem:[%s1 + $0xa28] sm:$0xff]
  %v9385 = vld [vmem:[%s1 + $0xa50] sm:$0xff]
  %v9386 = vld [vmem:[%s1 + $0xa78] sm:$0xff]
  %v9387 = vld [vmem:[%s1 + $0xaa0] sm:$0xff]
  %v9388 = vld [vmem:[%s1 + $0xac8] sm:$0xff]
  %v9389 = vld [vmem:[%s1 + $0xaf0] sm:$0xff]
  %v9390 = vld [vmem:[%s1 + $0xb18] sm:$0xff]
  %v9391 = vld [vmem:[%s1 + $0xb40] sm:$0xff]
  %v9392 = vld [vmem:[%s2 + $0xa] sm:$0x1]
  %v9393 = vlaneseq
  %v9394 = vshrl.u32 %v9393, 7
  %v9395 = vsub.s32 0, %v9394
  %v9396 = vrot.slane %v9392, %v9395
  %9397 = vmatprep.subr.mxu0 0.0
  %9398 = vmatpush1.msra.mxu0 %v9376
  %9399 = vmatprep.subr.mxu0 0.0
  %9400 = vmatpush1.msra.mxu0 %v9377
  %9401 = vmatprep.subr.mxu0 0.0
  %9402 = vmatpush1.msra.mxu0 %v9378
  %9403 = vmatprep.subr.mxu0 0.0
  %9404 = vmatpush1.msra.mxu0 %v9379
  %9405 = vmatprep.subr.mxu0 0.0
  %9406 = vmatpush1.msra.mxu0 %v9380
  %9407 = vmatprep.subr.mxu0 0.0
  %9408 = vmatpush1.msra.mxu0 %v9381
  %9409 = vmatprep.subr.mxu0 0.0
  %9410 = vmatpush1.msra.mxu0 %v9382
  %9411 = vmatprep.subr.mxu0 0.0
  %9412 = vmatpush1.msra.mxu0 %v9383
  %9413 = vmatprep.subr.mxu0 0.0
  %9414 = vmatpush1.msra.mxu0 %v9384
  %9415 = vmatprep.subr.mxu0 0.0
  %9416 = vmatpush1.msra.mxu0 %v9385
  %9417 = vmatprep.subr.mxu0 0.0
  %9418 = vmatpush1.msra.mxu0 %v9386
  %9419 = vmatprep.subr.mxu0 0.0
  %9420 = vmatpush1.msra.mxu0 %v9387
  %9421 = vmatprep.subr.mxu0 0.0
  %9422 = vmatpush1.msra.mxu0 %v9388
  %9423 = vmatprep.subr.mxu0 0.0
  %9424 = vmatpush1.msra.mxu0 %v9389
  %9425 = vmatprep.subr.mxu0 0.0
  %9426 = vmatpush1.msra.mxu0 %v9390
  %9427 = vmatprep.subr.mxu0 0.0
  %9428 = vmatpush1.msra.mxu0 %v9391
  %9429 = vmatprep.subr.mxu0 0.0
  %9430 = vmatpush1.msra.mxu0 0.0
  %9431 = vmatprep.subr.mxu0 0.0
  %9432 = vmatpush1.msra.mxu0 0.0
  %9433 = vmatprep.subr.mxu0 0.0
  %9434 = vmatpush1.msra.mxu0 0.0
  %9435 = vmatprep.subr.mxu0 0.0
  %9436 = vmatpush1.msra.mxu0 0.0
  %9437 = vmatprep.subr.mxu0 0.0
  %9438 = vmatpush1.msra.mxu0 0.0
  %9439 = vmatprep.subr.mxu0 0.0
  %9440 = vmatpush1.msra.mxu0 0.0
  %9441 = vmatprep.subr.mxu0 0.0
  %9442 = vmatpush1.msra.mxu0 0.0
  %9443 = vmatprep.subr.mxu0 0.0
  %9444 = vmatpush1.msra.mxu0 0.0
  %9445 = vmatprep.subr.mxu0 0.0
  %9446 = vmatpush1.msra.mxu0 0.0
  %9447 = vmatprep.subr.mxu0 0.0
  %9448 = vmatpush1.msra.mxu0 0.0
  %9449 = vmatprep.subr.mxu0 0.0
  %9450 = vmatpush1.msra.mxu0 0.0
  %9451 = vmatprep.subr.mxu0 0.0
  %9452 = vmatpush1.msra.mxu0 0.0
  %9453 = vmatprep.subr.mxu0 0.0
  %9454 = vmatpush1.msra.mxu0 0.0
  %9455 = vmatprep.subr.mxu0 0.0
  %9456 = vmatpush1.msra.mxu0 0.0
  %9457 = vmatprep.subr.mxu0 0.0
  %9458 = vmatpush1.msra.mxu0 0.0
  %9459 = vmatprep.subr.mxu0 0.0
  %9460 = vmatpush1.msra.mxu0 0.0
  %9461 = vmatprep.mubr.f32.mxu0 0.0
  %9462 = vmatmul.mubr.f32.gmra.mrb[0].mxu0 %v9375
  %v9463 = vpop.f32.mrb[0].mxu0
  %v9464 = vadd.f32 %v9396, %v9463
  %v9465 = vpop.f32.mrb[0].mxu0
  %9466 = vdwg.mxu0
  %v9467 = vmax.f32 %v9464, 0.0
  %v9468 = vld [vmem:[%s1 + $0xb68] sm:$0xff]
  %v9469 = vld [vmem:[%s1 + $0xb90] sm:$0xff]
  %v9470 = vld [vmem:[%s1 + $0xbb8] sm:$0xff]
  %v9471 = vld [vmem:[%s1 + $0xbe0] sm:$0xff]
  %v9472 = vld [vmem:[%s1 + $0xc08] sm:$0xff]
  %v9473 = vld [vmem:[%s1 + $0xc30] sm:$0xff]
  %v9474 = vld [vmem:[%s1 + $0xc58] sm:$0xff]
  %v9475 = vld [vmem:[%s1 + $0xc80] sm:$0xff]
  %v9476 = vld [vmem:[%s1 + $0xca8] sm:$0xff]
  %v9477 = vld [vmem:[%s1 + $0xcd0] sm:$0xff]
  %v9478 = vld [vmem:[%s1 + $0xcf8] sm:$0xff]
  %v9479 = vld [vmem:[%s1 + $0xd20] sm:$0xff]
  %v9480 = vld [vmem:[%s1 + $0xd48] sm:$0xff]
  %v9481 = vld [vmem:[%s1 + $0xd70] sm:$0xff]
  %v9482 = vld [vmem:[%s1 + $0xd98] sm:$0xff]
  %v9483 = vld [vmem:[%s1 + $0xdc0] sm:$0xff]
  %v9484 = vld [vmem:[%s2 + $0xb] sm:$0x1]
  %v9485 = vlaneseq
  %v9486 = vshrl.u32 %v9485, 7
  %v9487 = vsub.s32 0, %v9486
  %v9488 = vrot.slane %v9484, %v9487
  %9489 = vmatprep.subr.mxu0 0.0
  %9490 = vmatpush1.msra.mxu0 %v9468
  %9491 = vmatprep.subr.mxu0 0.0
  %9492 = vmatpush1.msra.mxu0 %v9469
  %9493 = vmatprep.subr.mxu0 0.0
  %9494 = vmatpush1.msra.mxu0 %v9470
  %9495 = vmatprep.subr.mxu0 0.0
  %9496 = vmatpush1.msra.mxu0 %v9471
  %9497 = vmatprep.subr.mxu0 0.0
  %9498 = vmatpush1.msra.mxu0 %v9472
  %9499 = vmatprep.subr.mxu0 0.0
  %9500 = vmatpush1.msra.mxu0 %v9473
  %9501 = vmatprep.subr.mxu0 0.0
  %9502 = vmatpush1.msra.mxu0 %v9474
  %9503 = vmatprep.subr.mxu0 0.0
  %9504 = vmatpush1.msra.mxu0 %v9475
  %9505 = vmatprep.subr.mxu0 0.0
  %9506 = vmatpush1.msra.mxu0 %v9476
  %9507 = vmatprep.subr.mxu0 0.0
  %9508 = vmatpush1.msra.mxu0 %v9477
  %9509 = vmatprep.subr.mxu0 0.0
  %9510 = vmatpush1.msra.mxu0 %v9478
  %9511 = vmatprep.subr.mxu0 0.0
  %9512 = vmatpush1.msra.mxu0 %v9479
  %9513 = vmatprep.subr.mxu0 0.0
  %9514 = vmatpush1.msra.mxu0 %v9480
  %9515 = vmatprep.subr.mxu0 0.0
  %9516 = vmatpush1.msra.mxu0 %v9481
  %9517 = vmatprep.subr.mxu0 0.0
  %9518 = vmatpush1.msra.mxu0 %v9482
  %9519 = vmatprep.subr.mxu0 0.0
  %9520 = vmatpush1.msra.mxu0 %v9483
  %9521 = vmatprep.subr.mxu0 0.0
  %9522 = vmatpush1.msra.mxu0 0.0
  %9523 = vmatprep.subr.mxu0 0.0
  %9524 = vmatpush1.msra.mxu0 0.0
  %9525 = vmatprep.subr.mxu0 0.0
  %9526 = vmatpush1.msra.mxu0 0.0
  %9527 = vmatprep.subr.mxu0 0.0
  %9528 = vmatpush1.msra.mxu0 0.0
  %9529 = vmatprep.subr.mxu0 0.0
  %9530 = vmatpush1.msra.mxu0 0.0
  %9531 = vmatprep.subr.mxu0 0.0
  %9532 = vmatpush1.msra.mxu0 0.0
  %9533 = vmatprep.subr.mxu0 0.0
  %9534 = vmatpush1.msra.mxu0 0.0
  %9535 = vmatprep.subr.mxu0 0.0
  %9536 = vmatpush1.msra.mxu0 0.0
  %9537 = vmatprep.subr.mxu0 0.0
  %9538 = vmatpush1.msra.mxu0 0.0
  %9539 = vmatprep.subr.mxu0 0.0
  %9540 = vmatpush1.msra.mxu0 0.0
  %9541 = vmatprep.subr.mxu0 0.0
  %9542 = vmatpush1.msra.mxu0 0.0
  %9543 = vmatprep.subr.mxu0 0.0
  %9544 = vmatpush1.msra.mxu0 0.0
  %9545 = vmatprep.subr.mxu0 0.0
  %9546 = vmatpush1.msra.mxu0 0.0
  %9547 = vmatprep.subr.mxu0 0.0
  %9548 = vmatpush1.msra.mxu0 0.0
  %9549 = vmatprep.subr.mxu0 0.0
  %9550 = vmatpush1.msra.mxu0 0.0
  %9551 = vmatprep.subr.mxu0 0.0
  %9552 = vmatpush1.msra.mxu0 0.0
  %9553 = vmatprep.mubr.f32.mxu0 0.0
  %9554 = vmatmul.mubr.f32.gmra.mrb[0].mxu0 %v9467
  %v9555 = vpop.f32.mrb[0].mxu0
  %v9556 = vadd.f32 %v9488, %v9555
  %v9557 = vpop.f32.mrb[0].mxu0
  %9558 = vdwg.mxu0
  %v9559 = vmax.f32 %v9556, 0.0
  %v9560 = vld [vmem:[%s1 + $0xde8] sm:$0xff]
  %v9561 = vld [vmem:[%s1 + $0xe10] sm:$0xff]
  %v9562 = vld [vmem:[%s1 + $0xe38] sm:$0xff]
  %v9563 = vld [vmem:[%s1 + $0xe60] sm:$0xff]
  %v9564 = vld [vmem:[%s1 + $0xe88] sm:$0xff]
  %v9565 = vld [vmem:[%s1 + $0xeb0] sm:$0xff]
  %v9566 = vld [vmem:[%s1 + $0xed8] sm:$0xff]
  %v9567 = vld [vmem:[%s1 + $0xf00] sm:$0xff]
  %v9568 = vld [vmem:[%s1 + $0xf28] sm:$0xff]
  %v9569 = vld [vmem:[%s1 + $0xf50] sm:$0xff]
  %v9570 = vld [vmem:[%s1 + $0xf78] sm:$0xff]
  %v9571 = vld [vmem:[%s1 + $0xfa0] sm:$0xff]
  %v9572 = vld [vmem:[%s1 + $0xfc8] sm:$0xff]
  %v9573 = vld [vmem:[%s1 + $0xff0] sm:$0xff]
  %v9574 = vld [vmem:[%s1 + $0x1018] sm:$0xff]
  %v9575 = vld [vmem:[%s1 + $0x1040] sm:$0xff]
  %v9576 = vld [vmem:[%s2 + $0xc] sm:$0x1]
  %v9577 = vlaneseq
  %v9578 = vshrl.u32 %v9577, 7
  %v9579 = vsub.s32 0, %v9578
  %v9580 = vrot.slane %v9576, %v9579
  %9581 = vmatprep.subr.mxu0 0.0
  %9582 = vmatpush1.msra.mxu0 %v9560
  %9583 = vmatprep.subr.mxu0 0.0
  %9584 = vmatpush1.msra.mxu0 %v9561
  %9585 = vmatprep.subr.mxu0 0.0
  %9586 = vmatpush1.msra.mxu0 %v9562
  %9587 = vmatprep.subr.mxu0 0.0
  %9588 = vmatpush1.msra.mxu0 %v9563
  %9589 = vmatprep.subr.mxu0 0.0
  %9590 = vmatpush1.msra.mxu0 %v9564
  %9591 = vmatprep.subr.mxu0 0.0
  %9592 = vmatpush1.msra.mxu0 %v9565
  %9593 = vmatprep.subr.mxu0 0.0
  %9594 = vmatpush1.msra.mxu0 %v9566
  %9595 = vmatprep.subr.mxu0 0.0
  %9596 = vmatpush1.msra.mxu0 %v9567
  %9597 = vmatprep.subr.mxu0 0.0
  %9598 = vmatpush1.msra.mxu0 %v9568
  %9599 = vmatprep.subr.mxu0 0.0
  %9600 = vmatpush1.msra.mxu0 %v9569
  %9601 = vmatprep.subr.mxu0 0.0
  %9602 = vmatpush1.msra.mxu0 %v9570
  %9603 = vmatprep.subr.mxu0 0.0
  %9604 = vmatpush1.msra.mxu0 %v9571
  %9605 = vmatprep.subr.mxu0 0.0
  %9606 = vmatpush1.msra.mxu0 %v9572
  %9607 = vmatprep.subr.mxu0 0.0
  %9608 = vmatpush1.msra.mxu0 %v9573
  %9609 = vmatprep.subr.mxu0 0.0
  %9610 = vmatpush1.msra.mxu0 %v9574
  %9611 = vmatprep.subr.mxu0 0.0
  %9612 = vmatpush1.msra.mxu0 %v9575
  %9613 = vmatprep.subr.mxu0 0.0
  %9614 = vmatpush1.msra.mxu0 0.0
  %9615 = vmatprep.subr.mxu0 0.0
  %9616 = vmatpush1.msra.mxu0 0.0
  %9617 = vmatprep.subr.mxu0 0.0
  %9618 = vmatpush1.msra.mxu0 0.0
  %9619 = vmatprep.subr.mxu0 0.0
  %9620 = vmatpush1.msra.mxu0 0.0
  %9621 = vmatprep.subr.mxu0 0.0
  %9622 = vmatpush1.msra.mxu0 0.0
  %9623 = vmatprep.subr.mxu0 0.0
  %9624 = vmatpush1.msra.mxu0 0.0
  %9625 = vmatprep.subr.mxu0 0.0
  %9626 = vmatpush1.msra.mxu0 0.0
  %9627 = vmatprep.subr.mxu0 0.0
  %9628 = vmatpush1.msra.mxu0 0.0
  %9629 = vmatprep.subr.mxu0 0.0
  %9630 = vmatpush1.msra.mxu0 0.0
  %9631 = vmatprep.subr.mxu0 0.0
  %9632 = vmatpush1.msra.mxu0 0.0
  %9633 = vmatprep.subr.mxu0 0.0
  %9634 = vmatpush1.msra.mxu0 0.0
  %9635 = vmatprep.subr.mxu0 0.0
  %9636 = vmatpush1.msra.mxu0 0.0
  %9637 = vmatprep.subr.mxu0 0.0
  %9638 = vmatpush1.msra.mxu0 0.0
  %9639 = vmatprep.subr.mxu0 0.0
  %9640 = vmatpush1.msra.mxu0 0.0
  %9641 = vmatprep.subr.mxu0 0.0
  %9642 = vmatpush1.msra.mxu0 0.0
  %9643 = vmatprep.subr.mxu0 0.0
  %9644 = vmatpush1.msra.mxu0 0.0
  %9645 = vmatprep.mubr.f32.mxu0 0.0
  %9646 = vmatmul.mubr.f32.gmra.mrb[0].mxu0 %v9559
  %v9647 = vpop.f32.mrb[0].mxu0
  %v9648 = vadd.f32 %v9580, %v9647
  %v9649 = vpop.f32.mrb[0].mxu0
  %9650 = vdwg.mxu0
  %v9651 = vtanh.pop %v9648
  %vm9652 = vcmask 7168
  %9653 = vst.msk [vmem:[%s5] sm:$0xff] %vm9652, %v9651
  // Predicated region
  $region22: #{forward.1} parent=0 // pred_check
    _
  $region23: #{forward.1} parent=0 // pred_check_branch
    %9655 = sbr.rel (0) target = $region25
  $region24: #{forward.1} parent=0 // pred_region
    _
  $region25: #{forward.1} parent=0 // pred_fallthru
    _
  // Predicated region
  $region26: #{forward.1} parent=0 // pred_check
    _
  $region27: #{forward.1} parent=0 // pred_check_branch
    %9657 = sbr.rel (0) target = $region29
  $region28: #{forward.1} parent=0 // pred_region
    _
  $region29: #{forward.1} parent=0 // pred_fallthru
    _

</llo_original>
